<compile_context>
chip_gen: v7x
topology: tpu7x:2x2x1
jax: 0.10.0
libtpu: 0.0.40
codegen_flags: <defaults>
</compile_context>

<pallas_src>
import functools

import jax
import jax.numpy as jnp
from jax import lax
from jax.experimental import pallas as pl
from jax.experimental.pallas import tpu as pltpu


def _decoder_kernel(enc_ref, encA_ref, sbias_ref, w_ih_c_ref, emb_wb_ref,
                    w_hh_t_ref, b_hh_ref, out_wt_ref, out_b_ref, dec_ref):
    Bp, S, H = enc_ref.shape
    T, _, Vp = dec_ref.shape

    iota_v = lax.broadcasted_iota(jnp.int32, (Bp, Vp), 1)

    # --- step 0: SOS --------------------------------------------------------
    sos = (iota_v == 1).astype(jnp.float32)                 # (Bp, Vp)
    dec_ref[pl.ds(0, 1)] = sos[None]                        # lane-dense store

    hidden0 = jnp.zeros((Bp, H), jnp.float32)
    onehot0 = sos

    # --- steps 1..T-1 (fully unrolled; T is static and small) ---------------
    def body(t, carry):
        hidden, onehot = carry

        # Attention with the loop-invariant projection hoisted to the wrapper:
        # scores = sum_i encA[b,s,i]*hidden[b,i] + score_bias[b,s]
        scores = (jnp.sum(encA_ref[...] * hidden[:, None, :], axis=-1)
                  + sbias_ref[...])                                    # (Bp, S)
        m = jnp.max(scores, axis=-1, keepdims=True)
        e = jnp.exp(scores - m)
        # exact division kept (approx reciprocal risks flipping near-tie argmax)
        attn = e / jnp.sum(e, axis=-1, keepdims=True)                  # (Bp, S)
        context = jnp.sum(attn[:, :, None] * enc_ref[...], axis=1)     # (Bp, H)

        # GRU cell (PyTorch gate order r, z, n).  Embedding lookup + b_ih are
        # folded into emb_wb = emb @ w_ih_e + b_ih, so the whole input gate is
        # two MXU dots.  (Sampled idx is always < V, so the OOV -> UNK(3)
        # remap of the reference is a no-op on this path.)
        gi = (jnp.dot(context, w_ih_c_ref[...],
                      preferred_element_type=jnp.float32)
              + jnp.dot(onehot, emb_wb_ref[...],
                        preferred_element_type=jnp.float32))           # (Bp, 3H)
        gh = (jnp.dot(hidden, w_hh_t_ref[...],
                      preferred_element_type=jnp.float32)
              + b_hh_ref[...])                                         # (Bp, 3H)
        r = jax.nn.sigmoid(gi[:, :H] + gh[:, :H])
        z = jax.nn.sigmoid(gi[:, H:2 * H] + gh[:, H:2 * H])
        n = jnp.tanh(gi[:, 2 * H:] + r * gh[:, 2 * H:])
        h_new = (1.0 - z) * n + z * hidden                             # (Bp, H)

        # Output projection + log_softmax.  Padded vocab lanes carry -1e30 bias
        # so they add 0 to the partition function and never win the argmax.
        logits = (jnp.dot(h_new, out_wt_ref[...],
                          preferred_element_type=jnp.float32)
                  + out_b_ref[...])                                    # (Bp, Vp)
        lm = jnp.max(logits, axis=-1, keepdims=True)
        lse = lm + jnp.log(jnp.sum(jnp.exp(logits - lm), axis=-1,
                                   keepdims=True))
        dec_ref[pl.ds(t, 1)] = (logits - lse)[None]                    # (1,Bp,Vp)

        # Greedy next token: reuse lm; first occurrence of the max.
        is_max = logits >= lm
        idx = jnp.min(jnp.where(is_max, iota_v, Vp), axis=-1, keepdims=True)
        onehot_new = (iota_v == idx).astype(jnp.float32)               # (Bp, Vp)
        return h_new, onehot_new

    lax.fori_loop(1, T, body, (hidden0, onehot0), unroll=True)


def prepare_decoder_params(params):
    """One-time, call-invariant weight preparation (off the hot path)."""
    V, E = params["embedding"].shape
    threeH = params["w_hh"].shape[0]
    H = threeH // 3
    Vp = ((V + 127) // 128) * 128          # lane-dense vocab

    emb_p = jnp.zeros((Vp, E), jnp.float32).at[:V].set(
        params["embedding"].astype(jnp.float32))
    w_ih_t = params["w_ih"].T.astype(jnp.float32)                  # (H+E, 3H)
    w_ih_c = w_ih_t[:H]                                            # (H, 3H)
    w_ih_e = w_ih_t[H:]                                            # (E, 3H)
    # Fold embedding table and b_ih into one (Vp, 3H) gate table.
    emb_wb = emb_p @ w_ih_e + params["b_ih"].astype(jnp.float32)[None, :]
    w_hh_t = params["w_hh"].T.astype(jnp.float32)                  # (H, 3H)
    b_hh = params["b_hh"].reshape(1, 3 * H).astype(jnp.float32)
    out_wt = jnp.zeros((H, Vp), jnp.float32).at[:, :V].set(
        params["out_w"].T.astype(jnp.float32))                     # (H, Vp)
    out_b = jnp.full((1, Vp), -1e30, jnp.float32).at[0, :V].set(
        params["out_b"].astype(jnp.float32))                       # (1, Vp)
    return {
        "attn_w": params["attn_w"].astype(jnp.float32),            # (H, H) raw
        "attn_b": params["attn_b"].astype(jnp.float32),            # (H,)
        "w_ih_c": w_ih_c, "emb_wb": emb_wb, "w_hh_t": w_hh_t, "b_hh": b_hh,
        "out_wt": out_wt, "out_b": out_b,
    }


def attention_decoder_forward(encoder_outputs, prepped, max_length, vocab_size):
    """Returns (decoder_outputs (B,T,V) log-probs, sampled_idxs (B,T,1) int32)."""
    B, S, H = encoder_outputs.shape
    V, T = vocab_size, max_length
    Bp = ((B + 7) // 8) * 8                # pad batch to sublane width
    Vp = prepped["out_b"].shape[1]

    enc_p = jnp.zeros((Bp, S, H), jnp.float32).at[:B].set(
        encoder_outputs.astype(jnp.float32))
    # Loop-invariant attention projection, computed once per call.
    encA = jnp.einsum("bso,oi->bsi", enc_p, prepped["attn_w"])     # (Bp, S, H)
    sbias = jnp.einsum("bso,o->bs", enc_p, prepped["attn_b"])      # (Bp, S)

    vmem = lambda: pl.BlockSpec(memory_space=pltpu.MemorySpace.VMEM)

    dec_tmo = pl.pallas_call(
        _decoder_kernel,
        out_shape=jax.ShapeDtypeStruct((T, Bp, Vp), jnp.float32),
        in_specs=[vmem() for _ in range(9)],   # whole-array, single-shot, no pipeline
        out_specs=vmem(),
    )(enc_p, encA, sbias, prepped["w_ih_c"], prepped["emb_wb"],
      prepped["w_hh_t"], prepped["b_hh"], prepped["out_wt"], prepped["out_b"])

    decoder_outputs = jnp.transpose(dec_tmo[:, :B, :V], (1, 0, 2))  # (B, T, V)
    # Sampled indices recovered from the log-probs (identical to the in-kernel
    # greedy choice: first occurrence of the row max of the same logits).
    sampled_idxs = jnp.argmax(decoder_outputs, axis=-1).astype(jnp.int32)[..., None]
    return decoder_outputs, sampled_idxs


def reference_forward(encoder_outputs, params, max_length):
    """Pure-JAX replica of AttentionDecoder.forward (keep_prob=1, no teacher forcing)."""
    B, S, H = encoder_outputs.shape
    V, E = params["embedding"].shape
    hidden = jnp.zeros((B, H), jnp.float32)
    sos_out = jnp.zeros((B, V), jnp.float32).at[:, 1].set(1.0)
    idx = jnp.ones((B,), jnp.int32)
    dec, samp = [sos_out], [idx]
    for _ in range(1, max_length):
        th = hidden @ params["attn_w"].T + params["attn_b"]
        scores = jnp.einsum("bsh,bh->bs", encoder_outputs, th)
        attn = jax.nn.softmax(scores, axis=1)
        context = jnp.einsum("bs,bsh->bh", attn, encoder_outputs)
        idx_c = jnp.where(idx > V, 3, idx)
        embedded = params["embedding"][idx_c]
        x = jnp.concatenate([context, embedded], axis=-1)
        gi = x @ params["w_ih"].T + params["b_ih"]
        gh = hidden @ params["w_hh"].T + params["b_hh"]
        r = jax.nn.sigmoid(gi[:, :H] + gh[:, :H])
        z = jax.nn.sigmoid(gi[:, H:2 * H] + gh[:, H:2 * H])
        n = jnp.tanh(gi[:, 2 * H:] + r * gh[:, 2 * H:])
        hidden = (1.0 - z) * n + z * hidden
        logits = hidden @ params["out_w"].T + params["out_b"]
        logp = jax.nn.log_softmax(logits, axis=-1)
        idx = jnp.argmax(logp, axis=-1).astype(jnp.int32)
        dec.append(logp)
        samp.append(idx)
    return jnp.stack(dec, axis=1), jnp.stack(samp, axis=1)[..., None]


def init_params(key, hidden_size, embedding_size, vocab_size):
    ks = jax.random.split(key, 9)
    H, E, V = hidden_size, embedding_size, vocab_size
    emb = jax.random.normal(ks[0], (V, E), jnp.float32) / (E ** 0.5)
    emb = emb.at[0, :].set(0.0)  # padding_idx=0
    return {
        "embedding": emb,
        "attn_w": jax.random.normal(ks[1], (H, H), jnp.float32) / (H ** 0.5),
        "attn_b": jax.random.normal(ks[2], (H,), jnp.float32) * 0.01,
        "w_ih": jax.random.normal(ks[3], (3 * H, H + E), jnp.float32) / ((H + E) ** 0.5),
        "w_hh": jax.random.normal(ks[4], (3 * H, H), jnp.float32) / (H ** 0.5),
        "b_ih": jax.random.normal(ks[5], (3 * H,), jnp.float32) * 0.01,
        "b_hh": jax.random.normal(ks[6], (3 * H,), jnp.float32) * 0.01,
        "out_w": jax.random.normal(ks[7], (V, H), jnp.float32) / (H ** 0.5),
        "out_b": jax.random.normal(ks[8], (V,), jnp.float32) * 0.01,
    }


if __name__ == "__main__":
    B, S, H, E, V = 2, 8, 32, 16, 32
    MAX_LEN = 8

    key = jax.random.PRNGKey(0)
    k_params, k_enc = jax.random.split(key)
    params = init_params(k_params, H, E, V)
    encoder_outputs = jax.random.normal(k_enc, (B, S, H), jnp.float32)

    prepped = prepare_decoder_params(params)   # one-time, off the hot path

    fwd = jax.jit(functools.partial(attention_decoder_forward,
                                    max_length=MAX_LEN, vocab_size=V))
    dec_out, samp_idx = fwd(encoder_outputs, prepped)
    dec_out = jax.block_until_ready(dec_out)
    samp_idx = jax.block_until_ready(samp_idx)

    # Sanity check against a pure-JAX reference of the PyTorch forward.
    ref_dec, ref_idx = reference_forward(encoder_outputs, params, MAX_LEN)
    assert dec_out.shape == (B, MAX_LEN, V) and samp_idx.shape == (B, MAX_LEN, 1)
    assert jnp.allclose(dec_out, ref_dec, atol=1e-4, rtol=1e-4)
    assert jnp.array_equal(samp_idx, ref_idx.astype(jnp.int32))

    # TODO(synk): teacher-forcing / dropout branches use torch.rand at call time;
    # they are disabled here (targets=None, keep_prob=1.0, teacher_forcing=0.0).
    print("KERNEL_OK")
</pallas_src>

<mosaic_0001>
module attributes {stable_mosaic.version = 11 : i64} {
  func.func @_decoder_kernel(%arg0: memref<8x8x32xf32, #tpu.memory_space<vmem>>, %arg1: memref<8x8x32xf32, #tpu.memory_space<vmem>>, %arg2: memref<8x8xf32, #tpu.memory_space<vmem>>, %arg3: memref<32x96xf32, #tpu.memory_space<vmem>>, %arg4: memref<128x96xf32, #tpu.memory_space<vmem>>, %arg5: memref<32x96xf32, #tpu.memory_space<vmem>>, %arg6: memref<1x96xf32, #tpu.memory_space<vmem>>, %arg7: memref<32x128xf32, #tpu.memory_space<vmem>>, %arg8: memref<1x128xf32, #tpu.memory_space<vmem>>, %arg9: memref<8x8x128xf32, #tpu.memory_space<vmem>>) attributes {dimension_semantics = [], scalar_prefetch = 0 : i64, scratch_operands = 0 : i64, tpu.core_type = #tpu.core_type<tc>} {
    %0 = tpu.iota {dimensions = array<i32: 1>} : vector<8x128xi32>
    %c1_i32 = arith.constant 1 : i32
    %1 = vector.broadcast %c1_i32 : i32 to vector<8x128xi32>
    %2 = arith.cmpi eq, %0, %1 : vector<8x128xi32>
    %3 = arith.extui %2 : vector<8x128xi1> to vector<8x128xi32>
    %4 = arith.sitofp %3 : vector<8x128xi32> to vector<8x128xf32>
    %5 = vector.shape_cast %4 : vector<8x128xf32> to vector<1x8x128xf32>
    %c0 = arith.constant 0 : index
    %c0_0 = arith.constant 0 : index
    %c0_1 = arith.constant 0 : index
    %6 = vector.load %arg9[%c0, %c0_0, %c0_1] : memref<8x8x128xf32, #tpu.memory_space<vmem>>, vector<1x8x128xf32>
    tpu.vector_store %arg9[%c0, %c0_0, %c0_1], %5 {strides = array<i32>} : memref<8x8x128xf32, #tpu.memory_space<vmem>>, vector<1x8x128xf32>,
    %cst = arith.constant 0.000000e+00 : f32
    %7 = vector.broadcast %cst : f32 to vector<8x32xf32>
    %c1_i32_2 = arith.constant 1 : i32
    %c0_3 = arith.constant 0 : index
    %c0_4 = arith.constant 0 : index
    %c0_5 = arith.constant 0 : index
    %8 = vector.load %arg1[%c0_3, %c0_4, %c0_5] : memref<8x8x32xf32, #tpu.memory_space<vmem>>, vector<8x8x32xf32>
    %9 = vector.shape_cast %7 : vector<8x32xf32> to vector<8x1x32xf32>
    %10 = vector.broadcast %9 : vector<8x1x32xf32> to vector<8x8x32xf32>
    %11 = arith.mulf %8, %10 : vector<8x8x32xf32>
    %cst_6 = arith.constant dense<0.000000e+00> : vector<8x8xf32>
    %12 = vector.multi_reduction <add>, %11, %cst_6 [2] : vector<8x8x32xf32> to vector<8x8xf32>
    %c0_7 = arith.constant 0 : index
    %c0_8 = arith.constant 0 : index
    %13 = vector.load %arg2[%c0_7, %c0_8] : memref<8x8xf32, #tpu.memory_space<vmem>>, vector<8x8xf32>
    %14 = arith.addf %12, %13 : vector<8x8xf32>
    %cst_9 = arith.constant dense<0xFF800000> : vector<8xf32>
    %15 = vector.multi_reduction <maximumf>, %14, %cst_9 [1] : vector<8x8xf32> to vector<8xf32>
    %16 = vector.shape_cast %15 : vector<8xf32> to vector<8x1xf32>
    %17 = vector.broadcast %16 : vector<8x1xf32> to vector<8x8xf32>
    %18 = arith.subf %14, %17 : vector<8x8xf32>
    %19 = math.exp %18 : vector<8x8xf32>
    %cst_10 = arith.constant dense<0.000000e+00> : vector<8xf32>
    %20 = vector.multi_reduction <add>, %19, %cst_10 [1] : vector<8x8xf32> to vector<8xf32>
    %21 = vector.shape_cast %20 : vector<8xf32> to vector<8x1xf32>
    %22 = vector.broadcast %21 : vector<8x1xf32> to vector<8x8xf32>
    %23 = arith.divf %19, %22 : vector<8x8xf32>
    %24 = vector.shape_cast %23 : vector<8x8xf32> to vector<8x8x1xf32>
    %c0_11 = arith.constant 0 : index
    %c0_12 = arith.constant 0 : index
    %c0_13 = arith.constant 0 : index
    %25 = vector.load %arg0[%c0_11, %c0_12, %c0_13] : memref<8x8x32xf32, #tpu.memory_space<vmem>>, vector<8x8x32xf32>
    %26 = vector.broadcast %24 : vector<8x8x1xf32> to vector<8x8x32xf32>
    %27 = arith.mulf %26, %25 : vector<8x8x32xf32>
    %cst_14 = arith.constant dense<0.000000e+00> : vector<8x32xf32>
    %28 = vector.multi_reduction <add>, %27, %cst_14 [1] : vector<8x8x32xf32> to vector<8x32xf32>
    %c0_15 = arith.constant 0 : index
    %c0_16 = arith.constant 0 : index
    %29 = vector.load %arg3[%c0_15, %c0_16] : memref<32x96xf32, #tpu.memory_space<vmem>>, vector<32x96xf32>
    %cst_17 = arith.constant dense<0.000000e+00> : vector<8x96xf32>
    %30 = tpu.matmul %28, %29, %cst_17 {dimension_numbers = #tpu.dot_dimension_numbers<[1], [0], [0], [1], [0, 0, 1, 1], [], []>} : vector<8x32xf32>, vector<32x96xf32>, vector<8x96xf32> -> vector<8x96xf32>
    %c0_18 = arith.constant 0 : index
    %c0_19 = arith.constant 0 : index
    %31 = vector.load %arg4[%c0_18, %c0_19] : memref<128x96xf32, #tpu.memory_space<vmem>>, vector<128x96xf32>
    %cst_20 = arith.constant dense<0.000000e+00> : vector<8x96xf32>
    %32 = tpu.matmul %4, %31, %cst_20 {dimension_numbers = #tpu.dot_dimension_numbers<[1], [0], [0], [1], [0, 0, 1, 1], [], []>} : vector<8x128xf32>, vector<128x96xf32>, vector<8x96xf32> -> vector<8x96xf32>
    %33 = arith.addf %30, %32 : vector<8x96xf32>
    %c0_21 = arith.constant 0 : index
    %c0_22 = arith.constant 0 : index
    %34 = vector.load %arg5[%c0_21, %c0_22] : memref<32x96xf32, #tpu.memory_space<vmem>>, vector<32x96xf32>
    %cst_23 = arith.constant dense<0.000000e+00> : vector<8x96xf32>
    %35 = tpu.matmul %7, %34, %cst_23 {dimension_numbers = #tpu.dot_dimension_numbers<[1], [0], [0], [1], [0, 0, 1, 1], [], []>} : vector<8x32xf32>, vector<32x96xf32>, vector<8x96xf32> -> vector<8x96xf32>
    %c0_24 = arith.constant 0 : index
    %c0_25 = arith.constant 0 : index
    %36 = vector.load %arg6[%c0_24, %c0_25] : memref<1x96xf32, #tpu.memory_space<vmem>>, vector<1x96xf32>
    %37 = vector.broadcast %36 : vector<1x96xf32> to vector<8x96xf32>
    %38 = arith.addf %35, %37 : vector<8x96xf32>
    %39 = vector.extract_strided_slice %33 {offsets = [0, 0], sizes = [8, 32], strides = [1, 1]} : vector<8x96xf32> to vector<8x32xf32>
    %40 = vector.extract_strided_slice %38 {offsets = [0, 0], sizes = [8, 32], strides = [1, 1]} : vector<8x96xf32> to vector<8x32xf32>
    %41 = arith.addf %39, %40 : vector<8x32xf32>
    %42 = arith.negf %41 : vector<8x32xf32>
    %43 = math.exp %42 : vector<8x32xf32>
    %cst_26 = arith.constant 1.000000e+00 : f32
    %44 = vector.broadcast %cst_26 : f32 to vector<8x32xf32>
    %45 = arith.addf %44, %43 : vector<8x32xf32>
    %46 = arith.divf %44, %45 : vector<8x32xf32>
    %47 = vector.extract_strided_slice %33 {offsets = [0, 32], sizes = [8, 32], strides = [1, 1]} : vector<8x96xf32> to vector<8x32xf32>
    %48 = vector.extract_strided_slice %38 {offsets = [0, 32], sizes = [8, 32], strides = [1, 1]} : vector<8x96xf32> to vector<8x32xf32>
    %49 = arith.addf %47, %48 : vector<8x32xf32>
    %50 = arith.negf %49 : vector<8x32xf32>
    %51 = math.exp %50 : vector<8x32xf32>
    %cst_27 = arith.constant 1.000000e+00 : f32
    %52 = vector.broadcast %cst_27 : f32 to vector<8x32xf32>
    %53 = arith.addf %52, %51 : vector<8x32xf32>
    %54 = arith.divf %52, %53 : vector<8x32xf32>
    %55 = vector.extract_strided_slice %33 {offsets = [0, 64], sizes = [8, 32], strides = [1, 1]} : vector<8x96xf32> to vector<8x32xf32>
    %56 = vector.extract_strided_slice %38 {offsets = [0, 64], sizes = [8, 32], strides = [1, 1]} : vector<8x96xf32> to vector<8x32xf32>
    %57 = arith.mulf %46, %56 : vector<8x32xf32>
    %58 = arith.addf %55, %57 : vector<8x32xf32>
    %59 = math.tanh %58 : vector<8x32xf32>
    %cst_28 = arith.constant 1.000000e+00 : f32
    %60 = vector.broadcast %cst_28 : f32 to vector<8x32xf32>
    %61 = arith.subf %60, %54 : vector<8x32xf32>
    %62 = arith.mulf %61, %59 : vector<8x32xf32>
    %63 = arith.mulf %54, %7 : vector<8x32xf32>
    %64 = arith.addf %62, %63 : vector<8x32xf32>
    %c0_29 = arith.constant 0 : index
    %c0_30 = arith.constant 0 : index
    %65 = vector.load %arg7[%c0_29, %c0_30] : memref<32x128xf32, #tpu.memory_space<vmem>>, vector<32x128xf32>
    %cst_31 = arith.constant dense<0.000000e+00> : vector<8x128xf32>
    %66 = tpu.matmul %64, %65, %cst_31 {dimension_numbers = #tpu.dot_dimension_numbers<[1], [0], [0], [1], [0, 0, 1, 1], [], []>} : vector<8x32xf32>, vector<32x128xf32>, vector<8x128xf32> -> vector<8x128xf32>
    %c0_32 = arith.constant 0 : index
    %c0_33 = arith.constant 0 : index
    %67 = vector.load %arg8[%c0_32, %c0_33] : memref<1x128xf32, #tpu.memory_space<vmem>>, vector<1x128xf32>
    %68 = vector.broadcast %67 : vector<1x128xf32> to vector<8x128xf32>
    %69 = arith.addf %66, %68 : vector<8x128xf32>
    %cst_34 = arith.constant dense<0xFF800000> : vector<8xf32>
    %70 = vector.multi_reduction <maximumf>, %69, %cst_34 [1] : vector<8x128xf32> to vector<8xf32>
    %71 = vector.shape_cast %70 : vector<8xf32> to vector<8x1xf32>
    %72 = vector.broadcast %71 : vector<8x1xf32> to vector<8x128xf32>
    %73 = arith.subf %69, %72 : vector<8x128xf32>
    %74 = math.exp %73 : vector<8x128xf32>
    %cst_35 = arith.constant dense<0.000000e+00> : vector<8xf32>
    %75 = vector.multi_reduction <add>, %74, %cst_35 [1] : vector<8x128xf32> to vector<8xf32>
    %76 = vector.shape_cast %75 : vector<8xf32> to vector<8x1xf32>
    %77 = math.log %76 : vector<8x1xf32>
    %78 = arith.addf %71, %77 : vector<8x1xf32>
    %79 = vector.broadcast %78 : vector<8x1xf32> to vector<8x128xf32>
    %80 = arith.subf %69, %79 : vector<8x128xf32>
    %81 = vector.shape_cast %80 : vector<8x128xf32> to vector<1x8x128xf32>
    %82 = arith.index_cast %c1_i32_2 : i32 to index
    %c0_36 = arith.constant 0 : index
    %c0_37 = arith.constant 0 : index
    %83 = vector.load %arg9[%82, %c0_36, %c0_37] : memref<8x8x128xf32, #tpu.memory_space<vmem>>, vector<1x8x128xf32>
    tpu.vector_store %arg9[%82, %c0_36, %c0_37], %81 {strides = array<i32>} : memref<8x8x128xf32, #tpu.memory_space<vmem>>, vector<1x8x128xf32>,
    %84 = vector.broadcast %71 : vector<8x1xf32> to vector<8x128xf32>
    %85 = arith.cmpf oge, %69, %84 : vector<8x128xf32>
    %c128_i32 = arith.constant 128 : i32
    %86 = vector.broadcast %c128_i32 : i32 to vector<8x128xi32>
    %87 = arith.select %85, %0, %86 : vector<8x128xi1>, vector<8x128xi32>
    %cst_38 = arith.constant dense<2147483647> : vector<8xi32>
    %88 = vector.multi_reduction <minsi>, %87, %cst_38 [1] : vector<8x128xi32> to vector<8xi32>
    %89 = vector.shape_cast %88 : vector<8xi32> to vector<8x1xi32>
    %90 = vector.broadcast %89 : vector<8x1xi32> to vector<8x128xi32>
    %91 = arith.cmpi eq, %0, %90 : vector<8x128xi32>
    %92 = arith.extui %91 : vector<8x128xi1> to vector<8x128xi32>
    %93 = arith.sitofp %92 : vector<8x128xi32> to vector<8x128xf32>
    %c2_i32 = arith.constant 2 : i32
    %c0_39 = arith.constant 0 : index
    %c0_40 = arith.constant 0 : index
    %c0_41 = arith.constant 0 : index
    %94 = vector.load %arg1[%c0_39, %c0_40, %c0_41] : memref<8x8x32xf32, #tpu.memory_space<vmem>>, vector<8x8x32xf32>
    %95 = vector.shape_cast %64 : vector<8x32xf32> to vector<8x1x32xf32>
    %96 = vector.broadcast %95 : vector<8x1x32xf32> to vector<8x8x32xf32>
    %97 = arith.mulf %94, %96 : vector<8x8x32xf32>
    %cst_42 = arith.constant dense<0.000000e+00> : vector<8x8xf32>
    %98 = vector.multi_reduction <add>, %97, %cst_42 [2] : vector<8x8x32xf32> to vector<8x8xf32>
    %c0_43 = arith.constant 0 : index
    %c0_44 = arith.constant 0 : index
    %99 = vector.load %arg2[%c0_43, %c0_44] : memref<8x8xf32, #tpu.memory_space<vmem>>, vector<8x8xf32>
    %100 = arith.addf %98, %99 : vector<8x8xf32>
    %cst_45 = arith.constant dense<0xFF800000> : vector<8xf32>
    %101 = vector.multi_reduction <maximumf>, %100, %cst_45 [1] : vector<8x8xf32> to vector<8xf32>
    %102 = vector.shape_cast %101 : vector<8xf32> to vector<8x1xf32>
    %103 = vector.broadcast %102 : vector<8x1xf32> to vector<8x8xf32>
    %104 = arith.subf %100, %103 : vector<8x8xf32>
    %105 = math.exp %104 : vector<8x8xf32>
    %cst_46 = arith.constant dense<0.000000e+00> : vector<8xf32>
    %106 = vector.multi_reduction <add>, %105, %cst_46 [1] : vector<8x8xf32> to vector<8xf32>
    %107 = vector.shape_cast %106 : vector<8xf32> to vector<8x1xf32>
    %108 = vector.broadcast %107 : vector<8x1xf32> to vector<8x8xf32>
    %109 = arith.divf %105, %108 : vector<8x8xf32>
    %110 = vector.shape_cast %109 : vector<8x8xf32> to vector<8x8x1xf32>
    %c0_47 = arith.constant 0 : index
    %c0_48 = arith.constant 0 : index
    %c0_49 = arith.constant 0 : index
    %111 = vector.load %arg0[%c0_47, %c0_48, %c0_49] : memref<8x8x32xf32, #tpu.memory_space<vmem>>, vector<8x8x32xf32>
    %112 = vector.broadcast %110 : vector<8x8x1xf32> to vector<8x8x32xf32>
    %113 = arith.mulf %112, %111 : vector<8x8x32xf32>
    %cst_50 = arith.constant dense<0.000000e+00> : vector<8x32xf32>
    %114 = vector.multi_reduction <add>, %113, %cst_50 [1] : vector<8x8x32xf32> to vector<8x32xf32>
    %c0_51 = arith.constant 0 : index
    %c0_52 = arith.constant 0 : index
    %115 = vector.load %arg3[%c0_51, %c0_52] : memref<32x96xf32, #tpu.memory_space<vmem>>, vector<32x96xf32>
    %cst_53 = arith.constant dense<0.000000e+00> : vector<8x96xf32>
    %116 = tpu.matmul %114, %115, %cst_53 {dimension_numbers = #tpu.dot_dimension_numbers<[1], [0], [0], [1], [0, 0, 1, 1], [], []>} : vector<8x32xf32>, vector<32x96xf32>, vector<8x96xf32> -> vector<8x96xf32>
    %c0_54 = arith.constant 0 : index
    %c0_55 = arith.constant 0 : index
    %117 = vector.load %arg4[%c0_54, %c0_55] : memref<128x96xf32, #tpu.memory_space<vmem>>, vector<128x96xf32>
    %cst_56 = arith.constant dense<0.000000e+00> : vector<8x96xf32>
    %118 = tpu.matmul %93, %117, %cst_56 {dimension_numbers = #tpu.dot_dimension_numbers<[1], [0], [0], [1], [0, 0, 1, 1], [], []>} : vector<8x128xf32>, vector<128x96xf32>, vector<8x96xf32> -> vector<8x96xf32>
    %119 = arith.addf %116, %118 : vector<8x96xf32>
    %c0_57 = arith.constant 0 : index
    %c0_58 = arith.constant 0 : index
    %120 = vector.load %arg5[%c0_57, %c0_58] : memref<32x96xf32, #tpu.memory_space<vmem>>, vector<32x96xf32>
    %cst_59 = arith.constant dense<0.000000e+00> : vector<8x96xf32>
    %121 = tpu.matmul %64, %120, %cst_59 {dimension_numbers = #tpu.dot_dimension_numbers<[1], [0], [0], [1], [0, 0, 1, 1], [], []>} : vector<8x32xf32>, vector<32x96xf32>, vector<8x96xf32> -> vector<8x96xf32>
    %c0_60 = arith.constant 0 : index
    %c0_61 = arith.constant 0 : index
    %122 = vector.load %arg6[%c0_60, %c0_61] : memref<1x96xf32, #tpu.memory_space<vmem>>, vector<1x96xf32>
    %123 = vector.broadcast %122 : vector<1x96xf32> to vector<8x96xf32>
    %124 = arith.addf %121, %123 : vector<8x96xf32>
    %125 = vector.extract_strided_slice %119 {offsets = [0, 0], sizes = [8, 32], strides = [1, 1]} : vector<8x96xf32> to vector<8x32xf32>
    %126 = vector.extract_strided_slice %124 {offsets = [0, 0], sizes = [8, 32], strides = [1, 1]} : vector<8x96xf32> to vector<8x32xf32>
    %127 = arith.addf %125, %126 : vector<8x32xf32>
    %128 = arith.negf %127 : vector<8x32xf32>
    %129 = math.exp %128 : vector<8x32xf32>
    %cst_62 = arith.constant 1.000000e+00 : f32
    %130 = vector.broadcast %cst_62 : f32 to vector<8x32xf32>
    %131 = arith.addf %130, %129 : vector<8x32xf32>
    %132 = arith.divf %130, %131 : vector<8x32xf32>
    %133 = vector.extract_strided_slice %119 {offsets = [0, 32], sizes = [8, 32], strides = [1, 1]} : vector<8x96xf32> to vector<8x32xf32>
    %134 = vector.extract_strided_slice %124 {offsets = [0, 32], sizes = [8, 32], strides = [1, 1]} : vector<8x96xf32> to vector<8x32xf32>
    %135 = arith.addf %133, %134 : vector<8x32xf32>
    %136 = arith.negf %135 : vector<8x32xf32>
    %137 = math.exp %136 : vector<8x32xf32>
    %cst_63 = arith.constant 1.000000e+00 : f32
    %138 = vector.broadcast %cst_63 : f32 to vector<8x32xf32>
    %139 = arith.addf %138, %137 : vector<8x32xf32>
    %140 = arith.divf %138, %139 : vector<8x32xf32>
    %141 = vector.extract_strided_slice %119 {offsets = [0, 64], sizes = [8, 32], strides = [1, 1]} : vector<8x96xf32> to vector<8x32xf32>
    %142 = vector.extract_strided_slice %124 {offsets = [0, 64], sizes = [8, 32], strides = [1, 1]} : vector<8x96xf32> to vector<8x32xf32>
    %143 = arith.mulf %132, %142 : vector<8x32xf32>
    %144 = arith.addf %141, %143 : vector<8x32xf32>
    %145 = math.tanh %144 : vector<8x32xf32>
    %cst_64 = arith.constant 1.000000e+00 : f32
    %146 = vector.broadcast %cst_64 : f32 to vector<8x32xf32>
    %147 = arith.subf %146, %140 : vector<8x32xf32>
    %148 = arith.mulf %147, %145 : vector<8x32xf32>
    %149 = arith.mulf %140, %64 : vector<8x32xf32>
    %150 = arith.addf %148, %149 : vector<8x32xf32>
    %c0_65 = arith.constant 0 : index
    %c0_66 = arith.constant 0 : index
    %151 = vector.load %arg7[%c0_65, %c0_66] : memref<32x128xf32, #tpu.memory_space<vmem>>, vector<32x128xf32>
    %cst_67 = arith.constant dense<0.000000e+00> : vector<8x128xf32>
    %152 = tpu.matmul %150, %151, %cst_67 {dimension_numbers = #tpu.dot_dimension_numbers<[1], [0], [0], [1], [0, 0, 1, 1], [], []>} : vector<8x32xf32>, vector<32x128xf32>, vector<8x128xf32> -> vector<8x128xf32>
    %c0_68 = arith.constant 0 : index
    %c0_69 = arith.constant 0 : index
    %153 = vector.load %arg8[%c0_68, %c0_69] : memref<1x128xf32, #tpu.memory_space<vmem>>, vector<1x128xf32>
    %154 = vector.broadcast %153 : vector<1x128xf32> to vector<8x128xf32>
    %155 = arith.addf %152, %154 : vector<8x128xf32>
    %cst_70 = arith.constant dense<0xFF800000> : vector<8xf32>
    %156 = vector.multi_reduction <maximumf>, %155, %cst_70 [1] : vector<8x128xf32> to vector<8xf32>
    %157 = vector.shape_cast %156 : vector<8xf32> to vector<8x1xf32>
    %158 = vector.broadcast %157 : vector<8x1xf32> to vector<8x128xf32>
    %159 = arith.subf %155, %158 : vector<8x128xf32>
    %160 = math.exp %159 : vector<8x128xf32>
    %cst_71 = arith.constant dense<0.000000e+00> : vector<8xf32>
    %161 = vector.multi_reduction <add>, %160, %cst_71 [1] : vector<8x128xf32> to vector<8xf32>
    %162 = vector.shape_cast %161 : vector<8xf32> to vector<8x1xf32>
    %163 = math.log %162 : vector<8x1xf32>
    %164 = arith.addf %157, %163 : vector<8x1xf32>
    %165 = vector.broadcast %164 : vector<8x1xf32> to vector<8x128xf32>
    %166 = arith.subf %155, %165 : vector<8x128xf32>
    %167 = vector.shape_cast %166 : vector<8x128xf32> to vector<1x8x128xf32>
    %168 = arith.index_cast %c2_i32 : i32 to index
    %c0_72 = arith.constant 0 : index
    %c0_73 = arith.constant 0 : index
    %169 = vector.load %arg9[%168, %c0_72, %c0_73] : memref<8x8x128xf32, #tpu.memory_space<vmem>>, vector<1x8x128xf32>
    tpu.vector_store %arg9[%168, %c0_72, %c0_73], %167 {strides = array<i32>} : memref<8x8x128xf32, #tpu.memory_space<vmem>>, vector<1x8x128xf32>,
    %170 = vector.broadcast %157 : vector<8x1xf32> to vector<8x128xf32>
    %171 = arith.cmpf oge, %155, %170 : vector<8x128xf32>
    %c128_i32_74 = arith.constant 128 : i32
    %172 = vector.broadcast %c128_i32_74 : i32 to vector<8x128xi32>
    %173 = arith.select %171, %0, %172 : vector<8x128xi1>, vector<8x128xi32>
    %cst_75 = arith.constant dense<2147483647> : vector<8xi32>
    %174 = vector.multi_reduction <minsi>, %173, %cst_75 [1] : vector<8x128xi32> to vector<8xi32>
    %175 = vector.shape_cast %174 : vector<8xi32> to vector<8x1xi32>
    %176 = vector.broadcast %175 : vector<8x1xi32> to vector<8x128xi32>
    %177 = arith.cmpi eq, %0, %176 : vector<8x128xi32>
    %178 = arith.extui %177 : vector<8x128xi1> to vector<8x128xi32>
    %179 = arith.sitofp %178 : vector<8x128xi32> to vector<8x128xf32>
    %c3_i32 = arith.constant 3 : i32
    %c0_76 = arith.constant 0 : index
    %c0_77 = arith.constant 0 : index
    %c0_78 = arith.constant 0 : index
    %180 = vector.load %arg1[%c0_76, %c0_77, %c0_78] : memref<8x8x32xf32, #tpu.memory_space<vmem>>, vector<8x8x32xf32>
    %181 = vector.shape_cast %150 : vector<8x32xf32> to vector<8x1x32xf32>
    %182 = vector.broadcast %181 : vector<8x1x32xf32> to vector<8x8x32xf32>
    %183 = arith.mulf %180, %182 : vector<8x8x32xf32>
    %cst_79 = arith.constant dense<0.000000e+00> : vector<8x8xf32>
    %184 = vector.multi_reduction <add>, %183, %cst_79 [2] : vector<8x8x32xf32> to vector<8x8xf32>
    %c0_80 = arith.constant 0 : index
    %c0_81 = arith.constant 0 : index
    %185 = vector.load %arg2[%c0_80, %c0_81] : memref<8x8xf32, #tpu.memory_space<vmem>>, vector<8x8xf32>
    %186 = arith.addf %184, %185 : vector<8x8xf32>
    %cst_82 = arith.constant dense<0xFF800000> : vector<8xf32>
    %187 = vector.multi_reduction <maximumf>, %186, %cst_82 [1] : vector<8x8xf32> to vector<8xf32>
    %188 = vector.shape_cast %187 : vector<8xf32> to vector<8x1xf32>
    %189 = vector.broadcast %188 : vector<8x1xf32> to vector<8x8xf32>
    %190 = arith.subf %186, %189 : vector<8x8xf32>
    %191 = math.exp %190 : vector<8x8xf32>
    %cst_83 = arith.constant dense<0.000000e+00> : vector<8xf32>
    %192 = vector.multi_reduction <add>, %191, %cst_83 [1] : vector<8x8xf32> to vector<8xf32>
    %193 = vector.shape_cast %192 : vector<8xf32> to vector<8x1xf32>
    %194 = vector.broadcast %193 : vector<8x1xf32> to vector<8x8xf32>
    %195 = arith.divf %191, %194 : vector<8x8xf32>
    %196 = vector.shape_cast %195 : vector<8x8xf32> to vector<8x8x1xf32>
    %c0_84 = arith.constant 0 : index
    %c0_85 = arith.constant 0 : index
    %c0_86 = arith.constant 0 : index
    %197 = vector.load %arg0[%c0_84, %c0_85, %c0_86] : memref<8x8x32xf32, #tpu.memory_space<vmem>>, vector<8x8x32xf32>
    %198 = vector.broadcast %196 : vector<8x8x1xf32> to vector<8x8x32xf32>
    %199 = arith.mulf %198, %197 : vector<8x8x32xf32>
    %cst_87 = arith.constant dense<0.000000e+00> : vector<8x32xf32>
    %200 = vector.multi_reduction <add>, %199, %cst_87 [1] : vector<8x8x32xf32> to vector<8x32xf32>
    %c0_88 = arith.constant 0 : index
    %c0_89 = arith.constant 0 : index
    %201 = vector.load %arg3[%c0_88, %c0_89] : memref<32x96xf32, #tpu.memory_space<vmem>>, vector<32x96xf32>
    %cst_90 = arith.constant dense<0.000000e+00> : vector<8x96xf32>
    %202 = tpu.matmul %200, %201, %cst_90 {dimension_numbers = #tpu.dot_dimension_numbers<[1], [0], [0], [1], [0, 0, 1, 1], [], []>} : vector<8x32xf32>, vector<32x96xf32>, vector<8x96xf32> -> vector<8x96xf32>
    %c0_91 = arith.constant 0 : index
    %c0_92 = arith.constant 0 : index
    %203 = vector.load %arg4[%c0_91, %c0_92] : memref<128x96xf32, #tpu.memory_space<vmem>>, vector<128x96xf32>
    %cst_93 = arith.constant dense<0.000000e+00> : vector<8x96xf32>
    %204 = tpu.matmul %179, %203, %cst_93 {dimension_numbers = #tpu.dot_dimension_numbers<[1], [0], [0], [1], [0, 0, 1, 1], [], []>} : vector<8x128xf32>, vector<128x96xf32>, vector<8x96xf32> -> vector<8x96xf32>
    %205 = arith.addf %202, %204 : vector<8x96xf32>
    %c0_94 = arith.constant 0 : index
    %c0_95 = arith.constant 0 : index
    %206 = vector.load %arg5[%c0_94, %c0_95] : memref<32x96xf32, #tpu.memory_space<vmem>>, vector<32x96xf32>
    %cst_96 = arith.constant dense<0.000000e+00> : vector<8x96xf32>
    %207 = tpu.matmul %150, %206, %cst_96 {dimension_numbers = #tpu.dot_dimension_numbers<[1], [0], [0], [1], [0, 0, 1, 1], [], []>} : vector<8x32xf32>, vector<32x96xf32>, vector<8x96xf32> -> vector<8x96xf32>
    %c0_97 = arith.constant 0 : index
    %c0_98 = arith.constant 0 : index
    %208 = vector.load %arg6[%c0_97, %c0_98] : memref<1x96xf32, #tpu.memory_space<vmem>>, vector<1x96xf32>
    %209 = vector.broadcast %208 : vector<1x96xf32> to vector<8x96xf32>
    %210 = arith.addf %207, %209 : vector<8x96xf32>
    %211 = vector.extract_strided_slice %205 {offsets = [0, 0], sizes = [8, 32], strides = [1, 1]} : vector<8x96xf32> to vector<8x32xf32>
    %212 = vector.extract_strided_slice %210 {offsets = [0, 0], sizes = [8, 32], strides = [1, 1]} : vector<8x96xf32> to vector<8x32xf32>
    %213 = arith.addf %211, %212 : vector<8x32xf32>
    %214 = arith.negf %213 : vector<8x32xf32>
    %215 = math.exp %214 : vector<8x32xf32>
    %cst_99 = arith.constant 1.000000e+00 : f32
    %216 = vector.broadcast %cst_99 : f32 to vector<8x32xf32>
    %217 = arith.addf %216, %215 : vector<8x32xf32>
    %218 = arith.divf %216, %217 : vector<8x32xf32>
    %219 = vector.extract_strided_slice %205 {offsets = [0, 32], sizes = [8, 32], strides = [1, 1]} : vector<8x96xf32> to vector<8x32xf32>
    %220 = vector.extract_strided_slice %210 {offsets = [0, 32], sizes = [8, 32], strides = [1, 1]} : vector<8x96xf32> to vector<8x32xf32>
    %221 = arith.addf %219, %220 : vector<8x32xf32>
    %222 = arith.negf %221 : vector<8x32xf32>
    %223 = math.exp %222 : vector<8x32xf32>
    %cst_100 = arith.constant 1.000000e+00 : f32
    %224 = vector.broadcast %cst_100 : f32 to vector<8x32xf32>
    %225 = arith.addf %224, %223 : vector<8x32xf32>
    %226 = arith.divf %224, %225 : vector<8x32xf32>
    %227 = vector.extract_strided_slice %205 {offsets = [0, 64], sizes = [8, 32], strides = [1, 1]} : vector<8x96xf32> to vector<8x32xf32>
    %228 = vector.extract_strided_slice %210 {offsets = [0, 64], sizes = [8, 32], strides = [1, 1]} : vector<8x96xf32> to vector<8x32xf32>
    %229 = arith.mulf %218, %228 : vector<8x32xf32>
    %230 = arith.addf %227, %229 : vector<8x32xf32>
    %231 = math.tanh %230 : vector<8x32xf32>
    %cst_101 = arith.constant 1.000000e+00 : f32
    %232 = vector.broadcast %cst_101 : f32 to vector<8x32xf32>
    %233 = arith.subf %232, %226 : vector<8x32xf32>
    %234 = arith.mulf %233, %231 : vector<8x32xf32>
    %235 = arith.mulf %226, %150 : vector<8x32xf32>
    %236 = arith.addf %234, %235 : vector<8x32xf32>
    %c0_102 = arith.constant 0 : index
    %c0_103 = arith.constant 0 : index
    %237 = vector.load %arg7[%c0_102, %c0_103] : memref<32x128xf32, #tpu.memory_space<vmem>>, vector<32x128xf32>
    %cst_104 = arith.constant dense<0.000000e+00> : vector<8x128xf32>
    %238 = tpu.matmul %236, %237, %cst_104 {dimension_numbers = #tpu.dot_dimension_numbers<[1], [0], [0], [1], [0, 0, 1, 1], [], []>} : vector<8x32xf32>, vector<32x128xf32>, vector<8x128xf32> -> vector<8x128xf32>
    %c0_105 = arith.constant 0 : index
    %c0_106 = arith.constant 0 : index
    %239 = vector.load %arg8[%c0_105, %c0_106] : memref<1x128xf32, #tpu.memory_space<vmem>>, vector<1x128xf32>
    %240 = vector.broadcast %239 : vector<1x128xf32> to vector<8x128xf32>
    %241 = arith.addf %238, %240 : vector<8x128xf32>
    %cst_107 = arith.constant dense<0xFF800000> : vector<8xf32>
    %242 = vector.multi_reduction <maximumf>, %241, %cst_107 [1] : vector<8x128xf32> to vector<8xf32>
    %243 = vector.shape_cast %242 : vector<8xf32> to vector<8x1xf32>
    %244 = vector.broadcast %243 : vector<8x1xf32> to vector<8x128xf32>
    %245 = arith.subf %241, %244 : vector<8x128xf32>
    %246 = math.exp %245 : vector<8x128xf32>
    %cst_108 = arith.constant dense<0.000000e+00> : vector<8xf32>
    %247 = vector.multi_reduction <add>, %246, %cst_108 [1] : vector<8x128xf32> to vector<8xf32>
    %248 = vector.shape_cast %247 : vector<8xf32> to vector<8x1xf32>
    %249 = math.log %248 : vector<8x1xf32>
    %250 = arith.addf %243, %249 : vector<8x1xf32>
    %251 = vector.broadcast %250 : vector<8x1xf32> to vector<8x128xf32>
    %252 = arith.subf %241, %251 : vector<8x128xf32>
    %253 = vector.shape_cast %252 : vector<8x128xf32> to vector<1x8x128xf32>
    %254 = arith.index_cast %c3_i32 : i32 to index
    %c0_109 = arith.constant 0 : index
    %c0_110 = arith.constant 0 : index
    %255 = vector.load %arg9[%254, %c0_109, %c0_110] : memref<8x8x128xf32, #tpu.memory_space<vmem>>, vector<1x8x128xf32>
    tpu.vector_store %arg9[%254, %c0_109, %c0_110], %253 {strides = array<i32>} : memref<8x8x128xf32, #tpu.memory_space<vmem>>, vector<1x8x128xf32>,
    %256 = vector.broadcast %243 : vector<8x1xf32> to vector<8x128xf32>
    %257 = arith.cmpf oge, %241, %256 : vector<8x128xf32>
    %c128_i32_111 = arith.constant 128 : i32
    %258 = vector.broadcast %c128_i32_111 : i32 to vector<8x128xi32>
    %259 = arith.select %257, %0, %258 : vector<8x128xi1>, vector<8x128xi32>
    %cst_112 = arith.constant dense<2147483647> : vector<8xi32>
    %260 = vector.multi_reduction <minsi>, %259, %cst_112 [1] : vector<8x128xi32> to vector<8xi32>
    %261 = vector.shape_cast %260 : vector<8xi32> to vector<8x1xi32>
    %262 = vector.broadcast %261 : vector<8x1xi32> to vector<8x128xi32>
    %263 = arith.cmpi eq, %0, %262 : vector<8x128xi32>
    %264 = arith.extui %263 : vector<8x128xi1> to vector<8x128xi32>
    %265 = arith.sitofp %264 : vector<8x128xi32> to vector<8x128xf32>
    %c4_i32 = arith.constant 4 : i32
    %c0_113 = arith.constant 0 : index
    %c0_114 = arith.constant 0 : index
    %c0_115 = arith.constant 0 : index
    %266 = vector.load %arg1[%c0_113, %c0_114, %c0_115] : memref<8x8x32xf32, #tpu.memory_space<vmem>>, vector<8x8x32xf32>
    %267 = vector.shape_cast %236 : vector<8x32xf32> to vector<8x1x32xf32>
    %268 = vector.broadcast %267 : vector<8x1x32xf32> to vector<8x8x32xf32>
    %269 = arith.mulf %266, %268 : vector<8x8x32xf32>
    %cst_116 = arith.constant dense<0.000000e+00> : vector<8x8xf32>
    %270 = vector.multi_reduction <add>, %269, %cst_116 [2] : vector<8x8x32xf32> to vector<8x8xf32>
    %c0_117 = arith.constant 0 : index
    %c0_118 = arith.constant 0 : index
    %271 = vector.load %arg2[%c0_117, %c0_118] : memref<8x8xf32, #tpu.memory_space<vmem>>, vector<8x8xf32>
    %272 = arith.addf %270, %271 : vector<8x8xf32>
    %cst_119 = arith.constant dense<0xFF800000> : vector<8xf32>
    %273 = vector.multi_reduction <maximumf>, %272, %cst_119 [1] : vector<8x8xf32> to vector<8xf32>
    %274 = vector.shape_cast %273 : vector<8xf32> to vector<8x1xf32>
    %275 = vector.broadcast %274 : vector<8x1xf32> to vector<8x8xf32>
    %276 = arith.subf %272, %275 : vector<8x8xf32>
    %277 = math.exp %276 : vector<8x8xf32>
    %cst_120 = arith.constant dense<0.000000e+00> : vector<8xf32>
    %278 = vector.multi_reduction <add>, %277, %cst_120 [1] : vector<8x8xf32> to vector<8xf32>
    %279 = vector.shape_cast %278 : vector<8xf32> to vector<8x1xf32>
    %280 = vector.broadcast %279 : vector<8x1xf32> to vector<8x8xf32>
    %281 = arith.divf %277, %280 : vector<8x8xf32>
    %282 = vector.shape_cast %281 : vector<8x8xf32> to vector<8x8x1xf32>
    %c0_121 = arith.constant 0 : index
    %c0_122 = arith.constant 0 : index
    %c0_123 = arith.constant 0 : index
    %283 = vector.load %arg0[%c0_121, %c0_122, %c0_123] : memref<8x8x32xf32, #tpu.memory_space<vmem>>, vector<8x8x32xf32>
    %284 = vector.broadcast %282 : vector<8x8x1xf32> to vector<8x8x32xf32>
    %285 = arith.mulf %284, %283 : vector<8x8x32xf32>
    %cst_124 = arith.constant dense<0.000000e+00> : vector<8x32xf32>
    %286 = vector.multi_reduction <add>, %285, %cst_124 [1] : vector<8x8x32xf32> to vector<8x32xf32>
    %c0_125 = arith.constant 0 : index
    %c0_126 = arith.constant 0 : index
    %287 = vector.load %arg3[%c0_125, %c0_126] : memref<32x96xf32, #tpu.memory_space<vmem>>, vector<32x96xf32>
    %cst_127 = arith.constant dense<0.000000e+00> : vector<8x96xf32>
    %288 = tpu.matmul %286, %287, %cst_127 {dimension_numbers = #tpu.dot_dimension_numbers<[1], [0], [0], [1], [0, 0, 1, 1], [], []>} : vector<8x32xf32>, vector<32x96xf32>, vector<8x96xf32> -> vector<8x96xf32>
    %c0_128 = arith.constant 0 : index
    %c0_129 = arith.constant 0 : index
    %289 = vector.load %arg4[%c0_128, %c0_129] : memref<128x96xf32, #tpu.memory_space<vmem>>, vector<128x96xf32>
    %cst_130 = arith.constant dense<0.000000e+00> : vector<8x96xf32>
    %290 = tpu.matmul %265, %289, %cst_130 {dimension_numbers = #tpu.dot_dimension_numbers<[1], [0], [0], [1], [0, 0, 1, 1], [], []>} : vector<8x128xf32>, vector<128x96xf32>, vector<8x96xf32> -> vector<8x96xf32>
    %291 = arith.addf %288, %290 : vector<8x96xf32>
    %c0_131 = arith.constant 0 : index
    %c0_132 = arith.constant 0 : index
    %292 = vector.load %arg5[%c0_131, %c0_132] : memref<32x96xf32, #tpu.memory_space<vmem>>, vector<32x96xf32>
    %cst_133 = arith.constant dense<0.000000e+00> : vector<8x96xf32>
    %293 = tpu.matmul %236, %292, %cst_133 {dimension_numbers = #tpu.dot_dimension_numbers<[1], [0], [0], [1], [0, 0, 1, 1], [], []>} : vector<8x32xf32>, vector<32x96xf32>, vector<8x96xf32> -> vector<8x96xf32>
    %c0_134 = arith.constant 0 : index
    %c0_135 = arith.constant 0 : index
    %294 = vector.load %arg6[%c0_134, %c0_135] : memref<1x96xf32, #tpu.memory_space<vmem>>, vector<1x96xf32>
    %295 = vector.broadcast %294 : vector<1x96xf32> to vector<8x96xf32>
    %296 = arith.addf %293, %295 : vector<8x96xf32>
    %297 = vector.extract_strided_slice %291 {offsets = [0, 0], sizes = [8, 32], strides = [1, 1]} : vector<8x96xf32> to vector<8x32xf32>
    %298 = vector.extract_strided_slice %296 {offsets = [0, 0], sizes = [8, 32], strides = [1, 1]} : vector<8x96xf32> to vector<8x32xf32>
    %299 = arith.addf %297, %298 : vector<8x32xf32>
    %300 = arith.negf %299 : vector<8x32xf32>
    %301 = math.exp %300 : vector<8x32xf32>
    %cst_136 = arith.constant 1.000000e+00 : f32
    %302 = vector.broadcast %cst_136 : f32 to vector<8x32xf32>
    %303 = arith.addf %302, %301 : vector<8x32xf32>
    %304 = arith.divf %302, %303 : vector<8x32xf32>
    %305 = vector.extract_strided_slice %291 {offsets = [0, 32], sizes = [8, 32], strides = [1, 1]} : vector<8x96xf32> to vector<8x32xf32>
    %306 = vector.extract_strided_slice %296 {offsets = [0, 32], sizes = [8, 32], strides = [1, 1]} : vector<8x96xf32> to vector<8x32xf32>
    %307 = arith.addf %305, %306 : vector<8x32xf32>
    %308 = arith.negf %307 : vector<8x32xf32>
    %309 = math.exp %308 : vector<8x32xf32>
    %cst_137 = arith.constant 1.000000e+00 : f32
    %310 = vector.broadcast %cst_137 : f32 to vector<8x32xf32>
    %311 = arith.addf %310, %309 : vector<8x32xf32>
    %312 = arith.divf %310, %311 : vector<8x32xf32>
    %313 = vector.extract_strided_slice %291 {offsets = [0, 64], sizes = [8, 32], strides = [1, 1]} : vector<8x96xf32> to vector<8x32xf32>
    %314 = vector.extract_strided_slice %296 {offsets = [0, 64], sizes = [8, 32], strides = [1, 1]} : vector<8x96xf32> to vector<8x32xf32>
    %315 = arith.mulf %304, %314 : vector<8x32xf32>
    %316 = arith.addf %313, %315 : vector<8x32xf32>
    %317 = math.tanh %316 : vector<8x32xf32>
    %cst_138 = arith.constant 1.000000e+00 : f32
    %318 = vector.broadcast %cst_138 : f32 to vector<8x32xf32>
    %319 = arith.subf %318, %312 : vector<8x32xf32>
    %320 = arith.mulf %319, %317 : vector<8x32xf32>
    %321 = arith.mulf %312, %236 : vector<8x32xf32>
    %322 = arith.addf %320, %321 : vector<8x32xf32>
    %c0_139 = arith.constant 0 : index
    %c0_140 = arith.constant 0 : index
    %323 = vector.load %arg7[%c0_139, %c0_140] : memref<32x128xf32, #tpu.memory_space<vmem>>, vector<32x128xf32>
    %cst_141 = arith.constant dense<0.000000e+00> : vector<8x128xf32>
    %324 = tpu.matmul %322, %323, %cst_141 {dimension_numbers = #tpu.dot_dimension_numbers<[1], [0], [0], [1], [0, 0, 1, 1], [], []>} : vector<8x32xf32>, vector<32x128xf32>, vector<8x128xf32> -> vector<8x128xf32>
    %c0_142 = arith.constant 0 : index
    %c0_143 = arith.constant 0 : index
    %325 = vector.load %arg8[%c0_142, %c0_143] : memref<1x128xf32, #tpu.memory_space<vmem>>, vector<1x128xf32>
    %326 = vector.broadcast %325 : vector<1x128xf32> to vector<8x128xf32>
    %327 = arith.addf %324, %326 : vector<8x128xf32>
    %cst_144 = arith.constant dense<0xFF800000> : vector<8xf32>
    %328 = vector.multi_reduction <maximumf>, %327, %cst_144 [1] : vector<8x128xf32> to vector<8xf32>
    %329 = vector.shape_cast %328 : vector<8xf32> to vector<8x1xf32>
    %330 = vector.broadcast %329 : vector<8x1xf32> to vector<8x128xf32>
    %331 = arith.subf %327, %330 : vector<8x128xf32>
    %332 = math.exp %331 : vector<8x128xf32>
    %cst_145 = arith.constant dense<0.000000e+00> : vector<8xf32>
    %333 = vector.multi_reduction <add>, %332, %cst_145 [1] : vector<8x128xf32> to vector<8xf32>
    %334 = vector.shape_cast %333 : vector<8xf32> to vector<8x1xf32>
    %335 = math.log %334 : vector<8x1xf32>
    %336 = arith.addf %329, %335 : vector<8x1xf32>
    %337 = vector.broadcast %336 : vector<8x1xf32> to vector<8x128xf32>
    %338 = arith.subf %327, %337 : vector<8x128xf32>
    %339 = vector.shape_cast %338 : vector<8x128xf32> to vector<1x8x128xf32>
    %340 = arith.index_cast %c4_i32 : i32 to index
    %c0_146 = arith.constant 0 : index
    %c0_147 = arith.constant 0 : index
    %341 = vector.load %arg9[%340, %c0_146, %c0_147] : memref<8x8x128xf32, #tpu.memory_space<vmem>>, vector<1x8x128xf32>
    tpu.vector_store %arg9[%340, %c0_146, %c0_147], %339 {strides = array<i32>} : memref<8x8x128xf32, #tpu.memory_space<vmem>>, vector<1x8x128xf32>,
    %342 = vector.broadcast %329 : vector<8x1xf32> to vector<8x128xf32>
    %343 = arith.cmpf oge, %327, %342 : vector<8x128xf32>
    %c128_i32_148 = arith.constant 128 : i32
    %344 = vector.broadcast %c128_i32_148 : i32 to vector<8x128xi32>
    %345 = arith.select %343, %0, %344 : vector<8x128xi1>, vector<8x128xi32>
    %cst_149 = arith.constant dense<2147483647> : vector<8xi32>
    %346 = vector.multi_reduction <minsi>, %345, %cst_149 [1] : vector<8x128xi32> to vector<8xi32>
    %347 = vector.shape_cast %346 : vector<8xi32> to vector<8x1xi32>
    %348 = vector.broadcast %347 : vector<8x1xi32> to vector<8x128xi32>
    %349 = arith.cmpi eq, %0, %348 : vector<8x128xi32>
    %350 = arith.extui %349 : vector<8x128xi1> to vector<8x128xi32>
    %351 = arith.sitofp %350 : vector<8x128xi32> to vector<8x128xf32>
    %c5_i32 = arith.constant 5 : i32
    %c0_150 = arith.constant 0 : index
    %c0_151 = arith.constant 0 : index
    %c0_152 = arith.constant 0 : index
    %352 = vector.load %arg1[%c0_150, %c0_151, %c0_152] : memref<8x8x32xf32, #tpu.memory_space<vmem>>, vector<8x8x32xf32>
    %353 = vector.shape_cast %322 : vector<8x32xf32> to vector<8x1x32xf32>
    %354 = vector.broadcast %353 : vector<8x1x32xf32> to vector<8x8x32xf32>
    %355 = arith.mulf %352, %354 : vector<8x8x32xf32>
    %cst_153 = arith.constant dense<0.000000e+00> : vector<8x8xf32>
    %356 = vector.multi_reduction <add>, %355, %cst_153 [2] : vector<8x8x32xf32> to vector<8x8xf32>
    %c0_154 = arith.constant 0 : index
    %c0_155 = arith.constant 0 : index
    %357 = vector.load %arg2[%c0_154, %c0_155] : memref<8x8xf32, #tpu.memory_space<vmem>>, vector<8x8xf32>
    %358 = arith.addf %356, %357 : vector<8x8xf32>
    %cst_156 = arith.constant dense<0xFF800000> : vector<8xf32>
    %359 = vector.multi_reduction <maximumf>, %358, %cst_156 [1] : vector<8x8xf32> to vector<8xf32>
    %360 = vector.shape_cast %359 : vector<8xf32> to vector<8x1xf32>
    %361 = vector.broadcast %360 : vector<8x1xf32> to vector<8x8xf32>
    %362 = arith.subf %358, %361 : vector<8x8xf32>
    %363 = math.exp %362 : vector<8x8xf32>
    %cst_157 = arith.constant dense<0.000000e+00> : vector<8xf32>
    %364 = vector.multi_reduction <add>, %363, %cst_157 [1] : vector<8x8xf32> to vector<8xf32>
    %365 = vector.shape_cast %364 : vector<8xf32> to vector<8x1xf32>
    %366 = vector.broadcast %365 : vector<8x1xf32> to vector<8x8xf32>
    %367 = arith.divf %363, %366 : vector<8x8xf32>
    %368 = vector.shape_cast %367 : vector<8x8xf32> to vector<8x8x1xf32>
    %c0_158 = arith.constant 0 : index
    %c0_159 = arith.constant 0 : index
    %c0_160 = arith.constant 0 : index
    %369 = vector.load %arg0[%c0_158, %c0_159, %c0_160] : memref<8x8x32xf32, #tpu.memory_space<vmem>>, vector<8x8x32xf32>
    %370 = vector.broadcast %368 : vector<8x8x1xf32> to vector<8x8x32xf32>
    %371 = arith.mulf %370, %369 : vector<8x8x32xf32>
    %cst_161 = arith.constant dense<0.000000e+00> : vector<8x32xf32>
    %372 = vector.multi_reduction <add>, %371, %cst_161 [1] : vector<8x8x32xf32> to vector<8x32xf32>
    %c0_162 = arith.constant 0 : index
    %c0_163 = arith.constant 0 : index
    %373 = vector.load %arg3[%c0_162, %c0_163] : memref<32x96xf32, #tpu.memory_space<vmem>>, vector<32x96xf32>
    %cst_164 = arith.constant dense<0.000000e+00> : vector<8x96xf32>
    %374 = tpu.matmul %372, %373, %cst_164 {dimension_numbers = #tpu.dot_dimension_numbers<[1], [0], [0], [1], [0, 0, 1, 1], [], []>} : vector<8x32xf32>, vector<32x96xf32>, vector<8x96xf32> -> vector<8x96xf32>
    %c0_165 = arith.constant 0 : index
    %c0_166 = arith.constant 0 : index
    %375 = vector.load %arg4[%c0_165, %c0_166] : memref<128x96xf32, #tpu.memory_space<vmem>>, vector<128x96xf32>
    %cst_167 = arith.constant dense<0.000000e+00> : vector<8x96xf32>
    %376 = tpu.matmul %351, %375, %cst_167 {dimension_numbers = #tpu.dot_dimension_numbers<[1], [0], [0], [1], [0, 0, 1, 1], [], []>} : vector<8x128xf32>, vector<128x96xf32>, vector<8x96xf32> -> vector<8x96xf32>
    %377 = arith.addf %374, %376 : vector<8x96xf32>
    %c0_168 = arith.constant 0 : index
    %c0_169 = arith.constant 0 : index
    %378 = vector.load %arg5[%c0_168, %c0_169] : memref<32x96xf32, #tpu.memory_space<vmem>>, vector<32x96xf32>
    %cst_170 = arith.constant dense<0.000000e+00> : vector<8x96xf32>
    %379 = tpu.matmul %322, %378, %cst_170 {dimension_numbers = #tpu.dot_dimension_numbers<[1], [0], [0], [1], [0, 0, 1, 1], [], []>} : vector<8x32xf32>, vector<32x96xf32>, vector<8x96xf32> -> vector<8x96xf32>
    %c0_171 = arith.constant 0 : index
    %c0_172 = arith.constant 0 : index
    %380 = vector.load %arg6[%c0_171, %c0_172] : memref<1x96xf32, #tpu.memory_space<vmem>>, vector<1x96xf32>
    %381 = vector.broadcast %380 : vector<1x96xf32> to vector<8x96xf32>
    %382 = arith.addf %379, %381 : vector<8x96xf32>
    %383 = vector.extract_strided_slice %377 {offsets = [0, 0], sizes = [8, 32], strides = [1, 1]} : vector<8x96xf32> to vector<8x32xf32>
    %384 = vector.extract_strided_slice %382 {offsets = [0, 0], sizes = [8, 32], strides = [1, 1]} : vector<8x96xf32> to vector<8x32xf32>
    %385 = arith.addf %383, %384 : vector<8x32xf32>
    %386 = arith.negf %385 : vector<8x32xf32>
    %387 = math.exp %386 : vector<8x32xf32>
    %cst_173 = arith.constant 1.000000e+00 : f32
    %388 = vector.broadcast %cst_173 : f32 to vector<8x32xf32>
    %389 = arith.addf %388, %387 : vector<8x32xf32>
    %390 = arith.divf %388, %389 : vector<8x32xf32>
    %391 = vector.extract_strided_slice %377 {offsets = [0, 32], sizes = [8, 32], strides = [1, 1]} : vector<8x96xf32> to vector<8x32xf32>
    %392 = vector.extract_strided_slice %382 {offsets = [0, 32], sizes = [8, 32], strides = [1, 1]} : vector<8x96xf32> to vector<8x32xf32>
    %393 = arith.addf %391, %392 : vector<8x32xf32>
    %394 = arith.negf %393 : vector<8x32xf32>
    %395 = math.exp %394 : vector<8x32xf32>
    %cst_174 = arith.constant 1.000000e+00 : f32
    %396 = vector.broadcast %cst_174 : f32 to vector<8x32xf32>
    %397 = arith.addf %396, %395 : vector<8x32xf32>
    %398 = arith.divf %396, %397 : vector<8x32xf32>
    %399 = vector.extract_strided_slice %377 {offsets = [0, 64], sizes = [8, 32], strides = [1, 1]} : vector<8x96xf32> to vector<8x32xf32>
    %400 = vector.extract_strided_slice %382 {offsets = [0, 64], sizes = [8, 32], strides = [1, 1]} : vector<8x96xf32> to vector<8x32xf32>
    %401 = arith.mulf %390, %400 : vector<8x32xf32>
    %402 = arith.addf %399, %401 : vector<8x32xf32>
    %403 = math.tanh %402 : vector<8x32xf32>
    %cst_175 = arith.constant 1.000000e+00 : f32
    %404 = vector.broadcast %cst_175 : f32 to vector<8x32xf32>
    %405 = arith.subf %404, %398 : vector<8x32xf32>
    %406 = arith.mulf %405, %403 : vector<8x32xf32>
    %407 = arith.mulf %398, %322 : vector<8x32xf32>
    %408 = arith.addf %406, %407 : vector<8x32xf32>
    %c0_176 = arith.constant 0 : index
    %c0_177 = arith.constant 0 : index
    %409 = vector.load %arg7[%c0_176, %c0_177] : memref<32x128xf32, #tpu.memory_space<vmem>>, vector<32x128xf32>
    %cst_178 = arith.constant dense<0.000000e+00> : vector<8x128xf32>
    %410 = tpu.matmul %408, %409, %cst_178 {dimension_numbers = #tpu.dot_dimension_numbers<[1], [0], [0], [1], [0, 0, 1, 1], [], []>} : vector<8x32xf32>, vector<32x128xf32>, vector<8x128xf32> -> vector<8x128xf32>
    %c0_179 = arith.constant 0 : index
    %c0_180 = arith.constant 0 : index
    %411 = vector.load %arg8[%c0_179, %c0_180] : memref<1x128xf32, #tpu.memory_space<vmem>>, vector<1x128xf32>
    %412 = vector.broadcast %411 : vector<1x128xf32> to vector<8x128xf32>
    %413 = arith.addf %410, %412 : vector<8x128xf32>
    %cst_181 = arith.constant dense<0xFF800000> : vector<8xf32>
    %414 = vector.multi_reduction <maximumf>, %413, %cst_181 [1] : vector<8x128xf32> to vector<8xf32>
    %415 = vector.shape_cast %414 : vector<8xf32> to vector<8x1xf32>
    %416 = vector.broadcast %415 : vector<8x1xf32> to vector<8x128xf32>
    %417 = arith.subf %413, %416 : vector<8x128xf32>
    %418 = math.exp %417 : vector<8x128xf32>
    %cst_182 = arith.constant dense<0.000000e+00> : vector<8xf32>
    %419 = vector.multi_reduction <add>, %418, %cst_182 [1] : vector<8x128xf32> to vector<8xf32>
    %420 = vector.shape_cast %419 : vector<8xf32> to vector<8x1xf32>
    %421 = math.log %420 : vector<8x1xf32>
    %422 = arith.addf %415, %421 : vector<8x1xf32>
    %423 = vector.broadcast %422 : vector<8x1xf32> to vector<8x128xf32>
    %424 = arith.subf %413, %423 : vector<8x128xf32>
    %425 = vector.shape_cast %424 : vector<8x128xf32> to vector<1x8x128xf32>
    %426 = arith.index_cast %c5_i32 : i32 to index
    %c0_183 = arith.constant 0 : index
    %c0_184 = arith.constant 0 : index
    %427 = vector.load %arg9[%426, %c0_183, %c0_184] : memref<8x8x128xf32, #tpu.memory_space<vmem>>, vector<1x8x128xf32>
    tpu.vector_store %arg9[%426, %c0_183, %c0_184], %425 {strides = array<i32>} : memref<8x8x128xf32, #tpu.memory_space<vmem>>, vector<1x8x128xf32>,
    %428 = vector.broadcast %415 : vector<8x1xf32> to vector<8x128xf32>
    %429 = arith.cmpf oge, %413, %428 : vector<8x128xf32>
    %c128_i32_185 = arith.constant 128 : i32
    %430 = vector.broadcast %c128_i32_185 : i32 to vector<8x128xi32>
    %431 = arith.select %429, %0, %430 : vector<8x128xi1>, vector<8x128xi32>
    %cst_186 = arith.constant dense<2147483647> : vector<8xi32>
    %432 = vector.multi_reduction <minsi>, %431, %cst_186 [1] : vector<8x128xi32> to vector<8xi32>
    %433 = vector.shape_cast %432 : vector<8xi32> to vector<8x1xi32>
    %434 = vector.broadcast %433 : vector<8x1xi32> to vector<8x128xi32>
    %435 = arith.cmpi eq, %0, %434 : vector<8x128xi32>
    %436 = arith.extui %435 : vector<8x128xi1> to vector<8x128xi32>
    %437 = arith.sitofp %436 : vector<8x128xi32> to vector<8x128xf32>
    %c6_i32 = arith.constant 6 : i32
    %c0_187 = arith.constant 0 : index
    %c0_188 = arith.constant 0 : index
    %c0_189 = arith.constant 0 : index
    %438 = vector.load %arg1[%c0_187, %c0_188, %c0_189] : memref<8x8x32xf32, #tpu.memory_space<vmem>>, vector<8x8x32xf32>
    %439 = vector.shape_cast %408 : vector<8x32xf32> to vector<8x1x32xf32>
    %440 = vector.broadcast %439 : vector<8x1x32xf32> to vector<8x8x32xf32>
    %441 = arith.mulf %438, %440 : vector<8x8x32xf32>
    %cst_190 = arith.constant dense<0.000000e+00> : vector<8x8xf32>
    %442 = vector.multi_reduction <add>, %441, %cst_190 [2] : vector<8x8x32xf32> to vector<8x8xf32>
    %c0_191 = arith.constant 0 : index
    %c0_192 = arith.constant 0 : index
    %443 = vector.load %arg2[%c0_191, %c0_192] : memref<8x8xf32, #tpu.memory_space<vmem>>, vector<8x8xf32>
    %444 = arith.addf %442, %443 : vector<8x8xf32>
    %cst_193 = arith.constant dense<0xFF800000> : vector<8xf32>
    %445 = vector.multi_reduction <maximumf>, %444, %cst_193 [1] : vector<8x8xf32> to vector<8xf32>
    %446 = vector.shape_cast %445 : vector<8xf32> to vector<8x1xf32>
    %447 = vector.broadcast %446 : vector<8x1xf32> to vector<8x8xf32>
    %448 = arith.subf %444, %447 : vector<8x8xf32>
    %449 = math.exp %448 : vector<8x8xf32>
    %cst_194 = arith.constant dense<0.000000e+00> : vector<8xf32>
    %450 = vector.multi_reduction <add>, %449, %cst_194 [1] : vector<8x8xf32> to vector<8xf32>
    %451 = vector.shape_cast %450 : vector<8xf32> to vector<8x1xf32>
    %452 = vector.broadcast %451 : vector<8x1xf32> to vector<8x8xf32>
    %453 = arith.divf %449, %452 : vector<8x8xf32>
    %454 = vector.shape_cast %453 : vector<8x8xf32> to vector<8x8x1xf32>
    %c0_195 = arith.constant 0 : index
    %c0_196 = arith.constant 0 : index
    %c0_197 = arith.constant 0 : index
    %455 = vector.load %arg0[%c0_195, %c0_196, %c0_197] : memref<8x8x32xf32, #tpu.memory_space<vmem>>, vector<8x8x32xf32>
    %456 = vector.broadcast %454 : vector<8x8x1xf32> to vector<8x8x32xf32>
    %457 = arith.mulf %456, %455 : vector<8x8x32xf32>
    %cst_198 = arith.constant dense<0.000000e+00> : vector<8x32xf32>
    %458 = vector.multi_reduction <add>, %457, %cst_198 [1] : vector<8x8x32xf32> to vector<8x32xf32>
    %c0_199 = arith.constant 0 : index
    %c0_200 = arith.constant 0 : index
    %459 = vector.load %arg3[%c0_199, %c0_200] : memref<32x96xf32, #tpu.memory_space<vmem>>, vector<32x96xf32>
    %cst_201 = arith.constant dense<0.000000e+00> : vector<8x96xf32>
    %460 = tpu.matmul %458, %459, %cst_201 {dimension_numbers = #tpu.dot_dimension_numbers<[1], [0], [0], [1], [0, 0, 1, 1], [], []>} : vector<8x32xf32>, vector<32x96xf32>, vector<8x96xf32> -> vector<8x96xf32>
    %c0_202 = arith.constant 0 : index
    %c0_203 = arith.constant 0 : index
    %461 = vector.load %arg4[%c0_202, %c0_203] : memref<128x96xf32, #tpu.memory_space<vmem>>, vector<128x96xf32>
    %cst_204 = arith.constant dense<0.000000e+00> : vector<8x96xf32>
    %462 = tpu.matmul %437, %461, %cst_204 {dimension_numbers = #tpu.dot_dimension_numbers<[1], [0], [0], [1], [0, 0, 1, 1], [], []>} : vector<8x128xf32>, vector<128x96xf32>, vector<8x96xf32> -> vector<8x96xf32>
    %463 = arith.addf %460, %462 : vector<8x96xf32>
    %c0_205 = arith.constant 0 : index
    %c0_206 = arith.constant 0 : index
    %464 = vector.load %arg5[%c0_205, %c0_206] : memref<32x96xf32, #tpu.memory_space<vmem>>, vector<32x96xf32>
    %cst_207 = arith.constant dense<0.000000e+00> : vector<8x96xf32>
    %465 = tpu.matmul %408, %464, %cst_207 {dimension_numbers = #tpu.dot_dimension_numbers<[1], [0], [0], [1], [0, 0, 1, 1], [], []>} : vector<8x32xf32>, vector<32x96xf32>, vector<8x96xf32> -> vector<8x96xf32>
    %c0_208 = arith.constant 0 : index
    %c0_209 = arith.constant 0 : index
    %466 = vector.load %arg6[%c0_208, %c0_209] : memref<1x96xf32, #tpu.memory_space<vmem>>, vector<1x96xf32>
    %467 = vector.broadcast %466 : vector<1x96xf32> to vector<8x96xf32>
    %468 = arith.addf %465, %467 : vector<8x96xf32>
    %469 = vector.extract_strided_slice %463 {offsets = [0, 0], sizes = [8, 32], strides = [1, 1]} : vector<8x96xf32> to vector<8x32xf32>
    %470 = vector.extract_strided_slice %468 {offsets = [0, 0], sizes = [8, 32], strides = [1, 1]} : vector<8x96xf32> to vector<8x32xf32>
    %471 = arith.addf %469, %470 : vector<8x32xf32>
    %472 = arith.negf %471 : vector<8x32xf32>
    %473 = math.exp %472 : vector<8x32xf32>
    %cst_210 = arith.constant 1.000000e+00 : f32
    %474 = vector.broadcast %cst_210 : f32 to vector<8x32xf32>
    %475 = arith.addf %474, %473 : vector<8x32xf32>
    %476 = arith.divf %474, %475 : vector<8x32xf32>
    %477 = vector.extract_strided_slice %463 {offsets = [0, 32], sizes = [8, 32], strides = [1, 1]} : vector<8x96xf32> to vector<8x32xf32>
    %478 = vector.extract_strided_slice %468 {offsets = [0, 32], sizes = [8, 32], strides = [1, 1]} : vector<8x96xf32> to vector<8x32xf32>
    %479 = arith.addf %477, %478 : vector<8x32xf32>
    %480 = arith.negf %479 : vector<8x32xf32>
    %481 = math.exp %480 : vector<8x32xf32>
    %cst_211 = arith.constant 1.000000e+00 : f32
    %482 = vector.broadcast %cst_211 : f32 to vector<8x32xf32>
    %483 = arith.addf %482, %481 : vector<8x32xf32>
    %484 = arith.divf %482, %483 : vector<8x32xf32>
    %485 = vector.extract_strided_slice %463 {offsets = [0, 64], sizes = [8, 32], strides = [1, 1]} : vector<8x96xf32> to vector<8x32xf32>
    %486 = vector.extract_strided_slice %468 {offsets = [0, 64], sizes = [8, 32], strides = [1, 1]} : vector<8x96xf32> to vector<8x32xf32>
    %487 = arith.mulf %476, %486 : vector<8x32xf32>
    %488 = arith.addf %485, %487 : vector<8x32xf32>
    %489 = math.tanh %488 : vector<8x32xf32>
    %cst_212 = arith.constant 1.000000e+00 : f32
    %490 = vector.broadcast %cst_212 : f32 to vector<8x32xf32>
    %491 = arith.subf %490, %484 : vector<8x32xf32>
    %492 = arith.mulf %491, %489 : vector<8x32xf32>
    %493 = arith.mulf %484, %408 : vector<8x32xf32>
    %494 = arith.addf %492, %493 : vector<8x32xf32>
    %c0_213 = arith.constant 0 : index
    %c0_214 = arith.constant 0 : index
    %495 = vector.load %arg7[%c0_213, %c0_214] : memref<32x128xf32, #tpu.memory_space<vmem>>, vector<32x128xf32>
    %cst_215 = arith.constant dense<0.000000e+00> : vector<8x128xf32>
    %496 = tpu.matmul %494, %495, %cst_215 {dimension_numbers = #tpu.dot_dimension_numbers<[1], [0], [0], [1], [0, 0, 1, 1], [], []>} : vector<8x32xf32>, vector<32x128xf32>, vector<8x128xf32> -> vector<8x128xf32>
    %c0_216 = arith.constant 0 : index
    %c0_217 = arith.constant 0 : index
    %497 = vector.load %arg8[%c0_216, %c0_217] : memref<1x128xf32, #tpu.memory_space<vmem>>, vector<1x128xf32>
    %498 = vector.broadcast %497 : vector<1x128xf32> to vector<8x128xf32>
    %499 = arith.addf %496, %498 : vector<8x128xf32>
    %cst_218 = arith.constant dense<0xFF800000> : vector<8xf32>
    %500 = vector.multi_reduction <maximumf>, %499, %cst_218 [1] : vector<8x128xf32> to vector<8xf32>
    %501 = vector.shape_cast %500 : vector<8xf32> to vector<8x1xf32>
    %502 = vector.broadcast %501 : vector<8x1xf32> to vector<8x128xf32>
    %503 = arith.subf %499, %502 : vector<8x128xf32>
    %504 = math.exp %503 : vector<8x128xf32>
    %cst_219 = arith.constant dense<0.000000e+00> : vector<8xf32>
    %505 = vector.multi_reduction <add>, %504, %cst_219 [1] : vector<8x128xf32> to vector<8xf32>
    %506 = vector.shape_cast %505 : vector<8xf32> to vector<8x1xf32>
    %507 = math.log %506 : vector<8x1xf32>
    %508 = arith.addf %501, %507 : vector<8x1xf32>
    %509 = vector.broadcast %508 : vector<8x1xf32> to vector<8x128xf32>
    %510 = arith.subf %499, %509 : vector<8x128xf32>
    %511 = vector.shape_cast %510 : vector<8x128xf32> to vector<1x8x128xf32>
    %512 = arith.index_cast %c6_i32 : i32 to index
    %c0_220 = arith.constant 0 : index
    %c0_221 = arith.constant 0 : index
    %513 = vector.load %arg9[%512, %c0_220, %c0_221] : memref<8x8x128xf32, #tpu.memory_space<vmem>>, vector<1x8x128xf32>
    tpu.vector_store %arg9[%512, %c0_220, %c0_221], %511 {strides = array<i32>} : memref<8x8x128xf32, #tpu.memory_space<vmem>>, vector<1x8x128xf32>,
    %514 = vector.broadcast %501 : vector<8x1xf32> to vector<8x128xf32>
    %515 = arith.cmpf oge, %499, %514 : vector<8x128xf32>
    %c128_i32_222 = arith.constant 128 : i32
    %516 = vector.broadcast %c128_i32_222 : i32 to vector<8x128xi32>
    %517 = arith.select %515, %0, %516 : vector<8x128xi1>, vector<8x128xi32>
    %cst_223 = arith.constant dense<2147483647> : vector<8xi32>
    %518 = vector.multi_reduction <minsi>, %517, %cst_223 [1] : vector<8x128xi32> to vector<8xi32>
    %519 = vector.shape_cast %518 : vector<8xi32> to vector<8x1xi32>
    %520 = vector.broadcast %519 : vector<8x1xi32> to vector<8x128xi32>
    %521 = arith.cmpi eq, %0, %520 : vector<8x128xi32>
    %522 = arith.extui %521 : vector<8x128xi1> to vector<8x128xi32>
    %523 = arith.sitofp %522 : vector<8x128xi32> to vector<8x128xf32>
    %c7_i32 = arith.constant 7 : i32
    %c0_224 = arith.constant 0 : index
    %c0_225 = arith.constant 0 : index
    %c0_226 = arith.constant 0 : index
    %524 = vector.load %arg1[%c0_224, %c0_225, %c0_226] : memref<8x8x32xf32, #tpu.memory_space<vmem>>, vector<8x8x32xf32>
    %525 = vector.shape_cast %494 : vector<8x32xf32> to vector<8x1x32xf32>
    %526 = vector.broadcast %525 : vector<8x1x32xf32> to vector<8x8x32xf32>
    %527 = arith.mulf %524, %526 : vector<8x8x32xf32>
    %cst_227 = arith.constant dense<0.000000e+00> : vector<8x8xf32>
    %528 = vector.multi_reduction <add>, %527, %cst_227 [2] : vector<8x8x32xf32> to vector<8x8xf32>
    %c0_228 = arith.constant 0 : index
    %c0_229 = arith.constant 0 : index
    %529 = vector.load %arg2[%c0_228, %c0_229] : memref<8x8xf32, #tpu.memory_space<vmem>>, vector<8x8xf32>
    %530 = arith.addf %528, %529 : vector<8x8xf32>
    %cst_230 = arith.constant dense<0xFF800000> : vector<8xf32>
    %531 = vector.multi_reduction <maximumf>, %530, %cst_230 [1] : vector<8x8xf32> to vector<8xf32>
    %532 = vector.shape_cast %531 : vector<8xf32> to vector<8x1xf32>
    %533 = vector.broadcast %532 : vector<8x1xf32> to vector<8x8xf32>
    %534 = arith.subf %530, %533 : vector<8x8xf32>
    %535 = math.exp %534 : vector<8x8xf32>
    %cst_231 = arith.constant dense<0.000000e+00> : vector<8xf32>
    %536 = vector.multi_reduction <add>, %535, %cst_231 [1] : vector<8x8xf32> to vector<8xf32>
    %537 = vector.shape_cast %536 : vector<8xf32> to vector<8x1xf32>
    %538 = vector.broadcast %537 : vector<8x1xf32> to vector<8x8xf32>
    %539 = arith.divf %535, %538 : vector<8x8xf32>
    %540 = vector.shape_cast %539 : vector<8x8xf32> to vector<8x8x1xf32>
    %c0_232 = arith.constant 0 : index
    %c0_233 = arith.constant 0 : index
    %c0_234 = arith.constant 0 : index
    %541 = vector.load %arg0[%c0_232, %c0_233, %c0_234] : memref<8x8x32xf32, #tpu.memory_space<vmem>>, vector<8x8x32xf32>
    %542 = vector.broadcast %540 : vector<8x8x1xf32> to vector<8x8x32xf32>
    %543 = arith.mulf %542, %541 : vector<8x8x32xf32>
    %cst_235 = arith.constant dense<0.000000e+00> : vector<8x32xf32>
    %544 = vector.multi_reduction <add>, %543, %cst_235 [1] : vector<8x8x32xf32> to vector<8x32xf32>
    %c0_236 = arith.constant 0 : index
    %c0_237 = arith.constant 0 : index
    %545 = vector.load %arg3[%c0_236, %c0_237] : memref<32x96xf32, #tpu.memory_space<vmem>>, vector<32x96xf32>
    %cst_238 = arith.constant dense<0.000000e+00> : vector<8x96xf32>
    %546 = tpu.matmul %544, %545, %cst_238 {dimension_numbers = #tpu.dot_dimension_numbers<[1], [0], [0], [1], [0, 0, 1, 1], [], []>} : vector<8x32xf32>, vector<32x96xf32>, vector<8x96xf32> -> vector<8x96xf32>
    %c0_239 = arith.constant 0 : index
    %c0_240 = arith.constant 0 : index
    %547 = vector.load %arg4[%c0_239, %c0_240] : memref<128x96xf32, #tpu.memory_space<vmem>>, vector<128x96xf32>
    %cst_241 = arith.constant dense<0.000000e+00> : vector<8x96xf32>
    %548 = tpu.matmul %523, %547, %cst_241 {dimension_numbers = #tpu.dot_dimension_numbers<[1], [0], [0], [1], [0, 0, 1, 1], [], []>} : vector<8x128xf32>, vector<128x96xf32>, vector<8x96xf32> -> vector<8x96xf32>
    %549 = arith.addf %546, %548 : vector<8x96xf32>
    %c0_242 = arith.constant 0 : index
    %c0_243 = arith.constant 0 : index
    %550 = vector.load %arg5[%c0_242, %c0_243] : memref<32x96xf32, #tpu.memory_space<vmem>>, vector<32x96xf32>
    %cst_244 = arith.constant dense<0.000000e+00> : vector<8x96xf32>
    %551 = tpu.matmul %494, %550, %cst_244 {dimension_numbers = #tpu.dot_dimension_numbers<[1], [0], [0], [1], [0, 0, 1, 1], [], []>} : vector<8x32xf32>, vector<32x96xf32>, vector<8x96xf32> -> vector<8x96xf32>
    %c0_245 = arith.constant 0 : index
    %c0_246 = arith.constant 0 : index
    %552 = vector.load %arg6[%c0_245, %c0_246] : memref<1x96xf32, #tpu.memory_space<vmem>>, vector<1x96xf32>
    %553 = vector.broadcast %552 : vector<1x96xf32> to vector<8x96xf32>
    %554 = arith.addf %551, %553 : vector<8x96xf32>
    %555 = vector.extract_strided_slice %549 {offsets = [0, 0], sizes = [8, 32], strides = [1, 1]} : vector<8x96xf32> to vector<8x32xf32>
    %556 = vector.extract_strided_slice %554 {offsets = [0, 0], sizes = [8, 32], strides = [1, 1]} : vector<8x96xf32> to vector<8x32xf32>
    %557 = arith.addf %555, %556 : vector<8x32xf32>
    %558 = arith.negf %557 : vector<8x32xf32>
    %559 = math.exp %558 : vector<8x32xf32>
    %cst_247 = arith.constant 1.000000e+00 : f32
    %560 = vector.broadcast %cst_247 : f32 to vector<8x32xf32>
    %561 = arith.addf %560, %559 : vector<8x32xf32>
    %562 = arith.divf %560, %561 : vector<8x32xf32>
    %563 = vector.extract_strided_slice %549 {offsets = [0, 32], sizes = [8, 32], strides = [1, 1]} : vector<8x96xf32> to vector<8x32xf32>
    %564 = vector.extract_strided_slice %554 {offsets = [0, 32], sizes = [8, 32], strides = [1, 1]} : vector<8x96xf32> to vector<8x32xf32>
    %565 = arith.addf %563, %564 : vector<8x32xf32>
    %566 = arith.negf %565 : vector<8x32xf32>
    %567 = math.exp %566 : vector<8x32xf32>
    %cst_248 = arith.constant 1.000000e+00 : f32
    %568 = vector.broadcast %cst_248 : f32 to vector<8x32xf32>
    %569 = arith.addf %568, %567 : vector<8x32xf32>
    %570 = arith.divf %568, %569 : vector<8x32xf32>
    %571 = vector.extract_strided_slice %549 {offsets = [0, 64], sizes = [8, 32], strides = [1, 1]} : vector<8x96xf32> to vector<8x32xf32>
    %572 = vector.extract_strided_slice %554 {offsets = [0, 64], sizes = [8, 32], strides = [1, 1]} : vector<8x96xf32> to vector<8x32xf32>
    %573 = arith.mulf %562, %572 : vector<8x32xf32>
    %574 = arith.addf %571, %573 : vector<8x32xf32>
    %575 = math.tanh %574 : vector<8x32xf32>
    %cst_249 = arith.constant 1.000000e+00 : f32
    %576 = vector.broadcast %cst_249 : f32 to vector<8x32xf32>
    %577 = arith.subf %576, %570 : vector<8x32xf32>
    %578 = arith.mulf %577, %575 : vector<8x32xf32>
    %579 = arith.mulf %570, %494 : vector<8x32xf32>
    %580 = arith.addf %578, %579 : vector<8x32xf32>
    %c0_250 = arith.constant 0 : index
    %c0_251 = arith.constant 0 : index
    %581 = vector.load %arg7[%c0_250, %c0_251] : memref<32x128xf32, #tpu.memory_space<vmem>>, vector<32x128xf32>
    %cst_252 = arith.constant dense<0.000000e+00> : vector<8x128xf32>
    %582 = tpu.matmul %580, %581, %cst_252 {dimension_numbers = #tpu.dot_dimension_numbers<[1], [0], [0], [1], [0, 0, 1, 1], [], []>} : vector<8x32xf32>, vector<32x128xf32>, vector<8x128xf32> -> vector<8x128xf32>
    %c0_253 = arith.constant 0 : index
    %c0_254 = arith.constant 0 : index
    %583 = vector.load %arg8[%c0_253, %c0_254] : memref<1x128xf32, #tpu.memory_space<vmem>>, vector<1x128xf32>
    %584 = vector.broadcast %583 : vector<1x128xf32> to vector<8x128xf32>
    %585 = arith.addf %582, %584 : vector<8x128xf32>
    %cst_255 = arith.constant dense<0xFF800000> : vector<8xf32>
    %586 = vector.multi_reduction <maximumf>, %585, %cst_255 [1] : vector<8x128xf32> to vector<8xf32>
    %587 = vector.shape_cast %586 : vector<8xf32> to vector<8x1xf32>
    %588 = vector.broadcast %587 : vector<8x1xf32> to vector<8x128xf32>
    %589 = arith.subf %585, %588 : vector<8x128xf32>
    %590 = math.exp %589 : vector<8x128xf32>
    %cst_256 = arith.constant dense<0.000000e+00> : vector<8xf32>
    %591 = vector.multi_reduction <add>, %590, %cst_256 [1] : vector<8x128xf32> to vector<8xf32>
    %592 = vector.shape_cast %591 : vector<8xf32> to vector<8x1xf32>
    %593 = math.log %592 : vector<8x1xf32>
    %594 = arith.addf %587, %593 : vector<8x1xf32>
    %595 = vector.broadcast %594 : vector<8x1xf32> to vector<8x128xf32>
    %596 = arith.subf %585, %595 : vector<8x128xf32>
    %597 = vector.shape_cast %596 : vector<8x128xf32> to vector<1x8x128xf32>
    %598 = arith.index_cast %c7_i32 : i32 to index
    %c0_257 = arith.constant 0 : index
    %c0_258 = arith.constant 0 : index
    %599 = vector.load %arg9[%598, %c0_257, %c0_258] : memref<8x8x128xf32, #tpu.memory_space<vmem>>, vector<1x8x128xf32>
    tpu.vector_store %arg9[%598, %c0_257, %c0_258], %597 {strides = array<i32>} : memref<8x8x128xf32, #tpu.memory_space<vmem>>, vector<1x8x128xf32>,
    %600 = vector.broadcast %587 : vector<8x1xf32> to vector<8x128xf32>
    %601 = arith.cmpf oge, %585, %600 : vector<8x128xf32>
    %c128_i32_259 = arith.constant 128 : i32
    %602 = vector.broadcast %c128_i32_259 : i32 to vector<8x128xi32>
    %603 = arith.select %601, %0, %602 : vector<8x128xi1>, vector<8x128xi32>
    %cst_260 = arith.constant dense<2147483647> : vector<8xi32>
    %604 = vector.multi_reduction <minsi>, %603, %cst_260 [1] : vector<8x128xi32> to vector<8xi32>
    %605 = vector.shape_cast %604 : vector<8xi32> to vector<8x1xi32>
    %606 = vector.broadcast %605 : vector<8x1xi32> to vector<8x128xi32>
    %607 = arith.cmpi eq, %0, %606 : vector<8x128xi32>
    %608 = arith.extui %607 : vector<8x128xi1> to vector<8x128xi32>
    %609 = arith.sitofp %608 : vector<8x128xi32> to vector<8x128xf32>
    %c7_i32_261 = arith.constant 7 : i32
    return
  }
}

</mosaic_0001>

<llo_original>
// kernel: attention_decoder_forward.1
$region0: #{attention_decoder_forward.1}
  #allocation0 [shape = 'u32[]', space=smem, size = 0x4, offset = 0x4, fixed_abs, tag = 'smem constant byte address 0x4 - core index']
  #allocation1 [shape = 'u32[144,128]{1,0:T(1,128)}', space=vmem, size = 0x12000, scoped, tag = 'internal scratch']
  %s0 = inlined_call_operand.vmem [shape: f32[8,8,32], index: 0, kind: input, shape index: {}]
  %s1 = inlined_call_operand.vmem [shape: f32[8,8,32], index: 1, kind: input, shape index: {}]
  %s2 = inlined_call_operand.vmem [shape: f32[8,8], index: 2, kind: input, shape index: {}]
  %s3 = inlined_call_operand.vmem [shape: f32[32,96], index: 3, kind: input, shape index: {}]
  %s4 = inlined_call_operand.vmem [shape: f32[128,96], index: 4, kind: input, shape index: {}]
  %s5 = inlined_call_operand.vmem [shape: f32[32,96], index: 5, kind: input, shape index: {}]
  %s6 = inlined_call_operand.vmem [shape: f32[1,96], index: 6, kind: input, shape index: {}]
  %s7 = inlined_call_operand.vmem [shape: f32[32,128], index: 7, kind: input, shape index: {}]
  %s8 = inlined_call_operand.vmem [shape: f32[1,128], index: 8, kind: input, shape index: {}]
  %s9 = inlined_call_operand.vmem [shape: f32[8,8,128], index: 9, kind: output, shape index: {}]
  %s10 = sld [smem:[#allocation0]]
  $region46: #{attention_decoder_forward.1} parent=0
    _
  %s12 = ssub.s32 1, %s10
  %s13 = scalar_select 0, %s12, %s10
  // Predicated region
  $region2: #{attention_decoder_forward.1} parent=0 // pred_check
    _
  $region3: #{attention_decoder_forward.1} parent=0 // pred_check_branch
    %15 = sbr.rel (0) target = $region5
  $region4: #{attention_decoder_forward.1} parent=0 // pred_region
    _
  $region5: #{attention_decoder_forward.1} parent=0 // pred_fallthru
    _
  // Predicated region
  $region6: #{attention_decoder_forward.1} parent=0 // pred_check
    _
  $region7: #{attention_decoder_forward.1} parent=0 // pred_check_branch
    %17 = sbr.rel (0) target = $region9
  $region8: #{attention_decoder_forward.1} parent=0 // pred_region
    _
  $region9: #{attention_decoder_forward.1} parent=0 // pred_fallthru
    _
  // Predicated region
  $region10: #{attention_decoder_forward.1} parent=0 // pred_check
    _
  $region11: #{attention_decoder_forward.1} parent=0 // pred_check_branch
    %19 = sbr.rel (0) target = $region13
  $region12: #{attention_decoder_forward.1} parent=0 // pred_region
    _
  $region13: #{attention_decoder_forward.1} parent=0 // pred_fallthru
    _
  // Predicated region
  $region14: #{attention_decoder_forward.1} parent=0 // pred_check
    _
  $region15: #{attention_decoder_forward.1} parent=0 // pred_check_branch
    %21 = sbr.rel (0) target = $region17
  $region16: #{attention_decoder_forward.1} parent=0 // pred_region
    _
  $region17: #{attention_decoder_forward.1} parent=0 // pred_fallthru
    _
  // Predicated region
  $region18: #{attention_decoder_forward.1} parent=0 // pred_check
    _
  $region19: #{attention_decoder_forward.1} parent=0 // pred_check_branch
    %23 = sbr.rel (0) target = $region21
  $region20: #{attention_decoder_forward.1} parent=0 // pred_region
    _
  $region21: #{attention_decoder_forward.1} parent=0 // pred_fallthru
    _
  // Predicated region
  $region22: #{attention_decoder_forward.1} parent=0 // pred_check
    _
  $region23: #{attention_decoder_forward.1} parent=0 // pred_check_branch
    %25 = sbr.rel (0) target = $region25
  $region24: #{attention_decoder_forward.1} parent=0 // pred_region
    _
  $region25: #{attention_decoder_forward.1} parent=0 // pred_fallthru
    _
  // Predicated region
  $region26: #{attention_decoder_forward.1} parent=0 // pred_check
    _
  $region27: #{attention_decoder_forward.1} parent=0 // pred_check_branch
    %27 = sbr.rel (0) target = $region29
  $region28: #{attention_decoder_forward.1} parent=0 // pred_region
    _
  $region29: #{attention_decoder_forward.1} parent=0 // pred_fallthru
    _
  // Predicated region
  $region30: #{attention_decoder_forward.1} parent=0 // pred_check
    _
  $region31: #{attention_decoder_forward.1} parent=0 // pred_check_branch
    %29 = sbr.rel (0) target = $region33
  $region32: #{attention_decoder_forward.1} parent=0 // pred_region
    _
  $region33: #{attention_decoder_forward.1} parent=0 // pred_fallthru
    _
  // Predicated region
  $region34: #{attention_decoder_forward.1} parent=0 // pred_check
    _
  $region35: #{attention_decoder_forward.1} parent=0 // pred_check_branch
    %31 = sbr.rel (0) target = $region37
  $region36: #{attention_decoder_forward.1} parent=0 // pred_region
    _
  $region37: #{attention_decoder_forward.1} parent=0 // pred_fallthru
    _
  %v32 = vlaneseq
  %v33 = vand.u32 %v32, 127
  %vm34 = vcmp.eq.s32.totalorder %v33, 1
  %v35 = vsel %vm34, 1, 0
  %v36 = vcvt.s32.f32 %v35
  %37 = vst [vmem:[%s9] sm:$0xff] %v36
  %v38 = vld [vmem:[%s1] sm:$0xff]
  %v39 = vld [vmem:[%s1 + $0x8] sm:$0xff]
  %v40 = vld [vmem:[%s1 + $0x10] sm:$0xff]
  %v41 = vld [vmem:[%s1 + $0x18] sm:$0xff]
  %v42 = vld [vmem:[%s1 + $0x20] sm:$0xff]
  %v43 = vld [vmem:[%s1 + $0x28] sm:$0xff]
  %v44 = vld [vmem:[%s1 + $0x30] sm:$0xff]
  %v45 = vld [vmem:[%s1 + $0x38] sm:$0xff]
  %v46 = vmul.f32 %v38, 0.0
  %v47 = vmul.f32 %v39, 0.0
  %v48 = vmul.f32 %v40, 0.0
  %v49 = vmul.f32 %v41, 0.0
  %v50 = vmul.f32 %v42, 0.0
  %v51 = vmul.f32 %v43, 0.0
  %v52 = vmul.f32 %v44, 0.0
  %v53 = vmul.f32 %v45, 0.0
  %vm54 = vcmask 261120
  %v55 = vsel %vm54, %v46, 0.0
  %56 = vadd.xlane.f32.xlu0 %v55
  %v57 = vpop.xlane.xlu0 %56
  %v58 = vsel %vm54, %v47, 0.0
  %59 = vadd.xlane.f32.xlu0 %v58
  %v60 = vpop.xlane.xlu0 %59
  %v61 = vsel %vm54, %v48, 0.0
  %62 = vadd.xlane.f32.xlu0 %v61
  %v63 = vpop.xlane.xlu0 %62
  %v64 = vsel %vm54, %v49, 0.0
  %65 = vadd.xlane.f32.xlu0 %v64
  %v66 = vpop.xlane.xlu0 %65
  %v67 = vsel %vm54, %v50, 0.0
  %68 = vadd.xlane.f32.xlu0 %v67
  %v69 = vpop.xlane.xlu0 %68
  %v70 = vsel %vm54, %v51, 0.0
  %71 = vadd.xlane.f32.xlu0 %v70
  %v72 = vpop.xlane.xlu0 %71
  %v73 = vsel %vm54, %v52, 0.0
  %74 = vadd.xlane.f32.xlu0 %v73
  %v75 = vpop.xlane.xlu0 %74
  %v76 = vsel %vm54, %v53, 0.0
  %77 = vadd.xlane.f32.xlu0 %v76
  %v78 = vpop.xlane.xlu0 %77
  %v79 = vld [vmem:[%s2] sm:$0xff]
  %v81 = vlaneseq
  %v82 = vshrl.u32 %v81, 7
  %v83 = vsub.s32 0, %v82
  %v84 = vrot.slane %v79, %v83
  %86 = vbcast.lane.b32.xlu0 %v84, 256
  %v87 = vpop.permute.xlu0 %86
  %v88 = vlaneseq
  %v89 = vshrl.u32 %v88, 7
  %v90 = vsub.s32 1, %v89
  %v91 = vrot.slane %v79, %v90
  %93 = vbcast.lane.b32.xlu0 %v91, 256
  %v94 = vpop.permute.xlu0 %93
  %v95 = vlaneseq
  %v96 = vshrl.u32 %v95, 7
  %v97 = vsub.s32 2, %v96
  %v98 = vrot.slane %v79, %v97
  %100 = vbcast.lane.b32.xlu0 %v98, 256
  %v101 = vpop.permute.xlu0 %100
  %v102 = vlaneseq
  %v103 = vshrl.u32 %v102, 7
  %v104 = vsub.s32 3, %v103
  %v105 = vrot.slane %v79, %v104
  %107 = vbcast.lane.b32.xlu0 %v105, 256
  %v108 = vpop.permute.xlu0 %107
  %v109 = vlaneseq
  %v110 = vshrl.u32 %v109, 7
  %v111 = vsub.s32 4, %v110
  %v112 = vrot.slane %v79, %v111
  %114 = vbcast.lane.b32.xlu0 %v112, 256
  %v115 = vpop.permute.xlu0 %114
  %v116 = vlaneseq
  %v117 = vshrl.u32 %v116, 7
  %v118 = vsub.s32 5, %v117
  %v119 = vrot.slane %v79, %v118
  %121 = vbcast.lane.b32.xlu0 %v119, 256
  %v122 = vpop.permute.xlu0 %121
  %v123 = vlaneseq
  %v124 = vshrl.u32 %v123, 7
  %v125 = vsub.s32 6, %v124
  %v126 = vrot.slane %v79, %v125
  %128 = vbcast.lane.b32.xlu0 %v126, 256
  %v129 = vpop.permute.xlu0 %128
  %v130 = vlaneseq
  %v131 = vshrl.u32 %v130, 7
  %v132 = vsub.s32 7, %v131
  %v133 = vrot.slane %v79, %v132
  %135 = vbcast.lane.b32.xlu0 %v133, 256
  %v136 = vpop.permute.xlu0 %135
  %v145 = vadd.f32 %v57, %v87
  %v146 = vadd.f32 %v60, %v94
  %v147 = vadd.f32 %v63, %v101
  %v148 = vadd.f32 %v66, %v108
  %v149 = vadd.f32 %v69, %v115
  %v150 = vadd.f32 %v72, %v122
  %v151 = vadd.f32 %v75, %v129
  %v152 = vadd.f32 %v78, %v136
  %161 = vset.pattern.permute.xlu0 0
  %162 = vperm.xlu0 %161, %v145
  %v163 = vpop.permute.xlu0 %162
  %164 = vset.pattern.permute.xlu0 0
  %165 = vperm.xlu0 %164, %v146
  %v166 = vpop.permute.xlu0 %165
  %167 = vset.pattern.permute.xlu0 0
  %168 = vperm.xlu0 %167, %v147
  %v169 = vpop.permute.xlu0 %168
  %170 = vset.pattern.permute.xlu0 0
  %171 = vperm.xlu0 %170, %v148
  %v172 = vpop.permute.xlu0 %171
  %173 = vset.pattern.permute.xlu0 0
  %174 = vperm.xlu0 %173, %v149
  %v175 = vpop.permute.xlu0 %174
  %176 = vset.pattern.permute.xlu0 0
  %177 = vperm.xlu0 %176, %v150
  %v178 = vpop.permute.xlu0 %177
  %179 = vset.pattern.permute.xlu0 0
  %180 = vperm.xlu0 %179, %v151
  %v181 = vpop.permute.xlu0 %180
  %182 = vset.pattern.permute.xlu0 0
  %183 = vperm.xlu0 %182, %v152
  %v184 = vpop.permute.xlu0 %183
  %v185 = vlaneseq
  %v186 = vshrl.u32 %v185, 7
  %v187 = vsub.s32 %v33, %v186
  %v188 = vrot.slane %v163, %v187
  %v189 = vlaneseq
  %v190 = vshrl.u32 %v189, 7
  %v191 = vsub.s32 %v33, %v190
  %v192 = vrot.slane %v166, %v191
  %v193 = vlaneseq
  %v194 = vshrl.u32 %v193, 7
  %v195 = vsub.s32 %v33, %v194
  %v196 = vrot.slane %v169, %v195
  %v197 = vlaneseq
  %v198 = vshrl.u32 %v197, 7
  %v199 = vsub.s32 %v33, %v198
  %v200 = vrot.slane %v172, %v199
  %v201 = vlaneseq
  %v202 = vshrl.u32 %v201, 7
  %v203 = vsub.s32 %v33, %v202
  %v204 = vrot.slane %v175, %v203
  %v205 = vlaneseq
  %v206 = vshrl.u32 %v205, 7
  %v207 = vsub.s32 %v33, %v206
  %v208 = vrot.slane %v178, %v207
  %v209 = vlaneseq
  %v210 = vshrl.u32 %v209, 7
  %v211 = vsub.s32 %v33, %v210
  %v212 = vrot.slane %v181, %v211
  %v213 = vlaneseq
  %v214 = vshrl.u32 %v213, 7
  %v215 = vsub.s32 %v33, %v214
  %v216 = vrot.slane %v184, %v215
  %vm217 = vcmask 1041409
  %v218 = vsel %vm217, %v192, %v188
  %vm219 = vcmask 1042434
  %v220 = vsel %vm219, %v196, %v218
  %vm221 = vcmask 1043459
  %v222 = vsel %vm221, %v200, %v220
  %vm223 = vcmask 1044484
  %v224 = vsel %vm223, %v204, %v222
  %vm225 = vcmask 1045509
  %v226 = vsel %vm225, %v208, %v224
  %vm227 = vcmask 1046534
  %v228 = vsel %vm227, %v212, %v226
  %vm229 = vcmask 1047559
  %v230 = vsel %vm229, %v216, %v228
  %vm232 = vcmask 64512
  %v233 = vsel %vm232, %v230, -inf
  %234 = vmax.xlane.f32.xlu0 %v233
  %v235 = vpop.xlane.xlu0 %234
  %v237 = vlaneseq
  %v238 = vshrl.u32 %v237, 7
  %v239 = vsub.s32 0, %v238
  %v240 = vrot.slane %v235, %v239
  %v241 = vlaneseq
  %v242 = vshrl.u32 %v241, 7
  %v243 = vsub.s32 1, %v242
  %v244 = vrot.slane %v235, %v243
  %v245 = vlaneseq
  %v246 = vshrl.u32 %v245, 7
  %v247 = vsub.s32 2, %v246
  %v248 = vrot.slane %v235, %v247
  %v249 = vlaneseq
  %v250 = vshrl.u32 %v249, 7
  %v251 = vsub.s32 3, %v250
  %v252 = vrot.slane %v235, %v251
  %v253 = vlaneseq
  %v254 = vshrl.u32 %v253, 7
  %v255 = vsub.s32 4, %v254
  %v256 = vrot.slane %v235, %v255
  %v257 = vlaneseq
  %v258 = vshrl.u32 %v257, 7
  %v259 = vsub.s32 5, %v258
  %v260 = vrot.slane %v235, %v259
  %v261 = vlaneseq
  %v262 = vshrl.u32 %v261, 7
  %v263 = vsub.s32 6, %v262
  %v264 = vrot.slane %v235, %v263
  %v265 = vlaneseq
  %v266 = vshrl.u32 %v265, 7
  %v267 = vsub.s32 7, %v266
  %v268 = vrot.slane %v235, %v267
  %v277 = vsub.f32 %v145, %v240
  %v278 = vsub.f32 %v146, %v244
  %v279 = vsub.f32 %v147, %v248
  %v280 = vsub.f32 %v148, %v252
  %v281 = vsub.f32 %v149, %v256
  %v282 = vsub.f32 %v150, %v260
  %v283 = vsub.f32 %v151, %v264
  %v284 = vsub.f32 %v152, %v268
  %v285 = vmul.f32 %v277, 1.442695
  %v286 = vpow.pop %v285
  %v287 = vmul.f32 %v278, 1.442695
  %v288 = vpow.pop %v287
  %v289 = vmul.f32 %v279, 1.442695
  %v290 = vpow.pop %v289
  %v291 = vmul.f32 %v280, 1.442695
  %v292 = vpow.pop %v291
  %v293 = vmul.f32 %v281, 1.442695
  %v294 = vpow.pop %v293
  %v295 = vmul.f32 %v282, 1.442695
  %v296 = vpow.pop %v295
  %v297 = vmul.f32 %v283, 1.442695
  %v298 = vpow.pop %v297
  %v299 = vmul.f32 %v284, 1.442695
  %v300 = vpow.pop %v299
  %309 = vset.pattern.permute.xlu0 0
  %310 = vperm.xlu0 %309, %v286
  %v311 = vpop.permute.xlu0 %310
  %312 = vset.pattern.permute.xlu0 0
  %313 = vperm.xlu0 %312, %v288
  %v314 = vpop.permute.xlu0 %313
  %315 = vset.pattern.permute.xlu0 0
  %316 = vperm.xlu0 %315, %v290
  %v317 = vpop.permute.xlu0 %316
  %318 = vset.pattern.permute.xlu0 0
  %319 = vperm.xlu0 %318, %v292
  %v320 = vpop.permute.xlu0 %319
  %321 = vset.pattern.permute.xlu0 0
  %322 = vperm.xlu0 %321, %v294
  %v323 = vpop.permute.xlu0 %322
  %324 = vset.pattern.permute.xlu0 0
  %325 = vperm.xlu0 %324, %v296
  %v326 = vpop.permute.xlu0 %325
  %327 = vset.pattern.permute.xlu0 0
  %328 = vperm.xlu0 %327, %v298
  %v329 = vpop.permute.xlu0 %328
  %330 = vset.pattern.permute.xlu0 0
  %331 = vperm.xlu0 %330, %v300
  %v332 = vpop.permute.xlu0 %331
  %v333 = vlaneseq
  %v334 = vshrl.u32 %v333, 7
  %v335 = vsub.s32 %v33, %v334
  %v336 = vrot.slane %v311, %v335
  %v337 = vlaneseq
  %v338 = vshrl.u32 %v337, 7
  %v339 = vsub.s32 %v33, %v338
  %v340 = vrot.slane %v314, %v339
  %v341 = vlaneseq
  %v342 = vshrl.u32 %v341, 7
  %v343 = vsub.s32 %v33, %v342
  %v344 = vrot.slane %v317, %v343
  %v345 = vlaneseq
  %v346 = vshrl.u32 %v345, 7
  %v347 = vsub.s32 %v33, %v346
  %v348 = vrot.slane %v320, %v347
  %v349 = vlaneseq
  %v350 = vshrl.u32 %v349, 7
  %v351 = vsub.s32 %v33, %v350
  %v352 = vrot.slane %v323, %v351
  %v353 = vlaneseq
  %v354 = vshrl.u32 %v353, 7
  %v355 = vsub.s32 %v33, %v354
  %v356 = vrot.slane %v326, %v355
  %v357 = vlaneseq
  %v358 = vshrl.u32 %v357, 7
  %v359 = vsub.s32 %v33, %v358
  %v360 = vrot.slane %v329, %v359
  %v361 = vlaneseq
  %v362 = vshrl.u32 %v361, 7
  %v363 = vsub.s32 %v33, %v362
  %v364 = vrot.slane %v332, %v363
  %v365 = vsel %vm217, %v340, %v336
  %v366 = vsel %vm219, %v344, %v365
  %v367 = vsel %vm221, %v348, %v366
  %v368 = vsel %vm223, %v352, %v367
  %v369 = vsel %vm225, %v356, %v368
  %v370 = vsel %vm227, %v360, %v369
  %v371 = vsel %vm229, %v364, %v370
  %v373 = vsel %vm232, %v371, 0.0
  %374 = vadd.xlane.f32.xlu0 %v373
  %v375 = vpop.xlane.xlu0 %374
  %v377 = vlaneseq
  %v378 = vshrl.u32 %v377, 7
  %v379 = vsub.s32 0, %v378
  %v380 = vrot.slane %v375, %v379
  %v381 = vlaneseq
  %v382 = vshrl.u32 %v381, 7
  %v383 = vsub.s32 1, %v382
  %v384 = vrot.slane %v375, %v383
  %v385 = vlaneseq
  %v386 = vshrl.u32 %v385, 7
  %v387 = vsub.s32 2, %v386
  %v388 = vrot.slane %v375, %v387
  %v389 = vlaneseq
  %v390 = vshrl.u32 %v389, 7
  %v391 = vsub.s32 3, %v390
  %v392 = vrot.slane %v375, %v391
  %v393 = vlaneseq
  %v394 = vshrl.u32 %v393, 7
  %v395 = vsub.s32 4, %v394
  %v396 = vrot.slane %v375, %v395
  %v397 = vlaneseq
  %v398 = vshrl.u32 %v397, 7
  %v399 = vsub.s32 5, %v398
  %v400 = vrot.slane %v375, %v399
  %v401 = vlaneseq
  %v402 = vshrl.u32 %v401, 7
  %v403 = vsub.s32 6, %v402
  %v404 = vrot.slane %v375, %v403
  %v405 = vlaneseq
  %v406 = vshrl.u32 %v405, 7
  %v407 = vsub.s32 7, %v406
  %v408 = vrot.slane %v375, %v407
  %v417 = vrcp.pop %v380
  %v418 = vmul.f32 %v286, %v417
  %v419 = vrcp.pop %v384
  %v420 = vmul.f32 %v288, %v419
  %v421 = vrcp.pop %v388
  %v422 = vmul.f32 %v290, %v421
  %v423 = vrcp.pop %v392
  %v424 = vmul.f32 %v292, %v423
  %v425 = vrcp.pop %v396
  %v426 = vmul.f32 %v294, %v425
  %v427 = vrcp.pop %v400
  %v428 = vmul.f32 %v296, %v427
  %v429 = vrcp.pop %v404
  %v430 = vmul.f32 %v298, %v429
  %v431 = vrcp.pop %v408
  %v432 = vmul.f32 %v300, %v431
  %v433 = vld [vmem:[%s0] sm:$0xff]
  %v434 = vld [vmem:[%s0 + $0x8] sm:$0xff]
  %v435 = vld [vmem:[%s0 + $0x10] sm:$0xff]
  %v436 = vld [vmem:[%s0 + $0x18] sm:$0xff]
  %v437 = vld [vmem:[%s0 + $0x20] sm:$0xff]
  %v438 = vld [vmem:[%s0 + $0x28] sm:$0xff]
  %v439 = vld [vmem:[%s0 + $0x30] sm:$0xff]
  %v440 = vld [vmem:[%s0 + $0x38] sm:$0xff]
  %442 = vset.pattern.permute.xlu0 0
  %443 = vperm.xlu0 %442, %v418
  %v444 = vpop.permute.xlu0 %443
  %447 = vset.pattern.permute.xlu0 0
  %448 = vperm.xlu0 %447, %v420
  %v449 = vpop.permute.xlu0 %448
  %452 = vset.pattern.permute.xlu0 0
  %453 = vperm.xlu0 %452, %v422
  %v454 = vpop.permute.xlu0 %453
  %457 = vset.pattern.permute.xlu0 0
  %458 = vperm.xlu0 %457, %v424
  %v459 = vpop.permute.xlu0 %458
  %462 = vset.pattern.permute.xlu0 0
  %463 = vperm.xlu0 %462, %v426
  %v464 = vpop.permute.xlu0 %463
  %467 = vset.pattern.permute.xlu0 0
  %468 = vperm.xlu0 %467, %v428
  %v469 = vpop.permute.xlu0 %468
  %472 = vset.pattern.permute.xlu0 0
  %473 = vperm.xlu0 %472, %v430
  %v474 = vpop.permute.xlu0 %473
  %477 = vset.pattern.permute.xlu0 0
  %478 = vperm.xlu0 %477, %v432
  %v479 = vpop.permute.xlu0 %478
  %v481 = vmul.f32 %v444, %v433
  %v482 = vmul.f32 %v449, %v434
  %v483 = vmul.f32 %v454, %v435
  %v484 = vmul.f32 %v459, %v436
  %v485 = vmul.f32 %v464, %v437
  %v486 = vmul.f32 %v469, %v438
  %v487 = vmul.f32 %v474, %v439
  %v488 = vmul.f32 %v479, %v440
  %v489 = vsel %vm54, %v481, 0.0
  %v490 = vrot.slane %v489, 4
  %v491 = vadd.f32 %v489, %v490
  %v492 = vrot.slane %v491, 2
  %v493 = vadd.f32 %v491, %v492
  %v494 = vrot.slane %v493, 1
  %v495 = vadd.f32 %v493, %v494
  %v496 = vsel %vm54, %v482, 0.0
  %v497 = vrot.slane %v496, 4
  %v498 = vadd.f32 %v496, %v497
  %v499 = vrot.slane %v498, 2
  %v500 = vadd.f32 %v498, %v499
  %v501 = vrot.slane %v500, 1
  %v502 = vadd.f32 %v500, %v501
  %v503 = vsel %vm54, %v483, 0.0
  %v504 = vrot.slane %v503, 4
  %v505 = vadd.f32 %v503, %v504
  %v506 = vrot.slane %v505, 2
  %v507 = vadd.f32 %v505, %v506
  %v508 = vrot.slane %v507, 1
  %v509 = vadd.f32 %v507, %v508
  %v510 = vsel %vm54, %v484, 0.0
  %v511 = vrot.slane %v510, 4
  %v512 = vadd.f32 %v510, %v511
  %v513 = vrot.slane %v512, 2
  %v514 = vadd.f32 %v512, %v513
  %v515 = vrot.slane %v514, 1
  %v516 = vadd.f32 %v514, %v515
  %v517 = vsel %vm54, %v485, 0.0
  %v518 = vrot.slane %v517, 4
  %v519 = vadd.f32 %v517, %v518
  %v520 = vrot.slane %v519, 2
  %v521 = vadd.f32 %v519, %v520
  %v522 = vrot.slane %v521, 1
  %v523 = vadd.f32 %v521, %v522
  %v524 = vsel %vm54, %v486, 0.0
  %v525 = vrot.slane %v524, 4
  %v526 = vadd.f32 %v524, %v525
  %v527 = vrot.slane %v526, 2
  %v528 = vadd.f32 %v526, %v527
  %v529 = vrot.slane %v528, 1
  %v530 = vadd.f32 %v528, %v529
  %v531 = vsel %vm54, %v487, 0.0
  %v532 = vrot.slane %v531, 4
  %v533 = vadd.f32 %v531, %v532
  %v534 = vrot.slane %v533, 2
  %v535 = vadd.f32 %v533, %v534
  %v536 = vrot.slane %v535, 1
  %v537 = vadd.f32 %v535, %v536
  %v538 = vsel %vm54, %v488, 0.0
  %v539 = vrot.slane %v538, 4
  %v540 = vadd.f32 %v538, %v539
  %v541 = vrot.slane %v540, 2
  %v542 = vadd.f32 %v540, %v541
  %v543 = vrot.slane %v542, 1
  %v544 = vadd.f32 %v542, %v543
  %v545 = vld [vmem:[%s3] sm:$0xff]
  %v546 = vld [vmem:[%s3 + $0x8] sm:$0xff]
  %v547 = vld [vmem:[%s3 + $0x10] sm:$0xff]
  %v548 = vld [vmem:[%s3 + $0x18] sm:$0xff]
  %v549 = vld [vmem:[%s4] sm:$0xff]
  %v550 = vld [vmem:[%s4 + $0x8] sm:$0xff]
  %v551 = vld [vmem:[%s4 + $0x10] sm:$0xff]
  %v552 = vld [vmem:[%s4 + $0x18] sm:$0xff]
  %v553 = vld [vmem:[%s4 + $0x20] sm:$0xff]
  %v554 = vld [vmem:[%s4 + $0x28] sm:$0xff]
  %v555 = vld [vmem:[%s4 + $0x30] sm:$0xff]
  %v556 = vld [vmem:[%s4 + $0x38] sm:$0xff]
  %v557 = vld [vmem:[%s4 + $0x40] sm:$0xff]
  %v558 = vld [vmem:[%s4 + $0x48] sm:$0xff]
  %v559 = vld [vmem:[%s4 + $0x50] sm:$0xff]
  %v560 = vld [vmem:[%s4 + $0x58] sm:$0xff]
  %v561 = vld [vmem:[%s4 + $0x60] sm:$0xff]
  %v562 = vld [vmem:[%s4 + $0x68] sm:$0xff]
  %v563 = vld [vmem:[%s4 + $0x70] sm:$0xff]
  %v564 = vld [vmem:[%s4 + $0x78] sm:$0xff]
  %565 = vmatprep.subr.mxu0 0.0
  %566 = vmatpush1.msra.mxu0 %v549
  %567 = vmatprep.subr.mxu0 0.0
  %568 = vmatpush1.msra.mxu0 %v550
  %569 = vmatprep.subr.mxu0 0.0
  %570 = vmatpush1.msra.mxu0 %v551
  %571 = vmatprep.subr.mxu0 0.0
  %572 = vmatpush1.msra.mxu0 %v552
  %573 = vmatprep.subr.mxu0 0.0
  %574 = vmatpush1.msra.mxu0 %v553
  %575 = vmatprep.subr.mxu0 0.0
  %576 = vmatpush1.msra.mxu0 %v554
  %577 = vmatprep.subr.mxu0 0.0
  %578 = vmatpush1.msra.mxu0 %v555
  %579 = vmatprep.subr.mxu0 0.0
  %580 = vmatpush1.msra.mxu0 %v556
  %581 = vmatprep.subr.mxu0 0.0
  %582 = vmatpush1.msra.mxu0 %v557
  %583 = vmatprep.subr.mxu0 0.0
  %584 = vmatpush1.msra.mxu0 %v558
  %585 = vmatprep.subr.mxu0 0.0
  %586 = vmatpush1.msra.mxu0 %v559
  %587 = vmatprep.subr.mxu0 0.0
  %588 = vmatpush1.msra.mxu0 %v560
  %589 = vmatprep.subr.mxu0 0.0
  %590 = vmatpush1.msra.mxu0 %v561
  %591 = vmatprep.subr.mxu0 0.0
  %592 = vmatpush1.msra.mxu0 %v562
  %593 = vmatprep.subr.mxu0 0.0
  %594 = vmatpush1.msra.mxu0 %v563
  %595 = vmatprep.subr.mxu0 0.0
  %596 = vmatpush1.msra.mxu0 %v564
  %597 = vmatprep.subr.mxu0 0.0
  %598 = vmatpush1.msra.mxu0 0.0
  %599 = vmatprep.subr.mxu0 0.0
  %600 = vmatpush1.msra.mxu0 0.0
  %601 = vmatprep.subr.mxu0 0.0
  %602 = vmatpush1.msra.mxu0 0.0
  %603 = vmatprep.subr.mxu0 0.0
  %604 = vmatpush1.msra.mxu0 0.0
  %605 = vmatprep.subr.mxu0 0.0
  %606 = vmatpush1.msra.mxu0 0.0
  %607 = vmatprep.subr.mxu0 0.0
  %608 = vmatpush1.msra.mxu0 0.0
  %609 = vmatprep.subr.mxu0 0.0
  %610 = vmatpush1.msra.mxu0 0.0
  %611 = vmatprep.subr.mxu0 0.0
  %612 = vmatpush1.msra.mxu0 0.0
  %613 = vmatprep.subr.mxu0 0.0
  %614 = vmatpush1.msra.mxu0 0.0
  %615 = vmatprep.subr.mxu0 0.0
  %616 = vmatpush1.msra.mxu0 0.0
  %617 = vmatprep.subr.mxu0 0.0
  %618 = vmatpush1.msra.mxu0 0.0
  %619 = vmatprep.subr.mxu0 0.0
  %620 = vmatpush1.msra.mxu0 0.0
  %621 = vmatprep.subr.mxu0 0.0
  %622 = vmatpush1.msra.mxu0 0.0
  %623 = vmatprep.subr.mxu0 0.0
  %624 = vmatpush1.msra.mxu0 0.0
  %625 = vmatprep.subr.mxu0 0.0
  %626 = vmatpush1.msra.mxu0 0.0
  %627 = vmatprep.subr.mxu0 0.0
  %628 = vmatpush1.msra.mxu0 0.0
  %629 = vmatprep.mubr.f32.mxu0 0.0
  %630 = vmatmul.mubr.f32.gmra.mrb[0].mxu0 %v36
  %v631 = vpop.f32.mrb[0].mxu0
  %v632 = vadd.f32 0.0, %v631
  %v633 = vpop.f32.mrb[0].mxu0
  %634 = vdwg.mxu0
  %v643 = vsel %vm217, %v502, %v495
  %v644 = vsel %vm219, %v509, %v643
  %v645 = vsel %vm221, %v516, %v644
  %v646 = vsel %vm223, %v523, %v645
  %v647 = vsel %vm225, %v530, %v646
  %v648 = vsel %vm227, %v537, %v647
  %v649 = vsel %vm229, %v544, %v648
  %v650 = vsel %vm54, %v649, 0
  %652 = vmatprep.subr.mxu0 0.0
  %653 = vmatpush1.msra.mxu0 %v545
  %654 = vmatprep.subr.mxu0 0.0
  %655 = vmatpush1.msra.mxu0 %v546
  %656 = vmatprep.subr.mxu0 0.0
  %657 = vmatpush1.msra.mxu0 %v547
  %658 = vmatprep.subr.mxu0 0.0
  %659 = vmatpush1.msra.mxu0 %v548
  %660 = vmatprep.subr.mxu0 0.0
  %661 = vmatpush1.msra.mxu0 0.0
  %662 = vmatprep.subr.mxu0 0.0
  %663 = vmatpush1.msra.mxu0 0.0
  %664 = vmatprep.subr.mxu0 0.0
  %665 = vmatpush1.msra.mxu0 0.0
  %666 = vmatprep.subr.mxu0 0.0
  %667 = vmatpush1.msra.mxu0 0.0
  %668 = vmatprep.subr.mxu0 0.0
  %669 = vmatpush1.msra.mxu0 0.0
  %670 = vmatprep.subr.mxu0 0.0
  %671 = vmatpush1.msra.mxu0 0.0
  %672 = vmatprep.subr.mxu0 0.0
  %673 = vmatpush1.msra.mxu0 0.0
  %674 = vmatprep.subr.mxu0 0.0
  %675 = vmatpush1.msra.mxu0 0.0
  %676 = vmatprep.subr.mxu0 0.0
  %677 = vmatpush1.msra.mxu0 0.0
  %678 = vmatprep.subr.mxu0 0.0
  %679 = vmatpush1.msra.mxu0 0.0
  %680 = vmatprep.subr.mxu0 0.0
  %681 = vmatpush1.msra.mxu0 0.0
  %682 = vmatprep.subr.mxu0 0.0
  %683 = vmatpush1.msra.mxu0 0.0
  %684 = vmatprep.subr.mxu0 0.0
  %685 = vmatpush1.msra.mxu0 0.0
  %686 = vmatprep.subr.mxu0 0.0
  %687 = vmatpush1.msra.mxu0 0.0
  %688 = vmatprep.subr.mxu0 0.0
  %689 = vmatpush1.msra.mxu0 0.0
  %690 = vmatprep.subr.mxu0 0.0
  %691 = vmatpush1.msra.mxu0 0.0
  %692 = vmatprep.subr.mxu0 0.0
  %693 = vmatpush1.msra.mxu0 0.0
  %694 = vmatprep.subr.mxu0 0.0
  %695 = vmatpush1.msra.mxu0 0.0
  %696 = vmatprep.subr.mxu0 0.0
  %697 = vmatpush1.msra.mxu0 0.0
  %698 = vmatprep.subr.mxu0 0.0
  %699 = vmatpush1.msra.mxu0 0.0
  %700 = vmatprep.subr.mxu0 0.0
  %701 = vmatpush1.msra.mxu0 0.0
  %702 = vmatprep.subr.mxu0 0.0
  %703 = vmatpush1.msra.mxu0 0.0
  %704 = vmatprep.subr.mxu0 0.0
  %705 = vmatpush1.msra.mxu0 0.0
  %706 = vmatprep.subr.mxu0 0.0
  %707 = vmatpush1.msra.mxu0 0.0
  %708 = vmatprep.subr.mxu0 0.0
  %709 = vmatpush1.msra.mxu0 0.0
  %710 = vmatprep.subr.mxu0 0.0
  %711 = vmatpush1.msra.mxu0 0.0
  %712 = vmatprep.subr.mxu0 0.0
  %713 = vmatpush1.msra.mxu0 0.0
  %714 = vmatprep.subr.mxu0 0.0
  %715 = vmatpush1.msra.mxu0 0.0
  %716 = vmatprep.mubr.f32.mxu0 0.0
  %717 = vmatmul.mubr.f32.gmra.mrb[0].mxu0 %v650
  %v718 = vpop.f32.mrb[0].mxu0
  %v719 = vadd.f32 %v632, %v718
  %v720 = vpop.f32.mrb[0].mxu0
  %721 = vdwg.mxu0
  %v722 = vld [vmem:[%s5] sm:$0xff]
  %v723 = vld [vmem:[%s5 + $0x8] sm:$0xff]
  %v724 = vld [vmem:[%s5 + $0x10] sm:$0xff]
  %v725 = vld [vmem:[%s5 + $0x18] sm:$0xff]
  %v726 = vld [vmem:[%s6] sm:$0x1]
  %v728 = vlaneseq
  %v729 = vshrl.u32 %v728, 7
  %v730 = vsub.s32 0, %v729
  %v731 = vrot.slane %v726, %v730
  %v734 = vsel %vm54, 0.0, 0
  %736 = vmatprep.subr.mxu0 0.0
  %737 = vmatpush1.msra.mxu0 %v722
  %738 = vmatprep.subr.mxu0 0.0
  %739 = vmatpush1.msra.mxu0 %v723
  %740 = vmatprep.subr.mxu0 0.0
  %741 = vmatpush1.msra.mxu0 %v724
  %742 = vmatprep.subr.mxu0 0.0
  %743 = vmatpush1.msra.mxu0 %v725
  %744 = vmatprep.subr.mxu0 0.0
  %745 = vmatpush1.msra.mxu0 0.0
  %746 = vmatprep.subr.mxu0 0.0
  %747 = vmatpush1.msra.mxu0 0.0
  %748 = vmatprep.subr.mxu0 0.0
  %749 = vmatpush1.msra.mxu0 0.0
  %750 = vmatprep.subr.mxu0 0.0
  %751 = vmatpush1.msra.mxu0 0.0
  %752 = vmatprep.subr.mxu0 0.0
  %753 = vmatpush1.msra.mxu0 0.0
  %754 = vmatprep.subr.mxu0 0.0
  %755 = vmatpush1.msra.mxu0 0.0
  %756 = vmatprep.subr.mxu0 0.0
  %757 = vmatpush1.msra.mxu0 0.0
  %758 = vmatprep.subr.mxu0 0.0
  %759 = vmatpush1.msra.mxu0 0.0
  %760 = vmatprep.subr.mxu0 0.0
  %761 = vmatpush1.msra.mxu0 0.0
  %762 = vmatprep.subr.mxu0 0.0
  %763 = vmatpush1.msra.mxu0 0.0
  %764 = vmatprep.subr.mxu0 0.0
  %765 = vmatpush1.msra.mxu0 0.0
  %766 = vmatprep.subr.mxu0 0.0
  %767 = vmatpush1.msra.mxu0 0.0
  %768 = vmatprep.subr.mxu0 0.0
  %769 = vmatpush1.msra.mxu0 0.0
  %770 = vmatprep.subr.mxu0 0.0
  %771 = vmatpush1.msra.mxu0 0.0
  %772 = vmatprep.subr.mxu0 0.0
  %773 = vmatpush1.msra.mxu0 0.0
  %774 = vmatprep.subr.mxu0 0.0
  %775 = vmatpush1.msra.mxu0 0.0
  %776 = vmatprep.subr.mxu0 0.0
  %777 = vmatpush1.msra.mxu0 0.0
  %778 = vmatprep.subr.mxu0 0.0
  %779 = vmatpush1.msra.mxu0 0.0
  %780 = vmatprep.subr.mxu0 0.0
  %781 = vmatpush1.msra.mxu0 0.0
  %782 = vmatprep.subr.mxu0 0.0
  %783 = vmatpush1.msra.mxu0 0.0
  %784 = vmatprep.subr.mxu0 0.0
  %785 = vmatpush1.msra.mxu0 0.0
  %786 = vmatprep.subr.mxu0 0.0
  %787 = vmatpush1.msra.mxu0 0.0
  %788 = vmatprep.subr.mxu0 0.0
  %789 = vmatpush1.msra.mxu0 0.0
  %790 = vmatprep.subr.mxu0 0.0
  %791 = vmatpush1.msra.mxu0 0.0
  %792 = vmatprep.subr.mxu0 0.0
  %793 = vmatpush1.msra.mxu0 0.0
  %794 = vmatprep.subr.mxu0 0.0
  %795 = vmatpush1.msra.mxu0 0.0
  %796 = vmatprep.subr.mxu0 0.0
  %797 = vmatpush1.msra.mxu0 0.0
  %798 = vmatprep.subr.mxu0 0.0
  %799 = vmatpush1.msra.mxu0 0.0
  %800 = vmatprep.mubr.f32.mxu0 0.0
  %801 = vmatmul.mubr.f32.gmra.mrb[0].mxu0 %v734
  %v802 = vpop.f32.mrb[0].mxu0
  %v803 = vadd.f32 %v731, %v802
  %v804 = vpop.f32.mrb[0].mxu0
  %805 = vdwg.mxu0
  %v806 = vadd.f32 %v719, %v803
  %v807 = vxor.u32 %v806, 2147483648
  %v808 = vmul.f32 %v807, 1.442695
  %v809 = vpow.pop %v808
  %v810 = vadd.f32 %v809, 1.0
  %v811 = vrcp.pop %v810
  %v812 = vmul.f32 1.0, %v811
  %814 = vrot.lane.b32.xlu0 %v803, 64
  %v815 = vpop.permute.xlu0 %814
  %v817 = vmul.f32 %v812, %v815
  %819 = vrot.lane.b32.xlu0 %v817, 64
  %v820 = vpop.permute.xlu0 %819
  %v822 = vadd.f32 %v719, %v820
  %v823 = vtanh.pop %v822
  %v824 = vsub.f32 1.0, %v812
  %826 = vrot.lane.b32.xlu0 %v823, 96
  %v827 = vpop.permute.xlu0 %826
  %v829 = vmul.f32 %v824, %v827
  %v830 = vmul.f32 %v812, 0.0
  %v831 = vadd.f32 %v829, %v830
  %v832 = vld [vmem:[%s7] sm:$0xff]
  %v833 = vld [vmem:[%s7 + $0x8] sm:$0xff]
  %v834 = vld [vmem:[%s7 + $0x10] sm:$0xff]
  %v835 = vld [vmem:[%s7 + $0x18] sm:$0xff]
  %v836 = vld [vmem:[%s8] sm:$0x1]
  %v838 = vlaneseq
  %v839 = vshrl.u32 %v838, 7
  %v840 = vsub.s32 0, %v839
  %v841 = vrot.slane %v836, %v840
  %844 = vrot.lane.b32.xlu0 %v831, 96
  %v845 = vpop.permute.xlu0 %844
  %v846 = vsel %vm54, %v845, 0
  %848 = vmatprep.subr.mxu0 0.0
  %849 = vmatpush1.msra.mxu0 %v832
  %850 = vmatprep.subr.mxu0 0.0
  %851 = vmatpush1.msra.mxu0 %v833
  %852 = vmatprep.subr.mxu0 0.0
  %853 = vmatpush1.msra.mxu0 %v834
  %854 = vmatprep.subr.mxu0 0.0
  %855 = vmatpush1.msra.mxu0 %v835
  %856 = vmatprep.subr.mxu0 0.0
  %857 = vmatpush1.msra.mxu0 0.0
  %858 = vmatprep.subr.mxu0 0.0
  %859 = vmatpush1.msra.mxu0 0.0
  %860 = vmatprep.subr.mxu0 0.0
  %861 = vmatpush1.msra.mxu0 0.0
  %862 = vmatprep.subr.mxu0 0.0
  %863 = vmatpush1.msra.mxu0 0.0
  %864 = vmatprep.subr.mxu0 0.0
  %865 = vmatpush1.msra.mxu0 0.0
  %866 = vmatprep.subr.mxu0 0.0
  %867 = vmatpush1.msra.mxu0 0.0
  %868 = vmatprep.subr.mxu0 0.0
  %869 = vmatpush1.msra.mxu0 0.0
  %870 = vmatprep.subr.mxu0 0.0
  %871 = vmatpush1.msra.mxu0 0.0
  %872 = vmatprep.subr.mxu0 0.0
  %873 = vmatpush1.msra.mxu0 0.0
  %874 = vmatprep.subr.mxu0 0.0
  %875 = vmatpush1.msra.mxu0 0.0
  %876 = vmatprep.subr.mxu0 0.0
  %877 = vmatpush1.msra.mxu0 0.0
  %878 = vmatprep.subr.mxu0 0.0
  %879 = vmatpush1.msra.mxu0 0.0
  %880 = vmatprep.subr.mxu0 0.0
  %881 = vmatpush1.msra.mxu0 0.0
  %882 = vmatprep.subr.mxu0 0.0
  %883 = vmatpush1.msra.mxu0 0.0
  %884 = vmatprep.subr.mxu0 0.0
  %885 = vmatpush1.msra.mxu0 0.0
  %886 = vmatprep.subr.mxu0 0.0
  %887 = vmatpush1.msra.mxu0 0.0
  %888 = vmatprep.subr.mxu0 0.0
  %889 = vmatpush1.msra.mxu0 0.0
  %890 = vmatprep.subr.mxu0 0.0
  %891 = vmatpush1.msra.mxu0 0.0
  %892 = vmatprep.subr.mxu0 0.0
  %893 = vmatpush1.msra.mxu0 0.0
  %894 = vmatprep.subr.mxu0 0.0
  %895 = vmatpush1.msra.mxu0 0.0
  %896 = vmatprep.subr.mxu0 0.0
  %897 = vmatpush1.msra.mxu0 0.0
  %898 = vmatprep.subr.mxu0 0.0
  %899 = vmatpush1.msra.mxu0 0.0
  %900 = vmatprep.subr.mxu0 0.0
  %901 = vmatpush1.msra.mxu0 0.0
  %902 = vmatprep.subr.mxu0 0.0
  %903 = vmatpush1.msra.mxu0 0.0
  %904 = vmatprep.subr.mxu0 0.0
  %905 = vmatpush1.msra.mxu0 0.0
  %906 = vmatprep.subr.mxu0 0.0
  %907 = vmatpush1.msra.mxu0 0.0
  %908 = vmatprep.subr.mxu0 0.0
  %909 = vmatpush1.msra.mxu0 0.0
  %910 = vmatprep.subr.mxu0 0.0
  %911 = vmatpush1.msra.mxu0 0.0
  %912 = vmatprep.mubr.f32.mxu0 0.0
  %913 = vmatmul.mubr.f32.gmra.mrb[0].mxu0 %v846
  %v914 = vpop.f32.mrb[0].mxu0
  %v915 = vadd.f32 %v841, %v914
  %v916 = vpop.f32.mrb[0].mxu0
  %917 = vdwg.mxu0
  %918 = vmax.xlane.f32.xlu0 %v915
  %v919 = vpop.xlane.xlu0 %918
  %v920 = vsub.f32 %v915, %v919
  %v921 = vmul.f32 %v920, 1.442695
  %v922 = vpow.pop %v921
  %923 = vadd.xlane.f32.xlu0 %v922
  %v924 = vpop.xlane.xlu0 %923
  %v925 = vlog2.pop %v924
  %v926 = vmul.f32 %v925, 0.6931472
  %v927 = vadd.f32 %v919, %v926
  %v928 = vsub.f32 %v915, %v927
  %s929 = scalar_lea.vmem %s9, 8
  %930 = vst [vmem:[%s929] sm:$0xff] %v928
  %vm931 = vcmp.ge.f32.partialorder %v915, %v919
  %v932 = vsel %vm931, %v33, 128
  %v933 = vand.u32 %v932, 65535
  %v934 = vshra.s32 %v932, 16
  %v935 = vcvt.s32.f32 %v933
  %v936 = vcvt.s32.f32 %v934
  %937 = vmin.xlane.f32.xlu0 %v936
  %v938 = vpop.xlane.xlu0 %937
  %vm939 = vcmp.eq.f32.partialorder %v936, %v938
  %v940 = vsel %vm939, %v935, inf
  %941 = vmin.xlane.f32.xlu0 %v940
  %v942 = vpop.xlane.xlu0 %941
  %v943 = vcvt.f32.s32 %v942
  %v944 = vcvt.f32.s32 %v938
  %v945 = vshll.u32 %v944, 16
  %v946 = vadd.s32 %v945, %v943
  %vm947 = vcmp.eq.s32.totalorder %v33, %v946
  %v948 = vsel %vm947, 1, 0
  %v949 = vcvt.s32.f32 %v948
  %v950 = vld [vmem:[%s1] sm:$0xff]
  %v951 = vld [vmem:[%s1 + $0x8] sm:$0xff]
  %v952 = vld [vmem:[%s1 + $0x10] sm:$0xff]
  %v953 = vld [vmem:[%s1 + $0x18] sm:$0xff]
  %v954 = vld [vmem:[%s1 + $0x20] sm:$0xff]
  %v955 = vld [vmem:[%s1 + $0x28] sm:$0xff]
  %v956 = vld [vmem:[%s1 + $0x30] sm:$0xff]
  %v957 = vld [vmem:[%s1 + $0x38] sm:$0xff]
  %v958 = vcombine.high %v831, %v831
  %v960 = vunpack.c.l.s4 1966171168
  %v961 = vunpack.c.0.s8 %v960
  %v962 = vlaneseq
  %v963 = vshrl.u32 %v962, 7
  %v964 = vsub.s32 %v961, %v963
  %v965 = vrot.slane %v831, %v964
  %v967 = vunpack.c.l.s4 1966171168
  %v968 = vunpack.c.0.s8 %v967
  %v969 = vlaneseq
  %v970 = vshrl.u32 %v969, 7
  %v971 = vsub.s32 %v968, %v970
  %v972 = vrot.slane %v958, %v971
  %v973 = vcombine.high %v965, %v965
  %v974 = vcombine.high %v972, %v972
  %v976 = vunpack.c.l.s4 1966171168
  %v977 = vunpack.c.0.s8 %v976
  %v978 = vlaneseq
  %v979 = vshrl.u32 %v978, 7
  %v980 = vsub.s32 %v977, %v979
  %v981 = vrot.slane %v965, %v980
  %v983 = vunpack.c.l.s4 1966171168
  %v984 = vunpack.c.0.s8 %v983
  %v985 = vlaneseq
  %v986 = vshrl.u32 %v985, 7
  %v987 = vsub.s32 %v984, %v986
  %v988 = vrot.slane %v972, %v987
  %v990 = vunpack.c.l.s4 1966171168
  %v991 = vunpack.c.0.s8 %v990
  %v992 = vlaneseq
  %v993 = vshrl.u32 %v992, 7
  %v994 = vsub.s32 %v991, %v993
  %v995 = vrot.slane %v973, %v994
  %v997 = vunpack.c.l.s4 1966171168
  %v998 = vunpack.c.0.s8 %v997
  %v999 = vlaneseq
  %v1000 = vshrl.u32 %v999, 7
  %v1001 = vsub.s32 %v998, %v1000
  %v1002 = vrot.slane %v974, %v1001
  %v1003 = vcombine.high %v981, %v981
  %v1004 = vcombine.high %v988, %v988
  %v1005 = vcombine.high %v995, %v995
  %v1006 = vcombine.high %v1002, %v1002
  %v1007 = vlaneseq
  %v1008 = vshrl.u32 %v1007, 7
  %v1009 = vsub.s32 0, %v1008
  %v1010 = vrot.slane %v981, %v1009
  %v1011 = vlaneseq
  %v1012 = vshrl.u32 %v1011, 7
  %v1013 = vsub.s32 0, %v1012
  %v1014 = vrot.slane %v995, %v1013
  %v1015 = vlaneseq
  %v1016 = vshrl.u32 %v1015, 7
  %v1017 = vsub.s32 0, %v1016
  %v1018 = vrot.slane %v1003, %v1017
  %v1019 = vlaneseq
  %v1020 = vshrl.u32 %v1019, 7
  %v1021 = vsub.s32 0, %v1020
  %v1022 = vrot.slane %v1005, %v1021
  %v1023 = vlaneseq
  %v1024 = vshrl.u32 %v1023, 7
  %v1025 = vsub.s32 0, %v1024
  %v1026 = vrot.slane %v988, %v1025
  %v1027 = vlaneseq
  %v1028 = vshrl.u32 %v1027, 7
  %v1029 = vsub.s32 0, %v1028
  %v1030 = vrot.slane %v1002, %v1029
  %v1031 = vlaneseq
  %v1032 = vshrl.u32 %v1031, 7
  %v1033 = vsub.s32 0, %v1032
  %v1034 = vrot.slane %v1004, %v1033
  %v1035 = vlaneseq
  %v1036 = vshrl.u32 %v1035, 7
  %v1037 = vsub.s32 0, %v1036
  %v1038 = vrot.slane %v1006, %v1037
  %1039 = vrot.lane.b32.xlu0 %v1010, 96
  %v1040 = vpop.permute.xlu0 %1039
  %1041 = vrot.lane.b32.xlu0 %v1014, 96
  %v1042 = vpop.permute.xlu0 %1041
  %1043 = vrot.lane.b32.xlu0 %v1018, 96
  %v1044 = vpop.permute.xlu0 %1043
  %1045 = vrot.lane.b32.xlu0 %v1022, 96
  %v1046 = vpop.permute.xlu0 %1045
  %1047 = vrot.lane.b32.xlu0 %v1026, 96
  %v1048 = vpop.permute.xlu0 %1047
  %1049 = vrot.lane.b32.xlu0 %v1030, 96
  %v1050 = vpop.permute.xlu0 %1049
  %1051 = vrot.lane.b32.xlu0 %v1034, 96
  %v1052 = vpop.permute.xlu0 %1051
  %1053 = vrot.lane.b32.xlu0 %v1038, 96
  %v1054 = vpop.permute.xlu0 %1053
  %v1063 = vmul.f32 %v950, %v1040
  %v1064 = vmul.f32 %v951, %v1042
  %v1065 = vmul.f32 %v952, %v1044
  %v1066 = vmul.f32 %v953, %v1046
  %v1067 = vmul.f32 %v954, %v1048
  %v1068 = vmul.f32 %v955, %v1050
  %v1069 = vmul.f32 %v956, %v1052
  %v1070 = vmul.f32 %v957, %v1054
  %v1071 = vsel %vm54, %v1063, 0.0
  %1072 = vadd.xlane.f32.xlu0 %v1071
  %v1073 = vpop.xlane.xlu0 %1072
  %v1074 = vsel %vm54, %v1064, 0.0
  %1075 = vadd.xlane.f32.xlu0 %v1074
  %v1076 = vpop.xlane.xlu0 %1075
  %v1077 = vsel %vm54, %v1065, 0.0
  %1078 = vadd.xlane.f32.xlu0 %v1077
  %v1079 = vpop.xlane.xlu0 %1078
  %v1080 = vsel %vm54, %v1066, 0.0
  %1081 = vadd.xlane.f32.xlu0 %v1080
  %v1082 = vpop.xlane.xlu0 %1081
  %v1083 = vsel %vm54, %v1067, 0.0
  %1084 = vadd.xlane.f32.xlu0 %v1083
  %v1085 = vpop.xlane.xlu0 %1084
  %v1086 = vsel %vm54, %v1068, 0.0
  %1087 = vadd.xlane.f32.xlu0 %v1086
  %v1088 = vpop.xlane.xlu0 %1087
  %v1089 = vsel %vm54, %v1069, 0.0
  %1090 = vadd.xlane.f32.xlu0 %v1089
  %v1091 = vpop.xlane.xlu0 %1090
  %v1092 = vsel %vm54, %v1070, 0.0
  %1093 = vadd.xlane.f32.xlu0 %v1092
  %v1094 = vpop.xlane.xlu0 %1093
  %v1095 = vld [vmem:[%s2] sm:$0xff]
  %v1097 = vlaneseq
  %v1098 = vshrl.u32 %v1097, 7
  %v1099 = vsub.s32 0, %v1098
  %v1100 = vrot.slane %v1095, %v1099
  %1102 = vbcast.lane.b32.xlu0 %v1100, 256
  %v1103 = vpop.permute.xlu0 %1102
  %v1104 = vlaneseq
  %v1105 = vshrl.u32 %v1104, 7
  %v1106 = vsub.s32 1, %v1105
  %v1107 = vrot.slane %v1095, %v1106
  %1109 = vbcast.lane.b32.xlu0 %v1107, 256
  %v1110 = vpop.permute.xlu0 %1109
  %v1111 = vlaneseq
  %v1112 = vshrl.u32 %v1111, 7
  %v1113 = vsub.s32 2, %v1112
  %v1114 = vrot.slane %v1095, %v1113
  %1116 = vbcast.lane.b32.xlu0 %v1114, 256
  %v1117 = vpop.permute.xlu0 %1116
  %v1118 = vlaneseq
  %v1119 = vshrl.u32 %v1118, 7
  %v1120 = vsub.s32 3, %v1119
  %v1121 = vrot.slane %v1095, %v1120
  %1123 = vbcast.lane.b32.xlu0 %v1121, 256
  %v1124 = vpop.permute.xlu0 %1123
  %v1125 = vlaneseq
  %v1126 = vshrl.u32 %v1125, 7
  %v1127 = vsub.s32 4, %v1126
  %v1128 = vrot.slane %v1095, %v1127
  %1130 = vbcast.lane.b32.xlu0 %v1128, 256
  %v1131 = vpop.permute.xlu0 %1130
  %v1132 = vlaneseq
  %v1133 = vshrl.u32 %v1132, 7
  %v1134 = vsub.s32 5, %v1133
  %v1135 = vrot.slane %v1095, %v1134
  %1137 = vbcast.lane.b32.xlu0 %v1135, 256
  %v1138 = vpop.permute.xlu0 %1137
  %v1139 = vlaneseq
  %v1140 = vshrl.u32 %v1139, 7
  %v1141 = vsub.s32 6, %v1140
  %v1142 = vrot.slane %v1095, %v1141
  %1144 = vbcast.lane.b32.xlu0 %v1142, 256
  %v1145 = vpop.permute.xlu0 %1144
  %v1146 = vlaneseq
  %v1147 = vshrl.u32 %v1146, 7
  %v1148 = vsub.s32 7, %v1147
  %v1149 = vrot.slane %v1095, %v1148
  %1151 = vbcast.lane.b32.xlu0 %v1149, 256
  %v1152 = vpop.permute.xlu0 %1151
  %v1161 = vadd.f32 %v1073, %v1103
  %v1162 = vadd.f32 %v1076, %v1110
  %v1163 = vadd.f32 %v1079, %v1117
  %v1164 = vadd.f32 %v1082, %v1124
  %v1165 = vadd.f32 %v1085, %v1131
  %v1166 = vadd.f32 %v1088, %v1138
  %v1167 = vadd.f32 %v1091, %v1145
  %v1168 = vadd.f32 %v1094, %v1152
  %1177 = vset.pattern.permute.xlu0 0
  %1178 = vperm.xlu0 %1177, %v1161
  %v1179 = vpop.permute.xlu0 %1178
  %1180 = vset.pattern.permute.xlu0 0
  %1181 = vperm.xlu0 %1180, %v1162
  %v1182 = vpop.permute.xlu0 %1181
  %1183 = vset.pattern.permute.xlu0 0
  %1184 = vperm.xlu0 %1183, %v1163
  %v1185 = vpop.permute.xlu0 %1184
  %1186 = vset.pattern.permute.xlu0 0
  %1187 = vperm.xlu0 %1186, %v1164
  %v1188 = vpop.permute.xlu0 %1187
  %1189 = vset.pattern.permute.xlu0 0
  %1190 = vperm.xlu0 %1189, %v1165
  %v1191 = vpop.permute.xlu0 %1190
  %1192 = vset.pattern.permute.xlu0 0
  %1193 = vperm.xlu0 %1192, %v1166
  %v1194 = vpop.permute.xlu0 %1193
  %1195 = vset.pattern.permute.xlu0 0
  %1196 = vperm.xlu0 %1195, %v1167
  %v1197 = vpop.permute.xlu0 %1196
  %1198 = vset.pattern.permute.xlu0 0
  %1199 = vperm.xlu0 %1198, %v1168
  %v1200 = vpop.permute.xlu0 %1199
  %v1201 = vlaneseq
  %v1202 = vshrl.u32 %v1201, 7
  %v1203 = vsub.s32 %v33, %v1202
  %v1204 = vrot.slane %v1179, %v1203
  %v1205 = vlaneseq
  %v1206 = vshrl.u32 %v1205, 7
  %v1207 = vsub.s32 %v33, %v1206
  %v1208 = vrot.slane %v1182, %v1207
  %v1209 = vlaneseq
  %v1210 = vshrl.u32 %v1209, 7
  %v1211 = vsub.s32 %v33, %v1210
  %v1212 = vrot.slane %v1185, %v1211
  %v1213 = vlaneseq
  %v1214 = vshrl.u32 %v1213, 7
  %v1215 = vsub.s32 %v33, %v1214
  %v1216 = vrot.slane %v1188, %v1215
  %v1217 = vlaneseq
  %v1218 = vshrl.u32 %v1217, 7
  %v1219 = vsub.s32 %v33, %v1218
  %v1220 = vrot.slane %v1191, %v1219
  %v1221 = vlaneseq
  %v1222 = vshrl.u32 %v1221, 7
  %v1223 = vsub.s32 %v33, %v1222
  %v1224 = vrot.slane %v1194, %v1223
  %v1225 = vlaneseq
  %v1226 = vshrl.u32 %v1225, 7
  %v1227 = vsub.s32 %v33, %v1226
  %v1228 = vrot.slane %v1197, %v1227
  %v1229 = vlaneseq
  %v1230 = vshrl.u32 %v1229, 7
  %v1231 = vsub.s32 %v33, %v1230
  %v1232 = vrot.slane %v1200, %v1231
  %v1233 = vsel %vm217, %v1208, %v1204
  %v1234 = vsel %vm219, %v1212, %v1233
  %v1235 = vsel %vm221, %v1216, %v1234
  %v1236 = vsel %vm223, %v1220, %v1235
  %v1237 = vsel %vm225, %v1224, %v1236
  %v1238 = vsel %vm227, %v1228, %v1237
  %v1239 = vsel %vm229, %v1232, %v1238
  %v1241 = vsel %vm232, %v1239, -inf
  %1242 = vmax.xlane.f32.xlu0 %v1241
  %v1243 = vpop.xlane.xlu0 %1242
  %v1245 = vlaneseq
  %v1246 = vshrl.u32 %v1245, 7
  %v1247 = vsub.s32 0, %v1246
  %v1248 = vrot.slane %v1243, %v1247
  %v1249 = vlaneseq
  %v1250 = vshrl.u32 %v1249, 7
  %v1251 = vsub.s32 1, %v1250
  %v1252 = vrot.slane %v1243, %v1251
  %v1253 = vlaneseq
  %v1254 = vshrl.u32 %v1253, 7
  %v1255 = vsub.s32 2, %v1254
  %v1256 = vrot.slane %v1243, %v1255
  %v1257 = vlaneseq
  %v1258 = vshrl.u32 %v1257, 7
  %v1259 = vsub.s32 3, %v1258
  %v1260 = vrot.slane %v1243, %v1259
  %v1261 = vlaneseq
  %v1262 = vshrl.u32 %v1261, 7
  %v1263 = vsub.s32 4, %v1262
  %v1264 = vrot.slane %v1243, %v1263
  %v1265 = vlaneseq
  %v1266 = vshrl.u32 %v1265, 7
  %v1267 = vsub.s32 5, %v1266
  %v1268 = vrot.slane %v1243, %v1267
  %v1269 = vlaneseq
  %v1270 = vshrl.u32 %v1269, 7
  %v1271 = vsub.s32 6, %v1270
  %v1272 = vrot.slane %v1243, %v1271
  %v1273 = vlaneseq
  %v1274 = vshrl.u32 %v1273, 7
  %v1275 = vsub.s32 7, %v1274
  %v1276 = vrot.slane %v1243, %v1275
  %v1285 = vsub.f32 %v1161, %v1248
  %v1286 = vsub.f32 %v1162, %v1252
  %v1287 = vsub.f32 %v1163, %v1256
  %v1288 = vsub.f32 %v1164, %v1260
  %v1289 = vsub.f32 %v1165, %v1264
  %v1290 = vsub.f32 %v1166, %v1268
  %v1291 = vsub.f32 %v1167, %v1272
  %v1292 = vsub.f32 %v1168, %v1276
  %v1293 = vmul.f32 %v1285, 1.442695
  %v1294 = vpow.pop %v1293
  %v1295 = vmul.f32 %v1286, 1.442695
  %v1296 = vpow.pop %v1295
  %v1297 = vmul.f32 %v1287, 1.442695
  %v1298 = vpow.pop %v1297
  %v1299 = vmul.f32 %v1288, 1.442695
  %v1300 = vpow.pop %v1299
  %v1301 = vmul.f32 %v1289, 1.442695
  %v1302 = vpow.pop %v1301
  %v1303 = vmul.f32 %v1290, 1.442695
  %v1304 = vpow.pop %v1303
  %v1305 = vmul.f32 %v1291, 1.442695
  %v1306 = vpow.pop %v1305
  %v1307 = vmul.f32 %v1292, 1.442695
  %v1308 = vpow.pop %v1307
  %1317 = vset.pattern.permute.xlu0 0
  %1318 = vperm.xlu0 %1317, %v1294
  %v1319 = vpop.permute.xlu0 %1318
  %1320 = vset.pattern.permute.xlu0 0
  %1321 = vperm.xlu0 %1320, %v1296
  %v1322 = vpop.permute.xlu0 %1321
  %1323 = vset.pattern.permute.xlu0 0
  %1324 = vperm.xlu0 %1323, %v1298
  %v1325 = vpop.permute.xlu0 %1324
  %1326 = vset.pattern.permute.xlu0 0
  %1327 = vperm.xlu0 %1326, %v1300
  %v1328 = vpop.permute.xlu0 %1327
  %1329 = vset.pattern.permute.xlu0 0
  %1330 = vperm.xlu0 %1329, %v1302
  %v1331 = vpop.permute.xlu0 %1330
  %1332 = vset.pattern.permute.xlu0 0
  %1333 = vperm.xlu0 %1332, %v1304
  %v1334 = vpop.permute.xlu0 %1333
  %1335 = vset.pattern.permute.xlu0 0
  %1336 = vperm.xlu0 %1335, %v1306
  %v1337 = vpop.permute.xlu0 %1336
  %1338 = vset.pattern.permute.xlu0 0
  %1339 = vperm.xlu0 %1338, %v1308
  %v1340 = vpop.permute.xlu0 %1339
  %v1341 = vlaneseq
  %v1342 = vshrl.u32 %v1341, 7
  %v1343 = vsub.s32 %v33, %v1342
  %v1344 = vrot.slane %v1319, %v1343
  %v1345 = vlaneseq
  %v1346 = vshrl.u32 %v1345, 7
  %v1347 = vsub.s32 %v33, %v1346
  %v1348 = vrot.slane %v1322, %v1347
  %v1349 = vlaneseq
  %v1350 = vshrl.u32 %v1349, 7
  %v1351 = vsub.s32 %v33, %v1350
  %v1352 = vrot.slane %v1325, %v1351
  %v1353 = vlaneseq
  %v1354 = vshrl.u32 %v1353, 7
  %v1355 = vsub.s32 %v33, %v1354
  %v1356 = vrot.slane %v1328, %v1355
  %v1357 = vlaneseq
  %v1358 = vshrl.u32 %v1357, 7
  %v1359 = vsub.s32 %v33, %v1358
  %v1360 = vrot.slane %v1331, %v1359
  %v1361 = vlaneseq
  %v1362 = vshrl.u32 %v1361, 7
  %v1363 = vsub.s32 %v33, %v1362
  %v1364 = vrot.slane %v1334, %v1363
  %v1365 = vlaneseq
  %v1366 = vshrl.u32 %v1365, 7
  %v1367 = vsub.s32 %v33, %v1366
  %v1368 = vrot.slane %v1337, %v1367
  %v1369 = vlaneseq
  %v1370 = vshrl.u32 %v1369, 7
  %v1371 = vsub.s32 %v33, %v1370
  %v1372 = vrot.slane %v1340, %v1371
  %v1373 = vsel %vm217, %v1348, %v1344
  %v1374 = vsel %vm219, %v1352, %v1373
  %v1375 = vsel %vm221, %v1356, %v1374
  %v1376 = vsel %vm223, %v1360, %v1375
  %v1377 = vsel %vm225, %v1364, %v1376
  %v1378 = vsel %vm227, %v1368, %v1377
  %v1379 = vsel %vm229, %v1372, %v1378
  %v1381 = vsel %vm232, %v1379, 0.0
  %1382 = vadd.xlane.f32.xlu0 %v1381
  %v1383 = vpop.xlane.xlu0 %1382
  %v1385 = vlaneseq
  %v1386 = vshrl.u32 %v1385, 7
  %v1387 = vsub.s32 0, %v1386
  %v1388 = vrot.slane %v1383, %v1387
  %v1389 = vlaneseq
  %v1390 = vshrl.u32 %v1389, 7
  %v1391 = vsub.s32 1, %v1390
  %v1392 = vrot.slane %v1383, %v1391
  %v1393 = vlaneseq
  %v1394 = vshrl.u32 %v1393, 7
  %v1395 = vsub.s32 2, %v1394
  %v1396 = vrot.slane %v1383, %v1395
  %v1397 = vlaneseq
  %v1398 = vshrl.u32 %v1397, 7
  %v1399 = vsub.s32 3, %v1398
  %v1400 = vrot.slane %v1383, %v1399
  %v1401 = vlaneseq
  %v1402 = vshrl.u32 %v1401, 7
  %v1403 = vsub.s32 4, %v1402
  %v1404 = vrot.slane %v1383, %v1403
  %v1405 = vlaneseq
  %v1406 = vshrl.u32 %v1405, 7
  %v1407 = vsub.s32 5, %v1406
  %v1408 = vrot.slane %v1383, %v1407
  %v1409 = vlaneseq
  %v1410 = vshrl.u32 %v1409, 7
  %v1411 = vsub.s32 6, %v1410
  %v1412 = vrot.slane %v1383, %v1411
  %v1413 = vlaneseq
  %v1414 = vshrl.u32 %v1413, 7
  %v1415 = vsub.s32 7, %v1414
  %v1416 = vrot.slane %v1383, %v1415
  %v1425 = vrcp.pop %v1388
  %v1426 = vmul.f32 %v1294, %v1425
  %v1427 = vrcp.pop %v1392
  %v1428 = vmul.f32 %v1296, %v1427
  %v1429 = vrcp.pop %v1396
  %v1430 = vmul.f32 %v1298, %v1429
  %v1431 = vrcp.pop %v1400
  %v1432 = vmul.f32 %v1300, %v1431
  %v1433 = vrcp.pop %v1404
  %v1434 = vmul.f32 %v1302, %v1433
  %v1435 = vrcp.pop %v1408
  %v1436 = vmul.f32 %v1304, %v1435
  %v1437 = vrcp.pop %v1412
  %v1438 = vmul.f32 %v1306, %v1437
  %v1439 = vrcp.pop %v1416
  %v1440 = vmul.f32 %v1308, %v1439
  %v1441 = vld [vmem:[%s0] sm:$0xff]
  %v1442 = vld [vmem:[%s0 + $0x8] sm:$0xff]
  %v1443 = vld [vmem:[%s0 + $0x10] sm:$0xff]
  %v1444 = vld [vmem:[%s0 + $0x18] sm:$0xff]
  %v1445 = vld [vmem:[%s0 + $0x20] sm:$0xff]
  %v1446 = vld [vmem:[%s0 + $0x28] sm:$0xff]
  %v1447 = vld [vmem:[%s0 + $0x30] sm:$0xff]
  %v1448 = vld [vmem:[%s0 + $0x38] sm:$0xff]
  %1450 = vset.pattern.permute.xlu0 0
  %1451 = vperm.xlu0 %1450, %v1426
  %v1452 = vpop.permute.xlu0 %1451
  %1455 = vset.pattern.permute.xlu0 0
  %1456 = vperm.xlu0 %1455, %v1428
  %v1457 = vpop.permute.xlu0 %1456
  %1460 = vset.pattern.permute.xlu0 0
  %1461 = vperm.xlu0 %1460, %v1430
  %v1462 = vpop.permute.xlu0 %1461
  %1465 = vset.pattern.permute.xlu0 0
  %1466 = vperm.xlu0 %1465, %v1432
  %v1467 = vpop.permute.xlu0 %1466
  %1470 = vset.pattern.permute.xlu0 0
  %1471 = vperm.xlu0 %1470, %v1434
  %v1472 = vpop.permute.xlu0 %1471
  %1475 = vset.pattern.permute.xlu0 0
  %1476 = vperm.xlu0 %1475, %v1436
  %v1477 = vpop.permute.xlu0 %1476
  %1480 = vset.pattern.permute.xlu0 0
  %1481 = vperm.xlu0 %1480, %v1438
  %v1482 = vpop.permute.xlu0 %1481
  %1485 = vset.pattern.permute.xlu0 0
  %1486 = vperm.xlu0 %1485, %v1440
  %v1487 = vpop.permute.xlu0 %1486
  %v1489 = vmul.f32 %v1452, %v1441
  %v1490 = vmul.f32 %v1457, %v1442
  %v1491 = vmul.f32 %v1462, %v1443
  %v1492 = vmul.f32 %v1467, %v1444
  %v1493 = vmul.f32 %v1472, %v1445
  %v1494 = vmul.f32 %v1477, %v1446
  %v1495 = vmul.f32 %v1482, %v1447
  %v1496 = vmul.f32 %v1487, %v1448
  %v1497 = vsel %vm54, %v1489, 0.0
  %v1498 = vrot.slane %v1497, 4
  %v1499 = vadd.f32 %v1497, %v1498
  %v1500 = vrot.slane %v1499, 2
  %v1501 = vadd.f32 %v1499, %v1500
  %v1502 = vrot.slane %v1501, 1
  %v1503 = vadd.f32 %v1501, %v1502
  %v1504 = vsel %vm54, %v1490, 0.0
  %v1505 = vrot.slane %v1504, 4
  %v1506 = vadd.f32 %v1504, %v1505
  %v1507 = vrot.slane %v1506, 2
  %v1508 = vadd.f32 %v1506, %v1507
  %v1509 = vrot.slane %v1508, 1
  %v1510 = vadd.f32 %v1508, %v1509
  %v1511 = vsel %vm54, %v1491, 0.0
  %v1512 = vrot.slane %v1511, 4
  %v1513 = vadd.f32 %v1511, %v1512
  %v1514 = vrot.slane %v1513, 2
  %v1515 = vadd.f32 %v1513, %v1514
  %v1516 = vrot.slane %v1515, 1
  %v1517 = vadd.f32 %v1515, %v1516
  %v1518 = vsel %vm54, %v1492, 0.0
  %v1519 = vrot.slane %v1518, 4
  %v1520 = vadd.f32 %v1518, %v1519
  %v1521 = vrot.slane %v1520, 2
  %v1522 = vadd.f32 %v1520, %v1521
  %v1523 = vrot.slane %v1522, 1
  %v1524 = vadd.f32 %v1522, %v1523
  %v1525 = vsel %vm54, %v1493, 0.0
  %v1526 = vrot.slane %v1525, 4
  %v1527 = vadd.f32 %v1525, %v1526
  %v1528 = vrot.slane %v1527, 2
  %v1529 = vadd.f32 %v1527, %v1528
  %v1530 = vrot.slane %v1529, 1
  %v1531 = vadd.f32 %v1529, %v1530
  %v1532 = vsel %vm54, %v1494, 0.0
  %v1533 = vrot.slane %v1532, 4
  %v1534 = vadd.f32 %v1532, %v1533
  %v1535 = vrot.slane %v1534, 2
  %v1536 = vadd.f32 %v1534, %v1535
  %v1537 = vrot.slane %v1536, 1
  %v1538 = vadd.f32 %v1536, %v1537
  %v1539 = vsel %vm54, %v1495, 0.0
  %v1540 = vrot.slane %v1539, 4
  %v1541 = vadd.f32 %v1539, %v1540
  %v1542 = vrot.slane %v1541, 2
  %v1543 = vadd.f32 %v1541, %v1542
  %v1544 = vrot.slane %v1543, 1
  %v1545 = vadd.f32 %v1543, %v1544
  %v1546 = vsel %vm54, %v1496, 0.0
  %v1547 = vrot.slane %v1546, 4
  %v1548 = vadd.f32 %v1546, %v1547
  %v1549 = vrot.slane %v1548, 2
  %v1550 = vadd.f32 %v1548, %v1549
  %v1551 = vrot.slane %v1550, 1
  %v1552 = vadd.f32 %v1550, %v1551
  %v1553 = vld [vmem:[%s3] sm:$0xff]
  %v1554 = vld [vmem:[%s3 + $0x8] sm:$0xff]
  %v1555 = vld [vmem:[%s3 + $0x10] sm:$0xff]
  %v1556 = vld [vmem:[%s3 + $0x18] sm:$0xff]
  %v1557 = vld [vmem:[%s4] sm:$0xff]
  %v1558 = vld [vmem:[%s4 + $0x8] sm:$0xff]
  %v1559 = vld [vmem:[%s4 + $0x10] sm:$0xff]
  %v1560 = vld [vmem:[%s4 + $0x18] sm:$0xff]
  %v1561 = vld [vmem:[%s4 + $0x20] sm:$0xff]
  %v1562 = vld [vmem:[%s4 + $0x28] sm:$0xff]
  %v1563 = vld [vmem:[%s4 + $0x30] sm:$0xff]
  %v1564 = vld [vmem:[%s4 + $0x38] sm:$0xff]
  %v1565 = vld [vmem:[%s4 + $0x40] sm:$0xff]
  %v1566 = vld [vmem:[%s4 + $0x48] sm:$0xff]
  %v1567 = vld [vmem:[%s4 + $0x50] sm:$0xff]
  %v1568 = vld [vmem:[%s4 + $0x58] sm:$0xff]
  %v1569 = vld [vmem:[%s4 + $0x60] sm:$0xff]
  %v1570 = vld [vmem:[%s4 + $0x68] sm:$0xff]
  %v1571 = vld [vmem:[%s4 + $0x70] sm:$0xff]
  %v1572 = vld [vmem:[%s4 + $0x78] sm:$0xff]
  %1573 = vmatprep.subr.mxu0 0.0
  %1574 = vmatpush1.msra.mxu0 %v1557
  %1575 = vmatprep.subr.mxu0 0.0
  %1576 = vmatpush1.msra.mxu0 %v1558
  %1577 = vmatprep.subr.mxu0 0.0
  %1578 = vmatpush1.msra.mxu0 %v1559
  %1579 = vmatprep.subr.mxu0 0.0
  %1580 = vmatpush1.msra.mxu0 %v1560
  %1581 = vmatprep.subr.mxu0 0.0
  %1582 = vmatpush1.msra.mxu0 %v1561
  %1583 = vmatprep.subr.mxu0 0.0
  %1584 = vmatpush1.msra.mxu0 %v1562
  %1585 = vmatprep.subr.mxu0 0.0
  %1586 = vmatpush1.msra.mxu0 %v1563
  %1587 = vmatprep.subr.mxu0 0.0
  %1588 = vmatpush1.msra.mxu0 %v1564
  %1589 = vmatprep.subr.mxu0 0.0
  %1590 = vmatpush1.msra.mxu0 %v1565
  %1591 = vmatprep.subr.mxu0 0.0
  %1592 = vmatpush1.msra.mxu0 %v1566
  %1593 = vmatprep.subr.mxu0 0.0
  %1594 = vmatpush1.msra.mxu0 %v1567
  %1595 = vmatprep.subr.mxu0 0.0
  %1596 = vmatpush1.msra.mxu0 %v1568
  %1597 = vmatprep.subr.mxu0 0.0
  %1598 = vmatpush1.msra.mxu0 %v1569
  %1599 = vmatprep.subr.mxu0 0.0
  %1600 = vmatpush1.msra.mxu0 %v1570
  %1601 = vmatprep.subr.mxu0 0.0
  %1602 = vmatpush1.msra.mxu0 %v1571
  %1603 = vmatprep.subr.mxu0 0.0
  %1604 = vmatpush1.msra.mxu0 %v1572
  %1605 = vmatprep.subr.mxu0 0.0
  %1606 = vmatpush1.msra.mxu0 0.0
  %1607 = vmatprep.subr.mxu0 0.0
  %1608 = vmatpush1.msra.mxu0 0.0
  %1609 = vmatprep.subr.mxu0 0.0
  %1610 = vmatpush1.msra.mxu0 0.0
  %1611 = vmatprep.subr.mxu0 0.0
  %1612 = vmatpush1.msra.mxu0 0.0
  %1613 = vmatprep.subr.mxu0 0.0
  %1614 = vmatpush1.msra.mxu0 0.0
  %1615 = vmatprep.subr.mxu0 0.0
  %1616 = vmatpush1.msra.mxu0 0.0
  %1617 = vmatprep.subr.mxu0 0.0
  %1618 = vmatpush1.msra.mxu0 0.0
  %1619 = vmatprep.subr.mxu0 0.0
  %1620 = vmatpush1.msra.mxu0 0.0
  %1621 = vmatprep.subr.mxu0 0.0
  %1622 = vmatpush1.msra.mxu0 0.0
  %1623 = vmatprep.subr.mxu0 0.0
  %1624 = vmatpush1.msra.mxu0 0.0
  %1625 = vmatprep.subr.mxu0 0.0
  %1626 = vmatpush1.msra.mxu0 0.0
  %1627 = vmatprep.subr.mxu0 0.0
  %1628 = vmatpush1.msra.mxu0 0.0
  %1629 = vmatprep.subr.mxu0 0.0
  %1630 = vmatpush1.msra.mxu0 0.0
  %1631 = vmatprep.subr.mxu0 0.0
  %1632 = vmatpush1.msra.mxu0 0.0
  %1633 = vmatprep.subr.mxu0 0.0
  %1634 = vmatpush1.msra.mxu0 0.0
  %1635 = vmatprep.subr.mxu0 0.0
  %1636 = vmatpush1.msra.mxu0 0.0
  %1637 = vmatprep.mubr.f32.mxu0 0.0
  %1638 = vmatmul.mubr.f32.gmra.mrb[0].mxu0 %v949
  %v1639 = vpop.f32.mrb[0].mxu0
  %v1640 = vadd.f32 0.0, %v1639
  %v1641 = vpop.f32.mrb[0].mxu0
  %1642 = vdwg.mxu0
  %v1651 = vsel %vm217, %v1510, %v1503
  %v1652 = vsel %vm219, %v1517, %v1651
  %v1653 = vsel %vm221, %v1524, %v1652
  %v1654 = vsel %vm223, %v1531, %v1653
  %v1655 = vsel %vm225, %v1538, %v1654
  %v1656 = vsel %vm227, %v1545, %v1655
  %v1657 = vsel %vm229, %v1552, %v1656
  %v1658 = vsel %vm54, %v1657, 0
  %1660 = vmatprep.subr.mxu0 0.0
  %1661 = vmatpush1.msra.mxu0 %v1553
  %1662 = vmatprep.subr.mxu0 0.0
  %1663 = vmatpush1.msra.mxu0 %v1554
  %1664 = vmatprep.subr.mxu0 0.0
  %1665 = vmatpush1.msra.mxu0 %v1555
  %1666 = vmatprep.subr.mxu0 0.0
  %1667 = vmatpush1.msra.mxu0 %v1556
  %1668 = vmatprep.subr.mxu0 0.0
  %1669 = vmatpush1.msra.mxu0 0.0
  %1670 = vmatprep.subr.mxu0 0.0
  %1671 = vmatpush1.msra.mxu0 0.0
  %1672 = vmatprep.subr.mxu0 0.0
  %1673 = vmatpush1.msra.mxu0 0.0
  %1674 = vmatprep.subr.mxu0 0.0
  %1675 = vmatpush1.msra.mxu0 0.0
  %1676 = vmatprep.subr.mxu0 0.0
  %1677 = vmatpush1.msra.mxu0 0.0
  %1678 = vmatprep.subr.mxu0 0.0
  %1679 = vmatpush1.msra.mxu0 0.0
  %1680 = vmatprep.subr.mxu0 0.0
  %1681 = vmatpush1.msra.mxu0 0.0
  %1682 = vmatprep.subr.mxu0 0.0
  %1683 = vmatpush1.msra.mxu0 0.0
  %1684 = vmatprep.subr.mxu0 0.0
  %1685 = vmatpush1.msra.mxu0 0.0
  %1686 = vmatprep.subr.mxu0 0.0
  %1687 = vmatpush1.msra.mxu0 0.0
  %1688 = vmatprep.subr.mxu0 0.0
  %1689 = vmatpush1.msra.mxu0 0.0
  %1690 = vmatprep.subr.mxu0 0.0
  %1691 = vmatpush1.msra.mxu0 0.0
  %1692 = vmatprep.subr.mxu0 0.0
  %1693 = vmatpush1.msra.mxu0 0.0
  %1694 = vmatprep.subr.mxu0 0.0
  %1695 = vmatpush1.msra.mxu0 0.0
  %1696 = vmatprep.subr.mxu0 0.0
  %1697 = vmatpush1.msra.mxu0 0.0
  %1698 = vmatprep.subr.mxu0 0.0
  %1699 = vmatpush1.msra.mxu0 0.0
  %1700 = vmatprep.subr.mxu0 0.0
  %1701 = vmatpush1.msra.mxu0 0.0
  %1702 = vmatprep.subr.mxu0 0.0
  %1703 = vmatpush1.msra.mxu0 0.0
  %1704 = vmatprep.subr.mxu0 0.0
  %1705 = vmatpush1.msra.mxu0 0.0
  %1706 = vmatprep.subr.mxu0 0.0
  %1707 = vmatpush1.msra.mxu0 0.0
  %1708 = vmatprep.subr.mxu0 0.0
  %1709 = vmatpush1.msra.mxu0 0.0
  %1710 = vmatprep.subr.mxu0 0.0
  %1711 = vmatpush1.msra.mxu0 0.0
  %1712 = vmatprep.subr.mxu0 0.0
  %1713 = vmatpush1.msra.mxu0 0.0
  %1714 = vmatprep.subr.mxu0 0.0
  %1715 = vmatpush1.msra.mxu0 0.0
  %1716 = vmatprep.subr.mxu0 0.0
  %1717 = vmatpush1.msra.mxu0 0.0
  %1718 = vmatprep.subr.mxu0 0.0
  %1719 = vmatpush1.msra.mxu0 0.0
  %1720 = vmatprep.subr.mxu0 0.0
  %1721 = vmatpush1.msra.mxu0 0.0
  %1722 = vmatprep.subr.mxu0 0.0
  %1723 = vmatpush1.msra.mxu0 0.0
  %1724 = vmatprep.mubr.f32.mxu0 0.0
  %1725 = vmatmul.mubr.f32.gmra.mrb[0].mxu0 %v1658
  %v1726 = vpop.f32.mrb[0].mxu0
  %v1727 = vadd.f32 %v1640, %v1726
  %v1728 = vpop.f32.mrb[0].mxu0
  %1729 = vdwg.mxu0
  %v1730 = vld [vmem:[%s5] sm:$0xff]
  %v1731 = vld [vmem:[%s5 + $0x8] sm:$0xff]
  %v1732 = vld [vmem:[%s5 + $0x10] sm:$0xff]
  %v1733 = vld [vmem:[%s5 + $0x18] sm:$0xff]
  %v1734 = vld [vmem:[%s6] sm:$0x1]
  %v1736 = vlaneseq
  %v1737 = vshrl.u32 %v1736, 7
  %v1738 = vsub.s32 0, %v1737
  %v1739 = vrot.slane %v1734, %v1738
  %1741 = vmatprep.subr.mxu0 0.0
  %1742 = vmatpush1.msra.mxu0 %v1730
  %1743 = vmatprep.subr.mxu0 0.0
  %1744 = vmatpush1.msra.mxu0 %v1731
  %1745 = vmatprep.subr.mxu0 0.0
  %1746 = vmatpush1.msra.mxu0 %v1732
  %1747 = vmatprep.subr.mxu0 0.0
  %1748 = vmatpush1.msra.mxu0 %v1733
  %1749 = vmatprep.subr.mxu0 0.0
  %1750 = vmatpush1.msra.mxu0 0.0
  %1751 = vmatprep.subr.mxu0 0.0
  %1752 = vmatpush1.msra.mxu0 0.0
  %1753 = vmatprep.subr.mxu0 0.0
  %1754 = vmatpush1.msra.mxu0 0.0
  %1755 = vmatprep.subr.mxu0 0.0
  %1756 = vmatpush1.msra.mxu0 0.0
  %1757 = vmatprep.subr.mxu0 0.0
  %1758 = vmatpush1.msra.mxu0 0.0
  %1759 = vmatprep.subr.mxu0 0.0
  %1760 = vmatpush1.msra.mxu0 0.0
  %1761 = vmatprep.subr.mxu0 0.0
  %1762 = vmatpush1.msra.mxu0 0.0
  %1763 = vmatprep.subr.mxu0 0.0
  %1764 = vmatpush1.msra.mxu0 0.0
  %1765 = vmatprep.subr.mxu0 0.0
  %1766 = vmatpush1.msra.mxu0 0.0
  %1767 = vmatprep.subr.mxu0 0.0
  %1768 = vmatpush1.msra.mxu0 0.0
  %1769 = vmatprep.subr.mxu0 0.0
  %1770 = vmatpush1.msra.mxu0 0.0
  %1771 = vmatprep.subr.mxu0 0.0
  %1772 = vmatpush1.msra.mxu0 0.0
  %1773 = vmatprep.subr.mxu0 0.0
  %1774 = vmatpush1.msra.mxu0 0.0
  %1775 = vmatprep.subr.mxu0 0.0
  %1776 = vmatpush1.msra.mxu0 0.0
  %1777 = vmatprep.subr.mxu0 0.0
  %1778 = vmatpush1.msra.mxu0 0.0
  %1779 = vmatprep.subr.mxu0 0.0
  %1780 = vmatpush1.msra.mxu0 0.0
  %1781 = vmatprep.subr.mxu0 0.0
  %1782 = vmatpush1.msra.mxu0 0.0
  %1783 = vmatprep.subr.mxu0 0.0
  %1784 = vmatpush1.msra.mxu0 0.0
  %1785 = vmatprep.subr.mxu0 0.0
  %1786 = vmatpush1.msra.mxu0 0.0
  %1787 = vmatprep.subr.mxu0 0.0
  %1788 = vmatpush1.msra.mxu0 0.0
  %1789 = vmatprep.subr.mxu0 0.0
  %1790 = vmatpush1.msra.mxu0 0.0
  %1791 = vmatprep.subr.mxu0 0.0
  %1792 = vmatpush1.msra.mxu0 0.0
  %1793 = vmatprep.subr.mxu0 0.0
  %1794 = vmatpush1.msra.mxu0 0.0
  %1795 = vmatprep.subr.mxu0 0.0
  %1796 = vmatpush1.msra.mxu0 0.0
  %1797 = vmatprep.subr.mxu0 0.0
  %1798 = vmatpush1.msra.mxu0 0.0
  %1799 = vmatprep.subr.mxu0 0.0
  %1800 = vmatpush1.msra.mxu0 0.0
  %1801 = vmatprep.subr.mxu0 0.0
  %1802 = vmatpush1.msra.mxu0 0.0
  %1803 = vmatprep.subr.mxu0 0.0
  %1804 = vmatpush1.msra.mxu0 0.0
  %1805 = vmatprep.mubr.f32.mxu0 0.0
  %1806 = vmatmul.mubr.f32.gmra.mrb[0].mxu0 %v846
  %v1807 = vpop.f32.mrb[0].mxu0
  %v1808 = vadd.f32 %v1739, %v1807
  %v1809 = vpop.f32.mrb[0].mxu0
  %1810 = vdwg.mxu0
  %v1811 = vadd.f32 %v1727, %v1808
  %v1812 = vxor.u32 %v1811, 2147483648
  %v1813 = vmul.f32 %v1812, 1.442695
  %v1814 = vpow.pop %v1813
  %v1815 = vadd.f32 %v1814, 1.0
  %v1816 = vrcp.pop %v1815
  %v1817 = vmul.f32 1.0, %v1816
  %1819 = vrot.lane.b32.xlu0 %v1808, 64
  %v1820 = vpop.permute.xlu0 %1819
  %v1822 = vmul.f32 %v1817, %v1820
  %1824 = vrot.lane.b32.xlu0 %v1822, 64
  %v1825 = vpop.permute.xlu0 %1824
  %v1827 = vadd.f32 %v1727, %v1825
  %v1828 = vtanh.pop %v1827
  %v1829 = vsub.f32 1.0, %v1817
  %1831 = vrot.lane.b32.xlu0 %v1828, 96
  %v1832 = vpop.permute.xlu0 %1831
  %v1834 = vmul.f32 %v1829, %v1832
  %v1835 = vmul.f32 %v1817, %v831
  %v1836 = vadd.f32 %v1834, %v1835
  %v1837 = vld [vmem:[%s7] sm:$0xff]
  %v1838 = vld [vmem:[%s7 + $0x8] sm:$0xff]
  %v1839 = vld [vmem:[%s7 + $0x10] sm:$0xff]
  %v1840 = vld [vmem:[%s7 + $0x18] sm:$0xff]
  %v1841 = vld [vmem:[%s8] sm:$0x1]
  %v1843 = vlaneseq
  %v1844 = vshrl.u32 %v1843, 7
  %v1845 = vsub.s32 0, %v1844
  %v1846 = vrot.slane %v1841, %v1845
  %1849 = vrot.lane.b32.xlu0 %v1836, 96
  %v1850 = vpop.permute.xlu0 %1849
  %v1851 = vsel %vm54, %v1850, 0
  %1853 = vmatprep.subr.mxu0 0.0
  %1854 = vmatpush1.msra.mxu0 %v1837
  %1855 = vmatprep.subr.mxu0 0.0
  %1856 = vmatpush1.msra.mxu0 %v1838
  %1857 = vmatprep.subr.mxu0 0.0
  %1858 = vmatpush1.msra.mxu0 %v1839
  %1859 = vmatprep.subr.mxu0 0.0
  %1860 = vmatpush1.msra.mxu0 %v1840
  %1861 = vmatprep.subr.mxu0 0.0
  %1862 = vmatpush1.msra.mxu0 0.0
  %1863 = vmatprep.subr.mxu0 0.0
  %1864 = vmatpush1.msra.mxu0 0.0
  %1865 = vmatprep.subr.mxu0 0.0
  %1866 = vmatpush1.msra.mxu0 0.0
  %1867 = vmatprep.subr.mxu0 0.0
  %1868 = vmatpush1.msra.mxu0 0.0
  %1869 = vmatprep.subr.mxu0 0.0
  %1870 = vmatpush1.msra.mxu0 0.0
  %1871 = vmatprep.subr.mxu0 0.0
  %1872 = vmatpush1.msra.mxu0 0.0
  %1873 = vmatprep.subr.mxu0 0.0
  %1874 = vmatpush1.msra.mxu0 0.0
  %1875 = vmatprep.subr.mxu0 0.0
  %1876 = vmatpush1.msra.mxu0 0.0
  %1877 = vmatprep.subr.mxu0 0.0
  %1878 = vmatpush1.msra.mxu0 0.0
  %1879 = vmatprep.subr.mxu0 0.0
  %1880 = vmatpush1.msra.mxu0 0.0
  %1881 = vmatprep.subr.mxu0 0.0
  %1882 = vmatpush1.msra.mxu0 0.0
  %1883 = vmatprep.subr.mxu0 0.0
  %1884 = vmatpush1.msra.mxu0 0.0
  %1885 = vmatprep.subr.mxu0 0.0
  %1886 = vmatpush1.msra.mxu0 0.0
  %1887 = vmatprep.subr.mxu0 0.0
  %1888 = vmatpush1.msra.mxu0 0.0
  %1889 = vmatprep.subr.mxu0 0.0
  %1890 = vmatpush1.msra.mxu0 0.0
  %1891 = vmatprep.subr.mxu0 0.0
  %1892 = vmatpush1.msra.mxu0 0.0
  %1893 = vmatprep.subr.mxu0 0.0
  %1894 = vmatpush1.msra.mxu0 0.0
  %1895 = vmatprep.subr.mxu0 0.0
  %1896 = vmatpush1.msra.mxu0 0.0
  %1897 = vmatprep.subr.mxu0 0.0
  %1898 = vmatpush1.msra.mxu0 0.0
  %1899 = vmatprep.subr.mxu0 0.0
  %1900 = vmatpush1.msra.mxu0 0.0
  %1901 = vmatprep.subr.mxu0 0.0
  %1902 = vmatpush1.msra.mxu0 0.0
  %1903 = vmatprep.subr.mxu0 0.0
  %1904 = vmatpush1.msra.mxu0 0.0
  %1905 = vmatprep.subr.mxu0 0.0
  %1906 = vmatpush1.msra.mxu0 0.0
  %1907 = vmatprep.subr.mxu0 0.0
  %1908 = vmatpush1.msra.mxu0 0.0
  %1909 = vmatprep.subr.mxu0 0.0
  %1910 = vmatpush1.msra.mxu0 0.0
  %1911 = vmatprep.subr.mxu0 0.0
  %1912 = vmatpush1.msra.mxu0 0.0
  %1913 = vmatprep.subr.mxu0 0.0
  %1914 = vmatpush1.msra.mxu0 0.0
  %1915 = vmatprep.subr.mxu0 0.0
  %1916 = vmatpush1.msra.mxu0 0.0
  %1917 = vmatprep.mubr.f32.mxu0 0.0
  %1918 = vmatmul.mubr.f32.gmra.mrb[0].mxu0 %v1851
  %v1919 = vpop.f32.mrb[0].mxu0
  %v1920 = vadd.f32 %v1846, %v1919
  %v1921 = vpop.f32.mrb[0].mxu0
  %1922 = vdwg.mxu0
  %1923 = vmax.xlane.f32.xlu0 %v1920
  %v1924 = vpop.xlane.xlu0 %1923
  %v1925 = vsub.f32 %v1920, %v1924
  %v1926 = vmul.f32 %v1925, 1.442695
  %v1927 = vpow.pop %v1926
  %1928 = vadd.xlane.f32.xlu0 %v1927
  %v1929 = vpop.xlane.xlu0 %1928
  %v1930 = vlog2.pop %v1929
  %v1931 = vmul.f32 %v1930, 0.6931472
  %v1932 = vadd.f32 %v1924, %v1931
  %v1933 = vsub.f32 %v1920, %v1932
  %s1934 = scalar_lea.vmem %s9, 16
  %1935 = vst [vmem:[%s1934] sm:$0xff] %v1933
  %vm1936 = vcmp.ge.f32.partialorder %v1920, %v1924
  %v1937 = vsel %vm1936, %v33, 128
  %v1938 = vand.u32 %v1937, 65535
  %v1939 = vshra.s32 %v1937, 16
  %v1940 = vcvt.s32.f32 %v1938
  %v1941 = vcvt.s32.f32 %v1939
  %1942 = vmin.xlane.f32.xlu0 %v1941
  %v1943 = vpop.xlane.xlu0 %1942
  %vm1944 = vcmp.eq.f32.partialorder %v1941, %v1943
  %v1945 = vsel %vm1944, %v1940, inf
  %1946 = vmin.xlane.f32.xlu0 %v1945
  %v1947 = vpop.xlane.xlu0 %1946
  %v1948 = vcvt.f32.s32 %v1947
  %v1949 = vcvt.f32.s32 %v1943
  %v1950 = vshll.u32 %v1949, 16
  %v1951 = vadd.s32 %v1950, %v1948
  %vm1952 = vcmp.eq.s32.totalorder %v33, %v1951
  %v1953 = vsel %vm1952, 1, 0
  %v1954 = vcvt.s32.f32 %v1953
  %v1955 = vld [vmem:[%s1] sm:$0xff]
  %v1956 = vld [vmem:[%s1 + $0x8] sm:$0xff]
  %v1957 = vld [vmem:[%s1 + $0x10] sm:$0xff]
  %v1958 = vld [vmem:[%s1 + $0x18] sm:$0xff]
  %v1959 = vld [vmem:[%s1 + $0x20] sm:$0xff]
  %v1960 = vld [vmem:[%s1 + $0x28] sm:$0xff]
  %v1961 = vld [vmem:[%s1 + $0x30] sm:$0xff]
  %v1962 = vld [vmem:[%s1 + $0x38] sm:$0xff]
  %v1963 = vcombine.high %v1836, %v1836
  %v1965 = vunpack.c.l.s4 1966171168
  %v1966 = vunpack.c.0.s8 %v1965
  %v1967 = vlaneseq
  %v1968 = vshrl.u32 %v1967, 7
  %v1969 = vsub.s32 %v1966, %v1968
  %v1970 = vrot.slane %v1836, %v1969
  %v1972 = vunpack.c.l.s4 1966171168
  %v1973 = vunpack.c.0.s8 %v1972
  %v1974 = vlaneseq
  %v1975 = vshrl.u32 %v1974, 7
  %v1976 = vsub.s32 %v1973, %v1975
  %v1977 = vrot.slane %v1963, %v1976
  %v1978 = vcombine.high %v1970, %v1970
  %v1979 = vcombine.high %v1977, %v1977
  %v1981 = vunpack.c.l.s4 1966171168
  %v1982 = vunpack.c.0.s8 %v1981
  %v1983 = vlaneseq
  %v1984 = vshrl.u32 %v1983, 7
  %v1985 = vsub.s32 %v1982, %v1984
  %v1986 = vrot.slane %v1970, %v1985
  %v1988 = vunpack.c.l.s4 1966171168
  %v1989 = vunpack.c.0.s8 %v1988
  %v1990 = vlaneseq
  %v1991 = vshrl.u32 %v1990, 7
  %v1992 = vsub.s32 %v1989, %v1991
  %v1993 = vrot.slane %v1977, %v1992
  %v1995 = vunpack.c.l.s4 1966171168
  %v1996 = vunpack.c.0.s8 %v1995
  %v1997 = vlaneseq
  %v1998 = vshrl.u32 %v1997, 7
  %v1999 = vsub.s32 %v1996, %v1998
  %v2000 = vrot.slane %v1978, %v1999
  %v2002 = vunpack.c.l.s4 1966171168
  %v2003 = vunpack.c.0.s8 %v2002
  %v2004 = vlaneseq
  %v2005 = vshrl.u32 %v2004, 7
  %v2006 = vsub.s32 %v2003, %v2005
  %v2007 = vrot.slane %v1979, %v2006
  %v2008 = vcombine.high %v1986, %v1986
  %v2009 = vcombine.high %v1993, %v1993
  %v2010 = vcombine.high %v2000, %v2000
  %v2011 = vcombine.high %v2007, %v2007
  %v2012 = vlaneseq
  %v2013 = vshrl.u32 %v2012, 7
  %v2014 = vsub.s32 0, %v2013
  %v2015 = vrot.slane %v1986, %v2014
  %v2016 = vlaneseq
  %v2017 = vshrl.u32 %v2016, 7
  %v2018 = vsub.s32 0, %v2017
  %v2019 = vrot.slane %v2000, %v2018
  %v2020 = vlaneseq
  %v2021 = vshrl.u32 %v2020, 7
  %v2022 = vsub.s32 0, %v2021
  %v2023 = vrot.slane %v2008, %v2022
  %v2024 = vlaneseq
  %v2025 = vshrl.u32 %v2024, 7
  %v2026 = vsub.s32 0, %v2025
  %v2027 = vrot.slane %v2010, %v2026
  %v2028 = vlaneseq
  %v2029 = vshrl.u32 %v2028, 7
  %v2030 = vsub.s32 0, %v2029
  %v2031 = vrot.slane %v1993, %v2030
  %v2032 = vlaneseq
  %v2033 = vshrl.u32 %v2032, 7
  %v2034 = vsub.s32 0, %v2033
  %v2035 = vrot.slane %v2007, %v2034
  %v2036 = vlaneseq
  %v2037 = vshrl.u32 %v2036, 7
  %v2038 = vsub.s32 0, %v2037
  %v2039 = vrot.slane %v2009, %v2038
  %v2040 = vlaneseq
  %v2041 = vshrl.u32 %v2040, 7
  %v2042 = vsub.s32 0, %v2041
  %v2043 = vrot.slane %v2011, %v2042
  %2044 = vrot.lane.b32.xlu0 %v2015, 96
  %v2045 = vpop.permute.xlu0 %2044
  %2046 = vrot.lane.b32.xlu0 %v2019, 96
  %v2047 = vpop.permute.xlu0 %2046
  %2048 = vrot.lane.b32.xlu0 %v2023, 96
  %v2049 = vpop.permute.xlu0 %2048
  %2050 = vrot.lane.b32.xlu0 %v2027, 96
  %v2051 = vpop.permute.xlu0 %2050
  %2052 = vrot.lane.b32.xlu0 %v2031, 96
  %v2053 = vpop.permute.xlu0 %2052
  %2054 = vrot.lane.b32.xlu0 %v2035, 96
  %v2055 = vpop.permute.xlu0 %2054
  %2056 = vrot.lane.b32.xlu0 %v2039, 96
  %v2057 = vpop.permute.xlu0 %2056
  %2058 = vrot.lane.b32.xlu0 %v2043, 96
  %v2059 = vpop.permute.xlu0 %2058
  %v2068 = vmul.f32 %v1955, %v2045
  %v2069 = vmul.f32 %v1956, %v2047
  %v2070 = vmul.f32 %v1957, %v2049
  %v2071 = vmul.f32 %v1958, %v2051
  %v2072 = vmul.f32 %v1959, %v2053
  %v2073 = vmul.f32 %v1960, %v2055
  %v2074 = vmul.f32 %v1961, %v2057
  %v2075 = vmul.f32 %v1962, %v2059
  %v2076 = vsel %vm54, %v2068, 0.0
  %2077 = vadd.xlane.f32.xlu0 %v2076
  %v2078 = vpop.xlane.xlu0 %2077
  %v2079 = vsel %vm54, %v2069, 0.0
  %2080 = vadd.xlane.f32.xlu0 %v2079
  %v2081 = vpop.xlane.xlu0 %2080
  %v2082 = vsel %vm54, %v2070, 0.0
  %2083 = vadd.xlane.f32.xlu0 %v2082
  %v2084 = vpop.xlane.xlu0 %2083
  %v2085 = vsel %vm54, %v2071, 0.0
  %2086 = vadd.xlane.f32.xlu0 %v2085
  %v2087 = vpop.xlane.xlu0 %2086
  %v2088 = vsel %vm54, %v2072, 0.0
  %2089 = vadd.xlane.f32.xlu0 %v2088
  %v2090 = vpop.xlane.xlu0 %2089
  %v2091 = vsel %vm54, %v2073, 0.0
  %2092 = vadd.xlane.f32.xlu0 %v2091
  %v2093 = vpop.xlane.xlu0 %2092
  %v2094 = vsel %vm54, %v2074, 0.0
  %2095 = vadd.xlane.f32.xlu0 %v2094
  %v2096 = vpop.xlane.xlu0 %2095
  %v2097 = vsel %vm54, %v2075, 0.0
  %2098 = vadd.xlane.f32.xlu0 %v2097
  %v2099 = vpop.xlane.xlu0 %2098
  %v2100 = vld [vmem:[%s2] sm:$0xff]
  %v2102 = vlaneseq
  %v2103 = vshrl.u32 %v2102, 7
  %v2104 = vsub.s32 0, %v2103
  %v2105 = vrot.slane %v2100, %v2104
  %2107 = vbcast.lane.b32.xlu0 %v2105, 256
  %v2108 = vpop.permute.xlu0 %2107
  %v2109 = vlaneseq
  %v2110 = vshrl.u32 %v2109, 7
  %v2111 = vsub.s32 1, %v2110
  %v2112 = vrot.slane %v2100, %v2111
  %2114 = vbcast.lane.b32.xlu0 %v2112, 256
  %v2115 = vpop.permute.xlu0 %2114
  %v2116 = vlaneseq
  %v2117 = vshrl.u32 %v2116, 7
  %v2118 = vsub.s32 2, %v2117
  %v2119 = vrot.slane %v2100, %v2118
  %2121 = vbcast.lane.b32.xlu0 %v2119, 256
  %v2122 = vpop.permute.xlu0 %2121
  %v2123 = vlaneseq
  %v2124 = vshrl.u32 %v2123, 7
  %v2125 = vsub.s32 3, %v2124
  %v2126 = vrot.slane %v2100, %v2125
  %2128 = vbcast.lane.b32.xlu0 %v2126, 256
  %v2129 = vpop.permute.xlu0 %2128
  %v2130 = vlaneseq
  %v2131 = vshrl.u32 %v2130, 7
  %v2132 = vsub.s32 4, %v2131
  %v2133 = vrot.slane %v2100, %v2132
  %2135 = vbcast.lane.b32.xlu0 %v2133, 256
  %v2136 = vpop.permute.xlu0 %2135
  %v2137 = vlaneseq
  %v2138 = vshrl.u32 %v2137, 7
  %v2139 = vsub.s32 5, %v2138
  %v2140 = vrot.slane %v2100, %v2139
  %2142 = vbcast.lane.b32.xlu0 %v2140, 256
  %v2143 = vpop.permute.xlu0 %2142
  %v2144 = vlaneseq
  %v2145 = vshrl.u32 %v2144, 7
  %v2146 = vsub.s32 6, %v2145
  %v2147 = vrot.slane %v2100, %v2146
  %2149 = vbcast.lane.b32.xlu0 %v2147, 256
  %v2150 = vpop.permute.xlu0 %2149
  %v2151 = vlaneseq
  %v2152 = vshrl.u32 %v2151, 7
  %v2153 = vsub.s32 7, %v2152
  %v2154 = vrot.slane %v2100, %v2153
  %2156 = vbcast.lane.b32.xlu0 %v2154, 256
  %v2157 = vpop.permute.xlu0 %2156
  %v2166 = vadd.f32 %v2078, %v2108
  %v2167 = vadd.f32 %v2081, %v2115
  %v2168 = vadd.f32 %v2084, %v2122
  %v2169 = vadd.f32 %v2087, %v2129
  %v2170 = vadd.f32 %v2090, %v2136
  %v2171 = vadd.f32 %v2093, %v2143
  %v2172 = vadd.f32 %v2096, %v2150
  %v2173 = vadd.f32 %v2099, %v2157
  %2182 = vset.pattern.permute.xlu0 0
  %2183 = vperm.xlu0 %2182, %v2166
  %v2184 = vpop.permute.xlu0 %2183
  %2185 = vset.pattern.permute.xlu0 0
  %2186 = vperm.xlu0 %2185, %v2167
  %v2187 = vpop.permute.xlu0 %2186
  %2188 = vset.pattern.permute.xlu0 0
  %2189 = vperm.xlu0 %2188, %v2168
  %v2190 = vpop.permute.xlu0 %2189
  %2191 = vset.pattern.permute.xlu0 0
  %2192 = vperm.xlu0 %2191, %v2169
  %v2193 = vpop.permute.xlu0 %2192
  %2194 = vset.pattern.permute.xlu0 0
  %2195 = vperm.xlu0 %2194, %v2170
  %v2196 = vpop.permute.xlu0 %2195
  %2197 = vset.pattern.permute.xlu0 0
  %2198 = vperm.xlu0 %2197, %v2171
  %v2199 = vpop.permute.xlu0 %2198
  %2200 = vset.pattern.permute.xlu0 0
  %2201 = vperm.xlu0 %2200, %v2172
  %v2202 = vpop.permute.xlu0 %2201
  %2203 = vset.pattern.permute.xlu0 0
  %2204 = vperm.xlu0 %2203, %v2173
  %v2205 = vpop.permute.xlu0 %2204
  %v2206 = vlaneseq
  %v2207 = vshrl.u32 %v2206, 7
  %v2208 = vsub.s32 %v33, %v2207
  %v2209 = vrot.slane %v2184, %v2208
  %v2210 = vlaneseq
  %v2211 = vshrl.u32 %v2210, 7
  %v2212 = vsub.s32 %v33, %v2211
  %v2213 = vrot.slane %v2187, %v2212
  %v2214 = vlaneseq
  %v2215 = vshrl.u32 %v2214, 7
  %v2216 = vsub.s32 %v33, %v2215
  %v2217 = vrot.slane %v2190, %v2216
  %v2218 = vlaneseq
  %v2219 = vshrl.u32 %v2218, 7
  %v2220 = vsub.s32 %v33, %v2219
  %v2221 = vrot.slane %v2193, %v2220
  %v2222 = vlaneseq
  %v2223 = vshrl.u32 %v2222, 7
  %v2224 = vsub.s32 %v33, %v2223
  %v2225 = vrot.slane %v2196, %v2224
  %v2226 = vlaneseq
  %v2227 = vshrl.u32 %v2226, 7
  %v2228 = vsub.s32 %v33, %v2227
  %v2229 = vrot.slane %v2199, %v2228
  %v2230 = vlaneseq
  %v2231 = vshrl.u32 %v2230, 7
  %v2232 = vsub.s32 %v33, %v2231
  %v2233 = vrot.slane %v2202, %v2232
  %v2234 = vlaneseq
  %v2235 = vshrl.u32 %v2234, 7
  %v2236 = vsub.s32 %v33, %v2235
  %v2237 = vrot.slane %v2205, %v2236
  %v2238 = vsel %vm217, %v2213, %v2209
  %v2239 = vsel %vm219, %v2217, %v2238
  %v2240 = vsel %vm221, %v2221, %v2239
  %v2241 = vsel %vm223, %v2225, %v2240
  %v2242 = vsel %vm225, %v2229, %v2241
  %v2243 = vsel %vm227, %v2233, %v2242
  %v2244 = vsel %vm229, %v2237, %v2243
  %v2246 = vsel %vm232, %v2244, -inf
  %2247 = vmax.xlane.f32.xlu0 %v2246
  %v2248 = vpop.xlane.xlu0 %2247
  %v2250 = vlaneseq
  %v2251 = vshrl.u32 %v2250, 7
  %v2252 = vsub.s32 0, %v2251
  %v2253 = vrot.slane %v2248, %v2252
  %v2254 = vlaneseq
  %v2255 = vshrl.u32 %v2254, 7
  %v2256 = vsub.s32 1, %v2255
  %v2257 = vrot.slane %v2248, %v2256
  %v2258 = vlaneseq
  %v2259 = vshrl.u32 %v2258, 7
  %v2260 = vsub.s32 2, %v2259
  %v2261 = vrot.slane %v2248, %v2260
  %v2262 = vlaneseq
  %v2263 = vshrl.u32 %v2262, 7
  %v2264 = vsub.s32 3, %v2263
  %v2265 = vrot.slane %v2248, %v2264
  %v2266 = vlaneseq
  %v2267 = vshrl.u32 %v2266, 7
  %v2268 = vsub.s32 4, %v2267
  %v2269 = vrot.slane %v2248, %v2268
  %v2270 = vlaneseq
  %v2271 = vshrl.u32 %v2270, 7
  %v2272 = vsub.s32 5, %v2271
  %v2273 = vrot.slane %v2248, %v2272
  %v2274 = vlaneseq
  %v2275 = vshrl.u32 %v2274, 7
  %v2276 = vsub.s32 6, %v2275
  %v2277 = vrot.slane %v2248, %v2276
  %v2278 = vlaneseq
  %v2279 = vshrl.u32 %v2278, 7
  %v2280 = vsub.s32 7, %v2279
  %v2281 = vrot.slane %v2248, %v2280
  %v2290 = vsub.f32 %v2166, %v2253
  %v2291 = vsub.f32 %v2167, %v2257
  %v2292 = vsub.f32 %v2168, %v2261
  %v2293 = vsub.f32 %v2169, %v2265
  %v2294 = vsub.f32 %v2170, %v2269
  %v2295 = vsub.f32 %v2171, %v2273
  %v2296 = vsub.f32 %v2172, %v2277
  %v2297 = vsub.f32 %v2173, %v2281
  %v2298 = vmul.f32 %v2290, 1.442695
  %v2299 = vpow.pop %v2298
  %v2300 = vmul.f32 %v2291, 1.442695
  %v2301 = vpow.pop %v2300
  %v2302 = vmul.f32 %v2292, 1.442695
  %v2303 = vpow.pop %v2302
  %v2304 = vmul.f32 %v2293, 1.442695
  %v2305 = vpow.pop %v2304
  %v2306 = vmul.f32 %v2294, 1.442695
  %v2307 = vpow.pop %v2306
  %v2308 = vmul.f32 %v2295, 1.442695
  %v2309 = vpow.pop %v2308
  %v2310 = vmul.f32 %v2296, 1.442695
  %v2311 = vpow.pop %v2310
  %v2312 = vmul.f32 %v2297, 1.442695
  %v2313 = vpow.pop %v2312
  %2322 = vset.pattern.permute.xlu0 0
  %2323 = vperm.xlu0 %2322, %v2299
  %v2324 = vpop.permute.xlu0 %2323
  %2325 = vset.pattern.permute.xlu0 0
  %2326 = vperm.xlu0 %2325, %v2301
  %v2327 = vpop.permute.xlu0 %2326
  %2328 = vset.pattern.permute.xlu0 0
  %2329 = vperm.xlu0 %2328, %v2303
  %v2330 = vpop.permute.xlu0 %2329
  %2331 = vset.pattern.permute.xlu0 0
  %2332 = vperm.xlu0 %2331, %v2305
  %v2333 = vpop.permute.xlu0 %2332
  %2334 = vset.pattern.permute.xlu0 0
  %2335 = vperm.xlu0 %2334, %v2307
  %v2336 = vpop.permute.xlu0 %2335
  %2337 = vset.pattern.permute.xlu0 0
  %2338 = vperm.xlu0 %2337, %v2309
  %v2339 = vpop.permute.xlu0 %2338
  %2340 = vset.pattern.permute.xlu0 0
  %2341 = vperm.xlu0 %2340, %v2311
  %v2342 = vpop.permute.xlu0 %2341
  %2343 = vset.pattern.permute.xlu0 0
  %2344 = vperm.xlu0 %2343, %v2313
  %v2345 = vpop.permute.xlu0 %2344
  %v2346 = vlaneseq
  %v2347 = vshrl.u32 %v2346, 7
  %v2348 = vsub.s32 %v33, %v2347
  %v2349 = vrot.slane %v2324, %v2348
  %v2350 = vlaneseq
  %v2351 = vshrl.u32 %v2350, 7
  %v2352 = vsub.s32 %v33, %v2351
  %v2353 = vrot.slane %v2327, %v2352
  %v2354 = vlaneseq
  %v2355 = vshrl.u32 %v2354, 7
  %v2356 = vsub.s32 %v33, %v2355
  %v2357 = vrot.slane %v2330, %v2356
  %v2358 = vlaneseq
  %v2359 = vshrl.u32 %v2358, 7
  %v2360 = vsub.s32 %v33, %v2359
  %v2361 = vrot.slane %v2333, %v2360
  %v2362 = vlaneseq
  %v2363 = vshrl.u32 %v2362, 7
  %v2364 = vsub.s32 %v33, %v2363
  %v2365 = vrot.slane %v2336, %v2364
  %v2366 = vlaneseq
  %v2367 = vshrl.u32 %v2366, 7
  %v2368 = vsub.s32 %v33, %v2367
  %v2369 = vrot.slane %v2339, %v2368
  %v2370 = vlaneseq
  %v2371 = vshrl.u32 %v2370, 7
  %v2372 = vsub.s32 %v33, %v2371
  %v2373 = vrot.slane %v2342, %v2372
  %v2374 = vlaneseq
  %v2375 = vshrl.u32 %v2374, 7
  %v2376 = vsub.s32 %v33, %v2375
  %v2377 = vrot.slane %v2345, %v2376
  %v2378 = vsel %vm217, %v2353, %v2349
  %v2379 = vsel %vm219, %v2357, %v2378
  %v2380 = vsel %vm221, %v2361, %v2379
  %v2381 = vsel %vm223, %v2365, %v2380
  %v2382 = vsel %vm225, %v2369, %v2381
  %v2383 = vsel %vm227, %v2373, %v2382
  %v2384 = vsel %vm229, %v2377, %v2383
  %v2386 = vsel %vm232, %v2384, 0.0
  %2387 = vadd.xlane.f32.xlu0 %v2386
  %v2388 = vpop.xlane.xlu0 %2387
  %v2390 = vlaneseq
  %v2391 = vshrl.u32 %v2390, 7
  %v2392 = vsub.s32 0, %v2391
  %v2393 = vrot.slane %v2388, %v2392
  %v2394 = vlaneseq
  %v2395 = vshrl.u32 %v2394, 7
  %v2396 = vsub.s32 1, %v2395
  %v2397 = vrot.slane %v2388, %v2396
  %v2398 = vlaneseq
  %v2399 = vshrl.u32 %v2398, 7
  %v2400 = vsub.s32 2, %v2399
  %v2401 = vrot.slane %v2388, %v2400
  %v2402 = vlaneseq
  %v2403 = vshrl.u32 %v2402, 7
  %v2404 = vsub.s32 3, %v2403
  %v2405 = vrot.slane %v2388, %v2404
  %v2406 = vlaneseq
  %v2407 = vshrl.u32 %v2406, 7
  %v2408 = vsub.s32 4, %v2407
  %v2409 = vrot.slane %v2388, %v2408
  %v2410 = vlaneseq
  %v2411 = vshrl.u32 %v2410, 7
  %v2412 = vsub.s32 5, %v2411
  %v2413 = vrot.slane %v2388, %v2412
  %v2414 = vlaneseq
  %v2415 = vshrl.u32 %v2414, 7
  %v2416 = vsub.s32 6, %v2415
  %v2417 = vrot.slane %v2388, %v2416
  %v2418 = vlaneseq
  %v2419 = vshrl.u32 %v2418, 7
  %v2420 = vsub.s32 7, %v2419
  %v2421 = vrot.slane %v2388, %v2420
  %v2430 = vrcp.pop %v2393
  %v2431 = vmul.f32 %v2299, %v2430
  %v2432 = vrcp.pop %v2397
  %v2433 = vmul.f32 %v2301, %v2432
  %v2434 = vrcp.pop %v2401
  %v2435 = vmul.f32 %v2303, %v2434
  %v2436 = vrcp.pop %v2405
  %v2437 = vmul.f32 %v2305, %v2436
  %v2438 = vrcp.pop %v2409
  %v2439 = vmul.f32 %v2307, %v2438
  %v2440 = vrcp.pop %v2413
  %v2441 = vmul.f32 %v2309, %v2440
  %v2442 = vrcp.pop %v2417
  %v2443 = vmul.f32 %v2311, %v2442
  %v2444 = vrcp.pop %v2421
  %v2445 = vmul.f32 %v2313, %v2444
  %v2446 = vld [vmem:[%s0] sm:$0xff]
  %v2447 = vld [vmem:[%s0 + $0x8] sm:$0xff]
  %v2448 = vld [vmem:[%s0 + $0x10] sm:$0xff]
  %v2449 = vld [vmem:[%s0 + $0x18] sm:$0xff]
  %v2450 = vld [vmem:[%s0 + $0x20] sm:$0xff]
  %v2451 = vld [vmem:[%s0 + $0x28] sm:$0xff]
  %v2452 = vld [vmem:[%s0 + $0x30] sm:$0xff]
  %v2453 = vld [vmem:[%s0 + $0x38] sm:$0xff]
  %2455 = vset.pattern.permute.xlu0 0
  %2456 = vperm.xlu0 %2455, %v2431
  %v2457 = vpop.permute.xlu0 %2456
  %2460 = vset.pattern.permute.xlu0 0
  %2461 = vperm.xlu0 %2460, %v2433
  %v2462 = vpop.permute.xlu0 %2461
  %2465 = vset.pattern.permute.xlu0 0
  %2466 = vperm.xlu0 %2465, %v2435
  %v2467 = vpop.permute.xlu0 %2466
  %2470 = vset.pattern.permute.xlu0 0
  %2471 = vperm.xlu0 %2470, %v2437
  %v2472 = vpop.permute.xlu0 %2471
  %2475 = vset.pattern.permute.xlu0 0
  %2476 = vperm.xlu0 %2475, %v2439
  %v2477 = vpop.permute.xlu0 %2476
  %2480 = vset.pattern.permute.xlu0 0
  %2481 = vperm.xlu0 %2480, %v2441
  %v2482 = vpop.permute.xlu0 %2481
  %2485 = vset.pattern.permute.xlu0 0
  %2486 = vperm.xlu0 %2485, %v2443
  %v2487 = vpop.permute.xlu0 %2486
  %2490 = vset.pattern.permute.xlu0 0
  %2491 = vperm.xlu0 %2490, %v2445
  %v2492 = vpop.permute.xlu0 %2491
  %v2494 = vmul.f32 %v2457, %v2446
  %v2495 = vmul.f32 %v2462, %v2447
  %v2496 = vmul.f32 %v2467, %v2448
  %v2497 = vmul.f32 %v2472, %v2449
  %v2498 = vmul.f32 %v2477, %v2450
  %v2499 = vmul.f32 %v2482, %v2451
  %v2500 = vmul.f32 %v2487, %v2452
  %v2501 = vmul.f32 %v2492, %v2453
  %v2502 = vsel %vm54, %v2494, 0.0
  %v2503 = vrot.slane %v2502, 4
  %v2504 = vadd.f32 %v2502, %v2503
  %v2505 = vrot.slane %v2504, 2
  %v2506 = vadd.f32 %v2504, %v2505
  %v2507 = vrot.slane %v2506, 1
  %v2508 = vadd.f32 %v2506, %v2507
  %v2509 = vsel %vm54, %v2495, 0.0
  %v2510 = vrot.slane %v2509, 4
  %v2511 = vadd.f32 %v2509, %v2510
  %v2512 = vrot.slane %v2511, 2
  %v2513 = vadd.f32 %v2511, %v2512
  %v2514 = vrot.slane %v2513, 1
  %v2515 = vadd.f32 %v2513, %v2514
  %v2516 = vsel %vm54, %v2496, 0.0
  %v2517 = vrot.slane %v2516, 4
  %v2518 = vadd.f32 %v2516, %v2517
  %v2519 = vrot.slane %v2518, 2
  %v2520 = vadd.f32 %v2518, %v2519
  %v2521 = vrot.slane %v2520, 1
  %v2522 = vadd.f32 %v2520, %v2521
  %v2523 = vsel %vm54, %v2497, 0.0
  %v2524 = vrot.slane %v2523, 4
  %v2525 = vadd.f32 %v2523, %v2524
  %v2526 = vrot.slane %v2525, 2
  %v2527 = vadd.f32 %v2525, %v2526
  %v2528 = vrot.slane %v2527, 1
  %v2529 = vadd.f32 %v2527, %v2528
  %v2530 = vsel %vm54, %v2498, 0.0
  %v2531 = vrot.slane %v2530, 4
  %v2532 = vadd.f32 %v2530, %v2531
  %v2533 = vrot.slane %v2532, 2
  %v2534 = vadd.f32 %v2532, %v2533
  %v2535 = vrot.slane %v2534, 1
  %v2536 = vadd.f32 %v2534, %v2535
  %v2537 = vsel %vm54, %v2499, 0.0
  %v2538 = vrot.slane %v2537, 4
  %v2539 = vadd.f32 %v2537, %v2538
  %v2540 = vrot.slane %v2539, 2
  %v2541 = vadd.f32 %v2539, %v2540
  %v2542 = vrot.slane %v2541, 1
  %v2543 = vadd.f32 %v2541, %v2542
  %v2544 = vsel %vm54, %v2500, 0.0
  %v2545 = vrot.slane %v2544, 4
  %v2546 = vadd.f32 %v2544, %v2545
  %v2547 = vrot.slane %v2546, 2
  %v2548 = vadd.f32 %v2546, %v2547
  %v2549 = vrot.slane %v2548, 1
  %v2550 = vadd.f32 %v2548, %v2549
  %v2551 = vsel %vm54, %v2501, 0.0
  %v2552 = vrot.slane %v2551, 4
  %v2553 = vadd.f32 %v2551, %v2552
  %v2554 = vrot.slane %v2553, 2
  %v2555 = vadd.f32 %v2553, %v2554
  %v2556 = vrot.slane %v2555, 1
  %v2557 = vadd.f32 %v2555, %v2556
  %v2558 = vld [vmem:[%s3] sm:$0xff]
  %v2559 = vld [vmem:[%s3 + $0x8] sm:$0xff]
  %v2560 = vld [vmem:[%s3 + $0x10] sm:$0xff]
  %v2561 = vld [vmem:[%s3 + $0x18] sm:$0xff]
  %v2562 = vld [vmem:[%s4] sm:$0xff]
  %v2563 = vld [vmem:[%s4 + $0x8] sm:$0xff]
  %v2564 = vld [vmem:[%s4 + $0x10] sm:$0xff]
  %v2565 = vld [vmem:[%s4 + $0x18] sm:$0xff]
  %v2566 = vld [vmem:[%s4 + $0x20] sm:$0xff]
  %v2567 = vld [vmem:[%s4 + $0x28] sm:$0xff]
  %v2568 = vld [vmem:[%s4 + $0x30] sm:$0xff]
  %v2569 = vld [vmem:[%s4 + $0x38] sm:$0xff]
  %v2570 = vld [vmem:[%s4 + $0x40] sm:$0xff]
  %v2571 = vld [vmem:[%s4 + $0x48] sm:$0xff]
  %v2572 = vld [vmem:[%s4 + $0x50] sm:$0xff]
  %v2573 = vld [vmem:[%s4 + $0x58] sm:$0xff]
  %v2574 = vld [vmem:[%s4 + $0x60] sm:$0xff]
  %v2575 = vld [vmem:[%s4 + $0x68] sm:$0xff]
  %v2576 = vld [vmem:[%s4 + $0x70] sm:$0xff]
  %v2577 = vld [vmem:[%s4 + $0x78] sm:$0xff]
  %2578 = vmatprep.subr.mxu0 0.0
  %2579 = vmatpush1.msra.mxu0 %v2562
  %2580 = vmatprep.subr.mxu0 0.0
  %2581 = vmatpush1.msra.mxu0 %v2563
  %2582 = vmatprep.subr.mxu0 0.0
  %2583 = vmatpush1.msra.mxu0 %v2564
  %2584 = vmatprep.subr.mxu0 0.0
  %2585 = vmatpush1.msra.mxu0 %v2565
  %2586 = vmatprep.subr.mxu0 0.0
  %2587 = vmatpush1.msra.mxu0 %v2566
  %2588 = vmatprep.subr.mxu0 0.0
  %2589 = vmatpush1.msra.mxu0 %v2567
  %2590 = vmatprep.subr.mxu0 0.0
  %2591 = vmatpush1.msra.mxu0 %v2568
  %2592 = vmatprep.subr.mxu0 0.0
  %2593 = vmatpush1.msra.mxu0 %v2569
  %2594 = vmatprep.subr.mxu0 0.0
  %2595 = vmatpush1.msra.mxu0 %v2570
  %2596 = vmatprep.subr.mxu0 0.0
  %2597 = vmatpush1.msra.mxu0 %v2571
  %2598 = vmatprep.subr.mxu0 0.0
  %2599 = vmatpush1.msra.mxu0 %v2572
  %2600 = vmatprep.subr.mxu0 0.0
  %2601 = vmatpush1.msra.mxu0 %v2573
  %2602 = vmatprep.subr.mxu0 0.0
  %2603 = vmatpush1.msra.mxu0 %v2574
  %2604 = vmatprep.subr.mxu0 0.0
  %2605 = vmatpush1.msra.mxu0 %v2575
  %2606 = vmatprep.subr.mxu0 0.0
  %2607 = vmatpush1.msra.mxu0 %v2576
  %2608 = vmatprep.subr.mxu0 0.0
  %2609 = vmatpush1.msra.mxu0 %v2577
  %2610 = vmatprep.subr.mxu0 0.0
  %2611 = vmatpush1.msra.mxu0 0.0
  %2612 = vmatprep.subr.mxu0 0.0
  %2613 = vmatpush1.msra.mxu0 0.0
  %2614 = vmatprep.subr.mxu0 0.0
  %2615 = vmatpush1.msra.mxu0 0.0
  %2616 = vmatprep.subr.mxu0 0.0
  %2617 = vmatpush1.msra.mxu0 0.0
  %2618 = vmatprep.subr.mxu0 0.0
  %2619 = vmatpush1.msra.mxu0 0.0
  %2620 = vmatprep.subr.mxu0 0.0
  %2621 = vmatpush1.msra.mxu0 0.0
  %2622 = vmatprep.subr.mxu0 0.0
  %2623 = vmatpush1.msra.mxu0 0.0
  %2624 = vmatprep.subr.mxu0 0.0
  %2625 = vmatpush1.msra.mxu0 0.0
  %2626 = vmatprep.subr.mxu0 0.0
  %2627 = vmatpush1.msra.mxu0 0.0
  %2628 = vmatprep.subr.mxu0 0.0
  %2629 = vmatpush1.msra.mxu0 0.0
  %2630 = vmatprep.subr.mxu0 0.0
  %2631 = vmatpush1.msra.mxu0 0.0
  %2632 = vmatprep.subr.mxu0 0.0
  %2633 = vmatpush1.msra.mxu0 0.0
  %2634 = vmatprep.subr.mxu0 0.0
  %2635 = vmatpush1.msra.mxu0 0.0
  %2636 = vmatprep.subr.mxu0 0.0
  %2637 = vmatpush1.msra.mxu0 0.0
  %2638 = vmatprep.subr.mxu0 0.0
  %2639 = vmatpush1.msra.mxu0 0.0
  %2640 = vmatprep.subr.mxu0 0.0
  %2641 = vmatpush1.msra.mxu0 0.0
  %2642 = vmatprep.mubr.f32.mxu0 0.0
  %2643 = vmatmul.mubr.f32.gmra.mrb[0].mxu0 %v1954
  %v2644 = vpop.f32.mrb[0].mxu0
  %v2645 = vadd.f32 0.0, %v2644
  %v2646 = vpop.f32.mrb[0].mxu0
  %2647 = vdwg.mxu0
  %v2656 = vsel %vm217, %v2515, %v2508
  %v2657 = vsel %vm219, %v2522, %v2656
  %v2658 = vsel %vm221, %v2529, %v2657
  %v2659 = vsel %vm223, %v2536, %v2658
  %v2660 = vsel %vm225, %v2543, %v2659
  %v2661 = vsel %vm227, %v2550, %v2660
  %v2662 = vsel %vm229, %v2557, %v2661
  %v2663 = vsel %vm54, %v2662, 0
  %2665 = vmatprep.subr.mxu0 0.0
  %2666 = vmatpush1.msra.mxu0 %v2558
  %2667 = vmatprep.subr.mxu0 0.0
  %2668 = vmatpush1.msra.mxu0 %v2559
  %2669 = vmatprep.subr.mxu0 0.0
  %2670 = vmatpush1.msra.mxu0 %v2560
  %2671 = vmatprep.subr.mxu0 0.0
  %2672 = vmatpush1.msra.mxu0 %v2561
  %2673 = vmatprep.subr.mxu0 0.0
  %2674 = vmatpush1.msra.mxu0 0.0
  %2675 = vmatprep.subr.mxu0 0.0
  %2676 = vmatpush1.msra.mxu0 0.0
  %2677 = vmatprep.subr.mxu0 0.0
  %2678 = vmatpush1.msra.mxu0 0.0
  %2679 = vmatprep.subr.mxu0 0.0
  %2680 = vmatpush1.msra.mxu0 0.0
  %2681 = vmatprep.subr.mxu0 0.0
  %2682 = vmatpush1.msra.mxu0 0.0
  %2683 = vmatprep.subr.mxu0 0.0
  %2684 = vmatpush1.msra.mxu0 0.0
  %2685 = vmatprep.subr.mxu0 0.0
  %2686 = vmatpush1.msra.mxu0 0.0
  %2687 = vmatprep.subr.mxu0 0.0
  %2688 = vmatpush1.msra.mxu0 0.0
  %2689 = vmatprep.subr.mxu0 0.0
  %2690 = vmatpush1.msra.mxu0 0.0
  %2691 = vmatprep.subr.mxu0 0.0
  %2692 = vmatpush1.msra.mxu0 0.0
  %2693 = vmatprep.subr.mxu0 0.0
  %2694 = vmatpush1.msra.mxu0 0.0
  %2695 = vmatprep.subr.mxu0 0.0
  %2696 = vmatpush1.msra.mxu0 0.0
  %2697 = vmatprep.subr.mxu0 0.0
  %2698 = vmatpush1.msra.mxu0 0.0
  %2699 = vmatprep.subr.mxu0 0.0
  %2700 = vmatpush1.msra.mxu0 0.0
  %2701 = vmatprep.subr.mxu0 0.0
  %2702 = vmatpush1.msra.mxu0 0.0
  %2703 = vmatprep.subr.mxu0 0.0
  %2704 = vmatpush1.msra.mxu0 0.0
  %2705 = vmatprep.subr.mxu0 0.0
  %2706 = vmatpush1.msra.mxu0 0.0
  %2707 = vmatprep.subr.mxu0 0.0
  %2708 = vmatpush1.msra.mxu0 0.0
  %2709 = vmatprep.subr.mxu0 0.0
  %2710 = vmatpush1.msra.mxu0 0.0
  %2711 = vmatprep.subr.mxu0 0.0
  %2712 = vmatpush1.msra.mxu0 0.0
  %2713 = vmatprep.subr.mxu0 0.0
  %2714 = vmatpush1.msra.mxu0 0.0
  %2715 = vmatprep.subr.mxu0 0.0
  %2716 = vmatpush1.msra.mxu0 0.0
  %2717 = vmatprep.subr.mxu0 0.0
  %2718 = vmatpush1.msra.mxu0 0.0
  %2719 = vmatprep.subr.mxu0 0.0
  %2720 = vmatpush1.msra.mxu0 0.0
  %2721 = vmatprep.subr.mxu0 0.0
  %2722 = vmatpush1.msra.mxu0 0.0
  %2723 = vmatprep.subr.mxu0 0.0
  %2724 = vmatpush1.msra.mxu0 0.0
  %2725 = vmatprep.subr.mxu0 0.0
  %2726 = vmatpush1.msra.mxu0 0.0
  %2727 = vmatprep.subr.mxu0 0.0
  %2728 = vmatpush1.msra.mxu0 0.0
  %2729 = vmatprep.mubr.f32.mxu0 0.0
  %2730 = vmatmul.mubr.f32.gmra.mrb[0].mxu0 %v2663
  %v2731 = vpop.f32.mrb[0].mxu0
  %v2732 = vadd.f32 %v2645, %v2731
  %v2733 = vpop.f32.mrb[0].mxu0
  %2734 = vdwg.mxu0
  %v2735 = vld [vmem:[%s5] sm:$0xff]
  %v2736 = vld [vmem:[%s5 + $0x8] sm:$0xff]
  %v2737 = vld [vmem:[%s5 + $0x10] sm:$0xff]
  %v2738 = vld [vmem:[%s5 + $0x18] sm:$0xff]
  %v2739 = vld [vmem:[%s6] sm:$0x1]
  %v2741 = vlaneseq
  %v2742 = vshrl.u32 %v2741, 7
  %v2743 = vsub.s32 0, %v2742
  %v2744 = vrot.slane %v2739, %v2743
  %2746 = vmatprep.subr.mxu0 0.0
  %2747 = vmatpush1.msra.mxu0 %v2735
  %2748 = vmatprep.subr.mxu0 0.0
  %2749 = vmatpush1.msra.mxu0 %v2736
  %2750 = vmatprep.subr.mxu0 0.0
  %2751 = vmatpush1.msra.mxu0 %v2737
  %2752 = vmatprep.subr.mxu0 0.0
  %2753 = vmatpush1.msra.mxu0 %v2738
  %2754 = vmatprep.subr.mxu0 0.0
  %2755 = vmatpush1.msra.mxu0 0.0
  %2756 = vmatprep.subr.mxu0 0.0
  %2757 = vmatpush1.msra.mxu0 0.0
  %2758 = vmatprep.subr.mxu0 0.0
  %2759 = vmatpush1.msra.mxu0 0.0
  %2760 = vmatprep.subr.mxu0 0.0
  %2761 = vmatpush1.msra.mxu0 0.0
  %2762 = vmatprep.subr.mxu0 0.0
  %2763 = vmatpush1.msra.mxu0 0.0
  %2764 = vmatprep.subr.mxu0 0.0
  %2765 = vmatpush1.msra.mxu0 0.0
  %2766 = vmatprep.subr.mxu0 0.0
  %2767 = vmatpush1.msra.mxu0 0.0
  %2768 = vmatprep.subr.mxu0 0.0
  %2769 = vmatpush1.msra.mxu0 0.0
  %2770 = vmatprep.subr.mxu0 0.0
  %2771 = vmatpush1.msra.mxu0 0.0
  %2772 = vmatprep.subr.mxu0 0.0
  %2773 = vmatpush1.msra.mxu0 0.0
  %2774 = vmatprep.subr.mxu0 0.0
  %2775 = vmatpush1.msra.mxu0 0.0
  %2776 = vmatprep.subr.mxu0 0.0
  %2777 = vmatpush1.msra.mxu0 0.0
  %2778 = vmatprep.subr.mxu0 0.0
  %2779 = vmatpush1.msra.mxu0 0.0
  %2780 = vmatprep.subr.mxu0 0.0
  %2781 = vmatpush1.msra.mxu0 0.0
  %2782 = vmatprep.subr.mxu0 0.0
  %2783 = vmatpush1.msra.mxu0 0.0
  %2784 = vmatprep.subr.mxu0 0.0
  %2785 = vmatpush1.msra.mxu0 0.0
  %2786 = vmatprep.subr.mxu0 0.0
  %2787 = vmatpush1.msra.mxu0 0.0
  %2788 = vmatprep.subr.mxu0 0.0
  %2789 = vmatpush1.msra.mxu0 0.0
  %2790 = vmatprep.subr.mxu0 0.0
  %2791 = vmatpush1.msra.mxu0 0.0
  %2792 = vmatprep.subr.mxu0 0.0
  %2793 = vmatpush1.msra.mxu0 0.0
  %2794 = vmatprep.subr.mxu0 0.0
  %2795 = vmatpush1.msra.mxu0 0.0
  %2796 = vmatprep.subr.mxu0 0.0
  %2797 = vmatpush1.msra.mxu0 0.0
  %2798 = vmatprep.subr.mxu0 0.0
  %2799 = vmatpush1.msra.mxu0 0.0
  %2800 = vmatprep.subr.mxu0 0.0
  %2801 = vmatpush1.msra.mxu0 0.0
  %2802 = vmatprep.subr.mxu0 0.0
  %2803 = vmatpush1.msra.mxu0 0.0
  %2804 = vmatprep.subr.mxu0 0.0
  %2805 = vmatpush1.msra.mxu0 0.0
  %2806 = vmatprep.subr.mxu0 0.0
  %2807 = vmatpush1.msra.mxu0 0.0
  %2808 = vmatprep.subr.mxu0 0.0
  %2809 = vmatpush1.msra.mxu0 0.0
  %2810 = vmatprep.mubr.f32.mxu0 0.0
  %2811 = vmatmul.mubr.f32.gmra.mrb[0].mxu0 %v1851
  %v2812 = vpop.f32.mrb[0].mxu0
  %v2813 = vadd.f32 %v2744, %v2812
  %v2814 = vpop.f32.mrb[0].mxu0
  %2815 = vdwg.mxu0
  %v2816 = vadd.f32 %v2732, %v2813
  %v2817 = vxor.u32 %v2816, 2147483648
  %v2818 = vmul.f32 %v2817, 1.442695
  %v2819 = vpow.pop %v2818
  %v2820 = vadd.f32 %v2819, 1.0
  %v2821 = vrcp.pop %v2820
  %v2822 = vmul.f32 1.0, %v2821
  %2824 = vrot.lane.b32.xlu0 %v2813, 64
  %v2825 = vpop.permute.xlu0 %2824
  %v2827 = vmul.f32 %v2822, %v2825
  %2829 = vrot.lane.b32.xlu0 %v2827, 64
  %v2830 = vpop.permute.xlu0 %2829
  %v2832 = vadd.f32 %v2732, %v2830
  %v2833 = vtanh.pop %v2832
  %v2834 = vsub.f32 1.0, %v2822
  %2836 = vrot.lane.b32.xlu0 %v2833, 96
  %v2837 = vpop.permute.xlu0 %2836
  %v2839 = vmul.f32 %v2834, %v2837
  %v2840 = vmul.f32 %v2822, %v1836
  %v2841 = vadd.f32 %v2839, %v2840
  %v2842 = vld [vmem:[%s7] sm:$0xff]
  %v2843 = vld [vmem:[%s7 + $0x8] sm:$0xff]
  %v2844 = vld [vmem:[%s7 + $0x10] sm:$0xff]
  %v2845 = vld [vmem:[%s7 + $0x18] sm:$0xff]
  %v2846 = vld [vmem:[%s8] sm:$0x1]
  %v2848 = vlaneseq
  %v2849 = vshrl.u32 %v2848, 7
  %v2850 = vsub.s32 0, %v2849
  %v2851 = vrot.slane %v2846, %v2850
  %2854 = vrot.lane.b32.xlu0 %v2841, 96
  %v2855 = vpop.permute.xlu0 %2854
  %v2856 = vsel %vm54, %v2855, 0
  %2858 = vmatprep.subr.mxu0 0.0
  %2859 = vmatpush1.msra.mxu0 %v2842
  %2860 = vmatprep.subr.mxu0 0.0
  %2861 = vmatpush1.msra.mxu0 %v2843
  %2862 = vmatprep.subr.mxu0 0.0
  %2863 = vmatpush1.msra.mxu0 %v2844
  %2864 = vmatprep.subr.mxu0 0.0
  %2865 = vmatpush1.msra.mxu0 %v2845
  %2866 = vmatprep.subr.mxu0 0.0
  %2867 = vmatpush1.msra.mxu0 0.0
  %2868 = vmatprep.subr.mxu0 0.0
  %2869 = vmatpush1.msra.mxu0 0.0
  %2870 = vmatprep.subr.mxu0 0.0
  %2871 = vmatpush1.msra.mxu0 0.0
  %2872 = vmatprep.subr.mxu0 0.0
  %2873 = vmatpush1.msra.mxu0 0.0
  %2874 = vmatprep.subr.mxu0 0.0
  %2875 = vmatpush1.msra.mxu0 0.0
  %2876 = vmatprep.subr.mxu0 0.0
  %2877 = vmatpush1.msra.mxu0 0.0
  %2878 = vmatprep.subr.mxu0 0.0
  %2879 = vmatpush1.msra.mxu0 0.0
  %2880 = vmatprep.subr.mxu0 0.0
  %2881 = vmatpush1.msra.mxu0 0.0
  %2882 = vmatprep.subr.mxu0 0.0
  %2883 = vmatpush1.msra.mxu0 0.0
  %2884 = vmatprep.subr.mxu0 0.0
  %2885 = vmatpush1.msra.mxu0 0.0
  %2886 = vmatprep.subr.mxu0 0.0
  %2887 = vmatpush1.msra.mxu0 0.0
  %2888 = vmatprep.subr.mxu0 0.0
  %2889 = vmatpush1.msra.mxu0 0.0
  %2890 = vmatprep.subr.mxu0 0.0
  %2891 = vmatpush1.msra.mxu0 0.0
  %2892 = vmatprep.subr.mxu0 0.0
  %2893 = vmatpush1.msra.mxu0 0.0
  %2894 = vmatprep.subr.mxu0 0.0
  %2895 = vmatpush1.msra.mxu0 0.0
  %2896 = vmatprep.subr.mxu0 0.0
  %2897 = vmatpush1.msra.mxu0 0.0
  %2898 = vmatprep.subr.mxu0 0.0
  %2899 = vmatpush1.msra.mxu0 0.0
  %2900 = vmatprep.subr.mxu0 0.0
  %2901 = vmatpush1.msra.mxu0 0.0
  %2902 = vmatprep.subr.mxu0 0.0
  %2903 = vmatpush1.msra.mxu0 0.0
  %2904 = vmatprep.subr.mxu0 0.0
  %2905 = vmatpush1.msra.mxu0 0.0
  %2906 = vmatprep.subr.mxu0 0.0
  %2907 = vmatpush1.msra.mxu0 0.0
  %2908 = vmatprep.subr.mxu0 0.0
  %2909 = vmatpush1.msra.mxu0 0.0
  %2910 = vmatprep.subr.mxu0 0.0
  %2911 = vmatpush1.msra.mxu0 0.0
  %2912 = vmatprep.subr.mxu0 0.0
  %2913 = vmatpush1.msra.mxu0 0.0
  %2914 = vmatprep.subr.mxu0 0.0
  %2915 = vmatpush1.msra.mxu0 0.0
  %2916 = vmatprep.subr.mxu0 0.0
  %2917 = vmatpush1.msra.mxu0 0.0
  %2918 = vmatprep.subr.mxu0 0.0
  %2919 = vmatpush1.msra.mxu0 0.0
  %2920 = vmatprep.subr.mxu0 0.0
  %2921 = vmatpush1.msra.mxu0 0.0
  %2922 = vmatprep.mubr.f32.mxu0 0.0
  %2923 = vmatmul.mubr.f32.gmra.mrb[0].mxu0 %v2856
  %v2924 = vpop.f32.mrb[0].mxu0
  %v2925 = vadd.f32 %v2851, %v2924
  %v2926 = vpop.f32.mrb[0].mxu0
  %2927 = vdwg.mxu0
  %2928 = vmax.xlane.f32.xlu0 %v2925
  %v2929 = vpop.xlane.xlu0 %2928
  %v2930 = vsub.f32 %v2925, %v2929
  %v2931 = vmul.f32 %v2930, 1.442695
  %v2932 = vpow.pop %v2931
  %2933 = vadd.xlane.f32.xlu0 %v2932
  %v2934 = vpop.xlane.xlu0 %2933
  %v2935 = vlog2.pop %v2934
  %v2936 = vmul.f32 %v2935, 0.6931472
  %v2937 = vadd.f32 %v2929, %v2936
  %v2938 = vsub.f32 %v2925, %v2937
  %s2939 = scalar_lea.vmem %s9, 24
  %2940 = vst [vmem:[%s2939] sm:$0xff] %v2938
  %vm2941 = vcmp.ge.f32.partialorder %v2925, %v2929
  %v2942 = vsel %vm2941, %v33, 128
  %v2943 = vand.u32 %v2942, 65535
  %v2944 = vshra.s32 %v2942, 16
  %v2945 = vcvt.s32.f32 %v2943
  %v2946 = vcvt.s32.f32 %v2944
  %2947 = vmin.xlane.f32.xlu0 %v2946
  %v2948 = vpop.xlane.xlu0 %2947
  %vm2949 = vcmp.eq.f32.partialorder %v2946, %v2948
  %v2950 = vsel %vm2949, %v2945, inf
  %2951 = vmin.xlane.f32.xlu0 %v2950
  %v2952 = vpop.xlane.xlu0 %2951
  %v2953 = vcvt.f32.s32 %v2952
  %v2954 = vcvt.f32.s32 %v2948
  %v2955 = vshll.u32 %v2954, 16
  %v2956 = vadd.s32 %v2955, %v2953
  %vm2957 = vcmp.eq.s32.totalorder %v33, %v2956
  %v2958 = vsel %vm2957, 1, 0
  %v2959 = vcvt.s32.f32 %v2958
  %v2960 = vld [vmem:[%s1] sm:$0xff]
  %v2961 = vld [vmem:[%s1 + $0x8] sm:$0xff]
  %v2962 = vld [vmem:[%s1 + $0x10] sm:$0xff]
  %v2963 = vld [vmem:[%s1 + $0x18] sm:$0xff]
  %v2964 = vld [vmem:[%s1 + $0x20] sm:$0xff]
  %v2965 = vld [vmem:[%s1 + $0x28] sm:$0xff]
  %v2966 = vld [vmem:[%s1 + $0x30] sm:$0xff]
  %v2967 = vld [vmem:[%s1 + $0x38] sm:$0xff]
  %v2968 = vcombine.high %v2841, %v2841
  %v2970 = vunpack.c.l.s4 1966171168
  %v2971 = vunpack.c.0.s8 %v2970
  %v2972 = vlaneseq
  %v2973 = vshrl.u32 %v2972, 7
  %v2974 = vsub.s32 %v2971, %v2973
  %v2975 = vrot.slane %v2841, %v2974
  %v2977 = vunpack.c.l.s4 1966171168
  %v2978 = vunpack.c.0.s8 %v2977
  %v2979 = vlaneseq
  %v2980 = vshrl.u32 %v2979, 7
  %v2981 = vsub.s32 %v2978, %v2980
  %v2982 = vrot.slane %v2968, %v2981
  %v2983 = vcombine.high %v2975, %v2975
  %v2984 = vcombine.high %v2982, %v2982
  %v2986 = vunpack.c.l.s4 1966171168
  %v2987 = vunpack.c.0.s8 %v2986
  %v2988 = vlaneseq
  %v2989 = vshrl.u32 %v2988, 7
  %v2990 = vsub.s32 %v2987, %v2989
  %v2991 = vrot.slane %v2975, %v2990
  %v2993 = vunpack.c.l.s4 1966171168
  %v2994 = vunpack.c.0.s8 %v2993
  %v2995 = vlaneseq
  %v2996 = vshrl.u32 %v2995, 7
  %v2997 = vsub.s32 %v2994, %v2996
  %v2998 = vrot.slane %v2982, %v2997
  %v3000 = vunpack.c.l.s4 1966171168
  %v3001 = vunpack.c.0.s8 %v3000
  %v3002 = vlaneseq
  %v3003 = vshrl.u32 %v3002, 7
  %v3004 = vsub.s32 %v3001, %v3003
  %v3005 = vrot.slane %v2983, %v3004
  %v3007 = vunpack.c.l.s4 1966171168
  %v3008 = vunpack.c.0.s8 %v3007
  %v3009 = vlaneseq
  %v3010 = vshrl.u32 %v3009, 7
  %v3011 = vsub.s32 %v3008, %v3010
  %v3012 = vrot.slane %v2984, %v3011
  %v3013 = vcombine.high %v2991, %v2991
  %v3014 = vcombine.high %v2998, %v2998
  %v3015 = vcombine.high %v3005, %v3005
  %v3016 = vcombine.high %v3012, %v3012
  %v3017 = vlaneseq
  %v3018 = vshrl.u32 %v3017, 7
  %v3019 = vsub.s32 0, %v3018
  %v3020 = vrot.slane %v2991, %v3019
  %v3021 = vlaneseq
  %v3022 = vshrl.u32 %v3021, 7
  %v3023 = vsub.s32 0, %v3022
  %v3024 = vrot.slane %v3005, %v3023
  %v3025 = vlaneseq
  %v3026 = vshrl.u32 %v3025, 7
  %v3027 = vsub.s32 0, %v3026
  %v3028 = vrot.slane %v3013, %v3027
  %v3029 = vlaneseq
  %v3030 = vshrl.u32 %v3029, 7
  %v3031 = vsub.s32 0, %v3030
  %v3032 = vrot.slane %v3015, %v3031
  %v3033 = vlaneseq
  %v3034 = vshrl.u32 %v3033, 7
  %v3035 = vsub.s32 0, %v3034
  %v3036 = vrot.slane %v2998, %v3035
  %v3037 = vlaneseq
  %v3038 = vshrl.u32 %v3037, 7
  %v3039 = vsub.s32 0, %v3038
  %v3040 = vrot.slane %v3012, %v3039
  %v3041 = vlaneseq
  %v3042 = vshrl.u32 %v3041, 7
  %v3043 = vsub.s32 0, %v3042
  %v3044 = vrot.slane %v3014, %v3043
  %v3045 = vlaneseq
  %v3046 = vshrl.u32 %v3045, 7
  %v3047 = vsub.s32 0, %v3046
  %v3048 = vrot.slane %v3016, %v3047
  %3049 = vrot.lane.b32.xlu0 %v3020, 96
  %v3050 = vpop.permute.xlu0 %3049
  %3051 = vrot.lane.b32.xlu0 %v3024, 96
  %v3052 = vpop.permute.xlu0 %3051
  %3053 = vrot.lane.b32.xlu0 %v3028, 96
  %v3054 = vpop.permute.xlu0 %3053
  %3055 = vrot.lane.b32.xlu0 %v3032, 96
  %v3056 = vpop.permute.xlu0 %3055
  %3057 = vrot.lane.b32.xlu0 %v3036, 96
  %v3058 = vpop.permute.xlu0 %3057
  %3059 = vrot.lane.b32.xlu0 %v3040, 96
  %v3060 = vpop.permute.xlu0 %3059
  %3061 = vrot.lane.b32.xlu0 %v3044, 96
  %v3062 = vpop.permute.xlu0 %3061
  %3063 = vrot.lane.b32.xlu0 %v3048, 96
  %v3064 = vpop.permute.xlu0 %3063
  %v3073 = vmul.f32 %v2960, %v3050
  %v3074 = vmul.f32 %v2961, %v3052
  %v3075 = vmul.f32 %v2962, %v3054
  %v3076 = vmul.f32 %v2963, %v3056
  %v3077 = vmul.f32 %v2964, %v3058
  %v3078 = vmul.f32 %v2965, %v3060
  %v3079 = vmul.f32 %v2966, %v3062
  %v3080 = vmul.f32 %v2967, %v3064
  %v3081 = vsel %vm54, %v3073, 0.0
  %3082 = vadd.xlane.f32.xlu0 %v3081
  %v3083 = vpop.xlane.xlu0 %3082
  %v3084 = vsel %vm54, %v3074, 0.0
  %3085 = vadd.xlane.f32.xlu0 %v3084
  %v3086 = vpop.xlane.xlu0 %3085
  %v3087 = vsel %vm54, %v3075, 0.0
  %3088 = vadd.xlane.f32.xlu0 %v3087
  %v3089 = vpop.xlane.xlu0 %3088
  %v3090 = vsel %vm54, %v3076, 0.0
  %3091 = vadd.xlane.f32.xlu0 %v3090
  %v3092 = vpop.xlane.xlu0 %3091
  %v3093 = vsel %vm54, %v3077, 0.0
  %3094 = vadd.xlane.f32.xlu0 %v3093
  %v3095 = vpop.xlane.xlu0 %3094
  %v3096 = vsel %vm54, %v3078, 0.0
  %3097 = vadd.xlane.f32.xlu0 %v3096
  %v3098 = vpop.xlane.xlu0 %3097
  %v3099 = vsel %vm54, %v3079, 0.0
  %3100 = vadd.xlane.f32.xlu0 %v3099
  %v3101 = vpop.xlane.xlu0 %3100
  %v3102 = vsel %vm54, %v3080, 0.0
  %3103 = vadd.xlane.f32.xlu0 %v3102
  %v3104 = vpop.xlane.xlu0 %3103
  %v3105 = vld [vmem:[%s2] sm:$0xff]
  %v3107 = vlaneseq
  %v3108 = vshrl.u32 %v3107, 7
  %v3109 = vsub.s32 0, %v3108
  %v3110 = vrot.slane %v3105, %v3109
  %3112 = vbcast.lane.b32.xlu0 %v3110, 256
  %v3113 = vpop.permute.xlu0 %3112
  %v3114 = vlaneseq
  %v3115 = vshrl.u32 %v3114, 7
  %v3116 = vsub.s32 1, %v3115
  %v3117 = vrot.slane %v3105, %v3116
  %3119 = vbcast.lane.b32.xlu0 %v3117, 256
  %v3120 = vpop.permute.xlu0 %3119
  %v3121 = vlaneseq
  %v3122 = vshrl.u32 %v3121, 7
  %v3123 = vsub.s32 2, %v3122
  %v3124 = vrot.slane %v3105, %v3123
  %3126 = vbcast.lane.b32.xlu0 %v3124, 256
  %v3127 = vpop.permute.xlu0 %3126
  %v3128 = vlaneseq
  %v3129 = vshrl.u32 %v3128, 7
  %v3130 = vsub.s32 3, %v3129
  %v3131 = vrot.slane %v3105, %v3130
  %3133 = vbcast.lane.b32.xlu0 %v3131, 256
  %v3134 = vpop.permute.xlu0 %3133
  %v3135 = vlaneseq
  %v3136 = vshrl.u32 %v3135, 7
  %v3137 = vsub.s32 4, %v3136
  %v3138 = vrot.slane %v3105, %v3137
  %3140 = vbcast.lane.b32.xlu0 %v3138, 256
  %v3141 = vpop.permute.xlu0 %3140
  %v3142 = vlaneseq
  %v3143 = vshrl.u32 %v3142, 7
  %v3144 = vsub.s32 5, %v3143
  %v3145 = vrot.slane %v3105, %v3144
  %3147 = vbcast.lane.b32.xlu0 %v3145, 256
  %v3148 = vpop.permute.xlu0 %3147
  %v3149 = vlaneseq
  %v3150 = vshrl.u32 %v3149, 7
  %v3151 = vsub.s32 6, %v3150
  %v3152 = vrot.slane %v3105, %v3151
  %3154 = vbcast.lane.b32.xlu0 %v3152, 256
  %v3155 = vpop.permute.xlu0 %3154
  %v3156 = vlaneseq
  %v3157 = vshrl.u32 %v3156, 7
  %v3158 = vsub.s32 7, %v3157
  %v3159 = vrot.slane %v3105, %v3158
  %3161 = vbcast.lane.b32.xlu0 %v3159, 256
  %v3162 = vpop.permute.xlu0 %3161
  %v3171 = vadd.f32 %v3083, %v3113
  %v3172 = vadd.f32 %v3086, %v3120
  %v3173 = vadd.f32 %v3089, %v3127
  %v3174 = vadd.f32 %v3092, %v3134
  %v3175 = vadd.f32 %v3095, %v3141
  %v3176 = vadd.f32 %v3098, %v3148
  %v3177 = vadd.f32 %v3101, %v3155
  %v3178 = vadd.f32 %v3104, %v3162
  %3187 = vset.pattern.permute.xlu0 0
  %3188 = vperm.xlu0 %3187, %v3171
  %v3189 = vpop.permute.xlu0 %3188
  %3190 = vset.pattern.permute.xlu0 0
  %3191 = vperm.xlu0 %3190, %v3172
  %v3192 = vpop.permute.xlu0 %3191
  %3193 = vset.pattern.permute.xlu0 0
  %3194 = vperm.xlu0 %3193, %v3173
  %v3195 = vpop.permute.xlu0 %3194
  %3196 = vset.pattern.permute.xlu0 0
  %3197 = vperm.xlu0 %3196, %v3174
  %v3198 = vpop.permute.xlu0 %3197
  %3199 = vset.pattern.permute.xlu0 0
  %3200 = vperm.xlu0 %3199, %v3175
  %v3201 = vpop.permute.xlu0 %3200
  %3202 = vset.pattern.permute.xlu0 0
  %3203 = vperm.xlu0 %3202, %v3176
  %v3204 = vpop.permute.xlu0 %3203
  %3205 = vset.pattern.permute.xlu0 0
  %3206 = vperm.xlu0 %3205, %v3177
  %v3207 = vpop.permute.xlu0 %3206
  %3208 = vset.pattern.permute.xlu0 0
  %3209 = vperm.xlu0 %3208, %v3178
  %v3210 = vpop.permute.xlu0 %3209
  %v3211 = vlaneseq
  %v3212 = vshrl.u32 %v3211, 7
  %v3213 = vsub.s32 %v33, %v3212
  %v3214 = vrot.slane %v3189, %v3213
  %v3215 = vlaneseq
  %v3216 = vshrl.u32 %v3215, 7
  %v3217 = vsub.s32 %v33, %v3216
  %v3218 = vrot.slane %v3192, %v3217
  %v3219 = vlaneseq
  %v3220 = vshrl.u32 %v3219, 7
  %v3221 = vsub.s32 %v33, %v3220
  %v3222 = vrot.slane %v3195, %v3221
  %v3223 = vlaneseq
  %v3224 = vshrl.u32 %v3223, 7
  %v3225 = vsub.s32 %v33, %v3224
  %v3226 = vrot.slane %v3198, %v3225
  %v3227 = vlaneseq
  %v3228 = vshrl.u32 %v3227, 7
  %v3229 = vsub.s32 %v33, %v3228
  %v3230 = vrot.slane %v3201, %v3229
  %v3231 = vlaneseq
  %v3232 = vshrl.u32 %v3231, 7
  %v3233 = vsub.s32 %v33, %v3232
  %v3234 = vrot.slane %v3204, %v3233
  %v3235 = vlaneseq
  %v3236 = vshrl.u32 %v3235, 7
  %v3237 = vsub.s32 %v33, %v3236
  %v3238 = vrot.slane %v3207, %v3237
  %v3239 = vlaneseq
  %v3240 = vshrl.u32 %v3239, 7
  %v3241 = vsub.s32 %v33, %v3240
  %v3242 = vrot.slane %v3210, %v3241
  %v3243 = vsel %vm217, %v3218, %v3214
  %v3244 = vsel %vm219, %v3222, %v3243
  %v3245 = vsel %vm221, %v3226, %v3244
  %v3246 = vsel %vm223, %v3230, %v3245
  %v3247 = vsel %vm225, %v3234, %v3246
  %v3248 = vsel %vm227, %v3238, %v3247
  %v3249 = vsel %vm229, %v3242, %v3248
  %v3251 = vsel %vm232, %v3249, -inf
  %3252 = vmax.xlane.f32.xlu0 %v3251
  %v3253 = vpop.xlane.xlu0 %3252
  %v3255 = vlaneseq
  %v3256 = vshrl.u32 %v3255, 7
  %v3257 = vsub.s32 0, %v3256
  %v3258 = vrot.slane %v3253, %v3257
  %v3259 = vlaneseq
  %v3260 = vshrl.u32 %v3259, 7
  %v3261 = vsub.s32 1, %v3260
  %v3262 = vrot.slane %v3253, %v3261
  %v3263 = vlaneseq
  %v3264 = vshrl.u32 %v3263, 7
  %v3265 = vsub.s32 2, %v3264
  %v3266 = vrot.slane %v3253, %v3265
  %v3267 = vlaneseq
  %v3268 = vshrl.u32 %v3267, 7
  %v3269 = vsub.s32 3, %v3268
  %v3270 = vrot.slane %v3253, %v3269
  %v3271 = vlaneseq
  %v3272 = vshrl.u32 %v3271, 7
  %v3273 = vsub.s32 4, %v3272
  %v3274 = vrot.slane %v3253, %v3273
  %v3275 = vlaneseq
  %v3276 = vshrl.u32 %v3275, 7
  %v3277 = vsub.s32 5, %v3276
  %v3278 = vrot.slane %v3253, %v3277
  %v3279 = vlaneseq
  %v3280 = vshrl.u32 %v3279, 7
  %v3281 = vsub.s32 6, %v3280
  %v3282 = vrot.slane %v3253, %v3281
  %v3283 = vlaneseq
  %v3284 = vshrl.u32 %v3283, 7
  %v3285 = vsub.s32 7, %v3284
  %v3286 = vrot.slane %v3253, %v3285
  %v3295 = vsub.f32 %v3171, %v3258
  %v3296 = vsub.f32 %v3172, %v3262
  %v3297 = vsub.f32 %v3173, %v3266
  %v3298 = vsub.f32 %v3174, %v3270
  %v3299 = vsub.f32 %v3175, %v3274
  %v3300 = vsub.f32 %v3176, %v3278
  %v3301 = vsub.f32 %v3177, %v3282
  %v3302 = vsub.f32 %v3178, %v3286
  %v3303 = vmul.f32 %v3295, 1.442695
  %v3304 = vpow.pop %v3303
  %v3305 = vmul.f32 %v3296, 1.442695
  %v3306 = vpow.pop %v3305
  %v3307 = vmul.f32 %v3297, 1.442695
  %v3308 = vpow.pop %v3307
  %v3309 = vmul.f32 %v3298, 1.442695
  %v3310 = vpow.pop %v3309
  %v3311 = vmul.f32 %v3299, 1.442695
  %v3312 = vpow.pop %v3311
  %v3313 = vmul.f32 %v3300, 1.442695
  %v3314 = vpow.pop %v3313
  %v3315 = vmul.f32 %v3301, 1.442695
  %v3316 = vpow.pop %v3315
  %v3317 = vmul.f32 %v3302, 1.442695
  %v3318 = vpow.pop %v3317
  %3327 = vset.pattern.permute.xlu0 0
  %3328 = vperm.xlu0 %3327, %v3304
  %v3329 = vpop.permute.xlu0 %3328
  %3330 = vset.pattern.permute.xlu0 0
  %3331 = vperm.xlu0 %3330, %v3306
  %v3332 = vpop.permute.xlu0 %3331
  %3333 = vset.pattern.permute.xlu0 0
  %3334 = vperm.xlu0 %3333, %v3308
  %v3335 = vpop.permute.xlu0 %3334
  %3336 = vset.pattern.permute.xlu0 0
  %3337 = vperm.xlu0 %3336, %v3310
  %v3338 = vpop.permute.xlu0 %3337
  %3339 = vset.pattern.permute.xlu0 0
  %3340 = vperm.xlu0 %3339, %v3312
  %v3341 = vpop.permute.xlu0 %3340
  %3342 = vset.pattern.permute.xlu0 0
  %3343 = vperm.xlu0 %3342, %v3314
  %v3344 = vpop.permute.xlu0 %3343
  %3345 = vset.pattern.permute.xlu0 0
  %3346 = vperm.xlu0 %3345, %v3316
  %v3347 = vpop.permute.xlu0 %3346
  %3348 = vset.pattern.permute.xlu0 0
  %3349 = vperm.xlu0 %3348, %v3318
  %v3350 = vpop.permute.xlu0 %3349
  %v3351 = vlaneseq
  %v3352 = vshrl.u32 %v3351, 7
  %v3353 = vsub.s32 %v33, %v3352
  %v3354 = vrot.slane %v3329, %v3353
  %v3355 = vlaneseq
  %v3356 = vshrl.u32 %v3355, 7
  %v3357 = vsub.s32 %v33, %v3356
  %v3358 = vrot.slane %v3332, %v3357
  %v3359 = vlaneseq
  %v3360 = vshrl.u32 %v3359, 7
  %v3361 = vsub.s32 %v33, %v3360
  %v3362 = vrot.slane %v3335, %v3361
  %v3363 = vlaneseq
  %v3364 = vshrl.u32 %v3363, 7
  %v3365 = vsub.s32 %v33, %v3364
  %v3366 = vrot.slane %v3338, %v3365
  %v3367 = vlaneseq
  %v3368 = vshrl.u32 %v3367, 7
  %v3369 = vsub.s32 %v33, %v3368
  %v3370 = vrot.slane %v3341, %v3369
  %v3371 = vlaneseq
  %v3372 = vshrl.u32 %v3371, 7
  %v3373 = vsub.s32 %v33, %v3372
  %v3374 = vrot.slane %v3344, %v3373
  %v3375 = vlaneseq
  %v3376 = vshrl.u32 %v3375, 7
  %v3377 = vsub.s32 %v33, %v3376
  %v3378 = vrot.slane %v3347, %v3377
  %v3379 = vlaneseq
  %v3380 = vshrl.u32 %v3379, 7
  %v3381 = vsub.s32 %v33, %v3380
  %v3382 = vrot.slane %v3350, %v3381
  %v3383 = vsel %vm217, %v3358, %v3354
  %v3384 = vsel %vm219, %v3362, %v3383
  %v3385 = vsel %vm221, %v3366, %v3384
  %v3386 = vsel %vm223, %v3370, %v3385
  %v3387 = vsel %vm225, %v3374, %v3386
  %v3388 = vsel %vm227, %v3378, %v3387
  %v3389 = vsel %vm229, %v3382, %v3388
  %v3391 = vsel %vm232, %v3389, 0.0
  %3392 = vadd.xlane.f32.xlu0 %v3391
  %v3393 = vpop.xlane.xlu0 %3392
  %v3395 = vlaneseq
  %v3396 = vshrl.u32 %v3395, 7
  %v3397 = vsub.s32 0, %v3396
  %v3398 = vrot.slane %v3393, %v3397
  %v3399 = vlaneseq
  %v3400 = vshrl.u32 %v3399, 7
  %v3401 = vsub.s32 1, %v3400
  %v3402 = vrot.slane %v3393, %v3401
  %v3403 = vlaneseq
  %v3404 = vshrl.u32 %v3403, 7
  %v3405 = vsub.s32 2, %v3404
  %v3406 = vrot.slane %v3393, %v3405
  %v3407 = vlaneseq
  %v3408 = vshrl.u32 %v3407, 7
  %v3409 = vsub.s32 3, %v3408
  %v3410 = vrot.slane %v3393, %v3409
  %v3411 = vlaneseq
  %v3412 = vshrl.u32 %v3411, 7
  %v3413 = vsub.s32 4, %v3412
  %v3414 = vrot.slane %v3393, %v3413
  %v3415 = vlaneseq
  %v3416 = vshrl.u32 %v3415, 7
  %v3417 = vsub.s32 5, %v3416
  %v3418 = vrot.slane %v3393, %v3417
  %v3419 = vlaneseq
  %v3420 = vshrl.u32 %v3419, 7
  %v3421 = vsub.s32 6, %v3420
  %v3422 = vrot.slane %v3393, %v3421
  %v3423 = vlaneseq
  %v3424 = vshrl.u32 %v3423, 7
  %v3425 = vsub.s32 7, %v3424
  %v3426 = vrot.slane %v3393, %v3425
  %v3435 = vrcp.pop %v3398
  %v3436 = vmul.f32 %v3304, %v3435
  %v3437 = vrcp.pop %v3402
  %v3438 = vmul.f32 %v3306, %v3437
  %v3439 = vrcp.pop %v3406
  %v3440 = vmul.f32 %v3308, %v3439
  %v3441 = vrcp.pop %v3410
  %v3442 = vmul.f32 %v3310, %v3441
  %v3443 = vrcp.pop %v3414
  %v3444 = vmul.f32 %v3312, %v3443
  %v3445 = vrcp.pop %v3418
  %v3446 = vmul.f32 %v3314, %v3445
  %v3447 = vrcp.pop %v3422
  %v3448 = vmul.f32 %v3316, %v3447
  %v3449 = vrcp.pop %v3426
  %v3450 = vmul.f32 %v3318, %v3449
  %v3451 = vld [vmem:[%s0] sm:$0xff]
  %v3452 = vld [vmem:[%s0 + $0x8] sm:$0xff]
  %v3453 = vld [vmem:[%s0 + $0x10] sm:$0xff]
  %v3454 = vld [vmem:[%s0 + $0x18] sm:$0xff]
  %v3455 = vld [vmem:[%s0 + $0x20] sm:$0xff]
  %v3456 = vld [vmem:[%s0 + $0x28] sm:$0xff]
  %v3457 = vld [vmem:[%s0 + $0x30] sm:$0xff]
  %v3458 = vld [vmem:[%s0 + $0x38] sm:$0xff]
  %3460 = vset.pattern.permute.xlu0 0
  %3461 = vperm.xlu0 %3460, %v3436
  %v3462 = vpop.permute.xlu0 %3461
  %3465 = vset.pattern.permute.xlu0 0
  %3466 = vperm.xlu0 %3465, %v3438
  %v3467 = vpop.permute.xlu0 %3466
  %3470 = vset.pattern.permute.xlu0 0
  %3471 = vperm.xlu0 %3470, %v3440
  %v3472 = vpop.permute.xlu0 %3471
  %3475 = vset.pattern.permute.xlu0 0
  %3476 = vperm.xlu0 %3475, %v3442
  %v3477 = vpop.permute.xlu0 %3476
  %3480 = vset.pattern.permute.xlu0 0
  %3481 = vperm.xlu0 %3480, %v3444
  %v3482 = vpop.permute.xlu0 %3481
  %3485 = vset.pattern.permute.xlu0 0
  %3486 = vperm.xlu0 %3485, %v3446
  %v3487 = vpop.permute.xlu0 %3486
  %3490 = vset.pattern.permute.xlu0 0
  %3491 = vperm.xlu0 %3490, %v3448
  %v3492 = vpop.permute.xlu0 %3491
  %3495 = vset.pattern.permute.xlu0 0
  %3496 = vperm.xlu0 %3495, %v3450
  %v3497 = vpop.permute.xlu0 %3496
  %v3499 = vmul.f32 %v3462, %v3451
  %v3500 = vmul.f32 %v3467, %v3452
  %v3501 = vmul.f32 %v3472, %v3453
  %v3502 = vmul.f32 %v3477, %v3454
  %v3503 = vmul.f32 %v3482, %v3455
  %v3504 = vmul.f32 %v3487, %v3456
  %v3505 = vmul.f32 %v3492, %v3457
  %v3506 = vmul.f32 %v3497, %v3458
  %v3507 = vsel %vm54, %v3499, 0.0
  %v3508 = vrot.slane %v3507, 4
  %v3509 = vadd.f32 %v3507, %v3508
  %v3510 = vrot.slane %v3509, 2
  %v3511 = vadd.f32 %v3509, %v3510
  %v3512 = vrot.slane %v3511, 1
  %v3513 = vadd.f32 %v3511, %v3512
  %v3514 = vsel %vm54, %v3500, 0.0
  %v3515 = vrot.slane %v3514, 4
  %v3516 = vadd.f32 %v3514, %v3515
  %v3517 = vrot.slane %v3516, 2
  %v3518 = vadd.f32 %v3516, %v3517
  %v3519 = vrot.slane %v3518, 1
  %v3520 = vadd.f32 %v3518, %v3519
  %v3521 = vsel %vm54, %v3501, 0.0
  %v3522 = vrot.slane %v3521, 4
  %v3523 = vadd.f32 %v3521, %v3522
  %v3524 = vrot.slane %v3523, 2
  %v3525 = vadd.f32 %v3523, %v3524
  %v3526 = vrot.slane %v3525, 1
  %v3527 = vadd.f32 %v3525, %v3526
  %v3528 = vsel %vm54, %v3502, 0.0
  %v3529 = vrot.slane %v3528, 4
  %v3530 = vadd.f32 %v3528, %v3529
  %v3531 = vrot.slane %v3530, 2
  %v3532 = vadd.f32 %v3530, %v3531
  %v3533 = vrot.slane %v3532, 1
  %v3534 = vadd.f32 %v3532, %v3533
  %v3535 = vsel %vm54, %v3503, 0.0
  %v3536 = vrot.slane %v3535, 4
  %v3537 = vadd.f32 %v3535, %v3536
  %v3538 = vrot.slane %v3537, 2
  %v3539 = vadd.f32 %v3537, %v3538
  %v3540 = vrot.slane %v3539, 1
  %v3541 = vadd.f32 %v3539, %v3540
  %v3542 = vsel %vm54, %v3504, 0.0
  %v3543 = vrot.slane %v3542, 4
  %v3544 = vadd.f32 %v3542, %v3543
  %v3545 = vrot.slane %v3544, 2
  %v3546 = vadd.f32 %v3544, %v3545
  %v3547 = vrot.slane %v3546, 1
  %v3548 = vadd.f32 %v3546, %v3547
  %v3549 = vsel %vm54, %v3505, 0.0
  %v3550 = vrot.slane %v3549, 4
  %v3551 = vadd.f32 %v3549, %v3550
  %v3552 = vrot.slane %v3551, 2
  %v3553 = vadd.f32 %v3551, %v3552
  %v3554 = vrot.slane %v3553, 1
  %v3555 = vadd.f32 %v3553, %v3554
  %v3556 = vsel %vm54, %v3506, 0.0
  %v3557 = vrot.slane %v3556, 4
  %v3558 = vadd.f32 %v3556, %v3557
  %v3559 = vrot.slane %v3558, 2
  %v3560 = vadd.f32 %v3558, %v3559
  %v3561 = vrot.slane %v3560, 1
  %v3562 = vadd.f32 %v3560, %v3561
  %v3563 = vld [vmem:[%s3] sm:$0xff]
  %v3564 = vld [vmem:[%s3 + $0x8] sm:$0xff]
  %v3565 = vld [vmem:[%s3 + $0x10] sm:$0xff]
  %v3566 = vld [vmem:[%s3 + $0x18] sm:$0xff]
  %v3567 = vld [vmem:[%s4] sm:$0xff]
  %v3568 = vld [vmem:[%s4 + $0x8] sm:$0xff]
  %v3569 = vld [vmem:[%s4 + $0x10] sm:$0xff]
  %v3570 = vld [vmem:[%s4 + $0x18] sm:$0xff]
  %v3571 = vld [vmem:[%s4 + $0x20] sm:$0xff]
  %v3572 = vld [vmem:[%s4 + $0x28] sm:$0xff]
  %v3573 = vld [vmem:[%s4 + $0x30] sm:$0xff]
  %v3574 = vld [vmem:[%s4 + $0x38] sm:$0xff]
  %v3575 = vld [vmem:[%s4 + $0x40] sm:$0xff]
  %v3576 = vld [vmem:[%s4 + $0x48] sm:$0xff]
  %v3577 = vld [vmem:[%s4 + $0x50] sm:$0xff]
  %v3578 = vld [vmem:[%s4 + $0x58] sm:$0xff]
  %v3579 = vld [vmem:[%s4 + $0x60] sm:$0xff]
  %v3580 = vld [vmem:[%s4 + $0x68] sm:$0xff]
  %v3581 = vld [vmem:[%s4 + $0x70] sm:$0xff]
  %v3582 = vld [vmem:[%s4 + $0x78] sm:$0xff]
  %3583 = vmatprep.subr.mxu0 0.0
  %3584 = vmatpush1.msra.mxu0 %v3567
  %3585 = vmatprep.subr.mxu0 0.0
  %3586 = vmatpush1.msra.mxu0 %v3568
  %3587 = vmatprep.subr.mxu0 0.0
  %3588 = vmatpush1.msra.mxu0 %v3569
  %3589 = vmatprep.subr.mxu0 0.0
  %3590 = vmatpush1.msra.mxu0 %v3570
  %3591 = vmatprep.subr.mxu0 0.0
  %3592 = vmatpush1.msra.mxu0 %v3571
  %3593 = vmatprep.subr.mxu0 0.0
  %3594 = vmatpush1.msra.mxu0 %v3572
  %3595 = vmatprep.subr.mxu0 0.0
  %3596 = vmatpush1.msra.mxu0 %v3573
  %3597 = vmatprep.subr.mxu0 0.0
  %3598 = vmatpush1.msra.mxu0 %v3574
  %3599 = vmatprep.subr.mxu0 0.0
  %3600 = vmatpush1.msra.mxu0 %v3575
  %3601 = vmatprep.subr.mxu0 0.0
  %3602 = vmatpush1.msra.mxu0 %v3576
  %3603 = vmatprep.subr.mxu0 0.0
  %3604 = vmatpush1.msra.mxu0 %v3577
  %3605 = vmatprep.subr.mxu0 0.0
  %3606 = vmatpush1.msra.mxu0 %v3578
  %3607 = vmatprep.subr.mxu0 0.0
  %3608 = vmatpush1.msra.mxu0 %v3579
  %3609 = vmatprep.subr.mxu0 0.0
  %3610 = vmatpush1.msra.mxu0 %v3580
  %3611 = vmatprep.subr.mxu0 0.0
  %3612 = vmatpush1.msra.mxu0 %v3581
  %3613 = vmatprep.subr.mxu0 0.0
  %3614 = vmatpush1.msra.mxu0 %v3582
  %3615 = vmatprep.subr.mxu0 0.0
  %3616 = vmatpush1.msra.mxu0 0.0
  %3617 = vmatprep.subr.mxu0 0.0
  %3618 = vmatpush1.msra.mxu0 0.0
  %3619 = vmatprep.subr.mxu0 0.0
  %3620 = vmatpush1.msra.mxu0 0.0
  %3621 = vmatprep.subr.mxu0 0.0
  %3622 = vmatpush1.msra.mxu0 0.0
  %3623 = vmatprep.subr.mxu0 0.0
  %3624 = vmatpush1.msra.mxu0 0.0
  %3625 = vmatprep.subr.mxu0 0.0
  %3626 = vmatpush1.msra.mxu0 0.0
  %3627 = vmatprep.subr.mxu0 0.0
  %3628 = vmatpush1.msra.mxu0 0.0
  %3629 = vmatprep.subr.mxu0 0.0
  %3630 = vmatpush1.msra.mxu0 0.0
  %3631 = vmatprep.subr.mxu0 0.0
  %3632 = vmatpush1.msra.mxu0 0.0
  %3633 = vmatprep.subr.mxu0 0.0
  %3634 = vmatpush1.msra.mxu0 0.0
  %3635 = vmatprep.subr.mxu0 0.0
  %3636 = vmatpush1.msra.mxu0 0.0
  %3637 = vmatprep.subr.mxu0 0.0
  %3638 = vmatpush1.msra.mxu0 0.0
  %3639 = vmatprep.subr.mxu0 0.0
  %3640 = vmatpush1.msra.mxu0 0.0
  %3641 = vmatprep.subr.mxu0 0.0
  %3642 = vmatpush1.msra.mxu0 0.0
  %3643 = vmatprep.subr.mxu0 0.0
  %3644 = vmatpush1.msra.mxu0 0.0
  %3645 = vmatprep.subr.mxu0 0.0
  %3646 = vmatpush1.msra.mxu0 0.0
  %3647 = vmatprep.mubr.f32.mxu0 0.0
  %3648 = vmatmul.mubr.f32.gmra.mrb[0].mxu0 %v2959
  %v3649 = vpop.f32.mrb[0].mxu0
  %v3650 = vadd.f32 0.0, %v3649
  %v3651 = vpop.f32.mrb[0].mxu0
  %3652 = vdwg.mxu0
  %v3661 = vsel %vm217, %v3520, %v3513
  %v3662 = vsel %vm219, %v3527, %v3661
  %v3663 = vsel %vm221, %v3534, %v3662
  %v3664 = vsel %vm223, %v3541, %v3663
  %v3665 = vsel %vm225, %v3548, %v3664
  %v3666 = vsel %vm227, %v3555, %v3665
  %v3667 = vsel %vm229, %v3562, %v3666
  %v3668 = vsel %vm54, %v3667, 0
  %3670 = vmatprep.subr.mxu0 0.0
  %3671 = vmatpush1.msra.mxu0 %v3563
  %3672 = vmatprep.subr.mxu0 0.0
  %3673 = vmatpush1.msra.mxu0 %v3564
  %3674 = vmatprep.subr.mxu0 0.0
  %3675 = vmatpush1.msra.mxu0 %v3565
  %3676 = vmatprep.subr.mxu0 0.0
  %3677 = vmatpush1.msra.mxu0 %v3566
  %3678 = vmatprep.subr.mxu0 0.0
  %3679 = vmatpush1.msra.mxu0 0.0
  %3680 = vmatprep.subr.mxu0 0.0
  %3681 = vmatpush1.msra.mxu0 0.0
  %3682 = vmatprep.subr.mxu0 0.0
  %3683 = vmatpush1.msra.mxu0 0.0
  %3684 = vmatprep.subr.mxu0 0.0
  %3685 = vmatpush1.msra.mxu0 0.0
  %3686 = vmatprep.subr.mxu0 0.0
  %3687 = vmatpush1.msra.mxu0 0.0
  %3688 = vmatprep.subr.mxu0 0.0
  %3689 = vmatpush1.msra.mxu0 0.0
  %3690 = vmatprep.subr.mxu0 0.0
  %3691 = vmatpush1.msra.mxu0 0.0
  %3692 = vmatprep.subr.mxu0 0.0
  %3693 = vmatpush1.msra.mxu0 0.0
  %3694 = vmatprep.subr.mxu0 0.0
  %3695 = vmatpush1.msra.mxu0 0.0
  %3696 = vmatprep.subr.mxu0 0.0
  %3697 = vmatpush1.msra.mxu0 0.0
  %3698 = vmatprep.subr.mxu0 0.0
  %3699 = vmatpush1.msra.mxu0 0.0
  %3700 = vmatprep.subr.mxu0 0.0
  %3701 = vmatpush1.msra.mxu0 0.0
  %3702 = vmatprep.subr.mxu0 0.0
  %3703 = vmatpush1.msra.mxu0 0.0
  %3704 = vmatprep.subr.mxu0 0.0
  %3705 = vmatpush1.msra.mxu0 0.0
  %3706 = vmatprep.subr.mxu0 0.0
  %3707 = vmatpush1.msra.mxu0 0.0
  %3708 = vmatprep.subr.mxu0 0.0
  %3709 = vmatpush1.msra.mxu0 0.0
  %3710 = vmatprep.subr.mxu0 0.0
  %3711 = vmatpush1.msra.mxu0 0.0
  %3712 = vmatprep.subr.mxu0 0.0
  %3713 = vmatpush1.msra.mxu0 0.0
  %3714 = vmatprep.subr.mxu0 0.0
  %3715 = vmatpush1.msra.mxu0 0.0
  %3716 = vmatprep.subr.mxu0 0.0
  %3717 = vmatpush1.msra.mxu0 0.0
  %3718 = vmatprep.subr.mxu0 0.0
  %3719 = vmatpush1.msra.mxu0 0.0
  %3720 = vmatprep.subr.mxu0 0.0
  %3721 = vmatpush1.msra.mxu0 0.0
  %3722 = vmatprep.subr.mxu0 0.0
  %3723 = vmatpush1.msra.mxu0 0.0
  %3724 = vmatprep.subr.mxu0 0.0
  %3725 = vmatpush1.msra.mxu0 0.0
  %3726 = vmatprep.subr.mxu0 0.0
  %3727 = vmatpush1.msra.mxu0 0.0
  %3728 = vmatprep.subr.mxu0 0.0
  %3729 = vmatpush1.msra.mxu0 0.0
  %3730 = vmatprep.subr.mxu0 0.0
  %3731 = vmatpush1.msra.mxu0 0.0
  %3732 = vmatprep.subr.mxu0 0.0
  %3733 = vmatpush1.msra.mxu0 0.0
  %3734 = vmatprep.mubr.f32.mxu0 0.0
  %3735 = vmatmul.mubr.f32.gmra.mrb[0].mxu0 %v3668
  %v3736 = vpop.f32.mrb[0].mxu0
  %v3737 = vadd.f32 %v3650, %v3736
  %v3738 = vpop.f32.mrb[0].mxu0
  %3739 = vdwg.mxu0
  %v3740 = vld [vmem:[%s5] sm:$0xff]
  %v3741 = vld [vmem:[%s5 + $0x8] sm:$0xff]
  %v3742 = vld [vmem:[%s5 + $0x10] sm:$0xff]
  %v3743 = vld [vmem:[%s5 + $0x18] sm:$0xff]
  %v3744 = vld [vmem:[%s6] sm:$0x1]
  %v3746 = vlaneseq
  %v3747 = vshrl.u32 %v3746, 7
  %v3748 = vsub.s32 0, %v3747
  %v3749 = vrot.slane %v3744, %v3748
  %3751 = vmatprep.subr.mxu0 0.0
  %3752 = vmatpush1.msra.mxu0 %v3740
  %3753 = vmatprep.subr.mxu0 0.0
  %3754 = vmatpush1.msra.mxu0 %v3741
  %3755 = vmatprep.subr.mxu0 0.0
  %3756 = vmatpush1.msra.mxu0 %v3742
  %3757 = vmatprep.subr.mxu0 0.0
  %3758 = vmatpush1.msra.mxu0 %v3743
  %3759 = vmatprep.subr.mxu0 0.0
  %3760 = vmatpush1.msra.mxu0 0.0
  %3761 = vmatprep.subr.mxu0 0.0
  %3762 = vmatpush1.msra.mxu0 0.0
  %3763 = vmatprep.subr.mxu0 0.0
  %3764 = vmatpush1.msra.mxu0 0.0
  %3765 = vmatprep.subr.mxu0 0.0
  %3766 = vmatpush1.msra.mxu0 0.0
  %3767 = vmatprep.subr.mxu0 0.0
  %3768 = vmatpush1.msra.mxu0 0.0
  %3769 = vmatprep.subr.mxu0 0.0
  %3770 = vmatpush1.msra.mxu0 0.0
  %3771 = vmatprep.subr.mxu0 0.0
  %3772 = vmatpush1.msra.mxu0 0.0
  %3773 = vmatprep.subr.mxu0 0.0
  %3774 = vmatpush1.msra.mxu0 0.0
  %3775 = vmatprep.subr.mxu0 0.0
  %3776 = vmatpush1.msra.mxu0 0.0
  %3777 = vmatprep.subr.mxu0 0.0
  %3778 = vmatpush1.msra.mxu0 0.0
  %3779 = vmatprep.subr.mxu0 0.0
  %3780 = vmatpush1.msra.mxu0 0.0
  %3781 = vmatprep.subr.mxu0 0.0
  %3782 = vmatpush1.msra.mxu0 0.0
  %3783 = vmatprep.subr.mxu0 0.0
  %3784 = vmatpush1.msra.mxu0 0.0
  %3785 = vmatprep.subr.mxu0 0.0
  %3786 = vmatpush1.msra.mxu0 0.0
  %3787 = vmatprep.subr.mxu0 0.0
  %3788 = vmatpush1.msra.mxu0 0.0
  %3789 = vmatprep.subr.mxu0 0.0
  %3790 = vmatpush1.msra.mxu0 0.0
  %3791 = vmatprep.subr.mxu0 0.0
  %3792 = vmatpush1.msra.mxu0 0.0
  %3793 = vmatprep.subr.mxu0 0.0
  %3794 = vmatpush1.msra.mxu0 0.0
  %3795 = vmatprep.subr.mxu0 0.0
  %3796 = vmatpush1.msra.mxu0 0.0
  %3797 = vmatprep.subr.mxu0 0.0
  %3798 = vmatpush1.msra.mxu0 0.0
  %3799 = vmatprep.subr.mxu0 0.0
  %3800 = vmatpush1.msra.mxu0 0.0
  %3801 = vmatprep.subr.mxu0 0.0
  %3802 = vmatpush1.msra.mxu0 0.0
  %3803 = vmatprep.subr.mxu0 0.0
  %3804 = vmatpush1.msra.mxu0 0.0
  %3805 = vmatprep.subr.mxu0 0.0
  %3806 = vmatpush1.msra.mxu0 0.0
  %3807 = vmatprep.subr.mxu0 0.0
  %3808 = vmatpush1.msra.mxu0 0.0
  %3809 = vmatprep.subr.mxu0 0.0
  %3810 = vmatpush1.msra.mxu0 0.0
  %3811 = vmatprep.subr.mxu0 0.0
  %3812 = vmatpush1.msra.mxu0 0.0
  %3813 = vmatprep.subr.mxu0 0.0
  %3814 = vmatpush1.msra.mxu0 0.0
  %3815 = vmatprep.mubr.f32.mxu0 0.0
  %3816 = vmatmul.mubr.f32.gmra.mrb[0].mxu0 %v2856
  %v3817 = vpop.f32.mrb[0].mxu0
  %v3818 = vadd.f32 %v3749, %v3817
  %v3819 = vpop.f32.mrb[0].mxu0
  %3820 = vdwg.mxu0
  %v3821 = vadd.f32 %v3737, %v3818
  %v3822 = vxor.u32 %v3821, 2147483648
  %v3823 = vmul.f32 %v3822, 1.442695
  %v3824 = vpow.pop %v3823
  %v3825 = vadd.f32 %v3824, 1.0
  %v3826 = vrcp.pop %v3825
  %v3827 = vmul.f32 1.0, %v3826
  %3829 = vrot.lane.b32.xlu0 %v3818, 64
  %v3830 = vpop.permute.xlu0 %3829
  %v3832 = vmul.f32 %v3827, %v3830
  %3834 = vrot.lane.b32.xlu0 %v3832, 64
  %v3835 = vpop.permute.xlu0 %3834
  %v3837 = vadd.f32 %v3737, %v3835
  %v3838 = vtanh.pop %v3837
  %v3839 = vsub.f32 1.0, %v3827
  %3841 = vrot.lane.b32.xlu0 %v3838, 96
  %v3842 = vpop.permute.xlu0 %3841
  %v3844 = vmul.f32 %v3839, %v3842
  %v3845 = vmul.f32 %v3827, %v2841
  %v3846 = vadd.f32 %v3844, %v3845
  %v3847 = vld [vmem:[%s7] sm:$0xff]
  %v3848 = vld [vmem:[%s7 + $0x8] sm:$0xff]
  %v3849 = vld [vmem:[%s7 + $0x10] sm:$0xff]
  %v3850 = vld [vmem:[%s7 + $0x18] sm:$0xff]
  %v3851 = vld [vmem:[%s8] sm:$0x1]
  %v3853 = vlaneseq
  %v3854 = vshrl.u32 %v3853, 7
  %v3855 = vsub.s32 0, %v3854
  %v3856 = vrot.slane %v3851, %v3855
  %3859 = vrot.lane.b32.xlu0 %v3846, 96
  %v3860 = vpop.permute.xlu0 %3859
  %v3861 = vsel %vm54, %v3860, 0
  %3863 = vmatprep.subr.mxu0 0.0
  %3864 = vmatpush1.msra.mxu0 %v3847
  %3865 = vmatprep.subr.mxu0 0.0
  %3866 = vmatpush1.msra.mxu0 %v3848
  %3867 = vmatprep.subr.mxu0 0.0
  %3868 = vmatpush1.msra.mxu0 %v3849
  %3869 = vmatprep.subr.mxu0 0.0
  %3870 = vmatpush1.msra.mxu0 %v3850
  %3871 = vmatprep.subr.mxu0 0.0
  %3872 = vmatpush1.msra.mxu0 0.0
  %3873 = vmatprep.subr.mxu0 0.0
  %3874 = vmatpush1.msra.mxu0 0.0
  %3875 = vmatprep.subr.mxu0 0.0
  %3876 = vmatpush1.msra.mxu0 0.0
  %3877 = vmatprep.subr.mxu0 0.0
  %3878 = vmatpush1.msra.mxu0 0.0
  %3879 = vmatprep.subr.mxu0 0.0
  %3880 = vmatpush1.msra.mxu0 0.0
  %3881 = vmatprep.subr.mxu0 0.0
  %3882 = vmatpush1.msra.mxu0 0.0
  %3883 = vmatprep.subr.mxu0 0.0
  %3884 = vmatpush1.msra.mxu0 0.0
  %3885 = vmatprep.subr.mxu0 0.0
  %3886 = vmatpush1.msra.mxu0 0.0
  %3887 = vmatprep.subr.mxu0 0.0
  %3888 = vmatpush1.msra.mxu0 0.0
  %3889 = vmatprep.subr.mxu0 0.0
  %3890 = vmatpush1.msra.mxu0 0.0
  %3891 = vmatprep.subr.mxu0 0.0
  %3892 = vmatpush1.msra.mxu0 0.0
  %3893 = vmatprep.subr.mxu0 0.0
  %3894 = vmatpush1.msra.mxu0 0.0
  %3895 = vmatprep.subr.mxu0 0.0
  %3896 = vmatpush1.msra.mxu0 0.0
  %3897 = vmatprep.subr.mxu0 0.0
  %3898 = vmatpush1.msra.mxu0 0.0
  %3899 = vmatprep.subr.mxu0 0.0
  %3900 = vmatpush1.msra.mxu0 0.0
  %3901 = vmatprep.subr.mxu0 0.0
  %3902 = vmatpush1.msra.mxu0 0.0
  %3903 = vmatprep.subr.mxu0 0.0
  %3904 = vmatpush1.msra.mxu0 0.0
  %3905 = vmatprep.subr.mxu0 0.0
  %3906 = vmatpush1.msra.mxu0 0.0
  %3907 = vmatprep.subr.mxu0 0.0
  %3908 = vmatpush1.msra.mxu0 0.0
  %3909 = vmatprep.subr.mxu0 0.0
  %3910 = vmatpush1.msra.mxu0 0.0
  %3911 = vmatprep.subr.mxu0 0.0
  %3912 = vmatpush1.msra.mxu0 0.0
  %3913 = vmatprep.subr.mxu0 0.0
  %3914 = vmatpush1.msra.mxu0 0.0
  %3915 = vmatprep.subr.mxu0 0.0
  %3916 = vmatpush1.msra.mxu0 0.0
  %3917 = vmatprep.subr.mxu0 0.0
  %3918 = vmatpush1.msra.mxu0 0.0
  %3919 = vmatprep.subr.mxu0 0.0
  %3920 = vmatpush1.msra.mxu0 0.0
  %3921 = vmatprep.subr.mxu0 0.0
  %3922 = vmatpush1.msra.mxu0 0.0
  %3923 = vmatprep.subr.mxu0 0.0
  %3924 = vmatpush1.msra.mxu0 0.0
  %3925 = vmatprep.subr.mxu0 0.0
  %3926 = vmatpush1.msra.mxu0 0.0
  %3927 = vmatprep.mubr.f32.mxu0 0.0
  %3928 = vmatmul.mubr.f32.gmra.mrb[0].mxu0 %v3861
  %v3929 = vpop.f32.mrb[0].mxu0
  %v3930 = vadd.f32 %v3856, %v3929
  %v3931 = vpop.f32.mrb[0].mxu0
  %3932 = vdwg.mxu0
  %3933 = vmax.xlane.f32.xlu0 %v3930
  %v3934 = vpop.xlane.xlu0 %3933
  %v3935 = vsub.f32 %v3930, %v3934
  %v3936 = vmul.f32 %v3935, 1.442695
  %v3937 = vpow.pop %v3936
  %3938 = vadd.xlane.f32.xlu0 %v3937
  %v3939 = vpop.xlane.xlu0 %3938
  %v3940 = vlog2.pop %v3939
  %v3941 = vmul.f32 %v3940, 0.6931472
  %v3942 = vadd.f32 %v3934, %v3941
  %v3943 = vsub.f32 %v3930, %v3942
  %s3944 = scalar_lea.vmem %s9, 32
  %3945 = vst [vmem:[%s3944] sm:$0xff] %v3943
  %vm3946 = vcmp.ge.f32.partialorder %v3930, %v3934
  %v3947 = vsel %vm3946, %v33, 128
  %v3948 = vand.u32 %v3947, 65535
  %v3949 = vshra.s32 %v3947, 16
  %v3950 = vcvt.s32.f32 %v3948
  %v3951 = vcvt.s32.f32 %v3949
  %3952 = vmin.xlane.f32.xlu0 %v3951
  %v3953 = vpop.xlane.xlu0 %3952
  %vm3954 = vcmp.eq.f32.partialorder %v3951, %v3953
  %v3955 = vsel %vm3954, %v3950, inf
  %3956 = vmin.xlane.f32.xlu0 %v3955
  %v3957 = vpop.xlane.xlu0 %3956
  %v3958 = vcvt.f32.s32 %v3957
  %v3959 = vcvt.f32.s32 %v3953
  %v3960 = vshll.u32 %v3959, 16
  %v3961 = vadd.s32 %v3960, %v3958
  %vm3962 = vcmp.eq.s32.totalorder %v33, %v3961
  %v3963 = vsel %vm3962, 1, 0
  %v3964 = vcvt.s32.f32 %v3963
  %v3965 = vld [vmem:[%s1] sm:$0xff]
  %v3966 = vld [vmem:[%s1 + $0x8] sm:$0xff]
  %v3967 = vld [vmem:[%s1 + $0x10] sm:$0xff]
  %v3968 = vld [vmem:[%s1 + $0x18] sm:$0xff]
  %v3969 = vld [vmem:[%s1 + $0x20] sm:$0xff]
  %v3970 = vld [vmem:[%s1 + $0x28] sm:$0xff]
  %v3971 = vld [vmem:[%s1 + $0x30] sm:$0xff]
  %v3972 = vld [vmem:[%s1 + $0x38] sm:$0xff]
  %v3973 = vcombine.high %v3846, %v3846
  %v3975 = vunpack.c.l.s4 1966171168
  %v3976 = vunpack.c.0.s8 %v3975
  %v3977 = vlaneseq
  %v3978 = vshrl.u32 %v3977, 7
  %v3979 = vsub.s32 %v3976, %v3978
  %v3980 = vrot.slane %v3846, %v3979
  %v3982 = vunpack.c.l.s4 1966171168
  %v3983 = vunpack.c.0.s8 %v3982
  %v3984 = vlaneseq
  %v3985 = vshrl.u32 %v3984, 7
  %v3986 = vsub.s32 %v3983, %v3985
  %v3987 = vrot.slane %v3973, %v3986
  %v3988 = vcombine.high %v3980, %v3980
  %v3989 = vcombine.high %v3987, %v3987
  %v3991 = vunpack.c.l.s4 1966171168
  %v3992 = vunpack.c.0.s8 %v3991
  %v3993 = vlaneseq
  %v3994 = vshrl.u32 %v3993, 7
  %v3995 = vsub.s32 %v3992, %v3994
  %v3996 = vrot.slane %v3980, %v3995
  %v3998 = vunpack.c.l.s4 1966171168
  %v3999 = vunpack.c.0.s8 %v3998
  %v4000 = vlaneseq
  %v4001 = vshrl.u32 %v4000, 7
  %v4002 = vsub.s32 %v3999, %v4001
  %v4003 = vrot.slane %v3987, %v4002
  %v4005 = vunpack.c.l.s4 1966171168
  %v4006 = vunpack.c.0.s8 %v4005
  %v4007 = vlaneseq
  %v4008 = vshrl.u32 %v4007, 7
  %v4009 = vsub.s32 %v4006, %v4008
  %v4010 = vrot.slane %v3988, %v4009
  %v4012 = vunpack.c.l.s4 1966171168
  %v4013 = vunpack.c.0.s8 %v4012
  %v4014 = vlaneseq
  %v4015 = vshrl.u32 %v4014, 7
  %v4016 = vsub.s32 %v4013, %v4015
  %v4017 = vrot.slane %v3989, %v4016
  %v4018 = vcombine.high %v3996, %v3996
  %v4019 = vcombine.high %v4003, %v4003
  %v4020 = vcombine.high %v4010, %v4010
  %v4021 = vcombine.high %v4017, %v4017
  %v4022 = vlaneseq
  %v4023 = vshrl.u32 %v4022, 7
  %v4024 = vsub.s32 0, %v4023
  %v4025 = vrot.slane %v3996, %v4024
  %v4026 = vlaneseq
  %v4027 = vshrl.u32 %v4026, 7
  %v4028 = vsub.s32 0, %v4027
  %v4029 = vrot.slane %v4010, %v4028
  %v4030 = vlaneseq
  %v4031 = vshrl.u32 %v4030, 7
  %v4032 = vsub.s32 0, %v4031
  %v4033 = vrot.slane %v4018, %v4032
  %v4034 = vlaneseq
  %v4035 = vshrl.u32 %v4034, 7
  %v4036 = vsub.s32 0, %v4035
  %v4037 = vrot.slane %v4020, %v4036
  %v4038 = vlaneseq
  %v4039 = vshrl.u32 %v4038, 7
  %v4040 = vsub.s32 0, %v4039
  %v4041 = vrot.slane %v4003, %v4040
  %v4042 = vlaneseq
  %v4043 = vshrl.u32 %v4042, 7
  %v4044 = vsub.s32 0, %v4043
  %v4045 = vrot.slane %v4017, %v4044
  %v4046 = vlaneseq
  %v4047 = vshrl.u32 %v4046, 7
  %v4048 = vsub.s32 0, %v4047
  %v4049 = vrot.slane %v4019, %v4048
  %v4050 = vlaneseq
  %v4051 = vshrl.u32 %v4050, 7
  %v4052 = vsub.s32 0, %v4051
  %v4053 = vrot.slane %v4021, %v4052
  %4054 = vrot.lane.b32.xlu0 %v4025, 96
  %v4055 = vpop.permute.xlu0 %4054
  %4056 = vrot.lane.b32.xlu0 %v4029, 96
  %v4057 = vpop.permute.xlu0 %4056
  %4058 = vrot.lane.b32.xlu0 %v4033, 96
  %v4059 = vpop.permute.xlu0 %4058
  %4060 = vrot.lane.b32.xlu0 %v4037, 96
  %v4061 = vpop.permute.xlu0 %4060
  %4062 = vrot.lane.b32.xlu0 %v4041, 96
  %v4063 = vpop.permute.xlu0 %4062
  %4064 = vrot.lane.b32.xlu0 %v4045, 96
  %v4065 = vpop.permute.xlu0 %4064
  %4066 = vrot.lane.b32.xlu0 %v4049, 96
  %v4067 = vpop.permute.xlu0 %4066
  %4068 = vrot.lane.b32.xlu0 %v4053, 96
  %v4069 = vpop.permute.xlu0 %4068
  %v4078 = vmul.f32 %v3965, %v4055
  %v4079 = vmul.f32 %v3966, %v4057
  %v4080 = vmul.f32 %v3967, %v4059
  %v4081 = vmul.f32 %v3968, %v4061
  %v4082 = vmul.f32 %v3969, %v4063
  %v4083 = vmul.f32 %v3970, %v4065
  %v4084 = vmul.f32 %v3971, %v4067
  %v4085 = vmul.f32 %v3972, %v4069
  %v4086 = vsel %vm54, %v4078, 0.0
  %4087 = vadd.xlane.f32.xlu0 %v4086
  %v4088 = vpop.xlane.xlu0 %4087
  %v4089 = vsel %vm54, %v4079, 0.0
  %4090 = vadd.xlane.f32.xlu0 %v4089
  %v4091 = vpop.xlane.xlu0 %4090
  %v4092 = vsel %vm54, %v4080, 0.0
  %4093 = vadd.xlane.f32.xlu0 %v4092
  %v4094 = vpop.xlane.xlu0 %4093
  %v4095 = vsel %vm54, %v4081, 0.0
  %4096 = vadd.xlane.f32.xlu0 %v4095
  %v4097 = vpop.xlane.xlu0 %4096
  %v4098 = vsel %vm54, %v4082, 0.0
  %4099 = vadd.xlane.f32.xlu0 %v4098
  %v4100 = vpop.xlane.xlu0 %4099
  %v4101 = vsel %vm54, %v4083, 0.0
  %4102 = vadd.xlane.f32.xlu0 %v4101
  %v4103 = vpop.xlane.xlu0 %4102
  %v4104 = vsel %vm54, %v4084, 0.0
  %4105 = vadd.xlane.f32.xlu0 %v4104
  %v4106 = vpop.xlane.xlu0 %4105
  %v4107 = vsel %vm54, %v4085, 0.0
  %4108 = vadd.xlane.f32.xlu0 %v4107
  %v4109 = vpop.xlane.xlu0 %4108
  %v4110 = vld [vmem:[%s2] sm:$0xff]
  %v4112 = vlaneseq
  %v4113 = vshrl.u32 %v4112, 7
  %v4114 = vsub.s32 0, %v4113
  %v4115 = vrot.slane %v4110, %v4114
  %4117 = vbcast.lane.b32.xlu0 %v4115, 256
  %v4118 = vpop.permute.xlu0 %4117
  %v4119 = vlaneseq
  %v4120 = vshrl.u32 %v4119, 7
  %v4121 = vsub.s32 1, %v4120
  %v4122 = vrot.slane %v4110, %v4121
  %4124 = vbcast.lane.b32.xlu0 %v4122, 256
  %v4125 = vpop.permute.xlu0 %4124
  %v4126 = vlaneseq
  %v4127 = vshrl.u32 %v4126, 7
  %v4128 = vsub.s32 2, %v4127
  %v4129 = vrot.slane %v4110, %v4128
  %4131 = vbcast.lane.b32.xlu0 %v4129, 256
  %v4132 = vpop.permute.xlu0 %4131
  %v4133 = vlaneseq
  %v4134 = vshrl.u32 %v4133, 7
  %v4135 = vsub.s32 3, %v4134
  %v4136 = vrot.slane %v4110, %v4135
  %4138 = vbcast.lane.b32.xlu0 %v4136, 256
  %v4139 = vpop.permute.xlu0 %4138
  %v4140 = vlaneseq
  %v4141 = vshrl.u32 %v4140, 7
  %v4142 = vsub.s32 4, %v4141
  %v4143 = vrot.slane %v4110, %v4142
  %4145 = vbcast.lane.b32.xlu0 %v4143, 256
  %v4146 = vpop.permute.xlu0 %4145
  %v4147 = vlaneseq
  %v4148 = vshrl.u32 %v4147, 7
  %v4149 = vsub.s32 5, %v4148
  %v4150 = vrot.slane %v4110, %v4149
  %4152 = vbcast.lane.b32.xlu0 %v4150, 256
  %v4153 = vpop.permute.xlu0 %4152
  %v4154 = vlaneseq
  %v4155 = vshrl.u32 %v4154, 7
  %v4156 = vsub.s32 6, %v4155
  %v4157 = vrot.slane %v4110, %v4156
  %4159 = vbcast.lane.b32.xlu0 %v4157, 256
  %v4160 = vpop.permute.xlu0 %4159
  %v4161 = vlaneseq
  %v4162 = vshrl.u32 %v4161, 7
  %v4163 = vsub.s32 7, %v4162
  %v4164 = vrot.slane %v4110, %v4163
  %4166 = vbcast.lane.b32.xlu0 %v4164, 256
  %v4167 = vpop.permute.xlu0 %4166
  %v4176 = vadd.f32 %v4088, %v4118
  %v4177 = vadd.f32 %v4091, %v4125
  %v4178 = vadd.f32 %v4094, %v4132
  %v4179 = vadd.f32 %v4097, %v4139
  %v4180 = vadd.f32 %v4100, %v4146
  %v4181 = vadd.f32 %v4103, %v4153
  %v4182 = vadd.f32 %v4106, %v4160
  %v4183 = vadd.f32 %v4109, %v4167
  %4192 = vset.pattern.permute.xlu0 0
  %4193 = vperm.xlu0 %4192, %v4176
  %v4194 = vpop.permute.xlu0 %4193
  %4195 = vset.pattern.permute.xlu0 0
  %4196 = vperm.xlu0 %4195, %v4177
  %v4197 = vpop.permute.xlu0 %4196
  %4198 = vset.pattern.permute.xlu0 0
  %4199 = vperm.xlu0 %4198, %v4178
  %v4200 = vpop.permute.xlu0 %4199
  %4201 = vset.pattern.permute.xlu0 0
  %4202 = vperm.xlu0 %4201, %v4179
  %v4203 = vpop.permute.xlu0 %4202
  %4204 = vset.pattern.permute.xlu0 0
  %4205 = vperm.xlu0 %4204, %v4180
  %v4206 = vpop.permute.xlu0 %4205
  %4207 = vset.pattern.permute.xlu0 0
  %4208 = vperm.xlu0 %4207, %v4181
  %v4209 = vpop.permute.xlu0 %4208
  %4210 = vset.pattern.permute.xlu0 0
  %4211 = vperm.xlu0 %4210, %v4182
  %v4212 = vpop.permute.xlu0 %4211
  %4213 = vset.pattern.permute.xlu0 0
  %4214 = vperm.xlu0 %4213, %v4183
  %v4215 = vpop.permute.xlu0 %4214
  %v4216 = vlaneseq
  %v4217 = vshrl.u32 %v4216, 7
  %v4218 = vsub.s32 %v33, %v4217
  %v4219 = vrot.slane %v4194, %v4218
  %v4220 = vlaneseq
  %v4221 = vshrl.u32 %v4220, 7
  %v4222 = vsub.s32 %v33, %v4221
  %v4223 = vrot.slane %v4197, %v4222
  %v4224 = vlaneseq
  %v4225 = vshrl.u32 %v4224, 7
  %v4226 = vsub.s32 %v33, %v4225
  %v4227 = vrot.slane %v4200, %v4226
  %v4228 = vlaneseq
  %v4229 = vshrl.u32 %v4228, 7
  %v4230 = vsub.s32 %v33, %v4229
  %v4231 = vrot.slane %v4203, %v4230
  %v4232 = vlaneseq
  %v4233 = vshrl.u32 %v4232, 7
  %v4234 = vsub.s32 %v33, %v4233
  %v4235 = vrot.slane %v4206, %v4234
  %v4236 = vlaneseq
  %v4237 = vshrl.u32 %v4236, 7
  %v4238 = vsub.s32 %v33, %v4237
  %v4239 = vrot.slane %v4209, %v4238
  %v4240 = vlaneseq
  %v4241 = vshrl.u32 %v4240, 7
  %v4242 = vsub.s32 %v33, %v4241
  %v4243 = vrot.slane %v4212, %v4242
  %v4244 = vlaneseq
  %v4245 = vshrl.u32 %v4244, 7
  %v4246 = vsub.s32 %v33, %v4245
  %v4247 = vrot.slane %v4215, %v4246
  %v4248 = vsel %vm217, %v4223, %v4219
  %v4249 = vsel %vm219, %v4227, %v4248
  %v4250 = vsel %vm221, %v4231, %v4249
  %v4251 = vsel %vm223, %v4235, %v4250
  %v4252 = vsel %vm225, %v4239, %v4251
  %v4253 = vsel %vm227, %v4243, %v4252
  %v4254 = vsel %vm229, %v4247, %v4253
  %v4256 = vsel %vm232, %v4254, -inf
  %4257 = vmax.xlane.f32.xlu0 %v4256
  %v4258 = vpop.xlane.xlu0 %4257
  %v4260 = vlaneseq
  %v4261 = vshrl.u32 %v4260, 7
  %v4262 = vsub.s32 0, %v4261
  %v4263 = vrot.slane %v4258, %v4262
  %v4264 = vlaneseq
  %v4265 = vshrl.u32 %v4264, 7
  %v4266 = vsub.s32 1, %v4265
  %v4267 = vrot.slane %v4258, %v4266
  %v4268 = vlaneseq
  %v4269 = vshrl.u32 %v4268, 7
  %v4270 = vsub.s32 2, %v4269
  %v4271 = vrot.slane %v4258, %v4270
  %v4272 = vlaneseq
  %v4273 = vshrl.u32 %v4272, 7
  %v4274 = vsub.s32 3, %v4273
  %v4275 = vrot.slane %v4258, %v4274
  %v4276 = vlaneseq
  %v4277 = vshrl.u32 %v4276, 7
  %v4278 = vsub.s32 4, %v4277
  %v4279 = vrot.slane %v4258, %v4278
  %v4280 = vlaneseq
  %v4281 = vshrl.u32 %v4280, 7
  %v4282 = vsub.s32 5, %v4281
  %v4283 = vrot.slane %v4258, %v4282
  %v4284 = vlaneseq
  %v4285 = vshrl.u32 %v4284, 7
  %v4286 = vsub.s32 6, %v4285
  %v4287 = vrot.slane %v4258, %v4286
  %v4288 = vlaneseq
  %v4289 = vshrl.u32 %v4288, 7
  %v4290 = vsub.s32 7, %v4289
  %v4291 = vrot.slane %v4258, %v4290
  %v4300 = vsub.f32 %v4176, %v4263
  %v4301 = vsub.f32 %v4177, %v4267
  %v4302 = vsub.f32 %v4178, %v4271
  %v4303 = vsub.f32 %v4179, %v4275
  %v4304 = vsub.f32 %v4180, %v4279
  %v4305 = vsub.f32 %v4181, %v4283
  %v4306 = vsub.f32 %v4182, %v4287
  %v4307 = vsub.f32 %v4183, %v4291
  %v4308 = vmul.f32 %v4300, 1.442695
  %v4309 = vpow.pop %v4308
  %v4310 = vmul.f32 %v4301, 1.442695
  %v4311 = vpow.pop %v4310
  %v4312 = vmul.f32 %v4302, 1.442695
  %v4313 = vpow.pop %v4312
  %v4314 = vmul.f32 %v4303, 1.442695
  %v4315 = vpow.pop %v4314
  %v4316 = vmul.f32 %v4304, 1.442695
  %v4317 = vpow.pop %v4316
  %v4318 = vmul.f32 %v4305, 1.442695
  %v4319 = vpow.pop %v4318
  %v4320 = vmul.f32 %v4306, 1.442695
  %v4321 = vpow.pop %v4320
  %v4322 = vmul.f32 %v4307, 1.442695
  %v4323 = vpow.pop %v4322
  %4332 = vset.pattern.permute.xlu0 0
  %4333 = vperm.xlu0 %4332, %v4309
  %v4334 = vpop.permute.xlu0 %4333
  %4335 = vset.pattern.permute.xlu0 0
  %4336 = vperm.xlu0 %4335, %v4311
  %v4337 = vpop.permute.xlu0 %4336
  %4338 = vset.pattern.permute.xlu0 0
  %4339 = vperm.xlu0 %4338, %v4313
  %v4340 = vpop.permute.xlu0 %4339
  %4341 = vset.pattern.permute.xlu0 0
  %4342 = vperm.xlu0 %4341, %v4315
  %v4343 = vpop.permute.xlu0 %4342
  %4344 = vset.pattern.permute.xlu0 0
  %4345 = vperm.xlu0 %4344, %v4317
  %v4346 = vpop.permute.xlu0 %4345
  %4347 = vset.pattern.permute.xlu0 0
  %4348 = vperm.xlu0 %4347, %v4319
  %v4349 = vpop.permute.xlu0 %4348
  %4350 = vset.pattern.permute.xlu0 0
  %4351 = vperm.xlu0 %4350, %v4321
  %v4352 = vpop.permute.xlu0 %4351
  %4353 = vset.pattern.permute.xlu0 0
  %4354 = vperm.xlu0 %4353, %v4323
  %v4355 = vpop.permute.xlu0 %4354
  %v4356 = vlaneseq
  %v4357 = vshrl.u32 %v4356, 7
  %v4358 = vsub.s32 %v33, %v4357
  %v4359 = vrot.slane %v4334, %v4358
  %v4360 = vlaneseq
  %v4361 = vshrl.u32 %v4360, 7
  %v4362 = vsub.s32 %v33, %v4361
  %v4363 = vrot.slane %v4337, %v4362
  %v4364 = vlaneseq
  %v4365 = vshrl.u32 %v4364, 7
  %v4366 = vsub.s32 %v33, %v4365
  %v4367 = vrot.slane %v4340, %v4366
  %v4368 = vlaneseq
  %v4369 = vshrl.u32 %v4368, 7
  %v4370 = vsub.s32 %v33, %v4369
  %v4371 = vrot.slane %v4343, %v4370
  %v4372 = vlaneseq
  %v4373 = vshrl.u32 %v4372, 7
  %v4374 = vsub.s32 %v33, %v4373
  %v4375 = vrot.slane %v4346, %v4374
  %v4376 = vlaneseq
  %v4377 = vshrl.u32 %v4376, 7
  %v4378 = vsub.s32 %v33, %v4377
  %v4379 = vrot.slane %v4349, %v4378
  %v4380 = vlaneseq
  %v4381 = vshrl.u32 %v4380, 7
  %v4382 = vsub.s32 %v33, %v4381
  %v4383 = vrot.slane %v4352, %v4382
  %v4384 = vlaneseq
  %v4385 = vshrl.u32 %v4384, 7
  %v4386 = vsub.s32 %v33, %v4385
  %v4387 = vrot.slane %v4355, %v4386
  %v4388 = vsel %vm217, %v4363, %v4359
  %v4389 = vsel %vm219, %v4367, %v4388
  %v4390 = vsel %vm221, %v4371, %v4389
  %v4391 = vsel %vm223, %v4375, %v4390
  %v4392 = vsel %vm225, %v4379, %v4391
  %v4393 = vsel %vm227, %v4383, %v4392
  %v4394 = vsel %vm229, %v4387, %v4393
  %v4396 = vsel %vm232, %v4394, 0.0
  %4397 = vadd.xlane.f32.xlu0 %v4396
  %v4398 = vpop.xlane.xlu0 %4397
  %v4400 = vlaneseq
  %v4401 = vshrl.u32 %v4400, 7
  %v4402 = vsub.s32 0, %v4401
  %v4403 = vrot.slane %v4398, %v4402
  %v4404 = vlaneseq
  %v4405 = vshrl.u32 %v4404, 7
  %v4406 = vsub.s32 1, %v4405
  %v4407 = vrot.slane %v4398, %v4406
  %v4408 = vlaneseq
  %v4409 = vshrl.u32 %v4408, 7
  %v4410 = vsub.s32 2, %v4409
  %v4411 = vrot.slane %v4398, %v4410
  %v4412 = vlaneseq
  %v4413 = vshrl.u32 %v4412, 7
  %v4414 = vsub.s32 3, %v4413
  %v4415 = vrot.slane %v4398, %v4414
  %v4416 = vlaneseq
  %v4417 = vshrl.u32 %v4416, 7
  %v4418 = vsub.s32 4, %v4417
  %v4419 = vrot.slane %v4398, %v4418
  %v4420 = vlaneseq
  %v4421 = vshrl.u32 %v4420, 7
  %v4422 = vsub.s32 5, %v4421
  %v4423 = vrot.slane %v4398, %v4422
  %v4424 = vlaneseq
  %v4425 = vshrl.u32 %v4424, 7
  %v4426 = vsub.s32 6, %v4425
  %v4427 = vrot.slane %v4398, %v4426
  %v4428 = vlaneseq
  %v4429 = vshrl.u32 %v4428, 7
  %v4430 = vsub.s32 7, %v4429
  %v4431 = vrot.slane %v4398, %v4430
  %v4440 = vrcp.pop %v4403
  %v4441 = vmul.f32 %v4309, %v4440
  %v4442 = vrcp.pop %v4407
  %v4443 = vmul.f32 %v4311, %v4442
  %v4444 = vrcp.pop %v4411
  %v4445 = vmul.f32 %v4313, %v4444
  %v4446 = vrcp.pop %v4415
  %v4447 = vmul.f32 %v4315, %v4446
  %v4448 = vrcp.pop %v4419
  %v4449 = vmul.f32 %v4317, %v4448
  %v4450 = vrcp.pop %v4423
  %v4451 = vmul.f32 %v4319, %v4450
  %v4452 = vrcp.pop %v4427
  %v4453 = vmul.f32 %v4321, %v4452
  %v4454 = vrcp.pop %v4431
  %v4455 = vmul.f32 %v4323, %v4454
  %v4456 = vld [vmem:[%s0] sm:$0xff]
  %v4457 = vld [vmem:[%s0 + $0x8] sm:$0xff]
  %v4458 = vld [vmem:[%s0 + $0x10] sm:$0xff]
  %v4459 = vld [vmem:[%s0 + $0x18] sm:$0xff]
  %v4460 = vld [vmem:[%s0 + $0x20] sm:$0xff]
  %v4461 = vld [vmem:[%s0 + $0x28] sm:$0xff]
  %v4462 = vld [vmem:[%s0 + $0x30] sm:$0xff]
  %v4463 = vld [vmem:[%s0 + $0x38] sm:$0xff]
  %4465 = vset.pattern.permute.xlu0 0
  %4466 = vperm.xlu0 %4465, %v4441
  %v4467 = vpop.permute.xlu0 %4466
  %4470 = vset.pattern.permute.xlu0 0
  %4471 = vperm.xlu0 %4470, %v4443
  %v4472 = vpop.permute.xlu0 %4471
  %4475 = vset.pattern.permute.xlu0 0
  %4476 = vperm.xlu0 %4475, %v4445
  %v4477 = vpop.permute.xlu0 %4476
  %4480 = vset.pattern.permute.xlu0 0
  %4481 = vperm.xlu0 %4480, %v4447
  %v4482 = vpop.permute.xlu0 %4481
  %4485 = vset.pattern.permute.xlu0 0
  %4486 = vperm.xlu0 %4485, %v4449
  %v4487 = vpop.permute.xlu0 %4486
  %4490 = vset.pattern.permute.xlu0 0
  %4491 = vperm.xlu0 %4490, %v4451
  %v4492 = vpop.permute.xlu0 %4491
  %4495 = vset.pattern.permute.xlu0 0
  %4496 = vperm.xlu0 %4495, %v4453
  %v4497 = vpop.permute.xlu0 %4496
  %4500 = vset.pattern.permute.xlu0 0
  %4501 = vperm.xlu0 %4500, %v4455
  %v4502 = vpop.permute.xlu0 %4501
  %v4504 = vmul.f32 %v4467, %v4456
  %v4505 = vmul.f32 %v4472, %v4457
  %v4506 = vmul.f32 %v4477, %v4458
  %v4507 = vmul.f32 %v4482, %v4459
  %v4508 = vmul.f32 %v4487, %v4460
  %v4509 = vmul.f32 %v4492, %v4461
  %v4510 = vmul.f32 %v4497, %v4462
  %v4511 = vmul.f32 %v4502, %v4463
  %v4512 = vsel %vm54, %v4504, 0.0
  %v4513 = vrot.slane %v4512, 4
  %v4514 = vadd.f32 %v4512, %v4513
  %v4515 = vrot.slane %v4514, 2
  %v4516 = vadd.f32 %v4514, %v4515
  %v4517 = vrot.slane %v4516, 1
  %v4518 = vadd.f32 %v4516, %v4517
  %v4519 = vsel %vm54, %v4505, 0.0
  %v4520 = vrot.slane %v4519, 4
  %v4521 = vadd.f32 %v4519, %v4520
  %v4522 = vrot.slane %v4521, 2
  %v4523 = vadd.f32 %v4521, %v4522
  %v4524 = vrot.slane %v4523, 1
  %v4525 = vadd.f32 %v4523, %v4524
  %v4526 = vsel %vm54, %v4506, 0.0
  %v4527 = vrot.slane %v4526, 4
  %v4528 = vadd.f32 %v4526, %v4527
  %v4529 = vrot.slane %v4528, 2
  %v4530 = vadd.f32 %v4528, %v4529
  %v4531 = vrot.slane %v4530, 1
  %v4532 = vadd.f32 %v4530, %v4531
  %v4533 = vsel %vm54, %v4507, 0.0
  %v4534 = vrot.slane %v4533, 4
  %v4535 = vadd.f32 %v4533, %v4534
  %v4536 = vrot.slane %v4535, 2
  %v4537 = vadd.f32 %v4535, %v4536
  %v4538 = vrot.slane %v4537, 1
  %v4539 = vadd.f32 %v4537, %v4538
  %v4540 = vsel %vm54, %v4508, 0.0
  %v4541 = vrot.slane %v4540, 4
  %v4542 = vadd.f32 %v4540, %v4541
  %v4543 = vrot.slane %v4542, 2
  %v4544 = vadd.f32 %v4542, %v4543
  %v4545 = vrot.slane %v4544, 1
  %v4546 = vadd.f32 %v4544, %v4545
  %v4547 = vsel %vm54, %v4509, 0.0
  %v4548 = vrot.slane %v4547, 4
  %v4549 = vadd.f32 %v4547, %v4548
  %v4550 = vrot.slane %v4549, 2
  %v4551 = vadd.f32 %v4549, %v4550
  %v4552 = vrot.slane %v4551, 1
  %v4553 = vadd.f32 %v4551, %v4552
  %v4554 = vsel %vm54, %v4510, 0.0
  %v4555 = vrot.slane %v4554, 4
  %v4556 = vadd.f32 %v4554, %v4555
  %v4557 = vrot.slane %v4556, 2
  %v4558 = vadd.f32 %v4556, %v4557
  %v4559 = vrot.slane %v4558, 1
  %v4560 = vadd.f32 %v4558, %v4559
  %v4561 = vsel %vm54, %v4511, 0.0
  %v4562 = vrot.slane %v4561, 4
  %v4563 = vadd.f32 %v4561, %v4562
  %v4564 = vrot.slane %v4563, 2
  %v4565 = vadd.f32 %v4563, %v4564
  %v4566 = vrot.slane %v4565, 1
  %v4567 = vadd.f32 %v4565, %v4566
  %v4568 = vld [vmem:[%s3] sm:$0xff]
  %v4569 = vld [vmem:[%s3 + $0x8] sm:$0xff]
  %v4570 = vld [vmem:[%s3 + $0x10] sm:$0xff]
  %v4571 = vld [vmem:[%s3 + $0x18] sm:$0xff]
  %v4572 = vld [vmem:[%s4] sm:$0xff]
  %v4573 = vld [vmem:[%s4 + $0x8] sm:$0xff]
  %v4574 = vld [vmem:[%s4 + $0x10] sm:$0xff]
  %v4575 = vld [vmem:[%s4 + $0x18] sm:$0xff]
  %v4576 = vld [vmem:[%s4 + $0x20] sm:$0xff]
  %v4577 = vld [vmem:[%s4 + $0x28] sm:$0xff]
  %v4578 = vld [vmem:[%s4 + $0x30] sm:$0xff]
  %v4579 = vld [vmem:[%s4 + $0x38] sm:$0xff]
  %v4580 = vld [vmem:[%s4 + $0x40] sm:$0xff]
  %v4581 = vld [vmem:[%s4 + $0x48] sm:$0xff]
  %v4582 = vld [vmem:[%s4 + $0x50] sm:$0xff]
  %v4583 = vld [vmem:[%s4 + $0x58] sm:$0xff]
  %v4584 = vld [vmem:[%s4 + $0x60] sm:$0xff]
  %v4585 = vld [vmem:[%s4 + $0x68] sm:$0xff]
  %v4586 = vld [vmem:[%s4 + $0x70] sm:$0xff]
  %v4587 = vld [vmem:[%s4 + $0x78] sm:$0xff]
  %4588 = vmatprep.subr.mxu0 0.0
  %4589 = vmatpush1.msra.mxu0 %v4572
  %4590 = vmatprep.subr.mxu0 0.0
  %4591 = vmatpush1.msra.mxu0 %v4573
  %4592 = vmatprep.subr.mxu0 0.0
  %4593 = vmatpush1.msra.mxu0 %v4574
  %4594 = vmatprep.subr.mxu0 0.0
  %4595 = vmatpush1.msra.mxu0 %v4575
  %4596 = vmatprep.subr.mxu0 0.0
  %4597 = vmatpush1.msra.mxu0 %v4576
  %4598 = vmatprep.subr.mxu0 0.0
  %4599 = vmatpush1.msra.mxu0 %v4577
  %4600 = vmatprep.subr.mxu0 0.0
  %4601 = vmatpush1.msra.mxu0 %v4578
  %4602 = vmatprep.subr.mxu0 0.0
  %4603 = vmatpush1.msra.mxu0 %v4579
  %4604 = vmatprep.subr.mxu0 0.0
  %4605 = vmatpush1.msra.mxu0 %v4580
  %4606 = vmatprep.subr.mxu0 0.0
  %4607 = vmatpush1.msra.mxu0 %v4581
  %4608 = vmatprep.subr.mxu0 0.0
  %4609 = vmatpush1.msra.mxu0 %v4582
  %4610 = vmatprep.subr.mxu0 0.0
  %4611 = vmatpush1.msra.mxu0 %v4583
  %4612 = vmatprep.subr.mxu0 0.0
  %4613 = vmatpush1.msra.mxu0 %v4584
  %4614 = vmatprep.subr.mxu0 0.0
  %4615 = vmatpush1.msra.mxu0 %v4585
  %4616 = vmatprep.subr.mxu0 0.0
  %4617 = vmatpush1.msra.mxu0 %v4586
  %4618 = vmatprep.subr.mxu0 0.0
  %4619 = vmatpush1.msra.mxu0 %v4587
  %4620 = vmatprep.subr.mxu0 0.0
  %4621 = vmatpush1.msra.mxu0 0.0
  %4622 = vmatprep.subr.mxu0 0.0
  %4623 = vmatpush1.msra.mxu0 0.0
  %4624 = vmatprep.subr.mxu0 0.0
  %4625 = vmatpush1.msra.mxu0 0.0
  %4626 = vmatprep.subr.mxu0 0.0
  %4627 = vmatpush1.msra.mxu0 0.0
  %4628 = vmatprep.subr.mxu0 0.0
  %4629 = vmatpush1.msra.mxu0 0.0
  %4630 = vmatprep.subr.mxu0 0.0
  %4631 = vmatpush1.msra.mxu0 0.0
  %4632 = vmatprep.subr.mxu0 0.0
  %4633 = vmatpush1.msra.mxu0 0.0
  %4634 = vmatprep.subr.mxu0 0.0
  %4635 = vmatpush1.msra.mxu0 0.0
  %4636 = vmatprep.subr.mxu0 0.0
  %4637 = vmatpush1.msra.mxu0 0.0
  %4638 = vmatprep.subr.mxu0 0.0
  %4639 = vmatpush1.msra.mxu0 0.0
  %4640 = vmatprep.subr.mxu0 0.0
  %4641 = vmatpush1.msra.mxu0 0.0
  %4642 = vmatprep.subr.mxu0 0.0
  %4643 = vmatpush1.msra.mxu0 0.0
  %4644 = vmatprep.subr.mxu0 0.0
  %4645 = vmatpush1.msra.mxu0 0.0
  %4646 = vmatprep.subr.mxu0 0.0
  %4647 = vmatpush1.msra.mxu0 0.0
  %4648 = vmatprep.subr.mxu0 0.0
  %4649 = vmatpush1.msra.mxu0 0.0
  %4650 = vmatprep.subr.mxu0 0.0
  %4651 = vmatpush1.msra.mxu0 0.0
  %4652 = vmatprep.mubr.f32.mxu0 0.0
  %4653 = vmatmul.mubr.f32.gmra.mrb[0].mxu0 %v3964
  %v4654 = vpop.f32.mrb[0].mxu0
  %v4655 = vadd.f32 0.0, %v4654
  %v4656 = vpop.f32.mrb[0].mxu0
  %4657 = vdwg.mxu0
  %v4666 = vsel %vm217, %v4525, %v4518
  %v4667 = vsel %vm219, %v4532, %v4666
  %v4668 = vsel %vm221, %v4539, %v4667
  %v4669 = vsel %vm223, %v4546, %v4668
  %v4670 = vsel %vm225, %v4553, %v4669
  %v4671 = vsel %vm227, %v4560, %v4670
  %v4672 = vsel %vm229, %v4567, %v4671
  %v4673 = vsel %vm54, %v4672, 0
  %4675 = vmatprep.subr.mxu0 0.0
  %4676 = vmatpush1.msra.mxu0 %v4568
  %4677 = vmatprep.subr.mxu0 0.0
  %4678 = vmatpush1.msra.mxu0 %v4569
  %4679 = vmatprep.subr.mxu0 0.0
  %4680 = vmatpush1.msra.mxu0 %v4570
  %4681 = vmatprep.subr.mxu0 0.0
  %4682 = vmatpush1.msra.mxu0 %v4571
  %4683 = vmatprep.subr.mxu0 0.0
  %4684 = vmatpush1.msra.mxu0 0.0
  %4685 = vmatprep.subr.mxu0 0.0
  %4686 = vmatpush1.msra.mxu0 0.0
  %4687 = vmatprep.subr.mxu0 0.0
  %4688 = vmatpush1.msra.mxu0 0.0
  %4689 = vmatprep.subr.mxu0 0.0
  %4690 = vmatpush1.msra.mxu0 0.0
  %4691 = vmatprep.subr.mxu0 0.0
  %4692 = vmatpush1.msra.mxu0 0.0
  %4693 = vmatprep.subr.mxu0 0.0
  %4694 = vmatpush1.msra.mxu0 0.0
  %4695 = vmatprep.subr.mxu0 0.0
  %4696 = vmatpush1.msra.mxu0 0.0
  %4697 = vmatprep.subr.mxu0 0.0
  %4698 = vmatpush1.msra.mxu0 0.0
  %4699 = vmatprep.subr.mxu0 0.0
  %4700 = vmatpush1.msra.mxu0 0.0
  %4701 = vmatprep.subr.mxu0 0.0
  %4702 = vmatpush1.msra.mxu0 0.0
  %4703 = vmatprep.subr.mxu0 0.0
  %4704 = vmatpush1.msra.mxu0 0.0
  %4705 = vmatprep.subr.mxu0 0.0
  %4706 = vmatpush1.msra.mxu0 0.0
  %4707 = vmatprep.subr.mxu0 0.0
  %4708 = vmatpush1.msra.mxu0 0.0
  %4709 = vmatprep.subr.mxu0 0.0
  %4710 = vmatpush1.msra.mxu0 0.0
  %4711 = vmatprep.subr.mxu0 0.0
  %4712 = vmatpush1.msra.mxu0 0.0
  %4713 = vmatprep.subr.mxu0 0.0
  %4714 = vmatpush1.msra.mxu0 0.0
  %4715 = vmatprep.subr.mxu0 0.0
  %4716 = vmatpush1.msra.mxu0 0.0
  %4717 = vmatprep.subr.mxu0 0.0
  %4718 = vmatpush1.msra.mxu0 0.0
  %4719 = vmatprep.subr.mxu0 0.0
  %4720 = vmatpush1.msra.mxu0 0.0
  %4721 = vmatprep.subr.mxu0 0.0
  %4722 = vmatpush1.msra.mxu0 0.0
  %4723 = vmatprep.subr.mxu0 0.0
  %4724 = vmatpush1.msra.mxu0 0.0
  %4725 = vmatprep.subr.mxu0 0.0
  %4726 = vmatpush1.msra.mxu0 0.0
  %4727 = vmatprep.subr.mxu0 0.0
  %4728 = vmatpush1.msra.mxu0 0.0
  %4729 = vmatprep.subr.mxu0 0.0
  %4730 = vmatpush1.msra.mxu0 0.0
  %4731 = vmatprep.subr.mxu0 0.0
  %4732 = vmatpush1.msra.mxu0 0.0
  %4733 = vmatprep.subr.mxu0 0.0
  %4734 = vmatpush1.msra.mxu0 0.0
  %4735 = vmatprep.subr.mxu0 0.0
  %4736 = vmatpush1.msra.mxu0 0.0
  %4737 = vmatprep.subr.mxu0 0.0
  %4738 = vmatpush1.msra.mxu0 0.0
  %4739 = vmatprep.mubr.f32.mxu0 0.0
  %4740 = vmatmul.mubr.f32.gmra.mrb[0].mxu0 %v4673
  %v4741 = vpop.f32.mrb[0].mxu0
  %v4742 = vadd.f32 %v4655, %v4741
  %v4743 = vpop.f32.mrb[0].mxu0
  %4744 = vdwg.mxu0
  %v4745 = vld [vmem:[%s5] sm:$0xff]
  %v4746 = vld [vmem:[%s5 + $0x8] sm:$0xff]
  %v4747 = vld [vmem:[%s5 + $0x10] sm:$0xff]
  %v4748 = vld [vmem:[%s5 + $0x18] sm:$0xff]
  %v4749 = vld [vmem:[%s6] sm:$0x1]
  %v4751 = vlaneseq
  %v4752 = vshrl.u32 %v4751, 7
  %v4753 = vsub.s32 0, %v4752
  %v4754 = vrot.slane %v4749, %v4753
  %4756 = vmatprep.subr.mxu0 0.0
  %4757 = vmatpush1.msra.mxu0 %v4745
  %4758 = vmatprep.subr.mxu0 0.0
  %4759 = vmatpush1.msra.mxu0 %v4746
  %4760 = vmatprep.subr.mxu0 0.0
  %4761 = vmatpush1.msra.mxu0 %v4747
  %4762 = vmatprep.subr.mxu0 0.0
  %4763 = vmatpush1.msra.mxu0 %v4748
  %4764 = vmatprep.subr.mxu0 0.0
  %4765 = vmatpush1.msra.mxu0 0.0
  %4766 = vmatprep.subr.mxu0 0.0
  %4767 = vmatpush1.msra.mxu0 0.0
  %4768 = vmatprep.subr.mxu0 0.0
  %4769 = vmatpush1.msra.mxu0 0.0
  %4770 = vmatprep.subr.mxu0 0.0
  %4771 = vmatpush1.msra.mxu0 0.0
  %4772 = vmatprep.subr.mxu0 0.0
  %4773 = vmatpush1.msra.mxu0 0.0
  %4774 = vmatprep.subr.mxu0 0.0
  %4775 = vmatpush1.msra.mxu0 0.0
  %4776 = vmatprep.subr.mxu0 0.0
  %4777 = vmatpush1.msra.mxu0 0.0
  %4778 = vmatprep.subr.mxu0 0.0
  %4779 = vmatpush1.msra.mxu0 0.0
  %4780 = vmatprep.subr.mxu0 0.0
  %4781 = vmatpush1.msra.mxu0 0.0
  %4782 = vmatprep.subr.mxu0 0.0
  %4783 = vmatpush1.msra.mxu0 0.0
  %4784 = vmatprep.subr.mxu0 0.0
  %4785 = vmatpush1.msra.mxu0 0.0
  %4786 = vmatprep.subr.mxu0 0.0
  %4787 = vmatpush1.msra.mxu0 0.0
  %4788 = vmatprep.subr.mxu0 0.0
  %4789 = vmatpush1.msra.mxu0 0.0
  %4790 = vmatprep.subr.mxu0 0.0
  %4791 = vmatpush1.msra.mxu0 0.0
  %4792 = vmatprep.subr.mxu0 0.0
  %4793 = vmatpush1.msra.mxu0 0.0
  %4794 = vmatprep.subr.mxu0 0.0
  %4795 = vmatpush1.msra.mxu0 0.0
  %4796 = vmatprep.subr.mxu0 0.0
  %4797 = vmatpush1.msra.mxu0 0.0
  %4798 = vmatprep.subr.mxu0 0.0
  %4799 = vmatpush1.msra.mxu0 0.0
  %4800 = vmatprep.subr.mxu0 0.0
  %4801 = vmatpush1.msra.mxu0 0.0
  %4802 = vmatprep.subr.mxu0 0.0
  %4803 = vmatpush1.msra.mxu0 0.0
  %4804 = vmatprep.subr.mxu0 0.0
  %4805 = vmatpush1.msra.mxu0 0.0
  %4806 = vmatprep.subr.mxu0 0.0
  %4807 = vmatpush1.msra.mxu0 0.0
  %4808 = vmatprep.subr.mxu0 0.0
  %4809 = vmatpush1.msra.mxu0 0.0
  %4810 = vmatprep.subr.mxu0 0.0
  %4811 = vmatpush1.msra.mxu0 0.0
  %4812 = vmatprep.subr.mxu0 0.0
  %4813 = vmatpush1.msra.mxu0 0.0
  %4814 = vmatprep.subr.mxu0 0.0
  %4815 = vmatpush1.msra.mxu0 0.0
  %4816 = vmatprep.subr.mxu0 0.0
  %4817 = vmatpush1.msra.mxu0 0.0
  %4818 = vmatprep.subr.mxu0 0.0
  %4819 = vmatpush1.msra.mxu0 0.0
  %4820 = vmatprep.mubr.f32.mxu0 0.0
  %4821 = vmatmul.mubr.f32.gmra.mrb[0].mxu0 %v3861
  %v4822 = vpop.f32.mrb[0].mxu0
  %v4823 = vadd.f32 %v4754, %v4822
  %v4824 = vpop.f32.mrb[0].mxu0
  %4825 = vdwg.mxu0
  %v4826 = vadd.f32 %v4742, %v4823
  %v4827 = vxor.u32 %v4826, 2147483648
  %v4828 = vmul.f32 %v4827, 1.442695
  %v4829 = vpow.pop %v4828
  %v4830 = vadd.f32 %v4829, 1.0
  %v4831 = vrcp.pop %v4830
  %v4832 = vmul.f32 1.0, %v4831
  %4834 = vrot.lane.b32.xlu0 %v4823, 64
  %v4835 = vpop.permute.xlu0 %4834
  %v4837 = vmul.f32 %v4832, %v4835
  %4839 = vrot.lane.b32.xlu0 %v4837, 64
  %v4840 = vpop.permute.xlu0 %4839
  %v4842 = vadd.f32 %v4742, %v4840
  %v4843 = vtanh.pop %v4842
  %v4844 = vsub.f32 1.0, %v4832
  %4846 = vrot.lane.b32.xlu0 %v4843, 96
  %v4847 = vpop.permute.xlu0 %4846
  %v4849 = vmul.f32 %v4844, %v4847
  %v4850 = vmul.f32 %v4832, %v3846
  %v4851 = vadd.f32 %v4849, %v4850
  %v4852 = vld [vmem:[%s7] sm:$0xff]
  %v4853 = vld [vmem:[%s7 + $0x8] sm:$0xff]
  %v4854 = vld [vmem:[%s7 + $0x10] sm:$0xff]
  %v4855 = vld [vmem:[%s7 + $0x18] sm:$0xff]
  %v4856 = vld [vmem:[%s8] sm:$0x1]
  %v4858 = vlaneseq
  %v4859 = vshrl.u32 %v4858, 7
  %v4860 = vsub.s32 0, %v4859
  %v4861 = vrot.slane %v4856, %v4860
  %4864 = vrot.lane.b32.xlu0 %v4851, 96
  %v4865 = vpop.permute.xlu0 %4864
  %v4866 = vsel %vm54, %v4865, 0
  %4868 = vmatprep.subr.mxu0 0.0
  %4869 = vmatpush1.msra.mxu0 %v4852
  %4870 = vmatprep.subr.mxu0 0.0
  %4871 = vmatpush1.msra.mxu0 %v4853
  %4872 = vmatprep.subr.mxu0 0.0
  %4873 = vmatpush1.msra.mxu0 %v4854
  %4874 = vmatprep.subr.mxu0 0.0
  %4875 = vmatpush1.msra.mxu0 %v4855
  %4876 = vmatprep.subr.mxu0 0.0
  %4877 = vmatpush1.msra.mxu0 0.0
  %4878 = vmatprep.subr.mxu0 0.0
  %4879 = vmatpush1.msra.mxu0 0.0
  %4880 = vmatprep.subr.mxu0 0.0
  %4881 = vmatpush1.msra.mxu0 0.0
  %4882 = vmatprep.subr.mxu0 0.0
  %4883 = vmatpush1.msra.mxu0 0.0
  %4884 = vmatprep.subr.mxu0 0.0
  %4885 = vmatpush1.msra.mxu0 0.0
  %4886 = vmatprep.subr.mxu0 0.0
  %4887 = vmatpush1.msra.mxu0 0.0
  %4888 = vmatprep.subr.mxu0 0.0
  %4889 = vmatpush1.msra.mxu0 0.0
  %4890 = vmatprep.subr.mxu0 0.0
  %4891 = vmatpush1.msra.mxu0 0.0
  %4892 = vmatprep.subr.mxu0 0.0
  %4893 = vmatpush1.msra.mxu0 0.0
  %4894 = vmatprep.subr.mxu0 0.0
  %4895 = vmatpush1.msra.mxu0 0.0
  %4896 = vmatprep.subr.mxu0 0.0
  %4897 = vmatpush1.msra.mxu0 0.0
  %4898 = vmatprep.subr.mxu0 0.0
  %4899 = vmatpush1.msra.mxu0 0.0
  %4900 = vmatprep.subr.mxu0 0.0
  %4901 = vmatpush1.msra.mxu0 0.0
  %4902 = vmatprep.subr.mxu0 0.0
  %4903 = vmatpush1.msra.mxu0 0.0
  %4904 = vmatprep.subr.mxu0 0.0
  %4905 = vmatpush1.msra.mxu0 0.0
  %4906 = vmatprep.subr.mxu0 0.0
  %4907 = vmatpush1.msra.mxu0 0.0
  %4908 = vmatprep.subr.mxu0 0.0
  %4909 = vmatpush1.msra.mxu0 0.0
  %4910 = vmatprep.subr.mxu0 0.0
  %4911 = vmatpush1.msra.mxu0 0.0
  %4912 = vmatprep.subr.mxu0 0.0
  %4913 = vmatpush1.msra.mxu0 0.0
  %4914 = vmatprep.subr.mxu0 0.0
  %4915 = vmatpush1.msra.mxu0 0.0
  %4916 = vmatprep.subr.mxu0 0.0
  %4917 = vmatpush1.msra.mxu0 0.0
  %4918 = vmatprep.subr.mxu0 0.0
  %4919 = vmatpush1.msra.mxu0 0.0
  %4920 = vmatprep.subr.mxu0 0.0
  %4921 = vmatpush1.msra.mxu0 0.0
  %4922 = vmatprep.subr.mxu0 0.0
  %4923 = vmatpush1.msra.mxu0 0.0
  %4924 = vmatprep.subr.mxu0 0.0
  %4925 = vmatpush1.msra.mxu0 0.0
  %4926 = vmatprep.subr.mxu0 0.0
  %4927 = vmatpush1.msra.mxu0 0.0
  %4928 = vmatprep.subr.mxu0 0.0
  %4929 = vmatpush1.msra.mxu0 0.0
  %4930 = vmatprep.subr.mxu0 0.0
  %4931 = vmatpush1.msra.mxu0 0.0
  %4932 = vmatprep.mubr.f32.mxu0 0.0
  %4933 = vmatmul.mubr.f32.gmra.mrb[0].mxu0 %v4866
  %v4934 = vpop.f32.mrb[0].mxu0
  %v4935 = vadd.f32 %v4861, %v4934
  %v4936 = vpop.f32.mrb[0].mxu0
  %4937 = vdwg.mxu0
  %4938 = vmax.xlane.f32.xlu0 %v4935
  %v4939 = vpop.xlane.xlu0 %4938
  %v4940 = vsub.f32 %v4935, %v4939
  %v4941 = vmul.f32 %v4940, 1.442695
  %v4942 = vpow.pop %v4941
  %4943 = vadd.xlane.f32.xlu0 %v4942
  %v4944 = vpop.xlane.xlu0 %4943
  %v4945 = vlog2.pop %v4944
  %v4946 = vmul.f32 %v4945, 0.6931472
  %v4947 = vadd.f32 %v4939, %v4946
  %v4948 = vsub.f32 %v4935, %v4947
  %s4949 = scalar_lea.vmem %s9, 40
  %4950 = vst [vmem:[%s4949] sm:$0xff] %v4948
  %vm4951 = vcmp.ge.f32.partialorder %v4935, %v4939
  %v4952 = vsel %vm4951, %v33, 128
  %v4953 = vand.u32 %v4952, 65535
  %v4954 = vshra.s32 %v4952, 16
  %v4955 = vcvt.s32.f32 %v4953
  %v4956 = vcvt.s32.f32 %v4954
  %4957 = vmin.xlane.f32.xlu0 %v4956
  %v4958 = vpop.xlane.xlu0 %4957
  %vm4959 = vcmp.eq.f32.partialorder %v4956, %v4958
  %v4960 = vsel %vm4959, %v4955, inf
  %4961 = vmin.xlane.f32.xlu0 %v4960
  %v4962 = vpop.xlane.xlu0 %4961
  %v4963 = vcvt.f32.s32 %v4962
  %v4964 = vcvt.f32.s32 %v4958
  %v4965 = vshll.u32 %v4964, 16
  %v4966 = vadd.s32 %v4965, %v4963
  %vm4967 = vcmp.eq.s32.totalorder %v33, %v4966
  %v4968 = vsel %vm4967, 1, 0
  %v4969 = vcvt.s32.f32 %v4968
  %v4970 = vld [vmem:[%s1] sm:$0xff]
  %v4971 = vld [vmem:[%s1 + $0x8] sm:$0xff]
  %v4972 = vld [vmem:[%s1 + $0x10] sm:$0xff]
  %v4973 = vld [vmem:[%s1 + $0x18] sm:$0xff]
  %v4974 = vld [vmem:[%s1 + $0x20] sm:$0xff]
  %v4975 = vld [vmem:[%s1 + $0x28] sm:$0xff]
  %v4976 = vld [vmem:[%s1 + $0x30] sm:$0xff]
  %v4977 = vld [vmem:[%s1 + $0x38] sm:$0xff]
  %v4978 = vcombine.high %v4851, %v4851
  %v4980 = vunpack.c.l.s4 1966171168
  %v4981 = vunpack.c.0.s8 %v4980
  %v4982 = vlaneseq
  %v4983 = vshrl.u32 %v4982, 7
  %v4984 = vsub.s32 %v4981, %v4983
  %v4985 = vrot.slane %v4851, %v4984
  %v4987 = vunpack.c.l.s4 1966171168
  %v4988 = vunpack.c.0.s8 %v4987
  %v4989 = vlaneseq
  %v4990 = vshrl.u32 %v4989, 7
  %v4991 = vsub.s32 %v4988, %v4990
  %v4992 = vrot.slane %v4978, %v4991
  %v4993 = vcombine.high %v4985, %v4985
  %v4994 = vcombine.high %v4992, %v4992
  %v4996 = vunpack.c.l.s4 1966171168
  %v4997 = vunpack.c.0.s8 %v4996
  %v4998 = vlaneseq
  %v4999 = vshrl.u32 %v4998, 7
  %v5000 = vsub.s32 %v4997, %v4999
  %v5001 = vrot.slane %v4985, %v5000
  %v5003 = vunpack.c.l.s4 1966171168
  %v5004 = vunpack.c.0.s8 %v5003
  %v5005 = vlaneseq
  %v5006 = vshrl.u32 %v5005, 7
  %v5007 = vsub.s32 %v5004, %v5006
  %v5008 = vrot.slane %v4992, %v5007
  %v5010 = vunpack.c.l.s4 1966171168
  %v5011 = vunpack.c.0.s8 %v5010
  %v5012 = vlaneseq
  %v5013 = vshrl.u32 %v5012, 7
  %v5014 = vsub.s32 %v5011, %v5013
  %v5015 = vrot.slane %v4993, %v5014
  %v5017 = vunpack.c.l.s4 1966171168
  %v5018 = vunpack.c.0.s8 %v5017
  %v5019 = vlaneseq
  %v5020 = vshrl.u32 %v5019, 7
  %v5021 = vsub.s32 %v5018, %v5020
  %v5022 = vrot.slane %v4994, %v5021
  %v5023 = vcombine.high %v5001, %v5001
  %v5024 = vcombine.high %v5008, %v5008
  %v5025 = vcombine.high %v5015, %v5015
  %v5026 = vcombine.high %v5022, %v5022
  %v5027 = vlaneseq
  %v5028 = vshrl.u32 %v5027, 7
  %v5029 = vsub.s32 0, %v5028
  %v5030 = vrot.slane %v5001, %v5029
  %v5031 = vlaneseq
  %v5032 = vshrl.u32 %v5031, 7
  %v5033 = vsub.s32 0, %v5032
  %v5034 = vrot.slane %v5015, %v5033
  %v5035 = vlaneseq
  %v5036 = vshrl.u32 %v5035, 7
  %v5037 = vsub.s32 0, %v5036
  %v5038 = vrot.slane %v5023, %v5037
  %v5039 = vlaneseq
  %v5040 = vshrl.u32 %v5039, 7
  %v5041 = vsub.s32 0, %v5040
  %v5042 = vrot.slane %v5025, %v5041
  %v5043 = vlaneseq
  %v5044 = vshrl.u32 %v5043, 7
  %v5045 = vsub.s32 0, %v5044
  %v5046 = vrot.slane %v5008, %v5045
  %v5047 = vlaneseq
  %v5048 = vshrl.u32 %v5047, 7
  %v5049 = vsub.s32 0, %v5048
  %v5050 = vrot.slane %v5022, %v5049
  %v5051 = vlaneseq
  %v5052 = vshrl.u32 %v5051, 7
  %v5053 = vsub.s32 0, %v5052
  %v5054 = vrot.slane %v5024, %v5053
  %v5055 = vlaneseq
  %v5056 = vshrl.u32 %v5055, 7
  %v5057 = vsub.s32 0, %v5056
  %v5058 = vrot.slane %v5026, %v5057
  %5059 = vrot.lane.b32.xlu0 %v5030, 96
  %v5060 = vpop.permute.xlu0 %5059
  %5061 = vrot.lane.b32.xlu0 %v5034, 96
  %v5062 = vpop.permute.xlu0 %5061
  %5063 = vrot.lane.b32.xlu0 %v5038, 96
  %v5064 = vpop.permute.xlu0 %5063
  %5065 = vrot.lane.b32.xlu0 %v5042, 96
  %v5066 = vpop.permute.xlu0 %5065
  %5067 = vrot.lane.b32.xlu0 %v5046, 96
  %v5068 = vpop.permute.xlu0 %5067
  %5069 = vrot.lane.b32.xlu0 %v5050, 96
  %v5070 = vpop.permute.xlu0 %5069
  %5071 = vrot.lane.b32.xlu0 %v5054, 96
  %v5072 = vpop.permute.xlu0 %5071
  %5073 = vrot.lane.b32.xlu0 %v5058, 96
  %v5074 = vpop.permute.xlu0 %5073
  %v5083 = vmul.f32 %v4970, %v5060
  %v5084 = vmul.f32 %v4971, %v5062
  %v5085 = vmul.f32 %v4972, %v5064
  %v5086 = vmul.f32 %v4973, %v5066
  %v5087 = vmul.f32 %v4974, %v5068
  %v5088 = vmul.f32 %v4975, %v5070
  %v5089 = vmul.f32 %v4976, %v5072
  %v5090 = vmul.f32 %v4977, %v5074
  %v5091 = vsel %vm54, %v5083, 0.0
  %5092 = vadd.xlane.f32.xlu0 %v5091
  %v5093 = vpop.xlane.xlu0 %5092
  %v5094 = vsel %vm54, %v5084, 0.0
  %5095 = vadd.xlane.f32.xlu0 %v5094
  %v5096 = vpop.xlane.xlu0 %5095
  %v5097 = vsel %vm54, %v5085, 0.0
  %5098 = vadd.xlane.f32.xlu0 %v5097
  %v5099 = vpop.xlane.xlu0 %5098
  %v5100 = vsel %vm54, %v5086, 0.0
  %5101 = vadd.xlane.f32.xlu0 %v5100
  %v5102 = vpop.xlane.xlu0 %5101
  %v5103 = vsel %vm54, %v5087, 0.0
  %5104 = vadd.xlane.f32.xlu0 %v5103
  %v5105 = vpop.xlane.xlu0 %5104
  %v5106 = vsel %vm54, %v5088, 0.0
  %5107 = vadd.xlane.f32.xlu0 %v5106
  %v5108 = vpop.xlane.xlu0 %5107
  %v5109 = vsel %vm54, %v5089, 0.0
  %5110 = vadd.xlane.f32.xlu0 %v5109
  %v5111 = vpop.xlane.xlu0 %5110
  %v5112 = vsel %vm54, %v5090, 0.0
  %5113 = vadd.xlane.f32.xlu0 %v5112
  %v5114 = vpop.xlane.xlu0 %5113
  %v5115 = vld [vmem:[%s2] sm:$0xff]
  %v5117 = vlaneseq
  %v5118 = vshrl.u32 %v5117, 7
  %v5119 = vsub.s32 0, %v5118
  %v5120 = vrot.slane %v5115, %v5119
  %5122 = vbcast.lane.b32.xlu0 %v5120, 256
  %v5123 = vpop.permute.xlu0 %5122
  %v5124 = vlaneseq
  %v5125 = vshrl.u32 %v5124, 7
  %v5126 = vsub.s32 1, %v5125
  %v5127 = vrot.slane %v5115, %v5126
  %5129 = vbcast.lane.b32.xlu0 %v5127, 256
  %v5130 = vpop.permute.xlu0 %5129
  %v5131 = vlaneseq
  %v5132 = vshrl.u32 %v5131, 7
  %v5133 = vsub.s32 2, %v5132
  %v5134 = vrot.slane %v5115, %v5133
  %5136 = vbcast.lane.b32.xlu0 %v5134, 256
  %v5137 = vpop.permute.xlu0 %5136
  %v5138 = vlaneseq
  %v5139 = vshrl.u32 %v5138, 7
  %v5140 = vsub.s32 3, %v5139
  %v5141 = vrot.slane %v5115, %v5140
  %5143 = vbcast.lane.b32.xlu0 %v5141, 256
  %v5144 = vpop.permute.xlu0 %5143
  %v5145 = vlaneseq
  %v5146 = vshrl.u32 %v5145, 7
  %v5147 = vsub.s32 4, %v5146
  %v5148 = vrot.slane %v5115, %v5147
  %5150 = vbcast.lane.b32.xlu0 %v5148, 256
  %v5151 = vpop.permute.xlu0 %5150
  %v5152 = vlaneseq
  %v5153 = vshrl.u32 %v5152, 7
  %v5154 = vsub.s32 5, %v5153
  %v5155 = vrot.slane %v5115, %v5154
  %5157 = vbcast.lane.b32.xlu0 %v5155, 256
  %v5158 = vpop.permute.xlu0 %5157
  %v5159 = vlaneseq
  %v5160 = vshrl.u32 %v5159, 7
  %v5161 = vsub.s32 6, %v5160
  %v5162 = vrot.slane %v5115, %v5161
  %5164 = vbcast.lane.b32.xlu0 %v5162, 256
  %v5165 = vpop.permute.xlu0 %5164
  %v5166 = vlaneseq
  %v5167 = vshrl.u32 %v5166, 7
  %v5168 = vsub.s32 7, %v5167
  %v5169 = vrot.slane %v5115, %v5168
  %5171 = vbcast.lane.b32.xlu0 %v5169, 256
  %v5172 = vpop.permute.xlu0 %5171
  %v5181 = vadd.f32 %v5093, %v5123
  %v5182 = vadd.f32 %v5096, %v5130
  %v5183 = vadd.f32 %v5099, %v5137
  %v5184 = vadd.f32 %v5102, %v5144
  %v5185 = vadd.f32 %v5105, %v5151
  %v5186 = vadd.f32 %v5108, %v5158
  %v5187 = vadd.f32 %v5111, %v5165
  %v5188 = vadd.f32 %v5114, %v5172
  %5197 = vset.pattern.permute.xlu0 0
  %5198 = vperm.xlu0 %5197, %v5181
  %v5199 = vpop.permute.xlu0 %5198
  %5200 = vset.pattern.permute.xlu0 0
  %5201 = vperm.xlu0 %5200, %v5182
  %v5202 = vpop.permute.xlu0 %5201
  %5203 = vset.pattern.permute.xlu0 0
  %5204 = vperm.xlu0 %5203, %v5183
  %v5205 = vpop.permute.xlu0 %5204
  %5206 = vset.pattern.permute.xlu0 0
  %5207 = vperm.xlu0 %5206, %v5184
  %v5208 = vpop.permute.xlu0 %5207
  %5209 = vset.pattern.permute.xlu0 0
  %5210 = vperm.xlu0 %5209, %v5185
  %v5211 = vpop.permute.xlu0 %5210
  %5212 = vset.pattern.permute.xlu0 0
  %5213 = vperm.xlu0 %5212, %v5186
  %v5214 = vpop.permute.xlu0 %5213
  %5215 = vset.pattern.permute.xlu0 0
  %5216 = vperm.xlu0 %5215, %v5187
  %v5217 = vpop.permute.xlu0 %5216
  %5218 = vset.pattern.permute.xlu0 0
  %5219 = vperm.xlu0 %5218, %v5188
  %v5220 = vpop.permute.xlu0 %5219
  %v5221 = vlaneseq
  %v5222 = vshrl.u32 %v5221, 7
  %v5223 = vsub.s32 %v33, %v5222
  %v5224 = vrot.slane %v5199, %v5223
  %v5225 = vlaneseq
  %v5226 = vshrl.u32 %v5225, 7
  %v5227 = vsub.s32 %v33, %v5226
  %v5228 = vrot.slane %v5202, %v5227
  %v5229 = vlaneseq
  %v5230 = vshrl.u32 %v5229, 7
  %v5231 = vsub.s32 %v33, %v5230
  %v5232 = vrot.slane %v5205, %v5231
  %v5233 = vlaneseq
  %v5234 = vshrl.u32 %v5233, 7
  %v5235 = vsub.s32 %v33, %v5234
  %v5236 = vrot.slane %v5208, %v5235
  %v5237 = vlaneseq
  %v5238 = vshrl.u32 %v5237, 7
  %v5239 = vsub.s32 %v33, %v5238
  %v5240 = vrot.slane %v5211, %v5239
  %v5241 = vlaneseq
  %v5242 = vshrl.u32 %v5241, 7
  %v5243 = vsub.s32 %v33, %v5242
  %v5244 = vrot.slane %v5214, %v5243
  %v5245 = vlaneseq
  %v5246 = vshrl.u32 %v5245, 7
  %v5247 = vsub.s32 %v33, %v5246
  %v5248 = vrot.slane %v5217, %v5247
  %v5249 = vlaneseq
  %v5250 = vshrl.u32 %v5249, 7
  %v5251 = vsub.s32 %v33, %v5250
  %v5252 = vrot.slane %v5220, %v5251
  %v5253 = vsel %vm217, %v5228, %v5224
  %v5254 = vsel %vm219, %v5232, %v5253
  %v5255 = vsel %vm221, %v5236, %v5254
  %v5256 = vsel %vm223, %v5240, %v5255
  %v5257 = vsel %vm225, %v5244, %v5256
  %v5258 = vsel %vm227, %v5248, %v5257
  %v5259 = vsel %vm229, %v5252, %v5258
  %v5261 = vsel %vm232, %v5259, -inf
  %5262 = vmax.xlane.f32.xlu0 %v5261
  %v5263 = vpop.xlane.xlu0 %5262
  %v5265 = vlaneseq
  %v5266 = vshrl.u32 %v5265, 7
  %v5267 = vsub.s32 0, %v5266
  %v5268 = vrot.slane %v5263, %v5267
  %v5269 = vlaneseq
  %v5270 = vshrl.u32 %v5269, 7
  %v5271 = vsub.s32 1, %v5270
  %v5272 = vrot.slane %v5263, %v5271
  %v5273 = vlaneseq
  %v5274 = vshrl.u32 %v5273, 7
  %v5275 = vsub.s32 2, %v5274
  %v5276 = vrot.slane %v5263, %v5275
  %v5277 = vlaneseq
  %v5278 = vshrl.u32 %v5277, 7
  %v5279 = vsub.s32 3, %v5278
  %v5280 = vrot.slane %v5263, %v5279
  %v5281 = vlaneseq
  %v5282 = vshrl.u32 %v5281, 7
  %v5283 = vsub.s32 4, %v5282
  %v5284 = vrot.slane %v5263, %v5283
  %v5285 = vlaneseq
  %v5286 = vshrl.u32 %v5285, 7
  %v5287 = vsub.s32 5, %v5286
  %v5288 = vrot.slane %v5263, %v5287
  %v5289 = vlaneseq
  %v5290 = vshrl.u32 %v5289, 7
  %v5291 = vsub.s32 6, %v5290
  %v5292 = vrot.slane %v5263, %v5291
  %v5293 = vlaneseq
  %v5294 = vshrl.u32 %v5293, 7
  %v5295 = vsub.s32 7, %v5294
  %v5296 = vrot.slane %v5263, %v5295
  %v5305 = vsub.f32 %v5181, %v5268
  %v5306 = vsub.f32 %v5182, %v5272
  %v5307 = vsub.f32 %v5183, %v5276
  %v5308 = vsub.f32 %v5184, %v5280
  %v5309 = vsub.f32 %v5185, %v5284
  %v5310 = vsub.f32 %v5186, %v5288
  %v5311 = vsub.f32 %v5187, %v5292
  %v5312 = vsub.f32 %v5188, %v5296
  %v5313 = vmul.f32 %v5305, 1.442695
  %v5314 = vpow.pop %v5313
  %v5315 = vmul.f32 %v5306, 1.442695
  %v5316 = vpow.pop %v5315
  %v5317 = vmul.f32 %v5307, 1.442695
  %v5318 = vpow.pop %v5317
  %v5319 = vmul.f32 %v5308, 1.442695
  %v5320 = vpow.pop %v5319
  %v5321 = vmul.f32 %v5309, 1.442695
  %v5322 = vpow.pop %v5321
  %v5323 = vmul.f32 %v5310, 1.442695
  %v5324 = vpow.pop %v5323
  %v5325 = vmul.f32 %v5311, 1.442695
  %v5326 = vpow.pop %v5325
  %v5327 = vmul.f32 %v5312, 1.442695
  %v5328 = vpow.pop %v5327
  %5337 = vset.pattern.permute.xlu0 0
  %5338 = vperm.xlu0 %5337, %v5314
  %v5339 = vpop.permute.xlu0 %5338
  %5340 = vset.pattern.permute.xlu0 0
  %5341 = vperm.xlu0 %5340, %v5316
  %v5342 = vpop.permute.xlu0 %5341
  %5343 = vset.pattern.permute.xlu0 0
  %5344 = vperm.xlu0 %5343, %v5318
  %v5345 = vpop.permute.xlu0 %5344
  %5346 = vset.pattern.permute.xlu0 0
  %5347 = vperm.xlu0 %5346, %v5320
  %v5348 = vpop.permute.xlu0 %5347
  %5349 = vset.pattern.permute.xlu0 0
  %5350 = vperm.xlu0 %5349, %v5322
  %v5351 = vpop.permute.xlu0 %5350
  %5352 = vset.pattern.permute.xlu0 0
  %5353 = vperm.xlu0 %5352, %v5324
  %v5354 = vpop.permute.xlu0 %5353
  %5355 = vset.pattern.permute.xlu0 0
  %5356 = vperm.xlu0 %5355, %v5326
  %v5357 = vpop.permute.xlu0 %5356
  %5358 = vset.pattern.permute.xlu0 0
  %5359 = vperm.xlu0 %5358, %v5328
  %v5360 = vpop.permute.xlu0 %5359
  %v5361 = vlaneseq
  %v5362 = vshrl.u32 %v5361, 7
  %v5363 = vsub.s32 %v33, %v5362
  %v5364 = vrot.slane %v5339, %v5363
  %v5365 = vlaneseq
  %v5366 = vshrl.u32 %v5365, 7
  %v5367 = vsub.s32 %v33, %v5366
  %v5368 = vrot.slane %v5342, %v5367
  %v5369 = vlaneseq
  %v5370 = vshrl.u32 %v5369, 7
  %v5371 = vsub.s32 %v33, %v5370
  %v5372 = vrot.slane %v5345, %v5371
  %v5373 = vlaneseq
  %v5374 = vshrl.u32 %v5373, 7
  %v5375 = vsub.s32 %v33, %v5374
  %v5376 = vrot.slane %v5348, %v5375
  %v5377 = vlaneseq
  %v5378 = vshrl.u32 %v5377, 7
  %v5379 = vsub.s32 %v33, %v5378
  %v5380 = vrot.slane %v5351, %v5379
  %v5381 = vlaneseq
  %v5382 = vshrl.u32 %v5381, 7
  %v5383 = vsub.s32 %v33, %v5382
  %v5384 = vrot.slane %v5354, %v5383
  %v5385 = vlaneseq
  %v5386 = vshrl.u32 %v5385, 7
  %v5387 = vsub.s32 %v33, %v5386
  %v5388 = vrot.slane %v5357, %v5387
  %v5389 = vlaneseq
  %v5390 = vshrl.u32 %v5389, 7
  %v5391 = vsub.s32 %v33, %v5390
  %v5392 = vrot.slane %v5360, %v5391
  %v5393 = vsel %vm217, %v5368, %v5364
  %v5394 = vsel %vm219, %v5372, %v5393
  %v5395 = vsel %vm221, %v5376, %v5394
  %v5396 = vsel %vm223, %v5380, %v5395
  %v5397 = vsel %vm225, %v5384, %v5396
  %v5398 = vsel %vm227, %v5388, %v5397
  %v5399 = vsel %vm229, %v5392, %v5398
  %v5401 = vsel %vm232, %v5399, 0.0
  %5402 = vadd.xlane.f32.xlu0 %v5401
  %v5403 = vpop.xlane.xlu0 %5402
  %v5405 = vlaneseq
  %v5406 = vshrl.u32 %v5405, 7
  %v5407 = vsub.s32 0, %v5406
  %v5408 = vrot.slane %v5403, %v5407
  %v5409 = vlaneseq
  %v5410 = vshrl.u32 %v5409, 7
  %v5411 = vsub.s32 1, %v5410
  %v5412 = vrot.slane %v5403, %v5411
  %v5413 = vlaneseq
  %v5414 = vshrl.u32 %v5413, 7
  %v5415 = vsub.s32 2, %v5414
  %v5416 = vrot.slane %v5403, %v5415
  %v5417 = vlaneseq
  %v5418 = vshrl.u32 %v5417, 7
  %v5419 = vsub.s32 3, %v5418
  %v5420 = vrot.slane %v5403, %v5419
  %v5421 = vlaneseq
  %v5422 = vshrl.u32 %v5421, 7
  %v5423 = vsub.s32 4, %v5422
  %v5424 = vrot.slane %v5403, %v5423
  %v5425 = vlaneseq
  %v5426 = vshrl.u32 %v5425, 7
  %v5427 = vsub.s32 5, %v5426
  %v5428 = vrot.slane %v5403, %v5427
  %v5429 = vlaneseq
  %v5430 = vshrl.u32 %v5429, 7
  %v5431 = vsub.s32 6, %v5430
  %v5432 = vrot.slane %v5403, %v5431
  %v5433 = vlaneseq
  %v5434 = vshrl.u32 %v5433, 7
  %v5435 = vsub.s32 7, %v5434
  %v5436 = vrot.slane %v5403, %v5435
  %v5445 = vrcp.pop %v5408
  %v5446 = vmul.f32 %v5314, %v5445
  %v5447 = vrcp.pop %v5412
  %v5448 = vmul.f32 %v5316, %v5447
  %v5449 = vrcp.pop %v5416
  %v5450 = vmul.f32 %v5318, %v5449
  %v5451 = vrcp.pop %v5420
  %v5452 = vmul.f32 %v5320, %v5451
  %v5453 = vrcp.pop %v5424
  %v5454 = vmul.f32 %v5322, %v5453
  %v5455 = vrcp.pop %v5428
  %v5456 = vmul.f32 %v5324, %v5455
  %v5457 = vrcp.pop %v5432
  %v5458 = vmul.f32 %v5326, %v5457
  %v5459 = vrcp.pop %v5436
  %v5460 = vmul.f32 %v5328, %v5459
  %v5461 = vld [vmem:[%s0] sm:$0xff]
  %v5462 = vld [vmem:[%s0 + $0x8] sm:$0xff]
  %v5463 = vld [vmem:[%s0 + $0x10] sm:$0xff]
  %v5464 = vld [vmem:[%s0 + $0x18] sm:$0xff]
  %v5465 = vld [vmem:[%s0 + $0x20] sm:$0xff]
  %v5466 = vld [vmem:[%s0 + $0x28] sm:$0xff]
  %v5467 = vld [vmem:[%s0 + $0x30] sm:$0xff]
  %v5468 = vld [vmem:[%s0 + $0x38] sm:$0xff]
  %5470 = vset.pattern.permute.xlu0 0
  %5471 = vperm.xlu0 %5470, %v5446
  %v5472 = vpop.permute.xlu0 %5471
  %5475 = vset.pattern.permute.xlu0 0
  %5476 = vperm.xlu0 %5475, %v5448
  %v5477 = vpop.permute.xlu0 %5476
  %5480 = vset.pattern.permute.xlu0 0
  %5481 = vperm.xlu0 %5480, %v5450
  %v5482 = vpop.permute.xlu0 %5481
  %5485 = vset.pattern.permute.xlu0 0
  %5486 = vperm.xlu0 %5485, %v5452
  %v5487 = vpop.permute.xlu0 %5486
  %5490 = vset.pattern.permute.xlu0 0
  %5491 = vperm.xlu0 %5490, %v5454
  %v5492 = vpop.permute.xlu0 %5491
  %5495 = vset.pattern.permute.xlu0 0
  %5496 = vperm.xlu0 %5495, %v5456
  %v5497 = vpop.permute.xlu0 %5496
  %5500 = vset.pattern.permute.xlu0 0
  %5501 = vperm.xlu0 %5500, %v5458
  %v5502 = vpop.permute.xlu0 %5501
  %5505 = vset.pattern.permute.xlu0 0
  %5506 = vperm.xlu0 %5505, %v5460
  %v5507 = vpop.permute.xlu0 %5506
  %v5509 = vmul.f32 %v5472, %v5461
  %v5510 = vmul.f32 %v5477, %v5462
  %v5511 = vmul.f32 %v5482, %v5463
  %v5512 = vmul.f32 %v5487, %v5464
  %v5513 = vmul.f32 %v5492, %v5465
  %v5514 = vmul.f32 %v5497, %v5466
  %v5515 = vmul.f32 %v5502, %v5467
  %v5516 = vmul.f32 %v5507, %v5468
  %v5517 = vsel %vm54, %v5509, 0.0
  %v5518 = vrot.slane %v5517, 4
  %v5519 = vadd.f32 %v5517, %v5518
  %v5520 = vrot.slane %v5519, 2
  %v5521 = vadd.f32 %v5519, %v5520
  %v5522 = vrot.slane %v5521, 1
  %v5523 = vadd.f32 %v5521, %v5522
  %v5524 = vsel %vm54, %v5510, 0.0
  %v5525 = vrot.slane %v5524, 4
  %v5526 = vadd.f32 %v5524, %v5525
  %v5527 = vrot.slane %v5526, 2
  %v5528 = vadd.f32 %v5526, %v5527
  %v5529 = vrot.slane %v5528, 1
  %v5530 = vadd.f32 %v5528, %v5529
  %v5531 = vsel %vm54, %v5511, 0.0
  %v5532 = vrot.slane %v5531, 4
  %v5533 = vadd.f32 %v5531, %v5532
  %v5534 = vrot.slane %v5533, 2
  %v5535 = vadd.f32 %v5533, %v5534
  %v5536 = vrot.slane %v5535, 1
  %v5537 = vadd.f32 %v5535, %v5536
  %v5538 = vsel %vm54, %v5512, 0.0
  %v5539 = vrot.slane %v5538, 4
  %v5540 = vadd.f32 %v5538, %v5539
  %v5541 = vrot.slane %v5540, 2
  %v5542 = vadd.f32 %v5540, %v5541
  %v5543 = vrot.slane %v5542, 1
  %v5544 = vadd.f32 %v5542, %v5543
  %v5545 = vsel %vm54, %v5513, 0.0
  %v5546 = vrot.slane %v5545, 4
  %v5547 = vadd.f32 %v5545, %v5546
  %v5548 = vrot.slane %v5547, 2
  %v5549 = vadd.f32 %v5547, %v5548
  %v5550 = vrot.slane %v5549, 1
  %v5551 = vadd.f32 %v5549, %v5550
  %v5552 = vsel %vm54, %v5514, 0.0
  %v5553 = vrot.slane %v5552, 4
  %v5554 = vadd.f32 %v5552, %v5553
  %v5555 = vrot.slane %v5554, 2
  %v5556 = vadd.f32 %v5554, %v5555
  %v5557 = vrot.slane %v5556, 1
  %v5558 = vadd.f32 %v5556, %v5557
  %v5559 = vsel %vm54, %v5515, 0.0
  %v5560 = vrot.slane %v5559, 4
  %v5561 = vadd.f32 %v5559, %v5560
  %v5562 = vrot.slane %v5561, 2
  %v5563 = vadd.f32 %v5561, %v5562
  %v5564 = vrot.slane %v5563, 1
  %v5565 = vadd.f32 %v5563, %v5564
  %v5566 = vsel %vm54, %v5516, 0.0
  %v5567 = vrot.slane %v5566, 4
  %v5568 = vadd.f32 %v5566, %v5567
  %v5569 = vrot.slane %v5568, 2
  %v5570 = vadd.f32 %v5568, %v5569
  %v5571 = vrot.slane %v5570, 1
  %v5572 = vadd.f32 %v5570, %v5571
  %v5573 = vld [vmem:[%s3] sm:$0xff]
  %v5574 = vld [vmem:[%s3 + $0x8] sm:$0xff]
  %v5575 = vld [vmem:[%s3 + $0x10] sm:$0xff]
  %v5576 = vld [vmem:[%s3 + $0x18] sm:$0xff]
  %v5577 = vld [vmem:[%s4] sm:$0xff]
  %v5578 = vld [vmem:[%s4 + $0x8] sm:$0xff]
  %v5579 = vld [vmem:[%s4 + $0x10] sm:$0xff]
  %v5580 = vld [vmem:[%s4 + $0x18] sm:$0xff]
  %v5581 = vld [vmem:[%s4 + $0x20] sm:$0xff]
  %v5582 = vld [vmem:[%s4 + $0x28] sm:$0xff]
  %v5583 = vld [vmem:[%s4 + $0x30] sm:$0xff]
  %v5584 = vld [vmem:[%s4 + $0x38] sm:$0xff]
  %v5585 = vld [vmem:[%s4 + $0x40] sm:$0xff]
  %v5586 = vld [vmem:[%s4 + $0x48] sm:$0xff]
  %v5587 = vld [vmem:[%s4 + $0x50] sm:$0xff]
  %v5588 = vld [vmem:[%s4 + $0x58] sm:$0xff]
  %v5589 = vld [vmem:[%s4 + $0x60] sm:$0xff]
  %v5590 = vld [vmem:[%s4 + $0x68] sm:$0xff]
  %v5591 = vld [vmem:[%s4 + $0x70] sm:$0xff]
  %v5592 = vld [vmem:[%s4 + $0x78] sm:$0xff]
  %5593 = vmatprep.subr.mxu0 0.0
  %5594 = vmatpush1.msra.mxu0 %v5577
  %5595 = vmatprep.subr.mxu0 0.0
  %5596 = vmatpush1.msra.mxu0 %v5578
  %5597 = vmatprep.subr.mxu0 0.0
  %5598 = vmatpush1.msra.mxu0 %v5579
  %5599 = vmatprep.subr.mxu0 0.0
  %5600 = vmatpush1.msra.mxu0 %v5580
  %5601 = vmatprep.subr.mxu0 0.0
  %5602 = vmatpush1.msra.mxu0 %v5581
  %5603 = vmatprep.subr.mxu0 0.0
  %5604 = vmatpush1.msra.mxu0 %v5582
  %5605 = vmatprep.subr.mxu0 0.0
  %5606 = vmatpush1.msra.mxu0 %v5583
  %5607 = vmatprep.subr.mxu0 0.0
  %5608 = vmatpush1.msra.mxu0 %v5584
  %5609 = vmatprep.subr.mxu0 0.0
  %5610 = vmatpush1.msra.mxu0 %v5585
  %5611 = vmatprep.subr.mxu0 0.0
  %5612 = vmatpush1.msra.mxu0 %v5586
  %5613 = vmatprep.subr.mxu0 0.0
  %5614 = vmatpush1.msra.mxu0 %v5587
  %5615 = vmatprep.subr.mxu0 0.0
  %5616 = vmatpush1.msra.mxu0 %v5588
  %5617 = vmatprep.subr.mxu0 0.0
  %5618 = vmatpush1.msra.mxu0 %v5589
  %5619 = vmatprep.subr.mxu0 0.0
  %5620 = vmatpush1.msra.mxu0 %v5590
  %5621 = vmatprep.subr.mxu0 0.0
  %5622 = vmatpush1.msra.mxu0 %v5591
  %5623 = vmatprep.subr.mxu0 0.0
  %5624 = vmatpush1.msra.mxu0 %v5592
  %5625 = vmatprep.subr.mxu0 0.0
  %5626 = vmatpush1.msra.mxu0 0.0
  %5627 = vmatprep.subr.mxu0 0.0
  %5628 = vmatpush1.msra.mxu0 0.0
  %5629 = vmatprep.subr.mxu0 0.0
  %5630 = vmatpush1.msra.mxu0 0.0
  %5631 = vmatprep.subr.mxu0 0.0
  %5632 = vmatpush1.msra.mxu0 0.0
  %5633 = vmatprep.subr.mxu0 0.0
  %5634 = vmatpush1.msra.mxu0 0.0
  %5635 = vmatprep.subr.mxu0 0.0
  %5636 = vmatpush1.msra.mxu0 0.0
  %5637 = vmatprep.subr.mxu0 0.0
  %5638 = vmatpush1.msra.mxu0 0.0
  %5639 = vmatprep.subr.mxu0 0.0
  %5640 = vmatpush1.msra.mxu0 0.0
  %5641 = vmatprep.subr.mxu0 0.0
  %5642 = vmatpush1.msra.mxu0 0.0
  %5643 = vmatprep.subr.mxu0 0.0
  %5644 = vmatpush1.msra.mxu0 0.0
  %5645 = vmatprep.subr.mxu0 0.0
  %5646 = vmatpush1.msra.mxu0 0.0
  %5647 = vmatprep.subr.mxu0 0.0
  %5648 = vmatpush1.msra.mxu0 0.0
  %5649 = vmatprep.subr.mxu0 0.0
  %5650 = vmatpush1.msra.mxu0 0.0
  %5651 = vmatprep.subr.mxu0 0.0
  %5652 = vmatpush1.msra.mxu0 0.0
  %5653 = vmatprep.subr.mxu0 0.0
  %5654 = vmatpush1.msra.mxu0 0.0
  %5655 = vmatprep.subr.mxu0 0.0
  %5656 = vmatpush1.msra.mxu0 0.0
  %5657 = vmatprep.mubr.f32.mxu0 0.0
  %5658 = vmatmul.mubr.f32.gmra.mrb[0].mxu0 %v4969
  %v5659 = vpop.f32.mrb[0].mxu0
  %v5660 = vadd.f32 0.0, %v5659
  %v5661 = vpop.f32.mrb[0].mxu0
  %5662 = vdwg.mxu0
  %v5671 = vsel %vm217, %v5530, %v5523
  %v5672 = vsel %vm219, %v5537, %v5671
  %v5673 = vsel %vm221, %v5544, %v5672
  %v5674 = vsel %vm223, %v5551, %v5673
  %v5675 = vsel %vm225, %v5558, %v5674
  %v5676 = vsel %vm227, %v5565, %v5675
  %v5677 = vsel %vm229, %v5572, %v5676
  %v5678 = vsel %vm54, %v5677, 0
  %5680 = vmatprep.subr.mxu0 0.0
  %5681 = vmatpush1.msra.mxu0 %v5573
  %5682 = vmatprep.subr.mxu0 0.0
  %5683 = vmatpush1.msra.mxu0 %v5574
  %5684 = vmatprep.subr.mxu0 0.0
  %5685 = vmatpush1.msra.mxu0 %v5575
  %5686 = vmatprep.subr.mxu0 0.0
  %5687 = vmatpush1.msra.mxu0 %v5576
  %5688 = vmatprep.subr.mxu0 0.0
  %5689 = vmatpush1.msra.mxu0 0.0
  %5690 = vmatprep.subr.mxu0 0.0
  %5691 = vmatpush1.msra.mxu0 0.0
  %5692 = vmatprep.subr.mxu0 0.0
  %5693 = vmatpush1.msra.mxu0 0.0
  %5694 = vmatprep.subr.mxu0 0.0
  %5695 = vmatpush1.msra.mxu0 0.0
  %5696 = vmatprep.subr.mxu0 0.0
  %5697 = vmatpush1.msra.mxu0 0.0
  %5698 = vmatprep.subr.mxu0 0.0
  %5699 = vmatpush1.msra.mxu0 0.0
  %5700 = vmatprep.subr.mxu0 0.0
  %5701 = vmatpush1.msra.mxu0 0.0
  %5702 = vmatprep.subr.mxu0 0.0
  %5703 = vmatpush1.msra.mxu0 0.0
  %5704 = vmatprep.subr.mxu0 0.0
  %5705 = vmatpush1.msra.mxu0 0.0
  %5706 = vmatprep.subr.mxu0 0.0
  %5707 = vmatpush1.msra.mxu0 0.0
  %5708 = vmatprep.subr.mxu0 0.0
  %5709 = vmatpush1.msra.mxu0 0.0
  %5710 = vmatprep.subr.mxu0 0.0
  %5711 = vmatpush1.msra.mxu0 0.0
  %5712 = vmatprep.subr.mxu0 0.0
  %5713 = vmatpush1.msra.mxu0 0.0
  %5714 = vmatprep.subr.mxu0 0.0
  %5715 = vmatpush1.msra.mxu0 0.0
  %5716 = vmatprep.subr.mxu0 0.0
  %5717 = vmatpush1.msra.mxu0 0.0
  %5718 = vmatprep.subr.mxu0 0.0
  %5719 = vmatpush1.msra.mxu0 0.0
  %5720 = vmatprep.subr.mxu0 0.0
  %5721 = vmatpush1.msra.mxu0 0.0
  %5722 = vmatprep.subr.mxu0 0.0
  %5723 = vmatpush1.msra.mxu0 0.0
  %5724 = vmatprep.subr.mxu0 0.0
  %5725 = vmatpush1.msra.mxu0 0.0
  %5726 = vmatprep.subr.mxu0 0.0
  %5727 = vmatpush1.msra.mxu0 0.0
  %5728 = vmatprep.subr.mxu0 0.0
  %5729 = vmatpush1.msra.mxu0 0.0
  %5730 = vmatprep.subr.mxu0 0.0
  %5731 = vmatpush1.msra.mxu0 0.0
  %5732 = vmatprep.subr.mxu0 0.0
  %5733 = vmatpush1.msra.mxu0 0.0
  %5734 = vmatprep.subr.mxu0 0.0
  %5735 = vmatpush1.msra.mxu0 0.0
  %5736 = vmatprep.subr.mxu0 0.0
  %5737 = vmatpush1.msra.mxu0 0.0
  %5738 = vmatprep.subr.mxu0 0.0
  %5739 = vmatpush1.msra.mxu0 0.0
  %5740 = vmatprep.subr.mxu0 0.0
  %5741 = vmatpush1.msra.mxu0 0.0
  %5742 = vmatprep.subr.mxu0 0.0
  %5743 = vmatpush1.msra.mxu0 0.0
  %5744 = vmatprep.mubr.f32.mxu0 0.0
  %5745 = vmatmul.mubr.f32.gmra.mrb[0].mxu0 %v5678
  %v5746 = vpop.f32.mrb[0].mxu0
  %v5747 = vadd.f32 %v5660, %v5746
  %v5748 = vpop.f32.mrb[0].mxu0
  %5749 = vdwg.mxu0
  %v5750 = vld [vmem:[%s5] sm:$0xff]
  %v5751 = vld [vmem:[%s5 + $0x8] sm:$0xff]
  %v5752 = vld [vmem:[%s5 + $0x10] sm:$0xff]
  %v5753 = vld [vmem:[%s5 + $0x18] sm:$0xff]
  %v5754 = vld [vmem:[%s6] sm:$0x1]
  %v5756 = vlaneseq
  %v5757 = vshrl.u32 %v5756, 7
  %v5758 = vsub.s32 0, %v5757
  %v5759 = vrot.slane %v5754, %v5758
  %5761 = vmatprep.subr.mxu0 0.0
  %5762 = vmatpush1.msra.mxu0 %v5750
  %5763 = vmatprep.subr.mxu0 0.0
  %5764 = vmatpush1.msra.mxu0 %v5751
  %5765 = vmatprep.subr.mxu0 0.0
  %5766 = vmatpush1.msra.mxu0 %v5752
  %5767 = vmatprep.subr.mxu0 0.0
  %5768 = vmatpush1.msra.mxu0 %v5753
  %5769 = vmatprep.subr.mxu0 0.0
  %5770 = vmatpush1.msra.mxu0 0.0
  %5771 = vmatprep.subr.mxu0 0.0
  %5772 = vmatpush1.msra.mxu0 0.0
  %5773 = vmatprep.subr.mxu0 0.0
  %5774 = vmatpush1.msra.mxu0 0.0
  %5775 = vmatprep.subr.mxu0 0.0
  %5776 = vmatpush1.msra.mxu0 0.0
  %5777 = vmatprep.subr.mxu0 0.0
  %5778 = vmatpush1.msra.mxu0 0.0
  %5779 = vmatprep.subr.mxu0 0.0
  %5780 = vmatpush1.msra.mxu0 0.0
  %5781 = vmatprep.subr.mxu0 0.0
  %5782 = vmatpush1.msra.mxu0 0.0
  %5783 = vmatprep.subr.mxu0 0.0
  %5784 = vmatpush1.msra.mxu0 0.0
  %5785 = vmatprep.subr.mxu0 0.0
  %5786 = vmatpush1.msra.mxu0 0.0
  %5787 = vmatprep.subr.mxu0 0.0
  %5788 = vmatpush1.msra.mxu0 0.0
  %5789 = vmatprep.subr.mxu0 0.0
  %5790 = vmatpush1.msra.mxu0 0.0
  %5791 = vmatprep.subr.mxu0 0.0
  %5792 = vmatpush1.msra.mxu0 0.0
  %5793 = vmatprep.subr.mxu0 0.0
  %5794 = vmatpush1.msra.mxu0 0.0
  %5795 = vmatprep.subr.mxu0 0.0
  %5796 = vmatpush1.msra.mxu0 0.0
  %5797 = vmatprep.subr.mxu0 0.0
  %5798 = vmatpush1.msra.mxu0 0.0
  %5799 = vmatprep.subr.mxu0 0.0
  %5800 = vmatpush1.msra.mxu0 0.0
  %5801 = vmatprep.subr.mxu0 0.0
  %5802 = vmatpush1.msra.mxu0 0.0
  %5803 = vmatprep.subr.mxu0 0.0
  %5804 = vmatpush1.msra.mxu0 0.0
  %5805 = vmatprep.subr.mxu0 0.0
  %5806 = vmatpush1.msra.mxu0 0.0
  %5807 = vmatprep.subr.mxu0 0.0
  %5808 = vmatpush1.msra.mxu0 0.0
  %5809 = vmatprep.subr.mxu0 0.0
  %5810 = vmatpush1.msra.mxu0 0.0
  %5811 = vmatprep.subr.mxu0 0.0
  %5812 = vmatpush1.msra.mxu0 0.0
  %5813 = vmatprep.subr.mxu0 0.0
  %5814 = vmatpush1.msra.mxu0 0.0
  %5815 = vmatprep.subr.mxu0 0.0
  %5816 = vmatpush1.msra.mxu0 0.0
  %5817 = vmatprep.subr.mxu0 0.0
  %5818 = vmatpush1.msra.mxu0 0.0
  %5819 = vmatprep.subr.mxu0 0.0
  %5820 = vmatpush1.msra.mxu0 0.0
  %5821 = vmatprep.subr.mxu0 0.0
  %5822 = vmatpush1.msra.mxu0 0.0
  %5823 = vmatprep.subr.mxu0 0.0
  %5824 = vmatpush1.msra.mxu0 0.0
  %5825 = vmatprep.mubr.f32.mxu0 0.0
  %5826 = vmatmul.mubr.f32.gmra.mrb[0].mxu0 %v4866
  %v5827 = vpop.f32.mrb[0].mxu0
  %v5828 = vadd.f32 %v5759, %v5827
  %v5829 = vpop.f32.mrb[0].mxu0
  %5830 = vdwg.mxu0
  %v5831 = vadd.f32 %v5747, %v5828
  %v5832 = vxor.u32 %v5831, 2147483648
  %v5833 = vmul.f32 %v5832, 1.442695
  %v5834 = vpow.pop %v5833
  %v5835 = vadd.f32 %v5834, 1.0
  %v5836 = vrcp.pop %v5835
  %v5837 = vmul.f32 1.0, %v5836
  %5839 = vrot.lane.b32.xlu0 %v5828, 64
  %v5840 = vpop.permute.xlu0 %5839
  %v5842 = vmul.f32 %v5837, %v5840
  %5844 = vrot.lane.b32.xlu0 %v5842, 64
  %v5845 = vpop.permute.xlu0 %5844
  %v5847 = vadd.f32 %v5747, %v5845
  %v5848 = vtanh.pop %v5847
  %v5849 = vsub.f32 1.0, %v5837
  %5851 = vrot.lane.b32.xlu0 %v5848, 96
  %v5852 = vpop.permute.xlu0 %5851
  %v5854 = vmul.f32 %v5849, %v5852
  %v5855 = vmul.f32 %v5837, %v4851
  %v5856 = vadd.f32 %v5854, %v5855
  %v5857 = vld [vmem:[%s7] sm:$0xff]
  %v5858 = vld [vmem:[%s7 + $0x8] sm:$0xff]
  %v5859 = vld [vmem:[%s7 + $0x10] sm:$0xff]
  %v5860 = vld [vmem:[%s7 + $0x18] sm:$0xff]
  %v5861 = vld [vmem:[%s8] sm:$0x1]
  %v5863 = vlaneseq
  %v5864 = vshrl.u32 %v5863, 7
  %v5865 = vsub.s32 0, %v5864
  %v5866 = vrot.slane %v5861, %v5865
  %5869 = vrot.lane.b32.xlu0 %v5856, 96
  %v5870 = vpop.permute.xlu0 %5869
  %v5871 = vsel %vm54, %v5870, 0
  %5873 = vmatprep.subr.mxu0 0.0
  %5874 = vmatpush1.msra.mxu0 %v5857
  %5875 = vmatprep.subr.mxu0 0.0
  %5876 = vmatpush1.msra.mxu0 %v5858
  %5877 = vmatprep.subr.mxu0 0.0
  %5878 = vmatpush1.msra.mxu0 %v5859
  %5879 = vmatprep.subr.mxu0 0.0
  %5880 = vmatpush1.msra.mxu0 %v5860
  %5881 = vmatprep.subr.mxu0 0.0
  %5882 = vmatpush1.msra.mxu0 0.0
  %5883 = vmatprep.subr.mxu0 0.0
  %5884 = vmatpush1.msra.mxu0 0.0
  %5885 = vmatprep.subr.mxu0 0.0
  %5886 = vmatpush1.msra.mxu0 0.0
  %5887 = vmatprep.subr.mxu0 0.0
  %5888 = vmatpush1.msra.mxu0 0.0
  %5889 = vmatprep.subr.mxu0 0.0
  %5890 = vmatpush1.msra.mxu0 0.0
  %5891 = vmatprep.subr.mxu0 0.0
  %5892 = vmatpush1.msra.mxu0 0.0
  %5893 = vmatprep.subr.mxu0 0.0
  %5894 = vmatpush1.msra.mxu0 0.0
  %5895 = vmatprep.subr.mxu0 0.0
  %5896 = vmatpush1.msra.mxu0 0.0
  %5897 = vmatprep.subr.mxu0 0.0
  %5898 = vmatpush1.msra.mxu0 0.0
  %5899 = vmatprep.subr.mxu0 0.0
  %5900 = vmatpush1.msra.mxu0 0.0
  %5901 = vmatprep.subr.mxu0 0.0
  %5902 = vmatpush1.msra.mxu0 0.0
  %5903 = vmatprep.subr.mxu0 0.0
  %5904 = vmatpush1.msra.mxu0 0.0
  %5905 = vmatprep.subr.mxu0 0.0
  %5906 = vmatpush1.msra.mxu0 0.0
  %5907 = vmatprep.subr.mxu0 0.0
  %5908 = vmatpush1.msra.mxu0 0.0
  %5909 = vmatprep.subr.mxu0 0.0
  %5910 = vmatpush1.msra.mxu0 0.0
  %5911 = vmatprep.subr.mxu0 0.0
  %5912 = vmatpush1.msra.mxu0 0.0
  %5913 = vmatprep.subr.mxu0 0.0
  %5914 = vmatpush1.msra.mxu0 0.0
  %5915 = vmatprep.subr.mxu0 0.0
  %5916 = vmatpush1.msra.mxu0 0.0
  %5917 = vmatprep.subr.mxu0 0.0
  %5918 = vmatpush1.msra.mxu0 0.0
  %5919 = vmatprep.subr.mxu0 0.0
  %5920 = vmatpush1.msra.mxu0 0.0
  %5921 = vmatprep.subr.mxu0 0.0
  %5922 = vmatpush1.msra.mxu0 0.0
  %5923 = vmatprep.subr.mxu0 0.0
  %5924 = vmatpush1.msra.mxu0 0.0
  %5925 = vmatprep.subr.mxu0 0.0
  %5926 = vmatpush1.msra.mxu0 0.0
  %5927 = vmatprep.subr.mxu0 0.0
  %5928 = vmatpush1.msra.mxu0 0.0
  %5929 = vmatprep.subr.mxu0 0.0
  %5930 = vmatpush1.msra.mxu0 0.0
  %5931 = vmatprep.subr.mxu0 0.0
  %5932 = vmatpush1.msra.mxu0 0.0
  %5933 = vmatprep.subr.mxu0 0.0
  %5934 = vmatpush1.msra.mxu0 0.0
  %5935 = vmatprep.subr.mxu0 0.0
  %5936 = vmatpush1.msra.mxu0 0.0
  %5937 = vmatprep.mubr.f32.mxu0 0.0
  %5938 = vmatmul.mubr.f32.gmra.mrb[0].mxu0 %v5871
  %v5939 = vpop.f32.mrb[0].mxu0
  %v5940 = vadd.f32 %v5866, %v5939
  %v5941 = vpop.f32.mrb[0].mxu0
  %5942 = vdwg.mxu0
  %5943 = vmax.xlane.f32.xlu0 %v5940
  %v5944 = vpop.xlane.xlu0 %5943
  %v5945 = vsub.f32 %v5940, %v5944
  %v5946 = vmul.f32 %v5945, 1.442695
  %v5947 = vpow.pop %v5946
  %5948 = vadd.xlane.f32.xlu0 %v5947
  %v5949 = vpop.xlane.xlu0 %5948
  %v5950 = vlog2.pop %v5949
  %v5951 = vmul.f32 %v5950, 0.6931472
  %v5952 = vadd.f32 %v5944, %v5951
  %v5953 = vsub.f32 %v5940, %v5952
  %s5954 = scalar_lea.vmem %s9, 48
  %5955 = vst [vmem:[%s5954] sm:$0xff] %v5953
  %vm5956 = vcmp.ge.f32.partialorder %v5940, %v5944
  %v5957 = vsel %vm5956, %v33, 128
  %v5958 = vand.u32 %v5957, 65535
  %v5959 = vshra.s32 %v5957, 16
  %v5960 = vcvt.s32.f32 %v5958
  %v5961 = vcvt.s32.f32 %v5959
  %5962 = vmin.xlane.f32.xlu0 %v5961
  %v5963 = vpop.xlane.xlu0 %5962
  %vm5964 = vcmp.eq.f32.partialorder %v5961, %v5963
  %v5965 = vsel %vm5964, %v5960, inf
  %5966 = vmin.xlane.f32.xlu0 %v5965
  %v5967 = vpop.xlane.xlu0 %5966
  %v5968 = vcvt.f32.s32 %v5967
  %v5969 = vcvt.f32.s32 %v5963
  %v5970 = vshll.u32 %v5969, 16
  %v5971 = vadd.s32 %v5970, %v5968
  %vm5972 = vcmp.eq.s32.totalorder %v33, %v5971
  %v5973 = vsel %vm5972, 1, 0
  %v5974 = vcvt.s32.f32 %v5973
  %v5975 = vld [vmem:[%s1] sm:$0xff]
  %v5976 = vld [vmem:[%s1 + $0x8] sm:$0xff]
  %v5977 = vld [vmem:[%s1 + $0x10] sm:$0xff]
  %v5978 = vld [vmem:[%s1 + $0x18] sm:$0xff]
  %v5979 = vld [vmem:[%s1 + $0x20] sm:$0xff]
  %v5980 = vld [vmem:[%s1 + $0x28] sm:$0xff]
  %v5981 = vld [vmem:[%s1 + $0x30] sm:$0xff]
  %v5982 = vld [vmem:[%s1 + $0x38] sm:$0xff]
  %v5983 = vcombine.high %v5856, %v5856
  %v5985 = vunpack.c.l.s4 1966171168
  %v5986 = vunpack.c.0.s8 %v5985
  %v5987 = vlaneseq
  %v5988 = vshrl.u32 %v5987, 7
  %v5989 = vsub.s32 %v5986, %v5988
  %v5990 = vrot.slane %v5856, %v5989
  %v5992 = vunpack.c.l.s4 1966171168
  %v5993 = vunpack.c.0.s8 %v5992
  %v5994 = vlaneseq
  %v5995 = vshrl.u32 %v5994, 7
  %v5996 = vsub.s32 %v5993, %v5995
  %v5997 = vrot.slane %v5983, %v5996
  %v5998 = vcombine.high %v5990, %v5990
  %v5999 = vcombine.high %v5997, %v5997
  %v6001 = vunpack.c.l.s4 1966171168
  %v6002 = vunpack.c.0.s8 %v6001
  %v6003 = vlaneseq
  %v6004 = vshrl.u32 %v6003, 7
  %v6005 = vsub.s32 %v6002, %v6004
  %v6006 = vrot.slane %v5990, %v6005
  %v6008 = vunpack.c.l.s4 1966171168
  %v6009 = vunpack.c.0.s8 %v6008
  %v6010 = vlaneseq
  %v6011 = vshrl.u32 %v6010, 7
  %v6012 = vsub.s32 %v6009, %v6011
  %v6013 = vrot.slane %v5997, %v6012
  %v6015 = vunpack.c.l.s4 1966171168
  %v6016 = vunpack.c.0.s8 %v6015
  %v6017 = vlaneseq
  %v6018 = vshrl.u32 %v6017, 7
  %v6019 = vsub.s32 %v6016, %v6018
  %v6020 = vrot.slane %v5998, %v6019
  %v6022 = vunpack.c.l.s4 1966171168
  %v6023 = vunpack.c.0.s8 %v6022
  %v6024 = vlaneseq
  %v6025 = vshrl.u32 %v6024, 7
  %v6026 = vsub.s32 %v6023, %v6025
  %v6027 = vrot.slane %v5999, %v6026
  %v6028 = vcombine.high %v6006, %v6006
  %v6029 = vcombine.high %v6013, %v6013
  %v6030 = vcombine.high %v6020, %v6020
  %v6031 = vcombine.high %v6027, %v6027
  %v6032 = vlaneseq
  %v6033 = vshrl.u32 %v6032, 7
  %v6034 = vsub.s32 0, %v6033
  %v6035 = vrot.slane %v6006, %v6034
  %v6036 = vlaneseq
  %v6037 = vshrl.u32 %v6036, 7
  %v6038 = vsub.s32 0, %v6037
  %v6039 = vrot.slane %v6020, %v6038
  %v6040 = vlaneseq
  %v6041 = vshrl.u32 %v6040, 7
  %v6042 = vsub.s32 0, %v6041
  %v6043 = vrot.slane %v6028, %v6042
  %v6044 = vlaneseq
  %v6045 = vshrl.u32 %v6044, 7
  %v6046 = vsub.s32 0, %v6045
  %v6047 = vrot.slane %v6030, %v6046
  %v6048 = vlaneseq
  %v6049 = vshrl.u32 %v6048, 7
  %v6050 = vsub.s32 0, %v6049
  %v6051 = vrot.slane %v6013, %v6050
  %v6052 = vlaneseq
  %v6053 = vshrl.u32 %v6052, 7
  %v6054 = vsub.s32 0, %v6053
  %v6055 = vrot.slane %v6027, %v6054
  %v6056 = vlaneseq
  %v6057 = vshrl.u32 %v6056, 7
  %v6058 = vsub.s32 0, %v6057
  %v6059 = vrot.slane %v6029, %v6058
  %v6060 = vlaneseq
  %v6061 = vshrl.u32 %v6060, 7
  %v6062 = vsub.s32 0, %v6061
  %v6063 = vrot.slane %v6031, %v6062
  %6064 = vrot.lane.b32.xlu0 %v6035, 96
  %v6065 = vpop.permute.xlu0 %6064
  %6066 = vrot.lane.b32.xlu0 %v6039, 96
  %v6067 = vpop.permute.xlu0 %6066
  %6068 = vrot.lane.b32.xlu0 %v6043, 96
  %v6069 = vpop.permute.xlu0 %6068
  %6070 = vrot.lane.b32.xlu0 %v6047, 96
  %v6071 = vpop.permute.xlu0 %6070
  %6072 = vrot.lane.b32.xlu0 %v6051, 96
  %v6073 = vpop.permute.xlu0 %6072
  %6074 = vrot.lane.b32.xlu0 %v6055, 96
  %v6075 = vpop.permute.xlu0 %6074
  %6076 = vrot.lane.b32.xlu0 %v6059, 96
  %v6077 = vpop.permute.xlu0 %6076
  %6078 = vrot.lane.b32.xlu0 %v6063, 96
  %v6079 = vpop.permute.xlu0 %6078
  %v6088 = vmul.f32 %v5975, %v6065
  %v6089 = vmul.f32 %v5976, %v6067
  %v6090 = vmul.f32 %v5977, %v6069
  %v6091 = vmul.f32 %v5978, %v6071
  %v6092 = vmul.f32 %v5979, %v6073
  %v6093 = vmul.f32 %v5980, %v6075
  %v6094 = vmul.f32 %v5981, %v6077
  %v6095 = vmul.f32 %v5982, %v6079
  %v6096 = vsel %vm54, %v6088, 0.0
  %6097 = vadd.xlane.f32.xlu0 %v6096
  %v6098 = vpop.xlane.xlu0 %6097
  %v6099 = vsel %vm54, %v6089, 0.0
  %6100 = vadd.xlane.f32.xlu0 %v6099
  %v6101 = vpop.xlane.xlu0 %6100
  %v6102 = vsel %vm54, %v6090, 0.0
  %6103 = vadd.xlane.f32.xlu0 %v6102
  %v6104 = vpop.xlane.xlu0 %6103
  %v6105 = vsel %vm54, %v6091, 0.0
  %6106 = vadd.xlane.f32.xlu0 %v6105
  %v6107 = vpop.xlane.xlu0 %6106
  %v6108 = vsel %vm54, %v6092, 0.0
  %6109 = vadd.xlane.f32.xlu0 %v6108
  %v6110 = vpop.xlane.xlu0 %6109
  %v6111 = vsel %vm54, %v6093, 0.0
  %6112 = vadd.xlane.f32.xlu0 %v6111
  %v6113 = vpop.xlane.xlu0 %6112
  %v6114 = vsel %vm54, %v6094, 0.0
  %6115 = vadd.xlane.f32.xlu0 %v6114
  %v6116 = vpop.xlane.xlu0 %6115
  %v6117 = vsel %vm54, %v6095, 0.0
  %6118 = vadd.xlane.f32.xlu0 %v6117
  %v6119 = vpop.xlane.xlu0 %6118
  %v6120 = vld [vmem:[%s2] sm:$0xff]
  %v6122 = vlaneseq
  %v6123 = vshrl.u32 %v6122, 7
  %v6124 = vsub.s32 0, %v6123
  %v6125 = vrot.slane %v6120, %v6124
  %6127 = vbcast.lane.b32.xlu0 %v6125, 256
  %v6128 = vpop.permute.xlu0 %6127
  %v6129 = vlaneseq
  %v6130 = vshrl.u32 %v6129, 7
  %v6131 = vsub.s32 1, %v6130
  %v6132 = vrot.slane %v6120, %v6131
  %6134 = vbcast.lane.b32.xlu0 %v6132, 256
  %v6135 = vpop.permute.xlu0 %6134
  %v6136 = vlaneseq
  %v6137 = vshrl.u32 %v6136, 7
  %v6138 = vsub.s32 2, %v6137
  %v6139 = vrot.slane %v6120, %v6138
  %6141 = vbcast.lane.b32.xlu0 %v6139, 256
  %v6142 = vpop.permute.xlu0 %6141
  %v6143 = vlaneseq
  %v6144 = vshrl.u32 %v6143, 7
  %v6145 = vsub.s32 3, %v6144
  %v6146 = vrot.slane %v6120, %v6145
  %6148 = vbcast.lane.b32.xlu0 %v6146, 256
  %v6149 = vpop.permute.xlu0 %6148
  %v6150 = vlaneseq
  %v6151 = vshrl.u32 %v6150, 7
  %v6152 = vsub.s32 4, %v6151
  %v6153 = vrot.slane %v6120, %v6152
  %6155 = vbcast.lane.b32.xlu0 %v6153, 256
  %v6156 = vpop.permute.xlu0 %6155
  %v6157 = vlaneseq
  %v6158 = vshrl.u32 %v6157, 7
  %v6159 = vsub.s32 5, %v6158
  %v6160 = vrot.slane %v6120, %v6159
  %6162 = vbcast.lane.b32.xlu0 %v6160, 256
  %v6163 = vpop.permute.xlu0 %6162
  %v6164 = vlaneseq
  %v6165 = vshrl.u32 %v6164, 7
  %v6166 = vsub.s32 6, %v6165
  %v6167 = vrot.slane %v6120, %v6166
  %6169 = vbcast.lane.b32.xlu0 %v6167, 256
  %v6170 = vpop.permute.xlu0 %6169
  %v6171 = vlaneseq
  %v6172 = vshrl.u32 %v6171, 7
  %v6173 = vsub.s32 7, %v6172
  %v6174 = vrot.slane %v6120, %v6173
  %6176 = vbcast.lane.b32.xlu0 %v6174, 256
  %v6177 = vpop.permute.xlu0 %6176
  %v6186 = vadd.f32 %v6098, %v6128
  %v6187 = vadd.f32 %v6101, %v6135
  %v6188 = vadd.f32 %v6104, %v6142
  %v6189 = vadd.f32 %v6107, %v6149
  %v6190 = vadd.f32 %v6110, %v6156
  %v6191 = vadd.f32 %v6113, %v6163
  %v6192 = vadd.f32 %v6116, %v6170
  %v6193 = vadd.f32 %v6119, %v6177
  %6202 = vset.pattern.permute.xlu0 0
  %6203 = vperm.xlu0 %6202, %v6186
  %v6204 = vpop.permute.xlu0 %6203
  %6205 = vset.pattern.permute.xlu0 0
  %6206 = vperm.xlu0 %6205, %v6187
  %v6207 = vpop.permute.xlu0 %6206
  %6208 = vset.pattern.permute.xlu0 0
  %6209 = vperm.xlu0 %6208, %v6188
  %v6210 = vpop.permute.xlu0 %6209
  %6211 = vset.pattern.permute.xlu0 0
  %6212 = vperm.xlu0 %6211, %v6189
  %v6213 = vpop.permute.xlu0 %6212
  %6214 = vset.pattern.permute.xlu0 0
  %6215 = vperm.xlu0 %6214, %v6190
  %v6216 = vpop.permute.xlu0 %6215
  %6217 = vset.pattern.permute.xlu0 0
  %6218 = vperm.xlu0 %6217, %v6191
  %v6219 = vpop.permute.xlu0 %6218
  %6220 = vset.pattern.permute.xlu0 0
  %6221 = vperm.xlu0 %6220, %v6192
  %v6222 = vpop.permute.xlu0 %6221
  %6223 = vset.pattern.permute.xlu0 0
  %6224 = vperm.xlu0 %6223, %v6193
  %v6225 = vpop.permute.xlu0 %6224
  %v6226 = vlaneseq
  %v6227 = vshrl.u32 %v6226, 7
  %v6228 = vsub.s32 %v33, %v6227
  %v6229 = vrot.slane %v6204, %v6228
  %v6230 = vlaneseq
  %v6231 = vshrl.u32 %v6230, 7
  %v6232 = vsub.s32 %v33, %v6231
  %v6233 = vrot.slane %v6207, %v6232
  %v6234 = vlaneseq
  %v6235 = vshrl.u32 %v6234, 7
  %v6236 = vsub.s32 %v33, %v6235
  %v6237 = vrot.slane %v6210, %v6236
  %v6238 = vlaneseq
  %v6239 = vshrl.u32 %v6238, 7
  %v6240 = vsub.s32 %v33, %v6239
  %v6241 = vrot.slane %v6213, %v6240
  %v6242 = vlaneseq
  %v6243 = vshrl.u32 %v6242, 7
  %v6244 = vsub.s32 %v33, %v6243
  %v6245 = vrot.slane %v6216, %v6244
  %v6246 = vlaneseq
  %v6247 = vshrl.u32 %v6246, 7
  %v6248 = vsub.s32 %v33, %v6247
  %v6249 = vrot.slane %v6219, %v6248
  %v6250 = vlaneseq
  %v6251 = vshrl.u32 %v6250, 7
  %v6252 = vsub.s32 %v33, %v6251
  %v6253 = vrot.slane %v6222, %v6252
  %v6254 = vlaneseq
  %v6255 = vshrl.u32 %v6254, 7
  %v6256 = vsub.s32 %v33, %v6255
  %v6257 = vrot.slane %v6225, %v6256
  %v6258 = vsel %vm217, %v6233, %v6229
  %v6259 = vsel %vm219, %v6237, %v6258
  %v6260 = vsel %vm221, %v6241, %v6259
  %v6261 = vsel %vm223, %v6245, %v6260
  %v6262 = vsel %vm225, %v6249, %v6261
  %v6263 = vsel %vm227, %v6253, %v6262
  %v6264 = vsel %vm229, %v6257, %v6263
  %v6266 = vsel %vm232, %v6264, -inf
  %6267 = vmax.xlane.f32.xlu0 %v6266
  %v6268 = vpop.xlane.xlu0 %6267
  %v6270 = vlaneseq
  %v6271 = vshrl.u32 %v6270, 7
  %v6272 = vsub.s32 0, %v6271
  %v6273 = vrot.slane %v6268, %v6272
  %v6274 = vlaneseq
  %v6275 = vshrl.u32 %v6274, 7
  %v6276 = vsub.s32 1, %v6275
  %v6277 = vrot.slane %v6268, %v6276
  %v6278 = vlaneseq
  %v6279 = vshrl.u32 %v6278, 7
  %v6280 = vsub.s32 2, %v6279
  %v6281 = vrot.slane %v6268, %v6280
  %v6282 = vlaneseq
  %v6283 = vshrl.u32 %v6282, 7
  %v6284 = vsub.s32 3, %v6283
  %v6285 = vrot.slane %v6268, %v6284
  %v6286 = vlaneseq
  %v6287 = vshrl.u32 %v6286, 7
  %v6288 = vsub.s32 4, %v6287
  %v6289 = vrot.slane %v6268, %v6288
  %v6290 = vlaneseq
  %v6291 = vshrl.u32 %v6290, 7
  %v6292 = vsub.s32 5, %v6291
  %v6293 = vrot.slane %v6268, %v6292
  %v6294 = vlaneseq
  %v6295 = vshrl.u32 %v6294, 7
  %v6296 = vsub.s32 6, %v6295
  %v6297 = vrot.slane %v6268, %v6296
  %v6298 = vlaneseq
  %v6299 = vshrl.u32 %v6298, 7
  %v6300 = vsub.s32 7, %v6299
  %v6301 = vrot.slane %v6268, %v6300
  %v6310 = vsub.f32 %v6186, %v6273
  %v6311 = vsub.f32 %v6187, %v6277
  %v6312 = vsub.f32 %v6188, %v6281
  %v6313 = vsub.f32 %v6189, %v6285
  %v6314 = vsub.f32 %v6190, %v6289
  %v6315 = vsub.f32 %v6191, %v6293
  %v6316 = vsub.f32 %v6192, %v6297
  %v6317 = vsub.f32 %v6193, %v6301
  %v6318 = vmul.f32 %v6310, 1.442695
  %v6319 = vpow.pop %v6318
  %v6320 = vmul.f32 %v6311, 1.442695
  %v6321 = vpow.pop %v6320
  %v6322 = vmul.f32 %v6312, 1.442695
  %v6323 = vpow.pop %v6322
  %v6324 = vmul.f32 %v6313, 1.442695
  %v6325 = vpow.pop %v6324
  %v6326 = vmul.f32 %v6314, 1.442695
  %v6327 = vpow.pop %v6326
  %v6328 = vmul.f32 %v6315, 1.442695
  %v6329 = vpow.pop %v6328
  %v6330 = vmul.f32 %v6316, 1.442695
  %v6331 = vpow.pop %v6330
  %v6332 = vmul.f32 %v6317, 1.442695
  %v6333 = vpow.pop %v6332
  %6342 = vset.pattern.permute.xlu0 0
  %6343 = vperm.xlu0 %6342, %v6319
  %v6344 = vpop.permute.xlu0 %6343
  %6345 = vset.pattern.permute.xlu0 0
  %6346 = vperm.xlu0 %6345, %v6321
  %v6347 = vpop.permute.xlu0 %6346
  %6348 = vset.pattern.permute.xlu0 0
  %6349 = vperm.xlu0 %6348, %v6323
  %v6350 = vpop.permute.xlu0 %6349
  %6351 = vset.pattern.permute.xlu0 0
  %6352 = vperm.xlu0 %6351, %v6325
  %v6353 = vpop.permute.xlu0 %6352
  %6354 = vset.pattern.permute.xlu0 0
  %6355 = vperm.xlu0 %6354, %v6327
  %v6356 = vpop.permute.xlu0 %6355
  %6357 = vset.pattern.permute.xlu0 0
  %6358 = vperm.xlu0 %6357, %v6329
  %v6359 = vpop.permute.xlu0 %6358
  %6360 = vset.pattern.permute.xlu0 0
  %6361 = vperm.xlu0 %6360, %v6331
  %v6362 = vpop.permute.xlu0 %6361
  %6363 = vset.pattern.permute.xlu0 0
  %6364 = vperm.xlu0 %6363, %v6333
  %v6365 = vpop.permute.xlu0 %6364
  %v6366 = vlaneseq
  %v6367 = vshrl.u32 %v6366, 7
  %v6368 = vsub.s32 %v33, %v6367
  %v6369 = vrot.slane %v6344, %v6368
  %v6370 = vlaneseq
  %v6371 = vshrl.u32 %v6370, 7
  %v6372 = vsub.s32 %v33, %v6371
  %v6373 = vrot.slane %v6347, %v6372
  %v6374 = vlaneseq
  %v6375 = vshrl.u32 %v6374, 7
  %v6376 = vsub.s32 %v33, %v6375
  %v6377 = vrot.slane %v6350, %v6376
  %v6378 = vlaneseq
  %v6379 = vshrl.u32 %v6378, 7
  %v6380 = vsub.s32 %v33, %v6379
  %v6381 = vrot.slane %v6353, %v6380
  %v6382 = vlaneseq
  %v6383 = vshrl.u32 %v6382, 7
  %v6384 = vsub.s32 %v33, %v6383
  %v6385 = vrot.slane %v6356, %v6384
  %v6386 = vlaneseq
  %v6387 = vshrl.u32 %v6386, 7
  %v6388 = vsub.s32 %v33, %v6387
  %v6389 = vrot.slane %v6359, %v6388
  %v6390 = vlaneseq
  %v6391 = vshrl.u32 %v6390, 7
  %v6392 = vsub.s32 %v33, %v6391
  %v6393 = vrot.slane %v6362, %v6392
  %v6394 = vlaneseq
  %v6395 = vshrl.u32 %v6394, 7
  %v6396 = vsub.s32 %v33, %v6395
  %v6397 = vrot.slane %v6365, %v6396
  %v6398 = vsel %vm217, %v6373, %v6369
  %v6399 = vsel %vm219, %v6377, %v6398
  %v6400 = vsel %vm221, %v6381, %v6399
  %v6401 = vsel %vm223, %v6385, %v6400
  %v6402 = vsel %vm225, %v6389, %v6401
  %v6403 = vsel %vm227, %v6393, %v6402
  %v6404 = vsel %vm229, %v6397, %v6403
  %v6406 = vsel %vm232, %v6404, 0.0
  %6407 = vadd.xlane.f32.xlu0 %v6406
  %v6408 = vpop.xlane.xlu0 %6407
  %v6410 = vlaneseq
  %v6411 = vshrl.u32 %v6410, 7
  %v6412 = vsub.s32 0, %v6411
  %v6413 = vrot.slane %v6408, %v6412
  %v6414 = vlaneseq
  %v6415 = vshrl.u32 %v6414, 7
  %v6416 = vsub.s32 1, %v6415
  %v6417 = vrot.slane %v6408, %v6416
  %v6418 = vlaneseq
  %v6419 = vshrl.u32 %v6418, 7
  %v6420 = vsub.s32 2, %v6419
  %v6421 = vrot.slane %v6408, %v6420
  %v6422 = vlaneseq
  %v6423 = vshrl.u32 %v6422, 7
  %v6424 = vsub.s32 3, %v6423
  %v6425 = vrot.slane %v6408, %v6424
  %v6426 = vlaneseq
  %v6427 = vshrl.u32 %v6426, 7
  %v6428 = vsub.s32 4, %v6427
  %v6429 = vrot.slane %v6408, %v6428
  %v6430 = vlaneseq
  %v6431 = vshrl.u32 %v6430, 7
  %v6432 = vsub.s32 5, %v6431
  %v6433 = vrot.slane %v6408, %v6432
  %v6434 = vlaneseq
  %v6435 = vshrl.u32 %v6434, 7
  %v6436 = vsub.s32 6, %v6435
  %v6437 = vrot.slane %v6408, %v6436
  %v6438 = vlaneseq
  %v6439 = vshrl.u32 %v6438, 7
  %v6440 = vsub.s32 7, %v6439
  %v6441 = vrot.slane %v6408, %v6440
  %v6450 = vrcp.pop %v6413
  %v6451 = vmul.f32 %v6319, %v6450
  %v6452 = vrcp.pop %v6417
  %v6453 = vmul.f32 %v6321, %v6452
  %v6454 = vrcp.pop %v6421
  %v6455 = vmul.f32 %v6323, %v6454
  %v6456 = vrcp.pop %v6425
  %v6457 = vmul.f32 %v6325, %v6456
  %v6458 = vrcp.pop %v6429
  %v6459 = vmul.f32 %v6327, %v6458
  %v6460 = vrcp.pop %v6433
  %v6461 = vmul.f32 %v6329, %v6460
  %v6462 = vrcp.pop %v6437
  %v6463 = vmul.f32 %v6331, %v6462
  %v6464 = vrcp.pop %v6441
  %v6465 = vmul.f32 %v6333, %v6464
  %v6466 = vld [vmem:[%s0] sm:$0xff]
  %v6467 = vld [vmem:[%s0 + $0x8] sm:$0xff]
  %v6468 = vld [vmem:[%s0 + $0x10] sm:$0xff]
  %v6469 = vld [vmem:[%s0 + $0x18] sm:$0xff]
  %v6470 = vld [vmem:[%s0 + $0x20] sm:$0xff]
  %v6471 = vld [vmem:[%s0 + $0x28] sm:$0xff]
  %v6472 = vld [vmem:[%s0 + $0x30] sm:$0xff]
  %v6473 = vld [vmem:[%s0 + $0x38] sm:$0xff]
  %6475 = vset.pattern.permute.xlu0 0
  %6476 = vperm.xlu0 %6475, %v6451
  %v6477 = vpop.permute.xlu0 %6476
  %6480 = vset.pattern.permute.xlu0 0
  %6481 = vperm.xlu0 %6480, %v6453
  %v6482 = vpop.permute.xlu0 %6481
  %6485 = vset.pattern.permute.xlu0 0
  %6486 = vperm.xlu0 %6485, %v6455
  %v6487 = vpop.permute.xlu0 %6486
  %6490 = vset.pattern.permute.xlu0 0
  %6491 = vperm.xlu0 %6490, %v6457
  %v6492 = vpop.permute.xlu0 %6491
  %6495 = vset.pattern.permute.xlu0 0
  %6496 = vperm.xlu0 %6495, %v6459
  %v6497 = vpop.permute.xlu0 %6496
  %6500 = vset.pattern.permute.xlu0 0
  %6501 = vperm.xlu0 %6500, %v6461
  %v6502 = vpop.permute.xlu0 %6501
  %6505 = vset.pattern.permute.xlu0 0
  %6506 = vperm.xlu0 %6505, %v6463
  %v6507 = vpop.permute.xlu0 %6506
  %6510 = vset.pattern.permute.xlu0 0
  %6511 = vperm.xlu0 %6510, %v6465
  %v6512 = vpop.permute.xlu0 %6511
  %v6514 = vmul.f32 %v6477, %v6466
  %v6515 = vmul.f32 %v6482, %v6467
  %v6516 = vmul.f32 %v6487, %v6468
  %v6517 = vmul.f32 %v6492, %v6469
  %v6518 = vmul.f32 %v6497, %v6470
  %v6519 = vmul.f32 %v6502, %v6471
  %v6520 = vmul.f32 %v6507, %v6472
  %v6521 = vmul.f32 %v6512, %v6473
  %v6522 = vsel %vm54, %v6514, 0.0
  %v6523 = vrot.slane %v6522, 4
  %v6524 = vadd.f32 %v6522, %v6523
  %v6525 = vrot.slane %v6524, 2
  %v6526 = vadd.f32 %v6524, %v6525
  %v6527 = vrot.slane %v6526, 1
  %v6528 = vadd.f32 %v6526, %v6527
  %v6529 = vsel %vm54, %v6515, 0.0
  %v6530 = vrot.slane %v6529, 4
  %v6531 = vadd.f32 %v6529, %v6530
  %v6532 = vrot.slane %v6531, 2
  %v6533 = vadd.f32 %v6531, %v6532
  %v6534 = vrot.slane %v6533, 1
  %v6535 = vadd.f32 %v6533, %v6534
  %v6536 = vsel %vm54, %v6516, 0.0
  %v6537 = vrot.slane %v6536, 4
  %v6538 = vadd.f32 %v6536, %v6537
  %v6539 = vrot.slane %v6538, 2
  %v6540 = vadd.f32 %v6538, %v6539
  %v6541 = vrot.slane %v6540, 1
  %v6542 = vadd.f32 %v6540, %v6541
  %v6543 = vsel %vm54, %v6517, 0.0
  %v6544 = vrot.slane %v6543, 4
  %v6545 = vadd.f32 %v6543, %v6544
  %v6546 = vrot.slane %v6545, 2
  %v6547 = vadd.f32 %v6545, %v6546
  %v6548 = vrot.slane %v6547, 1
  %v6549 = vadd.f32 %v6547, %v6548
  %v6550 = vsel %vm54, %v6518, 0.0
  %v6551 = vrot.slane %v6550, 4
  %v6552 = vadd.f32 %v6550, %v6551
  %v6553 = vrot.slane %v6552, 2
  %v6554 = vadd.f32 %v6552, %v6553
  %v6555 = vrot.slane %v6554, 1
  %v6556 = vadd.f32 %v6554, %v6555
  %v6557 = vsel %vm54, %v6519, 0.0
  %v6558 = vrot.slane %v6557, 4
  %v6559 = vadd.f32 %v6557, %v6558
  %v6560 = vrot.slane %v6559, 2
  %v6561 = vadd.f32 %v6559, %v6560
  %v6562 = vrot.slane %v6561, 1
  %v6563 = vadd.f32 %v6561, %v6562
  %v6564 = vsel %vm54, %v6520, 0.0
  %v6565 = vrot.slane %v6564, 4
  %v6566 = vadd.f32 %v6564, %v6565
  %v6567 = vrot.slane %v6566, 2
  %v6568 = vadd.f32 %v6566, %v6567
  %v6569 = vrot.slane %v6568, 1
  %v6570 = vadd.f32 %v6568, %v6569
  %v6571 = vsel %vm54, %v6521, 0.0
  %v6572 = vrot.slane %v6571, 4
  %v6573 = vadd.f32 %v6571, %v6572
  %v6574 = vrot.slane %v6573, 2
  %v6575 = vadd.f32 %v6573, %v6574
  %v6576 = vrot.slane %v6575, 1
  %v6577 = vadd.f32 %v6575, %v6576
  %v6578 = vld [vmem:[%s3] sm:$0xff]
  %v6579 = vld [vmem:[%s3 + $0x8] sm:$0xff]
  %v6580 = vld [vmem:[%s3 + $0x10] sm:$0xff]
  %v6581 = vld [vmem:[%s3 + $0x18] sm:$0xff]
  %v6582 = vld [vmem:[%s4] sm:$0xff]
  %v6583 = vld [vmem:[%s4 + $0x8] sm:$0xff]
  %v6584 = vld [vmem:[%s4 + $0x10] sm:$0xff]
  %v6585 = vld [vmem:[%s4 + $0x18] sm:$0xff]
  %v6586 = vld [vmem:[%s4 + $0x20] sm:$0xff]
  %v6587 = vld [vmem:[%s4 + $0x28] sm:$0xff]
  %v6588 = vld [vmem:[%s4 + $0x30] sm:$0xff]
  %v6589 = vld [vmem:[%s4 + $0x38] sm:$0xff]
  %v6590 = vld [vmem:[%s4 + $0x40] sm:$0xff]
  %v6591 = vld [vmem:[%s4 + $0x48] sm:$0xff]
  %v6592 = vld [vmem:[%s4 + $0x50] sm:$0xff]
  %v6593 = vld [vmem:[%s4 + $0x58] sm:$0xff]
  %v6594 = vld [vmem:[%s4 + $0x60] sm:$0xff]
  %v6595 = vld [vmem:[%s4 + $0x68] sm:$0xff]
  %v6596 = vld [vmem:[%s4 + $0x70] sm:$0xff]
  %v6597 = vld [vmem:[%s4 + $0x78] sm:$0xff]
  %6598 = vmatprep.subr.mxu0 0.0
  %6599 = vmatpush1.msra.mxu0 %v6582
  %6600 = vmatprep.subr.mxu0 0.0
  %6601 = vmatpush1.msra.mxu0 %v6583
  %6602 = vmatprep.subr.mxu0 0.0
  %6603 = vmatpush1.msra.mxu0 %v6584
  %6604 = vmatprep.subr.mxu0 0.0
  %6605 = vmatpush1.msra.mxu0 %v6585
  %6606 = vmatprep.subr.mxu0 0.0
  %6607 = vmatpush1.msra.mxu0 %v6586
  %6608 = vmatprep.subr.mxu0 0.0
  %6609 = vmatpush1.msra.mxu0 %v6587
  %6610 = vmatprep.subr.mxu0 0.0
  %6611 = vmatpush1.msra.mxu0 %v6588
  %6612 = vmatprep.subr.mxu0 0.0
  %6613 = vmatpush1.msra.mxu0 %v6589
  %6614 = vmatprep.subr.mxu0 0.0
  %6615 = vmatpush1.msra.mxu0 %v6590
  %6616 = vmatprep.subr.mxu0 0.0
  %6617 = vmatpush1.msra.mxu0 %v6591
  %6618 = vmatprep.subr.mxu0 0.0
  %6619 = vmatpush1.msra.mxu0 %v6592
  %6620 = vmatprep.subr.mxu0 0.0
  %6621 = vmatpush1.msra.mxu0 %v6593
  %6622 = vmatprep.subr.mxu0 0.0
  %6623 = vmatpush1.msra.mxu0 %v6594
  %6624 = vmatprep.subr.mxu0 0.0
  %6625 = vmatpush1.msra.mxu0 %v6595
  %6626 = vmatprep.subr.mxu0 0.0
  %6627 = vmatpush1.msra.mxu0 %v6596
  %6628 = vmatprep.subr.mxu0 0.0
  %6629 = vmatpush1.msra.mxu0 %v6597
  %6630 = vmatprep.subr.mxu0 0.0
  %6631 = vmatpush1.msra.mxu0 0.0
  %6632 = vmatprep.subr.mxu0 0.0
  %6633 = vmatpush1.msra.mxu0 0.0
  %6634 = vmatprep.subr.mxu0 0.0
  %6635 = vmatpush1.msra.mxu0 0.0
  %6636 = vmatprep.subr.mxu0 0.0
  %6637 = vmatpush1.msra.mxu0 0.0
  %6638 = vmatprep.subr.mxu0 0.0
  %6639 = vmatpush1.msra.mxu0 0.0
  %6640 = vmatprep.subr.mxu0 0.0
  %6641 = vmatpush1.msra.mxu0 0.0
  %6642 = vmatprep.subr.mxu0 0.0
  %6643 = vmatpush1.msra.mxu0 0.0
  %6644 = vmatprep.subr.mxu0 0.0
  %6645 = vmatpush1.msra.mxu0 0.0
  %6646 = vmatprep.subr.mxu0 0.0
  %6647 = vmatpush1.msra.mxu0 0.0
  %6648 = vmatprep.subr.mxu0 0.0
  %6649 = vmatpush1.msra.mxu0 0.0
  %6650 = vmatprep.subr.mxu0 0.0
  %6651 = vmatpush1.msra.mxu0 0.0
  %6652 = vmatprep.subr.mxu0 0.0
  %6653 = vmatpush1.msra.mxu0 0.0
  %6654 = vmatprep.subr.mxu0 0.0
  %6655 = vmatpush1.msra.mxu0 0.0
  %6656 = vmatprep.subr.mxu0 0.0
  %6657 = vmatpush1.msra.mxu0 0.0
  %6658 = vmatprep.subr.mxu0 0.0
  %6659 = vmatpush1.msra.mxu0 0.0
  %6660 = vmatprep.subr.mxu0 0.0
  %6661 = vmatpush1.msra.mxu0 0.0
  %6662 = vmatprep.mubr.f32.mxu0 0.0
  %6663 = vmatmul.mubr.f32.gmra.mrb[0].mxu0 %v5974
  %v6664 = vpop.f32.mrb[0].mxu0
  %v6665 = vadd.f32 0.0, %v6664
  %v6666 = vpop.f32.mrb[0].mxu0
  %6667 = vdwg.mxu0
  %v6676 = vsel %vm217, %v6535, %v6528
  %v6677 = vsel %vm219, %v6542, %v6676
  %v6678 = vsel %vm221, %v6549, %v6677
  %v6679 = vsel %vm223, %v6556, %v6678
  %v6680 = vsel %vm225, %v6563, %v6679
  %v6681 = vsel %vm227, %v6570, %v6680
  %v6682 = vsel %vm229, %v6577, %v6681
  %v6683 = vsel %vm54, %v6682, 0
  %6685 = vmatprep.subr.mxu0 0.0
  %6686 = vmatpush1.msra.mxu0 %v6578
  %6687 = vmatprep.subr.mxu0 0.0
  %6688 = vmatpush1.msra.mxu0 %v6579
  %6689 = vmatprep.subr.mxu0 0.0
  %6690 = vmatpush1.msra.mxu0 %v6580
  %6691 = vmatprep.subr.mxu0 0.0
  %6692 = vmatpush1.msra.mxu0 %v6581
  %6693 = vmatprep.subr.mxu0 0.0
  %6694 = vmatpush1.msra.mxu0 0.0
  %6695 = vmatprep.subr.mxu0 0.0
  %6696 = vmatpush1.msra.mxu0 0.0
  %6697 = vmatprep.subr.mxu0 0.0
  %6698 = vmatpush1.msra.mxu0 0.0
  %6699 = vmatprep.subr.mxu0 0.0
  %6700 = vmatpush1.msra.mxu0 0.0
  %6701 = vmatprep.subr.mxu0 0.0
  %6702 = vmatpush1.msra.mxu0 0.0
  %6703 = vmatprep.subr.mxu0 0.0
  %6704 = vmatpush1.msra.mxu0 0.0
  %6705 = vmatprep.subr.mxu0 0.0
  %6706 = vmatpush1.msra.mxu0 0.0
  %6707 = vmatprep.subr.mxu0 0.0
  %6708 = vmatpush1.msra.mxu0 0.0
  %6709 = vmatprep.subr.mxu0 0.0
  %6710 = vmatpush1.msra.mxu0 0.0
  %6711 = vmatprep.subr.mxu0 0.0
  %6712 = vmatpush1.msra.mxu0 0.0
  %6713 = vmatprep.subr.mxu0 0.0
  %6714 = vmatpush1.msra.mxu0 0.0
  %6715 = vmatprep.subr.mxu0 0.0
  %6716 = vmatpush1.msra.mxu0 0.0
  %6717 = vmatprep.subr.mxu0 0.0
  %6718 = vmatpush1.msra.mxu0 0.0
  %6719 = vmatprep.subr.mxu0 0.0
  %6720 = vmatpush1.msra.mxu0 0.0
  %6721 = vmatprep.subr.mxu0 0.0
  %6722 = vmatpush1.msra.mxu0 0.0
  %6723 = vmatprep.subr.mxu0 0.0
  %6724 = vmatpush1.msra.mxu0 0.0
  %6725 = vmatprep.subr.mxu0 0.0
  %6726 = vmatpush1.msra.mxu0 0.0
  %6727 = vmatprep.subr.mxu0 0.0
  %6728 = vmatpush1.msra.mxu0 0.0
  %6729 = vmatprep.subr.mxu0 0.0
  %6730 = vmatpush1.msra.mxu0 0.0
  %6731 = vmatprep.subr.mxu0 0.0
  %6732 = vmatpush1.msra.mxu0 0.0
  %6733 = vmatprep.subr.mxu0 0.0
  %6734 = vmatpush1.msra.mxu0 0.0
  %6735 = vmatprep.subr.mxu0 0.0
  %6736 = vmatpush1.msra.mxu0 0.0
  %6737 = vmatprep.subr.mxu0 0.0
  %6738 = vmatpush1.msra.mxu0 0.0
  %6739 = vmatprep.subr.mxu0 0.0
  %6740 = vmatpush1.msra.mxu0 0.0
  %6741 = vmatprep.subr.mxu0 0.0
  %6742 = vmatpush1.msra.mxu0 0.0
  %6743 = vmatprep.subr.mxu0 0.0
  %6744 = vmatpush1.msra.mxu0 0.0
  %6745 = vmatprep.subr.mxu0 0.0
  %6746 = vmatpush1.msra.mxu0 0.0
  %6747 = vmatprep.subr.mxu0 0.0
  %6748 = vmatpush1.msra.mxu0 0.0
  %6749 = vmatprep.mubr.f32.mxu0 0.0
  %6750 = vmatmul.mubr.f32.gmra.mrb[0].mxu0 %v6683
  %v6751 = vpop.f32.mrb[0].mxu0
  %v6752 = vadd.f32 %v6665, %v6751
  %v6753 = vpop.f32.mrb[0].mxu0
  %6754 = vdwg.mxu0
  %v6755 = vld [vmem:[%s5] sm:$0xff]
  %v6756 = vld [vmem:[%s5 + $0x8] sm:$0xff]
  %v6757 = vld [vmem:[%s5 + $0x10] sm:$0xff]
  %v6758 = vld [vmem:[%s5 + $0x18] sm:$0xff]
  %v6759 = vld [vmem:[%s6] sm:$0x1]
  %v6761 = vlaneseq
  %v6762 = vshrl.u32 %v6761, 7
  %v6763 = vsub.s32 0, %v6762
  %v6764 = vrot.slane %v6759, %v6763
  %6766 = vmatprep.subr.mxu0 0.0
  %6767 = vmatpush1.msra.mxu0 %v6755
  %6768 = vmatprep.subr.mxu0 0.0
  %6769 = vmatpush1.msra.mxu0 %v6756
  %6770 = vmatprep.subr.mxu0 0.0
  %6771 = vmatpush1.msra.mxu0 %v6757
  %6772 = vmatprep.subr.mxu0 0.0
  %6773 = vmatpush1.msra.mxu0 %v6758
  %6774 = vmatprep.subr.mxu0 0.0
  %6775 = vmatpush1.msra.mxu0 0.0
  %6776 = vmatprep.subr.mxu0 0.0
  %6777 = vmatpush1.msra.mxu0 0.0
  %6778 = vmatprep.subr.mxu0 0.0
  %6779 = vmatpush1.msra.mxu0 0.0
  %6780 = vmatprep.subr.mxu0 0.0
  %6781 = vmatpush1.msra.mxu0 0.0
  %6782 = vmatprep.subr.mxu0 0.0
  %6783 = vmatpush1.msra.mxu0 0.0
  %6784 = vmatprep.subr.mxu0 0.0
  %6785 = vmatpush1.msra.mxu0 0.0
  %6786 = vmatprep.subr.mxu0 0.0
  %6787 = vmatpush1.msra.mxu0 0.0
  %6788 = vmatprep.subr.mxu0 0.0
  %6789 = vmatpush1.msra.mxu0 0.0
  %6790 = vmatprep.subr.mxu0 0.0
  %6791 = vmatpush1.msra.mxu0 0.0
  %6792 = vmatprep.subr.mxu0 0.0
  %6793 = vmatpush1.msra.mxu0 0.0
  %6794 = vmatprep.subr.mxu0 0.0
  %6795 = vmatpush1.msra.mxu0 0.0
  %6796 = vmatprep.subr.mxu0 0.0
  %6797 = vmatpush1.msra.mxu0 0.0
  %6798 = vmatprep.subr.mxu0 0.0
  %6799 = vmatpush1.msra.mxu0 0.0
  %6800 = vmatprep.subr.mxu0 0.0
  %6801 = vmatpush1.msra.mxu0 0.0
  %6802 = vmatprep.subr.mxu0 0.0
  %6803 = vmatpush1.msra.mxu0 0.0
  %6804 = vmatprep.subr.mxu0 0.0
  %6805 = vmatpush1.msra.mxu0 0.0
  %6806 = vmatprep.subr.mxu0 0.0
  %6807 = vmatpush1.msra.mxu0 0.0
  %6808 = vmatprep.subr.mxu0 0.0
  %6809 = vmatpush1.msra.mxu0 0.0
  %6810 = vmatprep.subr.mxu0 0.0
  %6811 = vmatpush1.msra.mxu0 0.0
  %6812 = vmatprep.subr.mxu0 0.0
  %6813 = vmatpush1.msra.mxu0 0.0
  %6814 = vmatprep.subr.mxu0 0.0
  %6815 = vmatpush1.msra.mxu0 0.0
  %6816 = vmatprep.subr.mxu0 0.0
  %6817 = vmatpush1.msra.mxu0 0.0
  %6818 = vmatprep.subr.mxu0 0.0
  %6819 = vmatpush1.msra.mxu0 0.0
  %6820 = vmatprep.subr.mxu0 0.0
  %6821 = vmatpush1.msra.mxu0 0.0
  %6822 = vmatprep.subr.mxu0 0.0
  %6823 = vmatpush1.msra.mxu0 0.0
  %6824 = vmatprep.subr.mxu0 0.0
  %6825 = vmatpush1.msra.mxu0 0.0
  %6826 = vmatprep.subr.mxu0 0.0
  %6827 = vmatpush1.msra.mxu0 0.0
  %6828 = vmatprep.subr.mxu0 0.0
  %6829 = vmatpush1.msra.mxu0 0.0
  %6830 = vmatprep.mubr.f32.mxu0 0.0
  %6831 = vmatmul.mubr.f32.gmra.mrb[0].mxu0 %v5871
  %v6832 = vpop.f32.mrb[0].mxu0
  %v6833 = vadd.f32 %v6764, %v6832
  %v6834 = vpop.f32.mrb[0].mxu0
  %6835 = vdwg.mxu0
  %v6836 = vadd.f32 %v6752, %v6833
  %v6837 = vxor.u32 %v6836, 2147483648
  %v6838 = vmul.f32 %v6837, 1.442695
  %v6839 = vpow.pop %v6838
  %v6840 = vadd.f32 %v6839, 1.0
  %v6841 = vrcp.pop %v6840
  %v6842 = vmul.f32 1.0, %v6841
  %6844 = vrot.lane.b32.xlu0 %v6833, 64
  %v6845 = vpop.permute.xlu0 %6844
  %v6847 = vmul.f32 %v6842, %v6845
  %6849 = vrot.lane.b32.xlu0 %v6847, 64
  %v6850 = vpop.permute.xlu0 %6849
  %v6852 = vadd.f32 %v6752, %v6850
  %v6853 = vtanh.pop %v6852
  %v6854 = vsub.f32 1.0, %v6842
  %6856 = vrot.lane.b32.xlu0 %v6853, 96
  %v6857 = vpop.permute.xlu0 %6856
  %v6859 = vmul.f32 %v6854, %v6857
  %v6860 = vmul.f32 %v6842, %v5856
  %v6861 = vadd.f32 %v6859, %v6860
  %v6862 = vld [vmem:[%s7] sm:$0xff]
  %v6863 = vld [vmem:[%s7 + $0x8] sm:$0xff]
  %v6864 = vld [vmem:[%s7 + $0x10] sm:$0xff]
  %v6865 = vld [vmem:[%s7 + $0x18] sm:$0xff]
  %v6866 = vld [vmem:[%s8] sm:$0x1]
  %v6868 = vlaneseq
  %v6869 = vshrl.u32 %v6868, 7
  %v6870 = vsub.s32 0, %v6869
  %v6871 = vrot.slane %v6866, %v6870
  %6874 = vrot.lane.b32.xlu0 %v6861, 96
  %v6875 = vpop.permute.xlu0 %6874
  %v6876 = vsel %vm54, %v6875, 0
  %6878 = vmatprep.subr.mxu0 0.0
  %6879 = vmatpush1.msra.mxu0 %v6862
  %6880 = vmatprep.subr.mxu0 0.0
  %6881 = vmatpush1.msra.mxu0 %v6863
  %6882 = vmatprep.subr.mxu0 0.0
  %6883 = vmatpush1.msra.mxu0 %v6864
  %6884 = vmatprep.subr.mxu0 0.0
  %6885 = vmatpush1.msra.mxu0 %v6865
  %6886 = vmatprep.subr.mxu0 0.0
  %6887 = vmatpush1.msra.mxu0 0.0
  %6888 = vmatprep.subr.mxu0 0.0
  %6889 = vmatpush1.msra.mxu0 0.0
  %6890 = vmatprep.subr.mxu0 0.0
  %6891 = vmatpush1.msra.mxu0 0.0
  %6892 = vmatprep.subr.mxu0 0.0
  %6893 = vmatpush1.msra.mxu0 0.0
  %6894 = vmatprep.subr.mxu0 0.0
  %6895 = vmatpush1.msra.mxu0 0.0
  %6896 = vmatprep.subr.mxu0 0.0
  %6897 = vmatpush1.msra.mxu0 0.0
  %6898 = vmatprep.subr.mxu0 0.0
  %6899 = vmatpush1.msra.mxu0 0.0
  %6900 = vmatprep.subr.mxu0 0.0
  %6901 = vmatpush1.msra.mxu0 0.0
  %6902 = vmatprep.subr.mxu0 0.0
  %6903 = vmatpush1.msra.mxu0 0.0
  %6904 = vmatprep.subr.mxu0 0.0
  %6905 = vmatpush1.msra.mxu0 0.0
  %6906 = vmatprep.subr.mxu0 0.0
  %6907 = vmatpush1.msra.mxu0 0.0
  %6908 = vmatprep.subr.mxu0 0.0
  %6909 = vmatpush1.msra.mxu0 0.0
  %6910 = vmatprep.subr.mxu0 0.0
  %6911 = vmatpush1.msra.mxu0 0.0
  %6912 = vmatprep.subr.mxu0 0.0
  %6913 = vmatpush1.msra.mxu0 0.0
  %6914 = vmatprep.subr.mxu0 0.0
  %6915 = vmatpush1.msra.mxu0 0.0
  %6916 = vmatprep.subr.mxu0 0.0
  %6917 = vmatpush1.msra.mxu0 0.0
  %6918 = vmatprep.subr.mxu0 0.0
  %6919 = vmatpush1.msra.mxu0 0.0
  %6920 = vmatprep.subr.mxu0 0.0
  %6921 = vmatpush1.msra.mxu0 0.0
  %6922 = vmatprep.subr.mxu0 0.0
  %6923 = vmatpush1.msra.mxu0 0.0
  %6924 = vmatprep.subr.mxu0 0.0
  %6925 = vmatpush1.msra.mxu0 0.0
  %6926 = vmatprep.subr.mxu0 0.0
  %6927 = vmatpush1.msra.mxu0 0.0
  %6928 = vmatprep.subr.mxu0 0.0
  %6929 = vmatpush1.msra.mxu0 0.0
  %6930 = vmatprep.subr.mxu0 0.0
  %6931 = vmatpush1.msra.mxu0 0.0
  %6932 = vmatprep.subr.mxu0 0.0
  %6933 = vmatpush1.msra.mxu0 0.0
  %6934 = vmatprep.subr.mxu0 0.0
  %6935 = vmatpush1.msra.mxu0 0.0
  %6936 = vmatprep.subr.mxu0 0.0
  %6937 = vmatpush1.msra.mxu0 0.0
  %6938 = vmatprep.subr.mxu0 0.0
  %6939 = vmatpush1.msra.mxu0 0.0
  %6940 = vmatprep.subr.mxu0 0.0
  %6941 = vmatpush1.msra.mxu0 0.0
  %6942 = vmatprep.mubr.f32.mxu0 0.0
  %6943 = vmatmul.mubr.f32.gmra.mrb[0].mxu0 %v6876
  %v6944 = vpop.f32.mrb[0].mxu0
  %v6945 = vadd.f32 %v6871, %v6944
  %v6946 = vpop.f32.mrb[0].mxu0
  %6947 = vdwg.mxu0
  %6948 = vmax.xlane.f32.xlu0 %v6945
  %v6949 = vpop.xlane.xlu0 %6948
  %v6950 = vsub.f32 %v6945, %v6949
  %v6951 = vmul.f32 %v6950, 1.442695
  %v6952 = vpow.pop %v6951
  %6953 = vadd.xlane.f32.xlu0 %v6952
  %v6954 = vpop.xlane.xlu0 %6953
  %v6955 = vlog2.pop %v6954
  %v6956 = vmul.f32 %v6955, 0.6931472
  %v6957 = vadd.f32 %v6949, %v6956
  %v6958 = vsub.f32 %v6945, %v6957
  %s6959 = scalar_lea.vmem %s9, 56
  %6960 = vst [vmem:[%s6959] sm:$0xff] %v6958
  // Predicated region
  $region38: #{attention_decoder_forward.1} parent=0 // pred_check
    _
  $region39: #{attention_decoder_forward.1} parent=0 // pred_check_branch
    %6962 = sbr.rel (0) target = $region41
  $region40: #{attention_decoder_forward.1} parent=0 // pred_region
    _
  $region41: #{attention_decoder_forward.1} parent=0 // pred_fallthru
    _
  // Predicated region
  $region42: #{attention_decoder_forward.1} parent=0 // pred_check
    _
  $region43: #{attention_decoder_forward.1} parent=0 // pred_check_branch
    %6964 = sbr.rel (0) target = $region45
  $region44: #{attention_decoder_forward.1} parent=0 // pred_region
    _
  $region45: #{attention_decoder_forward.1} parent=0 // pred_fallthru
    _

</llo_original>
